<compile_context>
chip_gen: v7x
topology: tpu7x:2x2x1
jax: 0.10.0
libtpu: 0.0.40
codegen_flags: <defaults>
</compile_context>

<pallas_src>
import functools

import jax
import jax.numpy as jnp
from jax import lax
from jax.experimental import pallas as pl
from jax.experimental.pallas import tpu as pltpu


def _fused_dncnn_kernel(x_ref, w_all_ref, bias_ref, w_last_ref, o_ref,
                        act_ref, slab_ref, *, H, W, C, n_fused, T):
    """Fused forward pass for one batch element.

    x_ref     : (1, H+2, W+2, C) bf16  zero-padded input, image in channel 0
    w_all_ref : (n_fused, 9C, C) bf16  stacked conv weights (layer 0 embedded, BN scale folded)
    bias_ref  : (n_fused, 1, C)  f32   folded BN bias (zeros for layer 0)
    w_last_ref: (9, C)           f32   last-layer (C -> 1) weights, tap-major
    o_ref     : (1, H, W)        f32   output (lane-dense rows)
    act_ref   : (2, H+2, W+2, C) bf16  ping-pong padded activation buffers (VMEM)
    slab_ref  : (T*W, 9C)        bf16  persistent im2col patch slab (VMEM)
    """
    n_chunks = H // T
    bf16 = jnp.bfloat16

    # Stage the zero-padded input plane (halo already zero) into ping-pong slot 0.
    act_ref[0] = x_ref[0]

    # Zero only the 1-pixel halo strips of slot 1 (interiors are fully overwritten
    # every layer; slot 0's halo comes zeroed from the wrapper's padding).
    act_ref[1, 0:1, :, :] = jnp.zeros((1, W + 2, C), bf16)
    act_ref[1, H + 1:H + 2, :, :] = jnp.zeros((1, W + 2, C), bf16)
    act_ref[1, :, 0:1, :] = jnp.zeros((H + 2, 1, C), bf16)
    act_ref[1, :, W + 1:W + 2, :] = jnp.zeros((H + 2, 1, C), bf16)

    # ---- fused conv(+BN)+ReLU stack: layer 0 (1->C) is embedded as a (9C, C) matmul
    #      whose ci>0 weight rows are zero; layers 1..n_mid are conv+BN+ReLU.
    #      Dropout2d(0.1) is the identity in eval mode.
    def layer_body(l, carry):
        src = l % 2
        dst = 1 - src

        def chunk_body(c, carry2):
            r0 = c * T
            # im2col for output rows [r0, r0+T): write the 9 shifted tap blocks
            # straight into the persistent slab scratch (no concatenate).
            for ky in range(3):
                for kx in range(3):
                    tap = ky * 3 + kx
                    blk = act_ref[src, pl.ds(r0 + ky, T), kx:kx + W, :]
                    slab_ref[:, tap * C:(tap + 1) * C] = blk.reshape(T * W, C)
            # bf16 x bf16 -> f32 MXU matmul, f32 epilogue (bias + ReLU), bf16 store.
            y = jnp.dot(slab_ref[...], w_all_ref[l],
                        preferred_element_type=jnp.float32)
            y = jnp.maximum(y + bias_ref[l], 0.0)
            act_ref[dst, pl.ds(r0 + 1, T), 1:W + 1, :] = (
                y.reshape(T, W, C).astype(bf16))
            return carry2

        return lax.fori_loop(0, n_chunks, chunk_body, carry)

    lax.fori_loop(0, n_fused, layer_body, 0)

    # ---- final conv (C -> 1), no BN / ReLU.  Computed tap-wise with a lane reduction
    #      so the result comes out as lane-dense (T, W) rows (no (H*W, 1) column).
    fp = n_fused % 2                       # parity holding the final hidden activation
    w_last = w_last_ref[...]               # (9, C) f32

    def last_chunk(c, carry):
        r0 = c * T
        acc = jnp.zeros((T, W), jnp.float32)
        for ky in range(3):
            for kx in range(3):
                tap = ky * 3 + kx
                blk = act_ref[fp, pl.ds(r0 + ky, T), kx:kx + W, :].astype(jnp.float32)
                acc = acc + jnp.sum(blk * w_last[tap], axis=-1)
        o_ref[0, pl.ds(r0, T), :] = acc
        return carry

    lax.fori_loop(0, n_chunks, last_chunk, 0)


def _pick_chunk_rows(H, W, C, budget_bytes=2 * 1024 * 1024):
    """Largest divisor T of H whose (T*W, 9C) bf16 slab fits the byte budget."""
    best = 1
    for t in range(1, H + 1):
        if H % t == 0 and t * W * 9 * C * 2 <= budget_bytes:
            best = t
    return best


def _vmem_limit_bytes():
    """Per-generation scoped-VMEM limit (~80% of physical, clamped)."""
    try:
        cap = pltpu.get_tpu_info().vmem_capacity_bytes
    except Exception:
        cap = 64 * 1024 * 1024
    return int(max(32 * 1024 * 1024, min(0.8 * cap, 112 * 1024 * 1024)))


def denoising_cnn_forward(x_nchw, params):
    """Forward pass. x_nchw: (N, 1, H, W) float32 (PyTorch layout). Returns (N, 1, H, W)."""
    N, cin, H, W = x_nchw.shape
    assert cin == 1
    w_first = params["w_first"]            # (3, 3, 1, C)
    w_mid = params["w_mid"]                # (n_mid, 3, 3, C, C)
    scale_mid = params["scale_mid"]        # (n_mid, C)
    bias_mid = params["bias_mid"]          # (n_mid, C)
    w_last = params["w_last"]              # (3, 3, C, 1)
    n_mid = w_mid.shape[0]
    C = w_mid.shape[3]
    n_fused = n_mid + 1
    K = 9 * C

    # Input prep (data movement only): zero-pad spatially (== SAME padding / zero halo)
    # and embed the single channel into channel 0 of a channel-last C-wide plane so the
    # kernel never needs an image-layout -> channel-last relayout.
    xp = jnp.pad(x_nchw[:, 0], ((0, 0), (1, 1), (1, 1)))               # (N, H+2, W+2)
    x_in = jnp.pad(xp[..., None], ((0, 0), (0, 0), (0, 0), (0, C - 1)))
    x_in = x_in.astype(jnp.bfloat16)                                   # (N, H+2, W+2, C)

    # Weight prep: embed layer 0 into a (9C, C) matrix (only ci=0 rows nonzero), fold
    # the BN scale into the middle conv weights, stack, cast to bf16 for the MXU.
    w0 = jnp.zeros((9, C, C), jnp.float32).at[:, 0, :].set(w_first.reshape(9, C))
    w_mid_folded = w_mid * scale_mid[:, None, None, None, :]
    w_all = jnp.concatenate(
        [w0.reshape(1, K, C), w_mid_folded.reshape(n_mid, K, C)],
        axis=0).astype(jnp.bfloat16)                                   # (n_fused, 9C, C)
    bias_all = jnp.concatenate(
        [jnp.zeros((1, 1, C), jnp.float32), bias_mid.reshape(n_mid, 1, C)],
        axis=0)                                                        # (n_fused, 1, C)
    w_last2 = w_last[:, :, :, 0].reshape(9, C).astype(jnp.float32)     # (9, C)

    T = _pick_chunk_rows(H, W, C)

    kernel = functools.partial(_fused_dncnn_kernel, H=H, W=W, C=C,
                               n_fused=n_fused, T=T)

    flops = 2.0 * N * H * W * (9 * C * C * n_fused + 9 * C)
    bytes_accessed = (x_in.size * 2 + w_all.size * 2 + bias_all.size * 4
                      + w_last2.size * 4 + N * H * W * 4)

    out = pl.pallas_call(
        kernel,
        out_shape=jax.ShapeDtypeStruct((N, H, W), jnp.float32),
        grid_spec=pltpu.PrefetchScalarGridSpec(
            num_scalar_prefetch=0,
            grid=(N,),
            in_specs=[
                pl.BlockSpec((1, H + 2, W + 2, C), lambda n: (n, 0, 0, 0)),
                pl.BlockSpec((n_fused, K, C), lambda n: (0, 0, 0)),
                pl.BlockSpec((n_fused, 1, C), lambda n: (0, 0, 0)),
                pl.BlockSpec((9, C), lambda n: (0, 0)),
            ],
            out_specs=pl.BlockSpec((1, H, W), lambda n: (n, 0, 0)),
            scratch_shapes=[
                pltpu.VMEM((2, H + 2, W + 2, C), jnp.bfloat16),   # ping-pong activations
                pltpu.VMEM((T * W, K), jnp.bfloat16),             # im2col patch slab
            ],
        ),
        compiler_params=pltpu.CompilerParams(
            dimension_semantics=("parallel",),          # batch elements are independent
            vmem_limit_bytes=_vmem_limit_bytes(),
        ),
        cost_estimate=pl.CostEstimate(flops=int(flops), transcendentals=0,
                                      bytes_accessed=int(bytes_accessed)),
    )(x_in, w_all, bias_all, w_last2)

    return out[:, None, :, :]                                          # -> (N, 1, H, W)


def init_denoising_cnn_params(key, num_channels, num_of_layers=17):
    """Deterministic parameter init mirroring the PyTorch module's shapes.

    Weights use HWIO layout (3, 3, Cin, Cout); BatchNorm running stats are folded into
    per-channel scale/bias (eval mode, eps=1e-5).
    """
    C = num_channels
    eps = 1e-5
    n_mid = num_of_layers - 2
    assert n_mid >= 1

    keys = jax.random.split(key, 2 + 5 * n_mid)
    it = iter(keys)

    w_first = 0.2 * jax.random.normal(next(it), (3, 3, 1, C), dtype=jnp.float32)

    w_mid, scale_mid, bias_mid = [], [], []
    for _ in range(n_mid):
        w = 0.1 * jax.random.normal(next(it), (3, 3, C, C), dtype=jnp.float32)
        gamma = 1.0 + 0.1 * jax.random.normal(next(it), (C,), dtype=jnp.float32)
        beta = 0.1 * jax.random.normal(next(it), (C,), dtype=jnp.float32)
        running_mean = 0.1 * jax.random.normal(next(it), (C,), dtype=jnp.float32)
        running_var = jax.random.uniform(next(it), (C,), dtype=jnp.float32,
                                         minval=0.5, maxval=1.5)
        scale = gamma / jnp.sqrt(running_var + eps)
        bias = beta - running_mean * scale
        w_mid.append(w)
        scale_mid.append(scale)
        bias_mid.append(bias)

    w_last = 0.1 * jax.random.normal(next(it), (3, 3, C, 1), dtype=jnp.float32)

    return dict(
        w_first=w_first,
        w_mid=jnp.stack(w_mid),
        scale_mid=jnp.stack(scale_mid),
        bias_mid=jnp.stack(bias_mid),
        w_last=w_last,
    )


def _reference_forward(x_nchw, params):
    """Pure-JAX reference (XLA convs, f32) for correctness checking."""
    x = jnp.transpose(x_nchw, (0, 2, 3, 1))  # NHWC

    def conv(a, w):
        return jax.lax.conv_general_dilated(
            a, w, window_strides=(1, 1), padding="SAME",
            dimension_numbers=("NHWC", "HWIO", "NHWC"))

    y = jax.nn.relu(conv(x, params["w_first"]))
    for l in range(params["w_mid"].shape[0]):
        y = conv(y, params["w_mid"][l]) * params["scale_mid"][l] + params["bias_mid"][l]
        y = jax.nn.relu(y)
    y = conv(y, params["w_last"])
    return jnp.transpose(y, (0, 3, 1, 2))


if __name__ == "__main__":
    key = jax.random.PRNGKey(0)
    k_x, k_p = jax.random.split(key)

    N, H, W = 2, 16, 16
    num_channels = 8
    num_of_layers = 6   # small test config (PyTorch default is 17)

    x = jax.random.normal(k_x, (N, 1, H, W), dtype=jnp.float32)
    params = init_denoising_cnn_params(k_p, num_channels, num_of_layers)

    out = jax.jit(denoising_cnn_forward)(x, params)
    out = jax.block_until_ready(out)

    assert out.shape == (N, 1, H, W), out.shape
    assert out.dtype == jnp.float32
    assert bool(jnp.all(jnp.isfinite(out)))

    ref = _reference_forward(x, params)
    max_err = float(jnp.max(jnp.abs(out - ref)))
    # bf16 matmul operands (f32 accumulation) -> loosened tolerance vs. the f32 reference.
    assert max_err < 5e-2, max_err

    print("KERNEL_OK")
</pallas_src>

<mosaic_0001>
module attributes {stable_mosaic.version = 11 : i64} {
  func.func @_fused_dncnn_kernel(%arg0: i32, %arg1: memref<1x18x18x8xbf16, #tpu.memory_space<vmem>>, %arg2: memref<5x72x8xbf16, #tpu.memory_space<vmem>>, %arg3: memref<5x1x8xf32, #tpu.memory_space<vmem>>, %arg4: memref<9x8xf32, #tpu.memory_space<vmem>>, %arg5: memref<1x16x16xf32, #tpu.memory_space<vmem>>, %arg6: memref<2x18x18x8xbf16, #tpu.memory_space<vmem>>, %arg7: memref<256x72xbf16, #tpu.memory_space<vmem>>) attributes {dimension_semantics = [#tpu.dimension_semantics<parallel>], iteration_bounds = array<i64: 2>, scalar_prefetch = 0 : i64, scratch_operands = 2 : i64, tpu.core_type = #tpu.core_type<tc>, window_params = [{transform_indices = @transform_0, window_bounds = array<i64: 1, 18, 18, 8>}, {pipeline_mode = #tpu.pipeline_mode<synchronous>, transform_indices = @transform_1, window_bounds = array<i64: 5, 72, 8>}, {pipeline_mode = #tpu.pipeline_mode<synchronous>, transform_indices = @transform_2, window_bounds = array<i64: 5, 1, 8>}, {pipeline_mode = #tpu.pipeline_mode<synchronous>, transform_indices = @transform_3, window_bounds = array<i64: 9, 8>}, {transform_indices = @transform_4, window_bounds = array<i64: 1, 16, 16>}]} {
    %c0 = arith.constant 0 : index
    %c0_0 = arith.constant 0 : index
    %c0_1 = arith.constant 0 : index
    %c0_2 = arith.constant 0 : index
    %0 = vector.load %arg1[%c0, %c0_0, %c0_1, %c0_2] : memref<1x18x18x8xbf16, #tpu.memory_space<vmem>>, vector<1x18x18x8xbf16>
    %1 = vector.shape_cast %0 : vector<1x18x18x8xbf16> to vector<18x18x8xbf16>
    %c0_3 = arith.constant 0 : index
    %c0_4 = arith.constant 0 : index
    %c0_5 = arith.constant 0 : index
    %c0_6 = arith.constant 0 : index
    %2 = vector.load %arg6[%c0_3, %c0_4, %c0_5, %c0_6] : memref<2x18x18x8xbf16, #tpu.memory_space<vmem>>, vector<1x18x18x8xbf16>
    %3 = vector.shape_cast %2 : vector<1x18x18x8xbf16> to vector<18x18x8xbf16>
    %4 = vector.shape_cast %1 : vector<18x18x8xbf16> to vector<1x18x18x8xbf16>
    tpu.vector_store %arg6[%c0_3, %c0_4, %c0_5, %c0_6], %4 {strides = array<i32>} : memref<2x18x18x8xbf16, #tpu.memory_space<vmem>>, vector<1x18x18x8xbf16>,
    %cst = arith.constant 0.000000e+00 : bf16
    %5 = vector.broadcast %cst : bf16 to vector<1x18x8xbf16>
    %c1 = arith.constant 1 : index
    %c0_7 = arith.constant 0 : index
    %c0_8 = arith.constant 0 : index
    %c0_9 = arith.constant 0 : index
    %6 = vector.load %arg6[%c1, %c0_7, %c0_8, %c0_9] : memref<2x18x18x8xbf16, #tpu.memory_space<vmem>>, vector<1x1x18x8xbf16>
    %7 = vector.shape_cast %6 : vector<1x1x18x8xbf16> to vector<1x18x8xbf16>
    %8 = vector.shape_cast %5 : vector<1x18x8xbf16> to vector<1x1x18x8xbf16>
    tpu.vector_store %arg6[%c1, %c0_7, %c0_8, %c0_9], %8 {strides = array<i32>} : memref<2x18x18x8xbf16, #tpu.memory_space<vmem>>, vector<1x1x18x8xbf16>,
    %cst_10 = arith.constant 0.000000e+00 : bf16
    %9 = vector.broadcast %cst_10 : bf16 to vector<1x18x8xbf16>
    %c1_11 = arith.constant 1 : index
    %c17 = arith.constant 17 : index
    %c0_12 = arith.constant 0 : index
    %c0_13 = arith.constant 0 : index
    %10 = vector.load %arg6[%c1_11, %c17, %c0_12, %c0_13] : memref<2x18x18x8xbf16, #tpu.memory_space<vmem>>, vector<1x1x18x8xbf16>
    %11 = vector.shape_cast %10 : vector<1x1x18x8xbf16> to vector<1x18x8xbf16>
    %12 = vector.shape_cast %9 : vector<1x18x8xbf16> to vector<1x1x18x8xbf16>
    tpu.vector_store %arg6[%c1_11, %c17, %c0_12, %c0_13], %12 {strides = array<i32>} : memref<2x18x18x8xbf16, #tpu.memory_space<vmem>>, vector<1x1x18x8xbf16>,
    %cst_14 = arith.constant 0.000000e+00 : bf16
    %13 = vector.broadcast %cst_14 : bf16 to vector<18x1x8xbf16>
    %c1_15 = arith.constant 1 : index
    %c0_16 = arith.constant 0 : index
    %c0_17 = arith.constant 0 : index
    %c0_18 = arith.constant 0 : index
    %14 = vector.load %arg6[%c1_15, %c0_16, %c0_17, %c0_18] : memref<2x18x18x8xbf16, #tpu.memory_space<vmem>>, vector<1x18x1x8xbf16>
    %15 = vector.shape_cast %14 : vector<1x18x1x8xbf16> to vector<18x1x8xbf16>
    %16 = vector.shape_cast %13 : vector<18x1x8xbf16> to vector<1x18x1x8xbf16>
    tpu.vector_store %arg6[%c1_15, %c0_16, %c0_17, %c0_18], %16 {strides = array<i32>} : memref<2x18x18x8xbf16, #tpu.memory_space<vmem>>, vector<1x18x1x8xbf16>,
    %cst_19 = arith.constant 0.000000e+00 : bf16
    %17 = vector.broadcast %cst_19 : bf16 to vector<18x1x8xbf16>
    %c1_20 = arith.constant 1 : index
    %c0_21 = arith.constant 0 : index
    %c17_22 = arith.constant 17 : index
    %c0_23 = arith.constant 0 : index
    %18 = vector.load %arg6[%c1_20, %c0_21, %c17_22, %c0_23] : memref<2x18x18x8xbf16, #tpu.memory_space<vmem>>, vector<1x18x1x8xbf16>
    %19 = vector.shape_cast %18 : vector<1x18x1x8xbf16> to vector<18x1x8xbf16>
    %20 = vector.shape_cast %17 : vector<18x1x8xbf16> to vector<1x18x1x8xbf16>
    tpu.vector_store %arg6[%c1_20, %c0_21, %c17_22, %c0_23], %20 {strides = array<i32>} : memref<2x18x18x8xbf16, #tpu.memory_space<vmem>>, vector<1x18x1x8xbf16>,
    %c0_i32 = arith.constant 0 : i32
    %c5_i32 = arith.constant 5 : i32
    %21 = arith.addi %c0_i32, %c5_i32 : i32
    %c1_i32 = arith.constant 1 : i32
    scf.for %arg8 = %c0_i32 to %21 step %c1_i32  : i32 {
      %c2_i32_75 = arith.constant 2 : i32
      %c0_i32_76 = arith.constant 0 : i32
      %137 = arith.cmpi eq, %c2_i32_75, %c0_i32_76 : i32
      %c1_i32_77 = arith.constant 1 : i32
      %138 = arith.select %137, %c1_i32_77, %c2_i32_75 : i32
      %139 = arith.remsi %arg8, %138 : i32
      %c0_i32_78 = arith.constant 0 : i32
      %140 = arith.cmpi ne, %139, %c0_i32_78 : i32
      %c0_i32_79 = arith.constant 0 : i32
      %141 = arith.cmpi slt, %139, %c0_i32_79 : i32
      %c0_i32_80 = arith.constant 0 : i32
      %142 = arith.cmpi slt, %138, %c0_i32_80 : i32
      %143 = arith.xori %141, %142 : i1
      %144 = arith.andi %143, %140 : i1
      %145 = arith.addi %139, %138 : i32
      %146 = arith.select %144, %145, %139 : i32
      %c1_i32_81 = arith.constant 1 : i32
      %147 = arith.subi %c1_i32_81, %146 : i32
      %c0_i32_82 = arith.constant 0 : i32
      %c16_i32_83 = arith.constant 16 : i32
      %148 = arith.muli %c0_i32_82, %c16_i32_83 : i32
      %c0_i32_84 = arith.constant 0 : i32
      %149 = arith.addi %148, %c0_i32_84 : i32
      %150 = arith.index_cast %146 : i32 to index
      %151 = arith.index_cast %149 : i32 to index
      %c0_85 = arith.constant 0 : index
      %c0_86 = arith.constant 0 : index
      %152 = vector.load %arg6[%150, %151, %c0_85, %c0_86] : memref<2x18x18x8xbf16, #tpu.memory_space<vmem>>, vector<1x16x16x8xbf16>
      %153 = vector.shape_cast %152 : vector<1x16x16x8xbf16> to vector<16x16x8xbf16>
      %154 = vector.shape_cast %153 : vector<16x16x8xbf16> to vector<256x8xbf16>
      %c0_87 = arith.constant 0 : index
      %c0_88 = arith.constant 0 : index
      %155 = vector.load %arg7[%c0_87, %c0_88] : memref<256x72xbf16, #tpu.memory_space<vmem>>, vector<256x8xbf16>
      tpu.vector_store %arg7[%c0_87, %c0_88], %154 {strides = array<i32>} : memref<256x72xbf16, #tpu.memory_space<vmem>>, vector<256x8xbf16>,
      %c0_i32_89 = arith.constant 0 : i32
      %156 = arith.addi %148, %c0_i32_89 : i32
      %157 = arith.index_cast %146 : i32 to index
      %158 = arith.index_cast %156 : i32 to index
      %c1_90 = arith.constant 1 : index
      %c0_91 = arith.constant 0 : index
      %159 = vector.load %arg6[%157, %158, %c1_90, %c0_91] : memref<2x18x18x8xbf16, #tpu.memory_space<vmem>>, vector<1x16x16x8xbf16>
      %160 = vector.shape_cast %159 : vector<1x16x16x8xbf16> to vector<16x16x8xbf16>
      %161 = vector.shape_cast %160 : vector<16x16x8xbf16> to vector<256x8xbf16>
      %c0_92 = arith.constant 0 : index
      %c8 = arith.constant 8 : index
      %162 = vector.load %arg7[%c0_92, %c8] : memref<256x72xbf16, #tpu.memory_space<vmem>>, vector<256x8xbf16>
      tpu.vector_store %arg7[%c0_92, %c8], %161 {strides = array<i32>} : memref<256x72xbf16, #tpu.memory_space<vmem>>, vector<256x8xbf16>,
      %c0_i32_93 = arith.constant 0 : i32
      %163 = arith.addi %148, %c0_i32_93 : i32
      %164 = arith.index_cast %146 : i32 to index
      %165 = arith.index_cast %163 : i32 to index
      %c2_94 = arith.constant 2 : index
      %c0_95 = arith.constant 0 : index
      %166 = vector.load %arg6[%164, %165, %c2_94, %c0_95] : memref<2x18x18x8xbf16, #tpu.memory_space<vmem>>, vector<1x16x16x8xbf16>
      %167 = vector.shape_cast %166 : vector<1x16x16x8xbf16> to vector<16x16x8xbf16>
      %168 = vector.shape_cast %167 : vector<16x16x8xbf16> to vector<256x8xbf16>
      %c0_96 = arith.constant 0 : index
      %c16 = arith.constant 16 : index
      %169 = vector.load %arg7[%c0_96, %c16] : memref<256x72xbf16, #tpu.memory_space<vmem>>, vector<256x8xbf16>
      tpu.vector_store %arg7[%c0_96, %c16], %168 {strides = array<i32>} : memref<256x72xbf16, #tpu.memory_space<vmem>>, vector<256x8xbf16>,
      %c1_i32_97 = arith.constant 1 : i32
      %170 = arith.addi %148, %c1_i32_97 : i32
      %171 = arith.index_cast %146 : i32 to index
      %172 = arith.index_cast %170 : i32 to index
      %c0_98 = arith.constant 0 : index
      %c0_99 = arith.constant 0 : index
      %173 = vector.load %arg6[%171, %172, %c0_98, %c0_99] : memref<2x18x18x8xbf16, #tpu.memory_space<vmem>>, vector<1x16x16x8xbf16>
      %174 = vector.shape_cast %173 : vector<1x16x16x8xbf16> to vector<16x16x8xbf16>
      %175 = vector.shape_cast %174 : vector<16x16x8xbf16> to vector<256x8xbf16>
      %c0_100 = arith.constant 0 : index
      %c24 = arith.constant 24 : index
      %176 = vector.load %arg7[%c0_100, %c24] : memref<256x72xbf16, #tpu.memory_space<vmem>>, vector<256x8xbf16>
      tpu.vector_store %arg7[%c0_100, %c24], %175 {strides = array<i32>} : memref<256x72xbf16, #tpu.memory_space<vmem>>, vector<256x8xbf16>,
      %c1_i32_101 = arith.constant 1 : i32
      %177 = arith.addi %148, %c1_i32_101 : i32
      %178 = arith.index_cast %146 : i32 to index
      %179 = arith.index_cast %177 : i32 to index
      %c1_102 = arith.constant 1 : index
      %c0_103 = arith.constant 0 : index
      %180 = vector.load %arg6[%178, %179, %c1_102, %c0_103] : memref<2x18x18x8xbf16, #tpu.memory_space<vmem>>, vector<1x16x16x8xbf16>
      %181 = vector.shape_cast %180 : vector<1x16x16x8xbf16> to vector<16x16x8xbf16>
      %182 = vector.shape_cast %181 : vector<16x16x8xbf16> to vector<256x8xbf16>
      %c0_104 = arith.constant 0 : index
      %c32 = arith.constant 32 : index
      %183 = vector.load %arg7[%c0_104, %c32] : memref<256x72xbf16, #tpu.memory_space<vmem>>, vector<256x8xbf16>
      tpu.vector_store %arg7[%c0_104, %c32], %182 {strides = array<i32>} : memref<256x72xbf16, #tpu.memory_space<vmem>>, vector<256x8xbf16>,
      %c1_i32_105 = arith.constant 1 : i32
      %184 = arith.addi %148, %c1_i32_105 : i32
      %185 = arith.index_cast %146 : i32 to index
      %186 = arith.index_cast %184 : i32 to index
      %c2_106 = arith.constant 2 : index
      %c0_107 = arith.constant 0 : index
      %187 = vector.load %arg6[%185, %186, %c2_106, %c0_107] : memref<2x18x18x8xbf16, #tpu.memory_space<vmem>>, vector<1x16x16x8xbf16>
      %188 = vector.shape_cast %187 : vector<1x16x16x8xbf16> to vector<16x16x8xbf16>
      %189 = vector.shape_cast %188 : vector<16x16x8xbf16> to vector<256x8xbf16>
      %c0_108 = arith.constant 0 : index
      %c40 = arith.constant 40 : index
      %190 = vector.load %arg7[%c0_108, %c40] : memref<256x72xbf16, #tpu.memory_space<vmem>>, vector<256x8xbf16>
      tpu.vector_store %arg7[%c0_108, %c40], %189 {strides = array<i32>} : memref<256x72xbf16, #tpu.memory_space<vmem>>, vector<256x8xbf16>,
      %c2_i32_109 = arith.constant 2 : i32
      %191 = arith.addi %148, %c2_i32_109 : i32
      %192 = arith.index_cast %146 : i32 to index
      %193 = arith.index_cast %191 : i32 to index
      %c0_110 = arith.constant 0 : index
      %c0_111 = arith.constant 0 : index
      %194 = vector.load %arg6[%192, %193, %c0_110, %c0_111] : memref<2x18x18x8xbf16, #tpu.memory_space<vmem>>, vector<1x16x16x8xbf16>
      %195 = vector.shape_cast %194 : vector<1x16x16x8xbf16> to vector<16x16x8xbf16>
      %196 = vector.shape_cast %195 : vector<16x16x8xbf16> to vector<256x8xbf16>
      %c0_112 = arith.constant 0 : index
      %c48 = arith.constant 48 : index
      %197 = vector.load %arg7[%c0_112, %c48] : memref<256x72xbf16, #tpu.memory_space<vmem>>, vector<256x8xbf16>
      tpu.vector_store %arg7[%c0_112, %c48], %196 {strides = array<i32>} : memref<256x72xbf16, #tpu.memory_space<vmem>>, vector<256x8xbf16>,
      %c2_i32_113 = arith.constant 2 : i32
      %198 = arith.addi %148, %c2_i32_113 : i32
      %199 = arith.index_cast %146 : i32 to index
      %200 = arith.index_cast %198 : i32 to index
      %c1_114 = arith.constant 1 : index
      %c0_115 = arith.constant 0 : index
      %201 = vector.load %arg6[%199, %200, %c1_114, %c0_115] : memref<2x18x18x8xbf16, #tpu.memory_space<vmem>>, vector<1x16x16x8xbf16>
      %202 = vector.shape_cast %201 : vector<1x16x16x8xbf16> to vector<16x16x8xbf16>
      %203 = vector.shape_cast %202 : vector<16x16x8xbf16> to vector<256x8xbf16>
      %c0_116 = arith.constant 0 : index
      %c56 = arith.constant 56 : index
      %204 = vector.load %arg7[%c0_116, %c56] : memref<256x72xbf16, #tpu.memory_space<vmem>>, vector<256x8xbf16>
      tpu.vector_store %arg7[%c0_116, %c56], %203 {strides = array<i32>} : memref<256x72xbf16, #tpu.memory_space<vmem>>, vector<256x8xbf16>,
      %c2_i32_117 = arith.constant 2 : i32
      %205 = arith.addi %148, %c2_i32_117 : i32
      %206 = arith.index_cast %146 : i32 to index
      %207 = arith.index_cast %205 : i32 to index
      %c2_118 = arith.constant 2 : index
      %c0_119 = arith.constant 0 : index
      %208 = vector.load %arg6[%206, %207, %c2_118, %c0_119] : memref<2x18x18x8xbf16, #tpu.memory_space<vmem>>, vector<1x16x16x8xbf16>
      %209 = vector.shape_cast %208 : vector<1x16x16x8xbf16> to vector<16x16x8xbf16>
      %210 = vector.shape_cast %209 : vector<16x16x8xbf16> to vector<256x8xbf16>
      %c0_120 = arith.constant 0 : index
      %c64 = arith.constant 64 : index
      %211 = vector.load %arg7[%c0_120, %c64] : memref<256x72xbf16, #tpu.memory_space<vmem>>, vector<256x8xbf16>
      tpu.vector_store %arg7[%c0_120, %c64], %210 {strides = array<i32>} : memref<256x72xbf16, #tpu.memory_space<vmem>>, vector<256x8xbf16>,
      %c0_121 = arith.constant 0 : index
      %c0_122 = arith.constant 0 : index
      %212 = vector.load %arg7[%c0_121, %c0_122] : memref<256x72xbf16, #tpu.memory_space<vmem>>, vector<256x72xbf16>
      %213 = arith.index_cast %arg8 : i32 to index
      %c0_123 = arith.constant 0 : index
      %c0_124 = arith.constant 0 : index
      %214 = vector.load %arg2[%213, %c0_123, %c0_124] : memref<5x72x8xbf16, #tpu.memory_space<vmem>>, vector<1x72x8xbf16>
      %215 = vector.shape_cast %214 : vector<1x72x8xbf16> to vector<72x8xbf16>
      %cst_125 = arith.constant dense<0.000000e+00> : vector<256x8xf32>
      %216 = tpu.matmul %212, %215, %cst_125 {dimension_numbers = #tpu.dot_dimension_numbers<[1], [0], [0], [1], [0, 0, 1, 1], [], []>} : vector<256x72xbf16>, vector<72x8xbf16>, vector<256x8xf32> -> vector<256x8xf32>
      %217 = arith.index_cast %arg8 : i32 to index
      %c0_126 = arith.constant 0 : index
      %c0_127 = arith.constant 0 : index
      %218 = vector.load %arg3[%217, %c0_126, %c0_127] : memref<5x1x8xf32, #tpu.memory_space<vmem>>, vector<1x1x8xf32>
      %219 = vector.shape_cast %218 : vector<1x1x8xf32> to vector<1x8xf32>
      %220 = vector.broadcast %219 : vector<1x8xf32> to vector<256x8xf32>
      %221 = arith.addf %216, %220 : vector<256x8xf32>
      %cst_128 = arith.constant 0.000000e+00 : f32
      %222 = vector.broadcast %cst_128 : f32 to vector<256x8xf32>
      %223 = arith.maximumf %221, %222 : vector<256x8xf32>
      %224 = vector.shape_cast %223 : vector<256x8xf32> to vector<16x16x8xf32>
      %225 = arith.truncf %224 : vector<16x16x8xf32> to vector<16x16x8xbf16>
      %c1_i32_129 = arith.constant 1 : i32
      %226 = arith.addi %148, %c1_i32_129 : i32
      %227 = arith.index_cast %147 : i32 to index
      %228 = arith.index_cast %226 : i32 to index
      %c1_130 = arith.constant 1 : index
      %c0_131 = arith.constant 0 : index
      %229 = vector.load %arg6[%227, %228, %c1_130, %c0_131] : memref<2x18x18x8xbf16, #tpu.memory_space<vmem>>, vector<1x16x16x8xbf16>
      %230 = vector.shape_cast %229 : vector<1x16x16x8xbf16> to vector<16x16x8xbf16>
      %231 = vector.shape_cast %225 : vector<16x16x8xbf16> to vector<1x16x16x8xbf16>
      tpu.vector_store %arg6[%227, %228, %c1_130, %c0_131], %231 {strides = array<i32>} : memref<2x18x18x8xbf16, #tpu.memory_space<vmem>>, vector<1x16x16x8xbf16>,
      %c1_i32_132 = arith.constant 1 : i32
    }
    %c5_i32_24 = arith.constant 5 : i32
    %c0_25 = arith.constant 0 : index
    %c0_26 = arith.constant 0 : index
    %22 = vector.load %arg4[%c0_25, %c0_26] : memref<9x8xf32, #tpu.memory_space<vmem>>, vector<9x8xf32>
    %c0_i32_27 = arith.constant 0 : i32
    %c16_i32 = arith.constant 16 : i32
    %23 = arith.muli %c0_i32_27, %c16_i32 : i32
    %cst_28 = arith.constant 0.000000e+00 : f32
    %24 = vector.broadcast %cst_28 : f32 to vector<16x16xf32>
    %c0_i32_29 = arith.constant 0 : i32
    %25 = arith.addi %23, %c0_i32_29 : i32
    %c1_30 = arith.constant 1 : index
    %26 = arith.index_cast %25 : i32 to index
    %c0_31 = arith.constant 0 : index
    %c0_32 = arith.constant 0 : index
    %27 = vector.load %arg6[%c1_30, %26, %c0_31, %c0_32] : memref<2x18x18x8xbf16, #tpu.memory_space<vmem>>, vector<1x16x16x8xbf16>
    %28 = vector.shape_cast %27 : vector<1x16x16x8xbf16> to vector<16x16x8xbf16>
    %29 = arith.extf %28 : vector<16x16x8xbf16> to vector<16x16x8xf32>
    %30 = vector.extract_strided_slice %22 {offsets = [0, 0], sizes = [1, 8], strides = [1, 1]} : vector<9x8xf32> to vector<1x8xf32>
    %31 = vector.shape_cast %30 : vector<1x8xf32> to vector<8xf32>
    %32 = vector.shape_cast %31 : vector<8xf32> to vector<1x1x8xf32>
    %33 = vector.broadcast %32 : vector<1x1x8xf32> to vector<16x16x8xf32>
    %34 = arith.mulf %29, %33 : vector<16x16x8xf32>
    %cst_33 = arith.constant dense<0.000000e+00> : vector<16x16xf32>
    %35 = vector.multi_reduction <add>, %34, %cst_33 [2] : vector<16x16x8xf32> to vector<16x16xf32>
    %36 = arith.addf %24, %35 : vector<16x16xf32>
    %c0_i32_34 = arith.constant 0 : i32
    %37 = arith.addi %23, %c0_i32_34 : i32
    %c1_35 = arith.constant 1 : index
    %38 = arith.index_cast %37 : i32 to index
    %c1_36 = arith.constant 1 : index
    %c0_37 = arith.constant 0 : index
    %39 = vector.load %arg6[%c1_35, %38, %c1_36, %c0_37] : memref<2x18x18x8xbf16, #tpu.memory_space<vmem>>, vector<1x16x16x8xbf16>
    %40 = vector.shape_cast %39 : vector<1x16x16x8xbf16> to vector<16x16x8xbf16>
    %41 = arith.extf %40 : vector<16x16x8xbf16> to vector<16x16x8xf32>
    %42 = vector.extract_strided_slice %22 {offsets = [1, 0], sizes = [1, 8], strides = [1, 1]} : vector<9x8xf32> to vector<1x8xf32>
    %43 = vector.shape_cast %42 : vector<1x8xf32> to vector<8xf32>
    %44 = vector.shape_cast %43 : vector<8xf32> to vector<1x1x8xf32>
    %45 = vector.broadcast %44 : vector<1x1x8xf32> to vector<16x16x8xf32>
    %46 = arith.mulf %41, %45 : vector<16x16x8xf32>
    %cst_38 = arith.constant dense<0.000000e+00> : vector<16x16xf32>
    %47 = vector.multi_reduction <add>, %46, %cst_38 [2] : vector<16x16x8xf32> to vector<16x16xf32>
    %48 = arith.addf %36, %47 : vector<16x16xf32>
    %c0_i32_39 = arith.constant 0 : i32
    %49 = arith.addi %23, %c0_i32_39 : i32
    %c1_40 = arith.constant 1 : index
    %50 = arith.index_cast %49 : i32 to index
    %c2 = arith.constant 2 : index
    %c0_41 = arith.constant 0 : index
    %51 = vector.load %arg6[%c1_40, %50, %c2, %c0_41] : memref<2x18x18x8xbf16, #tpu.memory_space<vmem>>, vector<1x16x16x8xbf16>
    %52 = vector.shape_cast %51 : vector<1x16x16x8xbf16> to vector<16x16x8xbf16>
    %53 = arith.extf %52 : vector<16x16x8xbf16> to vector<16x16x8xf32>
    %54 = vector.extract_strided_slice %22 {offsets = [2, 0], sizes = [1, 8], strides = [1, 1]} : vector<9x8xf32> to vector<1x8xf32>
    %55 = vector.shape_cast %54 : vector<1x8xf32> to vector<8xf32>
    %56 = vector.shape_cast %55 : vector<8xf32> to vector<1x1x8xf32>
    %57 = vector.broadcast %56 : vector<1x1x8xf32> to vector<16x16x8xf32>
    %58 = arith.mulf %53, %57 : vector<16x16x8xf32>
    %cst_42 = arith.constant dense<0.000000e+00> : vector<16x16xf32>
    %59 = vector.multi_reduction <add>, %58, %cst_42 [2] : vector<16x16x8xf32> to vector<16x16xf32>
    %60 = arith.addf %48, %59 : vector<16x16xf32>
    %c1_i32_43 = arith.constant 1 : i32
    %61 = arith.addi %23, %c1_i32_43 : i32
    %c1_44 = arith.constant 1 : index
    %62 = arith.index_cast %61 : i32 to index
    %c0_45 = arith.constant 0 : index
    %c0_46 = arith.constant 0 : index
    %63 = vector.load %arg6[%c1_44, %62, %c0_45, %c0_46] : memref<2x18x18x8xbf16, #tpu.memory_space<vmem>>, vector<1x16x16x8xbf16>
    %64 = vector.shape_cast %63 : vector<1x16x16x8xbf16> to vector<16x16x8xbf16>
    %65 = arith.extf %64 : vector<16x16x8xbf16> to vector<16x16x8xf32>
    %66 = vector.extract_strided_slice %22 {offsets = [3, 0], sizes = [1, 8], strides = [1, 1]} : vector<9x8xf32> to vector<1x8xf32>
    %67 = vector.shape_cast %66 : vector<1x8xf32> to vector<8xf32>
    %68 = vector.shape_cast %67 : vector<8xf32> to vector<1x1x8xf32>
    %69 = vector.broadcast %68 : vector<1x1x8xf32> to vector<16x16x8xf32>
    %70 = arith.mulf %65, %69 : vector<16x16x8xf32>
    %cst_47 = arith.constant dense<0.000000e+00> : vector<16x16xf32>
    %71 = vector.multi_reduction <add>, %70, %cst_47 [2] : vector<16x16x8xf32> to vector<16x16xf32>
    %72 = arith.addf %60, %71 : vector<16x16xf32>
    %c1_i32_48 = arith.constant 1 : i32
    %73 = arith.addi %23, %c1_i32_48 : i32
    %c1_49 = arith.constant 1 : index
    %74 = arith.index_cast %73 : i32 to index
    %c1_50 = arith.constant 1 : index
    %c0_51 = arith.constant 0 : index
    %75 = vector.load %arg6[%c1_49, %74, %c1_50, %c0_51] : memref<2x18x18x8xbf16, #tpu.memory_space<vmem>>, vector<1x16x16x8xbf16>
    %76 = vector.shape_cast %75 : vector<1x16x16x8xbf16> to vector<16x16x8xbf16>
    %77 = arith.extf %76 : vector<16x16x8xbf16> to vector<16x16x8xf32>
    %78 = vector.extract_strided_slice %22 {offsets = [4, 0], sizes = [1, 8], strides = [1, 1]} : vector<9x8xf32> to vector<1x8xf32>
    %79 = vector.shape_cast %78 : vector<1x8xf32> to vector<8xf32>
    %80 = vector.shape_cast %79 : vector<8xf32> to vector<1x1x8xf32>
    %81 = vector.broadcast %80 : vector<1x1x8xf32> to vector<16x16x8xf32>
    %82 = arith.mulf %77, %81 : vector<16x16x8xf32>
    %cst_52 = arith.constant dense<0.000000e+00> : vector<16x16xf32>
    %83 = vector.multi_reduction <add>, %82, %cst_52 [2] : vector<16x16x8xf32> to vector<16x16xf32>
    %84 = arith.addf %72, %83 : vector<16x16xf32>
    %c1_i32_53 = arith.constant 1 : i32
    %85 = arith.addi %23, %c1_i32_53 : i32
    %c1_54 = arith.constant 1 : index
    %86 = arith.index_cast %85 : i32 to index
    %c2_55 = arith.constant 2 : index
    %c0_56 = arith.constant 0 : index
    %87 = vector.load %arg6[%c1_54, %86, %c2_55, %c0_56] : memref<2x18x18x8xbf16, #tpu.memory_space<vmem>>, vector<1x16x16x8xbf16>
    %88 = vector.shape_cast %87 : vector<1x16x16x8xbf16> to vector<16x16x8xbf16>
    %89 = arith.extf %88 : vector<16x16x8xbf16> to vector<16x16x8xf32>
    %90 = vector.extract_strided_slice %22 {offsets = [5, 0], sizes = [1, 8], strides = [1, 1]} : vector<9x8xf32> to vector<1x8xf32>
    %91 = vector.shape_cast %90 : vector<1x8xf32> to vector<8xf32>
    %92 = vector.shape_cast %91 : vector<8xf32> to vector<1x1x8xf32>
    %93 = vector.broadcast %92 : vector<1x1x8xf32> to vector<16x16x8xf32>
    %94 = arith.mulf %89, %93 : vector<16x16x8xf32>
    %cst_57 = arith.constant dense<0.000000e+00> : vector<16x16xf32>
    %95 = vector.multi_reduction <add>, %94, %cst_57 [2] : vector<16x16x8xf32> to vector<16x16xf32>
    %96 = arith.addf %84, %95 : vector<16x16xf32>
    %c2_i32 = arith.constant 2 : i32
    %97 = arith.addi %23, %c2_i32 : i32
    %c1_58 = arith.constant 1 : index
    %98 = arith.index_cast %97 : i32 to index
    %c0_59 = arith.constant 0 : index
    %c0_60 = arith.constant 0 : index
    %99 = vector.load %arg6[%c1_58, %98, %c0_59, %c0_60] : memref<2x18x18x8xbf16, #tpu.memory_space<vmem>>, vector<1x16x16x8xbf16>
    %100 = vector.shape_cast %99 : vector<1x16x16x8xbf16> to vector<16x16x8xbf16>
    %101 = arith.extf %100 : vector<16x16x8xbf16> to vector<16x16x8xf32>
    %102 = vector.extract_strided_slice %22 {offsets = [6, 0], sizes = [1, 8], strides = [1, 1]} : vector<9x8xf32> to vector<1x8xf32>
    %103 = vector.shape_cast %102 : vector<1x8xf32> to vector<8xf32>
    %104 = vector.shape_cast %103 : vector<8xf32> to vector<1x1x8xf32>
    %105 = vector.broadcast %104 : vector<1x1x8xf32> to vector<16x16x8xf32>
    %106 = arith.mulf %101, %105 : vector<16x16x8xf32>
    %cst_61 = arith.constant dense<0.000000e+00> : vector<16x16xf32>
    %107 = vector.multi_reduction <add>, %106, %cst_61 [2] : vector<16x16x8xf32> to vector<16x16xf32>
    %108 = arith.addf %96, %107 : vector<16x16xf32>
    %c2_i32_62 = arith.constant 2 : i32
    %109 = arith.addi %23, %c2_i32_62 : i32
    %c1_63 = arith.constant 1 : index
    %110 = arith.index_cast %109 : i32 to index
    %c1_64 = arith.constant 1 : index
    %c0_65 = arith.constant 0 : index
    %111 = vector.load %arg6[%c1_63, %110, %c1_64, %c0_65] : memref<2x18x18x8xbf16, #tpu.memory_space<vmem>>, vector<1x16x16x8xbf16>
    %112 = vector.shape_cast %111 : vector<1x16x16x8xbf16> to vector<16x16x8xbf16>
    %113 = arith.extf %112 : vector<16x16x8xbf16> to vector<16x16x8xf32>
    %114 = vector.extract_strided_slice %22 {offsets = [7, 0], sizes = [1, 8], strides = [1, 1]} : vector<9x8xf32> to vector<1x8xf32>
    %115 = vector.shape_cast %114 : vector<1x8xf32> to vector<8xf32>
    %116 = vector.shape_cast %115 : vector<8xf32> to vector<1x1x8xf32>
    %117 = vector.broadcast %116 : vector<1x1x8xf32> to vector<16x16x8xf32>
    %118 = arith.mulf %113, %117 : vector<16x16x8xf32>
    %cst_66 = arith.constant dense<0.000000e+00> : vector<16x16xf32>
    %119 = vector.multi_reduction <add>, %118, %cst_66 [2] : vector<16x16x8xf32> to vector<16x16xf32>
    %120 = arith.addf %108, %119 : vector<16x16xf32>
    %c2_i32_67 = arith.constant 2 : i32
    %121 = arith.addi %23, %c2_i32_67 : i32
    %c1_68 = arith.constant 1 : index
    %122 = arith.index_cast %121 : i32 to index
    %c2_69 = arith.constant 2 : index
    %c0_70 = arith.constant 0 : index
    %123 = vector.load %arg6[%c1_68, %122, %c2_69, %c0_70] : memref<2x18x18x8xbf16, #tpu.memory_space<vmem>>, vector<1x16x16x8xbf16>
    %124 = vector.shape_cast %123 : vector<1x16x16x8xbf16> to vector<16x16x8xbf16>
    %125 = arith.extf %124 : vector<16x16x8xbf16> to vector<16x16x8xf32>
    %126 = vector.extract_strided_slice %22 {offsets = [8, 0], sizes = [1, 8], strides = [1, 1]} : vector<9x8xf32> to vector<1x8xf32>
    %127 = vector.shape_cast %126 : vector<1x8xf32> to vector<8xf32>
    %128 = vector.shape_cast %127 : vector<8xf32> to vector<1x1x8xf32>
    %129 = vector.broadcast %128 : vector<1x1x8xf32> to vector<16x16x8xf32>
    %130 = arith.mulf %125, %129 : vector<16x16x8xf32>
    %cst_71 = arith.constant dense<0.000000e+00> : vector<16x16xf32>
    %131 = vector.multi_reduction <add>, %130, %cst_71 [2] : vector<16x16x8xf32> to vector<16x16xf32>
    %132 = arith.addf %120, %131 : vector<16x16xf32>
    %c0_72 = arith.constant 0 : index
    %133 = arith.index_cast %23 : i32 to index
    %c0_73 = arith.constant 0 : index
    %134 = vector.load %arg5[%c0_72, %133, %c0_73] : memref<1x16x16xf32, #tpu.memory_space<vmem>>, vector<1x16x16xf32>
    %135 = vector.shape_cast %134 : vector<1x16x16xf32> to vector<16x16xf32>
    %136 = vector.shape_cast %132 : vector<16x16xf32> to vector<1x16x16xf32>
    tpu.vector_store %arg5[%c0_72, %133, %c0_73], %136 {strides = array<i32>} : memref<1x16x16xf32, #tpu.memory_space<vmem>>, vector<1x16x16xf32>,
    %c1_i32_74 = arith.constant 1 : i32
    return
  }
  func.func @transform_0(%arg0: i32) -> (i32, i32, i32, i32) {
    %c0_i32 = arith.constant 0 : i32
    %c0_i32_0 = arith.constant 0 : i32
    %c0_i32_1 = arith.constant 0 : i32
    %c0_i32_2 = arith.constant 0 : i32
    return %arg0, %c0_i32, %c0_i32_0, %c0_i32_1 : i32, i32, i32, i32
  }
  func.func @transform_1(%arg0: i32) -> (i32, i32, i32) {
    %c0_i32 = arith.constant 0 : i32
    %c0_i32_0 = arith.constant 0 : i32
    %c0_i32_1 = arith.constant 0 : i32
    %c0_i32_2 = arith.constant 0 : i32
    return %c0_i32, %c0_i32_0, %c0_i32_1 : i32, i32, i32
  }
  func.func @transform_2(%arg0: i32) -> (i32, i32, i32) {
    %c0_i32 = arith.constant 0 : i32
    %c0_i32_0 = arith.constant 0 : i32
    %c0_i32_1 = arith.constant 0 : i32
    %c0_i32_2 = arith.constant 0 : i32
    return %c0_i32, %c0_i32_0, %c0_i32_1 : i32, i32, i32
  }
  func.func @transform_3(%arg0: i32) -> (i32, i32) {
    %c0_i32 = arith.constant 0 : i32
    %c0_i32_0 = arith.constant 0 : i32
    %c0_i32_1 = arith.constant 0 : i32
    return %c0_i32, %c0_i32_0 : i32, i32
  }
  func.func @transform_4(%arg0: i32) -> (i32, i32, i32) {
    %c0_i32 = arith.constant 0 : i32
    %c0_i32_0 = arith.constant 0 : i32
    %c0_i32_1 = arith.constant 0 : i32
    return %arg0, %c0_i32, %c0_i32_0 : i32, i32, i32
  }
}

</mosaic_0001>

<llo_original>
// kernel: squeeze.3
$region0: #{squeeze.3}
  %s0 = inlined_call_operand.vmem [shape: f32[3,3,8], index: 0, kind: input, shape index: {}]
  %s1 = inlined_call_operand.vmem [shape: f32[9,8], index: 1, kind: output, shape index: {}]
  $region1: #{squeeze.3} parent=0
    #allocation0 [shape = 'u8[12288]{0}', space=vmem, size = 0x3000, scoped, tag = 'scoped mem for input reshape']
    %s3 = sshllo.u32 0, 4
    %s4 = smul.addr 4, 2
    %s5 = scalar_lea.vmem %s0, %s4
    %v6 = vld [vmem:[%s5] sm:%s3]
    %s7 = scalar_lea.vmem [#allocation0], 16
    %8 = vst [vmem:[%s7] sm:%s3] %v6
    %s9 = scalar_lea.vmem %s0, 4
    %v10 = vld [vmem:[%s9] sm:%s3]
    %s11 = scalar_lea.vmem [#allocation0], 8
    %12 = vst [vmem:[%s11] sm:%s3] %v10
    %v13 = vld [vmem:[%s0] sm:%s3]
    %14 = vst [vmem:[#allocation0] sm:%s3] %v13
    %v15 = vld [vmem:[#allocation0] sm:$0x7]
    %vm16 = vcmask 64512
    %17 = vst.msk [vmem:[%s1] sm:$0x7] %vm16, %v15
    %s18 = scalar_lea.vmem [#allocation0], 8
    %v19 = vld [vmem:[%s18] sm:$0x7]
    %vm20 = vcmask 64512
    %s21 = scalar_lea.vmem %s1, 3
    %22 = vst.msk [vmem:[%s21] sm:$0x7] %vm20, %v19
    %s23 = scalar_lea.vmem [#allocation0], 16
    %v24 = vld [vmem:[%s23] sm:$0x7]
    %vm25 = vcmask 64512
    %s26 = scalar_lea.vmem %s1, 6
    %27 = vst.msk [vmem:[%s26] sm:$0x7] %vm25, %v24

// kernel: denoising_cnn_forward.1
$region0: #{denoising_cnn_forward.1}
  #allocation0 [shape = 'u32[]', space=smem, size = 0x4, offset = 0x4, fixed_abs, tag = 'smem constant byte address 0x4 - core index']
  #allocation1 [shape = 'u32[144,128]{1,0:T(1,128)}', space=vmem, size = 0x12000, scoped, tag = 'internal scratch']
  #allocation2 [shape = 'bf16[2,18,18,8]{3,2,1,0:T(8,128)(2,1)}', space=vmem, size = 0x36000, scoped, tag = 'scratch operand']
  #allocation3 [shape = 'bf16[256,72]{1,0:T(16,128)(2,1)}', space=vmem, size = 0x10000, scoped, tag = 'scratch operand']
  %s0 = inlined_call_operand.vmem [shape: bf16[2,18,18,8], index: 0, kind: input, shape index: {}]
  %s1 = inlined_call_operand.vmem [shape: bf16[5,72,8], index: 1, kind: input, shape index: {}]
  %s2 = inlined_call_operand.vmem [shape: f32[5,1,8], index: 2, kind: input, shape index: {}]
  %s3 = inlined_call_operand.vmem [shape: f32[9,8], index: 3, kind: input, shape index: {}]
  %s4 = inlined_call_operand.hbm [shape: f32[2,16,16], index: 4, kind: output, shape index: {}]
  %s5 = sld [smem:[#allocation0]]
  $region56: #{denoising_cnn_forward.1} parent=0
    _
  %s7 = ssub.s32 1, %s5
  %s8 = scalar_select 0, %s7, %s5
  $region1: #{denoising_cnn_forward.1} parent=0
    #allocation4 [shape = 'u8[16384]{0}', space=vmem, size = 0x4000, scoped, tag = 'output window, operand 0']
    #allocation5 [shape = 's32[2]{0}', space=sflag, size = 0x8, scoped, tag = 'scoped memory for denoising_cnn_forward.1']
    %9 = vsyncpa [#allocation5], 0
    %s10 = scalar_lea.sflag [#allocation5], 1
    %11 = vsyncpa %s10, 0
    loop: start=0, step=1, limit=4
    $region2: #{denoising_cnn_forward.1} parent=1 // loop_pre_header
      _
    $region3: #{denoising_cnn_forward.1} parent=1 // loop_header
      %s13 = sphi 0, %s17
      %p14 = scmp.ge.s32.totalorder %s13, 4
      %s23 = sphi 0, %s25
      %s26 = sphi 0, %s23
      %s27 = sphi 0, %s26
      %s43 = sphi 0, %s27
      %s47 = sphi 0, %s47
      %s49 = sphi 0, %s47
      %s50 = sphi 0, %s49
      %s64 = sphi 0, %s50
      %s68 = sphi 0, %s68
      %s70 = sphi 0, %s68
      %s71 = sphi 0, %s70
      %s85 = sphi 0, %s71
      %s89 = sphi 0, %s89
      %s91 = sphi 0, %s89
      %s92 = sphi 0, %s91
      %s106 = sphi 0, %s92
      %s112 = sphi 0, %s114
      %s115 = sphi 0, %s112
      %s116 = sphi 0, %s115
      %s132 = sphi 0, %s116
    $region4: #{denoising_cnn_forward.1} parent=1 // loop_header_branch
      %16 = sbr.rel (%p14) target = $region8
    $region5: #{denoising_cnn_forward.1} parent=1 // loop_body
      %s18 = ssub.s32 %s13, 1
      %s19 = ssub.s32 %s13, 2
      %s20 = sadd.s32 %s13, 1
      %s21 = ssub.s32 %s13, %s20
      %p22 = scmp.eq.s32.totalorder %s21, 0
      %s24 = sadd.s32 %s23, 1
      %s25 = scalar_select %p22, %s23, %s24
      %p28 = pneg %p22
      %p29 = scmp.eq.s32.totalorder %s13, 1
      %p30 = por %p28, %p29
      %p31 = scmp.ne.s32.totalorder %s23, %s26
      %p32 = scmp.eq.s32.totalorder %s13, 0
      %p33 = por %p31, %p32
      %p34 = scmp.ne.s32.totalorder %s23, %s26
      %p35 = scmp.eq.s32.totalorder %s18, 1
      %p36 = por %p34, %p35
      %p37 = scmp.ne.s32.totalorder %s26, %s27
      %p38 = scmp.eq.s32.totalorder %s18, 0
      %p39 = por %p37, %p38
      %p40 = scmp.ne.s32.totalorder %s26, %s27
      %p41 = scmp.eq.s32.totalorder %s19, 1
      %p42 = por %p40, %p41
      %p44 = scmp.ne.s32.totalorder %s27, %s43
      %p45 = scmp.eq.s32.totalorder %s19, 0
      %p46 = por %p44, %p45
      %s48 = sadd.s32 %s47, 1
      %p51 = scmp.eq.s32.totalorder %s13, 1
      %p52 = scmp.ne.s32.totalorder %s47, %s49
      %p53 = scmp.eq.s32.totalorder %s13, 0
      %p54 = por %p52, %p53
      %p55 = scmp.ne.s32.totalorder %s47, %s49
      %p56 = scmp.eq.s32.totalorder %s18, 1
      %p57 = por %p55, %p56
      %p58 = scmp.ne.s32.totalorder %s49, %s50
      %p59 = scmp.eq.s32.totalorder %s18, 0
      %p60 = por %p58, %p59
      %p61 = scmp.ne.s32.totalorder %s49, %s50
      %p62 = scmp.eq.s32.totalorder %s19, 1
      %p63 = por %p61, %p62
      %p65 = scmp.ne.s32.totalorder %s50, %s64
      %p66 = scmp.eq.s32.totalorder %s19, 0
      %p67 = por %p65, %p66
      %s69 = sadd.s32 %s68, 1
      %p72 = scmp.eq.s32.totalorder %s13, 1
      %p73 = scmp.ne.s32.totalorder %s68, %s70
      %p74 = scmp.eq.s32.totalorder %s13, 0
      %p75 = por %p73, %p74
      %p76 = scmp.ne.s32.totalorder %s68, %s70
      %p77 = scmp.eq.s32.totalorder %s18, 1
      %p78 = por %p76, %p77
      %p79 = scmp.ne.s32.totalorder %s70, %s71
      %p80 = scmp.eq.s32.totalorder %s18, 0
      %p81 = por %p79, %p80
      %p82 = scmp.ne.s32.totalorder %s70, %s71
      %p83 = scmp.eq.s32.totalorder %s19, 1
      %p84 = por %p82, %p83
      %p86 = scmp.ne.s32.totalorder %s71, %s85
      %p87 = scmp.eq.s32.totalorder %s19, 0
      %p88 = por %p86, %p87
      %s90 = sadd.s32 %s89, 1
      %p93 = scmp.eq.s32.totalorder %s13, 1
      %p94 = scmp.ne.s32.totalorder %s89, %s91
      %p95 = scmp.eq.s32.totalorder %s13, 0
      %p96 = por %p94, %p95
      %p97 = scmp.ne.s32.totalorder %s89, %s91
      %p98 = scmp.eq.s32.totalorder %s18, 1
      %p99 = por %p97, %p98
      %p100 = scmp.ne.s32.totalorder %s91, %s92
      %p101 = scmp.eq.s32.totalorder %s18, 0
      %p102 = por %p100, %p101
      %p103 = scmp.ne.s32.totalorder %s91, %s92
      %p104 = scmp.eq.s32.totalorder %s19, 1
      %p105 = por %p103, %p104
      %p107 = scmp.ne.s32.totalorder %s92, %s106
      %p108 = scmp.eq.s32.totalorder %s19, 0
      %p109 = por %p107, %p108
      %s110 = ssub.s32 %s13, %s20
      %p111 = scmp.eq.s32.totalorder %s110, 0
      %s113 = sadd.s32 %s112, 1
      %s114 = scalar_select %p111, %s112, %s113
      %p117 = pneg %p111
      %p118 = scmp.eq.s32.totalorder %s13, 1
      %p119 = por %p117, %p118
      %p120 = scmp.ne.s32.totalorder %s112, %s115
      %p121 = scmp.eq.s32.totalorder %s13, 0
      %p122 = por %p120, %p121
      %p123 = scmp.ne.s32.totalorder %s112, %s115
      %p124 = scmp.eq.s32.totalorder %s18, 1
      %p125 = por %p123, %p124
      %p126 = scmp.ne.s32.totalorder %s115, %s116
      %p127 = scmp.eq.s32.totalorder %s18, 0
      %p128 = por %p126, %p127
      %p129 = scmp.ne.s32.totalorder %s115, %s116
      %p130 = scmp.eq.s32.totalorder %s19, 1
      %p131 = por %p129, %p130
      %p133 = scmp.ne.s32.totalorder %s116, %s132
      %p134 = scmp.eq.s32.totalorder %s19, 0
      %p135 = por %p133, %p134
      %p136 = scmp.le.s32.totalorder 1, %s13
      %p137 = scmp.lt.s32.totalorder %s13, 3
      %p138 = pnand %p136, %p137
      %p139 = pneg %p138
      // Predicated region
      $region9: #{denoising_cnn_forward.1} parent=5 // pred_check
        _
      $region10: #{denoising_cnn_forward.1} parent=5 // pred_check_branch
        %141 = sbr.rel (%p138) target = $region12
      $region11: #{denoising_cnn_forward.1} parent=5 // pred_region
        %s142 = ssub.s32 %s13, 1
        // Predicated region
        $region13: #{denoising_cnn_forward.1} parent=11 // pred_check
          %p143 = pneg %p60
        $region14: #{denoising_cnn_forward.1} parent=11 // pred_check_branch
          %145 = sbr.rel (%p143) target = $region16
        $region15: #{denoising_cnn_forward.1} parent=11 // pred_region
          _
        $region16: #{denoising_cnn_forward.1} parent=11 // pred_fallthru
          _
        // Predicated region
        $region17: #{denoising_cnn_forward.1} parent=11 // pred_check
          %p146 = pneg %p81
        $region18: #{denoising_cnn_forward.1} parent=11 // pred_check_branch
          %148 = sbr.rel (%p146) target = $region20
        $region19: #{denoising_cnn_forward.1} parent=11 // pred_region
          _
        $region20: #{denoising_cnn_forward.1} parent=11 // pred_fallthru
          _
        // Predicated region
        $region21: #{denoising_cnn_forward.1} parent=11 // pred_check
          %p149 = pneg %p102
        $region22: #{denoising_cnn_forward.1} parent=11 // pred_check_branch
          %151 = sbr.rel (%p149) target = $region24
        $region23: #{denoising_cnn_forward.1} parent=11 // pred_region
          _
        $region24: #{denoising_cnn_forward.1} parent=11 // pred_fallthru
          _
      $region12: #{denoising_cnn_forward.1} parent=5 // pred_fallthru
        _
      %p152 = scmp.lt.s32.totalorder %s13, 2
      // Predicated region
      $region25: #{denoising_cnn_forward.1} parent=5 // pred_check
        %p153 = pneg %p152
      $region26: #{denoising_cnn_forward.1} parent=5 // pred_check_branch
        %155 = sbr.rel (%p153) target = $region28
      $region27: #{denoising_cnn_forward.1} parent=5 // pred_region
        // Predicated region
        $region29: #{denoising_cnn_forward.1} parent=27 // pred_check
          %p156 = pneg %p33
        $region30: #{denoising_cnn_forward.1} parent=27 // pred_check_branch
          %158 = sbr.rel (%p156) target = $region32
        $region31: #{denoising_cnn_forward.1} parent=27 // pred_region
          %p159 = scmp.lt.s32.totalorder %s13, 1
          %s160 = scalar_select %p159, %s13, 1
          %s161 = smul.addr %s160, 54
          %s162 = smul.addr %s161, 4
          %s163 = scalar_lea.vmem %s0, %s162
        $region32: #{denoising_cnn_forward.1} parent=27 // pred_fallthru
          _
      $region28: #{denoising_cnn_forward.1} parent=5 // pred_fallthru
        _
      %p164 = scmp.le.s32.totalorder 1, %s13
      %p165 = scmp.lt.s32.totalorder %s13, 3
      %p166 = pnand %p164, %p165
      %p167 = pneg %p166
      // Predicated region
      $region33: #{denoising_cnn_forward.1} parent=5 // pred_check
        _
      $region34: #{denoising_cnn_forward.1} parent=5 // pred_check_branch
        %169 = sbr.rel (%p166) target = $region36
      $region35: #{denoising_cnn_forward.1} parent=5 // pred_region
        %s170 = ssub.s32 %s13, 1
        %p171 = scmp.lt.s32.totalorder %s18, 1
        %s172 = scalar_select %p171, %s18, 1
        %s173 = smul.addr %s172, 54
        %s174 = smul.addr %s173, 4
        %s175 = scalar_lea.vmem %s0, %s174
        %p176 = pneg %p39
        %p177 = pneg %p36
        %p178 = pneg %p60
        %p179 = pneg %p57
        %p180 = pneg %p81
        %p181 = pneg %p78
        %p182 = pneg %p102
        %p183 = pneg %p99
        %p184 = pneg %p128
        %p185 = pneg %p125
        %s186 = sand.u32 %s115, 1
        %s187 = scalar_lea.sflag [#allocation5], %s186
        %s188 = sand.u32 %s115, 1
        %s189 = smul.addr %s188, 16
        %s190 = scalar_lea.vmem [#allocation4], %s189
        %p191 = scmp.lt.s32.totalorder %s18, 1
        %s192 = scalar_select %p191, %s18, 1
        %s193 = smul.addr %s192, 54
        %s194 = smul.addr %s193, 4
        %s195 = scalar_lea.vmem %s0, %s194
        %v197 = vld [vmem:[%s195] sm:$0xf]
        %v198 = vld [vmem:[%s195 + $0x4] sm:$0xf]
        %v199 = vld [vmem:[%s195 + $0x8] sm:$0x1]
        %v200 = vld [vmem:[%s195 + $0xc] sm:$0xf]
        %v201 = vld [vmem:[%s195 + $0x10] sm:$0xf]
        %v202 = vld [vmem:[%s195 + $0x14] sm:$0x1]
        %v203 = vld [vmem:[%s195 + $0x18] sm:$0xf]
        %v204 = vld [vmem:[%s195 + $0x1c] sm:$0xf]
        %v205 = vld [vmem:[%s195 + $0x20] sm:$0x1]
        %v206 = vld [vmem:[%s195 + $0x24] sm:$0xf]
        %v207 = vld [vmem:[%s195 + $0x28] sm:$0xf]
        %v208 = vld [vmem:[%s195 + $0x2c] sm:$0x1]
        %v209 = vld [vmem:[%s195 + $0x30] sm:$0xf]
        %v210 = vld [vmem:[%s195 + $0x34] sm:$0xf]
        %v211 = vld [vmem:[%s195 + $0x38] sm:$0x1]
        %v212 = vld [vmem:[%s195 + $0x3c] sm:$0xf]
        %v213 = vld [vmem:[%s195 + $0x40] sm:$0xf]
        %v214 = vld [vmem:[%s195 + $0x44] sm:$0x1]
        %v215 = vld [vmem:[%s195 + $0x48] sm:$0xf]
        %v216 = vld [vmem:[%s195 + $0x4c] sm:$0xf]
        %v217 = vld [vmem:[%s195 + $0x50] sm:$0x1]
        %v218 = vld [vmem:[%s195 + $0x54] sm:$0xf]
        %v219 = vld [vmem:[%s195 + $0x58] sm:$0xf]
        %v220 = vld [vmem:[%s195 + $0x5c] sm:$0x1]
        %v221 = vld [vmem:[%s195 + $0x60] sm:$0xf]
        %v222 = vld [vmem:[%s195 + $0x64] sm:$0xf]
        %v223 = vld [vmem:[%s195 + $0x68] sm:$0x1]
        %v224 = vld [vmem:[%s195 + $0x6c] sm:$0xf]
        %v225 = vld [vmem:[%s195 + $0x70] sm:$0xf]
        %v226 = vld [vmem:[%s195 + $0x74] sm:$0x1]
        %v227 = vld [vmem:[%s195 + $0x78] sm:$0xf]
        %v228 = vld [vmem:[%s195 + $0x7c] sm:$0xf]
        %v229 = vld [vmem:[%s195 + $0x80] sm:$0x1]
        %v230 = vld [vmem:[%s195 + $0x84] sm:$0xf]
        %v231 = vld [vmem:[%s195 + $0x88] sm:$0xf]
        %v232 = vld [vmem:[%s195 + $0x8c] sm:$0x1]
        %v233 = vld [vmem:[%s195 + $0x90] sm:$0xf]
        %v234 = vld [vmem:[%s195 + $0x94] sm:$0xf]
        %v235 = vld [vmem:[%s195 + $0x98] sm:$0x1]
        %v236 = vld [vmem:[%s195 + $0x9c] sm:$0xf]
        %v237 = vld [vmem:[%s195 + $0xa0] sm:$0xf]
        %v238 = vld [vmem:[%s195 + $0xa4] sm:$0x1]
        %v239 = vld [vmem:[%s195 + $0xa8] sm:$0xf]
        %v240 = vld [vmem:[%s195 + $0xac] sm:$0xf]
        %v241 = vld [vmem:[%s195 + $0xb0] sm:$0x1]
        %v242 = vld [vmem:[%s195 + $0xb4] sm:$0xf]
        %v243 = vld [vmem:[%s195 + $0xb8] sm:$0xf]
        %v244 = vld [vmem:[%s195 + $0xbc] sm:$0x1]
        %v245 = vld [vmem:[%s195 + $0xc0] sm:$0xf]
        %v246 = vld [vmem:[%s195 + $0xc4] sm:$0xf]
        %v247 = vld [vmem:[%s195 + $0xc8] sm:$0x1]
        %v248 = vld [vmem:[%s195 + $0xcc] sm:$0xf]
        %v249 = vld [vmem:[%s195 + $0xd0] sm:$0xf]
        %v250 = vld [vmem:[%s195 + $0xd4] sm:$0x1]
        %vm251 = vcmask 60416
        %252 = vst.msk [vmem:[#allocation2] sm:$0xf] %vm251, %v197
        %253 = vst.msk [vmem:[#allocation2 + $0x4] sm:$0xf] %vm251, %v198
        %vm254 = vcmask 57344
        %255 = vst.msk [vmem:[#allocation2 + $0x8] sm:$0x1] %vm254, %v199
        %256 = vst.msk [vmem:[#allocation2 + $0xc] sm:$0xf] %vm251, %v200
        %257 = vst.msk [vmem:[#allocation2 + $0x10] sm:$0xf] %vm251, %v201
        %258 = vst.msk [vmem:[#allocation2 + $0x14] sm:$0x1] %vm254, %v202
        %259 = vst.msk [vmem:[#allocation2 + $0x18] sm:$0xf] %vm251, %v203
        %260 = vst.msk [vmem:[#allocation2 + $0x1c] sm:$0xf] %vm251, %v204
        %261 = vst.msk [vmem:[#allocation2 + $0x20] sm:$0x1] %vm254, %v205
        %262 = vst.msk [vmem:[#allocation2 + $0x24] sm:$0xf] %vm251, %v206
        %263 = vst.msk [vmem:[#allocation2 + $0x28] sm:$0xf] %vm251, %v207
        %264 = vst.msk [vmem:[#allocation2 + $0x2c] sm:$0x1] %vm254, %v208
        %265 = vst.msk [vmem:[#allocation2 + $0x30] sm:$0xf] %vm251, %v209
        %266 = vst.msk [vmem:[#allocation2 + $0x34] sm:$0xf] %vm251, %v210
        %267 = vst.msk [vmem:[#allocation2 + $0x38] sm:$0x1] %vm254, %v211
        %268 = vst.msk [vmem:[#allocation2 + $0x3c] sm:$0xf] %vm251, %v212
        %269 = vst.msk [vmem:[#allocation2 + $0x40] sm:$0xf] %vm251, %v213
        %270 = vst.msk [vmem:[#allocation2 + $0x44] sm:$0x1] %vm254, %v214
        %271 = vst.msk [vmem:[#allocation2 + $0x48] sm:$0xf] %vm251, %v215
        %272 = vst.msk [vmem:[#allocation2 + $0x4c] sm:$0xf] %vm251, %v216
        %273 = vst.msk [vmem:[#allocation2 + $0x50] sm:$0x1] %vm254, %v217
        %274 = vst.msk [vmem:[#allocation2 + $0x54] sm:$0xf] %vm251, %v218
        %275 = vst.msk [vmem:[#allocation2 + $0x58] sm:$0xf] %vm251, %v219
        %276 = vst.msk [vmem:[#allocation2 + $0x5c] sm:$0x1] %vm254, %v220
        %277 = vst.msk [vmem:[#allocation2 + $0x60] sm:$0xf] %vm251, %v221
        %278 = vst.msk [vmem:[#allocation2 + $0x64] sm:$0xf] %vm251, %v222
        %279 = vst.msk [vmem:[#allocation2 + $0x68] sm:$0x1] %vm254, %v223
        %280 = vst.msk [vmem:[#allocation2 + $0x6c] sm:$0xf] %vm251, %v224
        %281 = vst.msk [vmem:[#allocation2 + $0x70] sm:$0xf] %vm251, %v225
        %282 = vst.msk [vmem:[#allocation2 + $0x74] sm:$0x1] %vm254, %v226
        %283 = vst.msk [vmem:[#allocation2 + $0x78] sm:$0xf] %vm251, %v227
        %284 = vst.msk [vmem:[#allocation2 + $0x7c] sm:$0xf] %vm251, %v228
        %285 = vst.msk [vmem:[#allocation2 + $0x80] sm:$0x1] %vm254, %v229
        %286 = vst.msk [vmem:[#allocation2 + $0x84] sm:$0xf] %vm251, %v230
        %287 = vst.msk [vmem:[#allocation2 + $0x88] sm:$0xf] %vm251, %v231
        %288 = vst.msk [vmem:[#allocation2 + $0x8c] sm:$0x1] %vm254, %v232
        %289 = vst.msk [vmem:[#allocation2 + $0x90] sm:$0xf] %vm251, %v233
        %290 = vst.msk [vmem:[#allocation2 + $0x94] sm:$0xf] %vm251, %v234
        %291 = vst.msk [vmem:[#allocation2 + $0x98] sm:$0x1] %vm254, %v235
        %292 = vst.msk [vmem:[#allocation2 + $0x9c] sm:$0xf] %vm251, %v236
        %293 = vst.msk [vmem:[#allocation2 + $0xa0] sm:$0xf] %vm251, %v237
        %294 = vst.msk [vmem:[#allocation2 + $0xa4] sm:$0x1] %vm254, %v238
        %295 = vst.msk [vmem:[#allocation2 + $0xa8] sm:$0xf] %vm251, %v239
        %296 = vst.msk [vmem:[#allocation2 + $0xac] sm:$0xf] %vm251, %v240
        %297 = vst.msk [vmem:[#allocation2 + $0xb0] sm:$0x1] %vm254, %v241
        %298 = vst.msk [vmem:[#allocation2 + $0xb4] sm:$0xf] %vm251, %v242
        %299 = vst.msk [vmem:[#allocation2 + $0xb8] sm:$0xf] %vm251, %v243
        %300 = vst.msk [vmem:[#allocation2 + $0xbc] sm:$0x1] %vm254, %v244
        %301 = vst.msk [vmem:[#allocation2 + $0xc0] sm:$0xf] %vm251, %v245
        %302 = vst.msk [vmem:[#allocation2 + $0xc4] sm:$0xf] %vm251, %v246
        %303 = vst.msk [vmem:[#allocation2 + $0xc8] sm:$0x1] %vm254, %v247
        %304 = vst.msk [vmem:[#allocation2 + $0xcc] sm:$0xf] %vm251, %v248
        %305 = vst.msk [vmem:[#allocation2 + $0xd0] sm:$0xf] %vm251, %v249
        %306 = vst.msk [vmem:[#allocation2 + $0xd4] sm:$0x1] %vm254, %v250
        %s307 = scalar_lea.vmem [#allocation2], 216
        %308 = vst.msk [vmem:[%s307] sm:$0xf] %vm251, 0
        %309 = vst.msk [vmem:[%s307 + $0x4] sm:$0xf] %vm251, 0
        %310 = vst.msk [vmem:[%s307 + $0x8] sm:$0x1] %vm254, 0
        %s311 = scalar_lea.vmem [#allocation2], 420
        %312 = vst.msk [vmem:[%s311] sm:$0xf] %vm251, 0
        %313 = vst.msk [vmem:[%s311 + $0x4] sm:$0xf] %vm251, 0
        %314 = vst.msk [vmem:[%s311 + $0x8] sm:$0x1] %vm254, 0
        %vm315 = vcmask 57344
        %vm316 = vsmask.f32 256
        %vm317 = vmand %vm315, %vm316
        %v318 = vld [vmem:[%s307] sm:$0x1]
        %v319 = vsel %vm317, 0, %v318
        %320 = vst [vmem:[%s307] sm:$0x1] %v319
        %v321 = vld [vmem:[%s307 + $0xc] sm:$0x1]
        %v322 = vsel %vm317, 0, %v321
        %323 = vst [vmem:[%s307 + $0xc] sm:$0x1] %v322
        %v324 = vld [vmem:[%s307 + $0x18] sm:$0x1]
        %v325 = vsel %vm317, 0, %v324
        %326 = vst [vmem:[%s307 + $0x18] sm:$0x1] %v325
        %v327 = vld [vmem:[%s307 + $0x24] sm:$0x1]
        %v328 = vsel %vm317, 0, %v327
        %329 = vst [vmem:[%s307 + $0x24] sm:$0x1] %v328
        %v330 = vld [vmem:[%s307 + $0x30] sm:$0x1]
        %v331 = vsel %vm317, 0, %v330
        %332 = vst [vmem:[%s307 + $0x30] sm:$0x1] %v331
        %v333 = vld [vmem:[%s307 + $0x3c] sm:$0x1]
        %v334 = vsel %vm317, 0, %v333
        %335 = vst [vmem:[%s307 + $0x3c] sm:$0x1] %v334
        %v336 = vld [vmem:[%s307 + $0x48] sm:$0x1]
        %v337 = vsel %vm317, 0, %v336
        %338 = vst [vmem:[%s307 + $0x48] sm:$0x1] %v337
        %v339 = vld [vmem:[%s307 + $0x54] sm:$0x1]
        %v340 = vsel %vm317, 0, %v339
        %341 = vst [vmem:[%s307 + $0x54] sm:$0x1] %v340
        %v342 = vld [vmem:[%s307 + $0x60] sm:$0x1]
        %v343 = vsel %vm317, 0, %v342
        %344 = vst [vmem:[%s307 + $0x60] sm:$0x1] %v343
        %v345 = vld [vmem:[%s307 + $0x6c] sm:$0x1]
        %v346 = vsel %vm317, 0, %v345
        %347 = vst [vmem:[%s307 + $0x6c] sm:$0x1] %v346
        %v348 = vld [vmem:[%s307 + $0x78] sm:$0x1]
        %v349 = vsel %vm317, 0, %v348
        %350 = vst [vmem:[%s307 + $0x78] sm:$0x1] %v349
        %v351 = vld [vmem:[%s307 + $0x84] sm:$0x1]
        %v352 = vsel %vm317, 0, %v351
        %353 = vst [vmem:[%s307 + $0x84] sm:$0x1] %v352
        %v354 = vld [vmem:[%s307 + $0x90] sm:$0x1]
        %v355 = vsel %vm317, 0, %v354
        %356 = vst [vmem:[%s307 + $0x90] sm:$0x1] %v355
        %v357 = vld [vmem:[%s307 + $0x9c] sm:$0x1]
        %v358 = vsel %vm317, 0, %v357
        %359 = vst [vmem:[%s307 + $0x9c] sm:$0x1] %v358
        %v360 = vld [vmem:[%s307 + $0xa8] sm:$0x1]
        %v361 = vsel %vm317, 0, %v360
        %362 = vst [vmem:[%s307 + $0xa8] sm:$0x1] %v361
        %v363 = vld [vmem:[%s307 + $0xb4] sm:$0x1]
        %v364 = vsel %vm317, 0, %v363
        %365 = vst [vmem:[%s307 + $0xb4] sm:$0x1] %v364
        %v366 = vld [vmem:[%s307 + $0xc0] sm:$0x1]
        %v367 = vsel %vm317, 0, %v366
        %368 = vst [vmem:[%s307 + $0xc0] sm:$0x1] %v367
        %v369 = vld [vmem:[%s307 + $0xcc] sm:$0x1]
        %v370 = vsel %vm317, 0, %v369
        %371 = vst [vmem:[%s307 + $0xcc] sm:$0x1] %v370
        %vm372 = vsmask.f32 7938
        %vm373 = vmand %vm315, %vm372
        %v374 = vld [vmem:[%s307 + $0x8] sm:$0x1]
        %v375 = vsel %vm373, 0, %v374
        %376 = vst [vmem:[%s307 + $0x8] sm:$0x1] %v375
        %v377 = vld [vmem:[%s307 + $0x14] sm:$0x1]
        %v378 = vsel %vm373, 0, %v377
        %379 = vst [vmem:[%s307 + $0x14] sm:$0x1] %v378
        %v380 = vld [vmem:[%s307 + $0x20] sm:$0x1]
        %v381 = vsel %vm373, 0, %v380
        %382 = vst [vmem:[%s307 + $0x20] sm:$0x1] %v381
        %v383 = vld [vmem:[%s307 + $0x2c] sm:$0x1]
        %v384 = vsel %vm373, 0, %v383
        %385 = vst [vmem:[%s307 + $0x2c] sm:$0x1] %v384
        %v386 = vld [vmem:[%s307 + $0x38] sm:$0x1]
        %v387 = vsel %vm373, 0, %v386
        %388 = vst [vmem:[%s307 + $0x38] sm:$0x1] %v387
        %v389 = vld [vmem:[%s307 + $0x44] sm:$0x1]
        %v390 = vsel %vm373, 0, %v389
        %391 = vst [vmem:[%s307 + $0x44] sm:$0x1] %v390
        %v392 = vld [vmem:[%s307 + $0x50] sm:$0x1]
        %v393 = vsel %vm373, 0, %v392
        %394 = vst [vmem:[%s307 + $0x50] sm:$0x1] %v393
        %v395 = vld [vmem:[%s307 + $0x5c] sm:$0x1]
        %v396 = vsel %vm373, 0, %v395
        %397 = vst [vmem:[%s307 + $0x5c] sm:$0x1] %v396
        %v398 = vld [vmem:[%s307 + $0x68] sm:$0x1]
        %v399 = vsel %vm373, 0, %v398
        %400 = vst [vmem:[%s307 + $0x68] sm:$0x1] %v399
        %v401 = vld [vmem:[%s307 + $0x74] sm:$0x1]
        %v402 = vsel %vm373, 0, %v401
        %403 = vst [vmem:[%s307 + $0x74] sm:$0x1] %v402
        %v404 = vld [vmem:[%s307 + $0x80] sm:$0x1]
        %v405 = vsel %vm373, 0, %v404
        %406 = vst [vmem:[%s307 + $0x80] sm:$0x1] %v405
        %v407 = vld [vmem:[%s307 + $0x8c] sm:$0x1]
        %v408 = vsel %vm373, 0, %v407
        %409 = vst [vmem:[%s307 + $0x8c] sm:$0x1] %v408
        %v410 = vld [vmem:[%s307 + $0x98] sm:$0x1]
        %v411 = vsel %vm373, 0, %v410
        %412 = vst [vmem:[%s307 + $0x98] sm:$0x1] %v411
        %v413 = vld [vmem:[%s307 + $0xa4] sm:$0x1]
        %v414 = vsel %vm373, 0, %v413
        %415 = vst [vmem:[%s307 + $0xa4] sm:$0x1] %v414
        %v416 = vld [vmem:[%s307 + $0xb0] sm:$0x1]
        %v417 = vsel %vm373, 0, %v416
        %418 = vst [vmem:[%s307 + $0xb0] sm:$0x1] %v417
        %v419 = vld [vmem:[%s307 + $0xbc] sm:$0x1]
        %v420 = vsel %vm373, 0, %v419
        %421 = vst [vmem:[%s307 + $0xbc] sm:$0x1] %v420
        %v422 = vld [vmem:[%s307 + $0xc8] sm:$0x1]
        %v423 = vsel %vm373, 0, %v422
        %424 = vst [vmem:[%s307 + $0xc8] sm:$0x1] %v423
        %v425 = vld [vmem:[%s307 + $0xd4] sm:$0x1]
        %v426 = vsel %vm373, 0, %v425
        %427 = vst [vmem:[%s307 + $0xd4] sm:$0x1] %v426
        loop: start=0, step=1, limit=5
        $region37: #{denoising_cnn_forward.1} parent=35 // loop_pre_header
          _
        $region38: #{denoising_cnn_forward.1} parent=35 // loop_header
          %s429 = sphi 0, %s433
          %p430 = scmp.ge.s32.totalorder %s429, 5
        $region39: #{denoising_cnn_forward.1} parent=35 // loop_header_branch
          %432 = sbr.rel (%p430) target = $region43
        $region40: #{denoising_cnn_forward.1} parent=35 // loop_body
          %p434 = scmp.lt.s32.totalorder %s429, 0
          %s435 = ssub.s32 0, %s429
          %s436 = scalar_select %p434, %s435, %s429
          %s437 = sand.u32 %s436, 1
          %s438 = ssub.s32 0, %s437
          %s439 = scalar_select %p434, %s438, %s437
          %p440 = scmp.ne.s32.totalorder %s439, 0
          %p441 = scmp.lt.s32.totalorder %s439, 0
          %p442 = pnand %p441, %p440
          %p443 = pneg %p442
          %s444 = sadd.s32 %s439, 2
          %s445 = scalar_select %p443, %s444, %s439
          %s446 = ssub.s32 1, %s445
          %s447 = smul.u32 %s445, 54
          %s448 = smul.addr %s447, 4
          %s449 = scalar_lea.vmem [#allocation2], %s448
          %v450 = vld [vmem:[%s449] sm:$0xf]
          %v451 = vld [vmem:[%s449 + $0x4] sm:$0xf]
          %v452 = vld [vmem:[%s449 + $0xc] sm:$0xf]
          %v453 = vld [vmem:[%s449 + $0x10] sm:$0xf]
          %v454 = vld [vmem:[%s449 + $0x18] sm:$0xf]
          %v455 = vld [vmem:[%s449 + $0x1c] sm:$0xf]
          %v456 = vld [vmem:[%s449 + $0x24] sm:$0xf]
          %v457 = vld [vmem:[%s449 + $0x28] sm:$0xf]
          %v458 = vld [vmem:[%s449 + $0x30] sm:$0xf]
          %v459 = vld [vmem:[%s449 + $0x34] sm:$0xf]
          %v460 = vld [vmem:[%s449 + $0x3c] sm:$0xf]
          %v461 = vld [vmem:[%s449 + $0x40] sm:$0xf]
          %v462 = vld [vmem:[%s449 + $0x48] sm:$0xf]
          %v463 = vld [vmem:[%s449 + $0x4c] sm:$0xf]
          %v464 = vld [vmem:[%s449 + $0x54] sm:$0xf]
          %v465 = vld [vmem:[%s449 + $0x58] sm:$0xf]
          %v466 = vld [vmem:[%s449 + $0x60] sm:$0xf]
          %v467 = vld [vmem:[%s449 + $0x64] sm:$0xf]
          %v468 = vld [vmem:[%s449 + $0x6c] sm:$0xf]
          %v469 = vld [vmem:[%s449 + $0x70] sm:$0xf]
          %v470 = vld [vmem:[%s449 + $0x78] sm:$0xf]
          %v471 = vld [vmem:[%s449 + $0x7c] sm:$0xf]
          %v472 = vld [vmem:[%s449 + $0x84] sm:$0xf]
          %v473 = vld [vmem:[%s449 + $0x88] sm:$0xf]
          %v474 = vld [vmem:[%s449 + $0x90] sm:$0xf]
          %v475 = vld [vmem:[%s449 + $0x94] sm:$0xf]
          %v476 = vld [vmem:[%s449 + $0x9c] sm:$0xf]
          %v477 = vld [vmem:[%s449 + $0xa0] sm:$0xf]
          %v478 = vld [vmem:[%s449 + $0xa8] sm:$0xf]
          %v479 = vld [vmem:[%s449 + $0xac] sm:$0xf]
          %v480 = vld [vmem:[%s449 + $0xb4] sm:$0xf]
          %v481 = vld [vmem:[%s449 + $0xb8] sm:$0xf]
          %v514 = vunpack.c.l.b16 %v450
          %v515 = vunpack.c.l.b16 %v451
          %v516 = vunpack.c.l.b16 %v452
          %v517 = vunpack.c.l.b16 %v453
          %v518 = vunpack.c.l.b16 %v454
          %v519 = vunpack.c.l.b16 %v455
          %v520 = vunpack.c.l.b16 %v456
          %v521 = vunpack.c.l.b16 %v457
          %v522 = vunpack.c.l.b16 %v458
          %v523 = vunpack.c.l.b16 %v459
          %v524 = vunpack.c.l.b16 %v460
          %v525 = vunpack.c.l.b16 %v461
          %v526 = vunpack.c.l.b16 %v462
          %v527 = vunpack.c.l.b16 %v463
          %v528 = vunpack.c.l.b16 %v464
          %v529 = vunpack.c.l.b16 %v465
          %v530 = vunpack.c.l.b16 %v466
          %v531 = vunpack.c.l.b16 %v467
          %v532 = vunpack.c.l.b16 %v468
          %v533 = vunpack.c.l.b16 %v469
          %v534 = vunpack.c.l.b16 %v470
          %v535 = vunpack.c.l.b16 %v471
          %v536 = vunpack.c.l.b16 %v472
          %v537 = vunpack.c.l.b16 %v473
          %v538 = vunpack.c.l.b16 %v474
          %v539 = vunpack.c.l.b16 %v475
          %v540 = vunpack.c.l.b16 %v476
          %v541 = vunpack.c.l.b16 %v477
          %v542 = vunpack.c.l.b16 %v478
          %v543 = vunpack.c.l.b16 %v479
          %v544 = vunpack.c.l.b16 %v480
          %v545 = vunpack.c.l.b16 %v481
          %v546 = vpack.c.b16 %v515, %v514
          %v547 = vpack.c.b16 %v517, %v516
          %v548 = vpack.c.b16 %v519, %v518
          %v549 = vpack.c.b16 %v521, %v520
          %v550 = vpack.c.b16 %v523, %v522
          %v551 = vpack.c.b16 %v525, %v524
          %v552 = vpack.c.b16 %v527, %v526
          %v553 = vpack.c.b16 %v529, %v528
          %v554 = vpack.c.b16 %v531, %v530
          %v555 = vpack.c.b16 %v533, %v532
          %v556 = vpack.c.b16 %v535, %v534
          %v557 = vpack.c.b16 %v537, %v536
          %v558 = vpack.c.b16 %v539, %v538
          %v559 = vpack.c.b16 %v541, %v540
          %v560 = vpack.c.b16 %v543, %v542
          %v561 = vpack.c.b16 %v545, %v544
          %vm578 = vcmask 64512
          %579 = vst.msk [vmem:[#allocation3] sm:$0xff] %vm578, %v546
          %580 = vst.msk [vmem:[#allocation3 + $0x8] sm:$0xff] %vm578, %v547
          %581 = vst.msk [vmem:[#allocation3 + $0x10] sm:$0xff] %vm578, %v548
          %582 = vst.msk [vmem:[#allocation3 + $0x18] sm:$0xff] %vm578, %v549
          %583 = vst.msk [vmem:[#allocation3 + $0x20] sm:$0xff] %vm578, %v550
          %584 = vst.msk [vmem:[#allocation3 + $0x28] sm:$0xff] %vm578, %v551
          %585 = vst.msk [vmem:[#allocation3 + $0x30] sm:$0xff] %vm578, %v552
          %586 = vst.msk [vmem:[#allocation3 + $0x38] sm:$0xff] %vm578, %v553
          %587 = vst.msk [vmem:[#allocation3 + $0x40] sm:$0xff] %vm578, %v554
          %588 = vst.msk [vmem:[#allocation3 + $0x48] sm:$0xff] %vm578, %v555
          %589 = vst.msk [vmem:[#allocation3 + $0x50] sm:$0xff] %vm578, %v556
          %590 = vst.msk [vmem:[#allocation3 + $0x58] sm:$0xff] %vm578, %v557
          %591 = vst.msk [vmem:[#allocation3 + $0x60] sm:$0xff] %vm578, %v558
          %592 = vst.msk [vmem:[#allocation3 + $0x68] sm:$0xff] %vm578, %v559
          %593 = vst.msk [vmem:[#allocation3 + $0x70] sm:$0xff] %vm578, %v560
          %594 = vst.msk [vmem:[#allocation3 + $0x78] sm:$0xff] %vm578, %v561
          %v595 = vld [vmem:[%s449] sm:$0xf]
          %v596 = vld [vmem:[%s449 + $0x4] sm:$0xf]
          %v597 = vld [vmem:[%s449 + $0x8] sm:$0x1]
          %v598 = vld [vmem:[%s449 + $0xc] sm:$0xf]
          %v599 = vld [vmem:[%s449 + $0x10] sm:$0xf]
          %v600 = vld [vmem:[%s449 + $0x14] sm:$0x1]
          %v601 = vld [vmem:[%s449 + $0x18] sm:$0xf]
          %v602 = vld [vmem:[%s449 + $0x1c] sm:$0xf]
          %v603 = vld [vmem:[%s449 + $0x20] sm:$0x1]
          %v604 = vld [vmem:[%s449 + $0x24] sm:$0xf]
          %v605 = vld [vmem:[%s449 + $0x28] sm:$0xf]
          %v606 = vld [vmem:[%s449 + $0x2c] sm:$0x1]
          %v607 = vld [vmem:[%s449 + $0x30] sm:$0xf]
          %v608 = vld [vmem:[%s449 + $0x34] sm:$0xf]
          %v609 = vld [vmem:[%s449 + $0x38] sm:$0x1]
          %v610 = vld [vmem:[%s449 + $0x3c] sm:$0xf]
          %v611 = vld [vmem:[%s449 + $0x40] sm:$0xf]
          %v612 = vld [vmem:[%s449 + $0x44] sm:$0x1]
          %v613 = vld [vmem:[%s449 + $0x48] sm:$0xf]
          %v614 = vld [vmem:[%s449 + $0x4c] sm:$0xf]
          %v615 = vld [vmem:[%s449 + $0x50] sm:$0x1]
          %v616 = vld [vmem:[%s449 + $0x54] sm:$0xf]
          %v617 = vld [vmem:[%s449 + $0x58] sm:$0xf]
          %v618 = vld [vmem:[%s449 + $0x5c] sm:$0x1]
          %v619 = vld [vmem:[%s449 + $0x60] sm:$0xf]
          %v620 = vld [vmem:[%s449 + $0x64] sm:$0xf]
          %v621 = vld [vmem:[%s449 + $0x68] sm:$0x1]
          %v622 = vld [vmem:[%s449 + $0x6c] sm:$0xf]
          %v623 = vld [vmem:[%s449 + $0x70] sm:$0xf]
          %v624 = vld [vmem:[%s449 + $0x74] sm:$0x1]
          %v625 = vld [vmem:[%s449 + $0x78] sm:$0xf]
          %v626 = vld [vmem:[%s449 + $0x7c] sm:$0xf]
          %v627 = vld [vmem:[%s449 + $0x80] sm:$0x1]
          %v628 = vld [vmem:[%s449 + $0x84] sm:$0xf]
          %v629 = vld [vmem:[%s449 + $0x88] sm:$0xf]
          %v630 = vld [vmem:[%s449 + $0x8c] sm:$0x1]
          %v631 = vld [vmem:[%s449 + $0x90] sm:$0xf]
          %v632 = vld [vmem:[%s449 + $0x94] sm:$0xf]
          %v633 = vld [vmem:[%s449 + $0x98] sm:$0x1]
          %v634 = vld [vmem:[%s449 + $0x9c] sm:$0xf]
          %v635 = vld [vmem:[%s449 + $0xa0] sm:$0xf]
          %v636 = vld [vmem:[%s449 + $0xa4] sm:$0x1]
          %v637 = vld [vmem:[%s449 + $0xa8] sm:$0xf]
          %v638 = vld [vmem:[%s449 + $0xac] sm:$0xf]
          %v639 = vld [vmem:[%s449 + $0xb0] sm:$0x1]
          %v640 = vld [vmem:[%s449 + $0xb4] sm:$0xf]
          %v641 = vld [vmem:[%s449 + $0xb8] sm:$0xf]
          %v642 = vld [vmem:[%s449 + $0xbc] sm:$0x1]
          %vm643 = vsmask.f32 3328
          %vm644 = vsmask.f32 7440
          %vm645 = vmor %vm643, %vm644
          %v647 = vshrl.u32 %v595, 16
          %v649 = vrot.slane %v647, 4
          %v650 = vshll.u32 %v595, 16
          %v652 = vrot.slane %v650, 5
          %v653 = vor.u32 %v649, %v652
          %v654 = vrot.slane %v653, 4
          %v656 = vshll.u32 %v596, 16
          %v658 = vrot.slane %v656, 5
          %v659 = vsel %vm645, %v654, %v658
          %v660 = vshrl.u32 %v596, 16
          %v662 = vrot.slane %v660, 4
          %v663 = vor.u32 %v662, %v658
          %v664 = vrot.slane %v663, 4
          %v666 = vshll.u32 %v597, 16
          %v668 = vrot.slane %v666, 5
          %v669 = vsel %vm645, %v664, %v668
          %v671 = vshrl.u32 %v598, 16
          %v673 = vrot.slane %v671, 4
          %v674 = vshll.u32 %v598, 16
          %v676 = vrot.slane %v674, 5
          %v677 = vor.u32 %v673, %v676
          %v678 = vrot.slane %v677, 4
          %v680 = vshll.u32 %v599, 16
          %v682 = vrot.slane %v680, 5
          %v683 = vsel %vm645, %v678, %v682
          %v684 = vshrl.u32 %v599, 16
          %v686 = vrot.slane %v684, 4
          %v687 = vor.u32 %v686, %v682
          %v688 = vrot.slane %v687, 4
          %v690 = vshll.u32 %v600, 16
          %v692 = vrot.slane %v690, 5
          %v693 = vsel %vm645, %v688, %v692
          %v695 = vshrl.u32 %v601, 16
          %v697 = vrot.slane %v695, 4
          %v698 = vshll.u32 %v601, 16
          %v700 = vrot.slane %v698, 5
          %v701 = vor.u32 %v697, %v700
          %v702 = vrot.slane %v701, 4
          %v704 = vshll.u32 %v602, 16
          %v706 = vrot.slane %v704, 5
          %v707 = vsel %vm645, %v702, %v706
          %v708 = vshrl.u32 %v602, 16
          %v710 = vrot.slane %v708, 4
          %v711 = vor.u32 %v710, %v706
          %v712 = vrot.slane %v711, 4
          %v714 = vshll.u32 %v603, 16
          %v716 = vrot.slane %v714, 5
          %v717 = vsel %vm645, %v712, %v716
          %v719 = vshrl.u32 %v604, 16
          %v721 = vrot.slane %v719, 4
          %v722 = vshll.u32 %v604, 16
          %v724 = vrot.slane %v722, 5
          %v725 = vor.u32 %v721, %v724
          %v726 = vrot.slane %v725, 4
          %v728 = vshll.u32 %v605, 16
          %v730 = vrot.slane %v728, 5
          %v731 = vsel %vm645, %v726, %v730
          %v732 = vshrl.u32 %v605, 16
          %v734 = vrot.slane %v732, 4
          %v735 = vor.u32 %v734, %v730
          %v736 = vrot.slane %v735, 4
          %v738 = vshll.u32 %v606, 16
          %v740 = vrot.slane %v738, 5
          %v741 = vsel %vm645, %v736, %v740
          %v743 = vshrl.u32 %v607, 16
          %v745 = vrot.slane %v743, 4
          %v746 = vshll.u32 %v607, 16
          %v748 = vrot.slane %v746, 5
          %v749 = vor.u32 %v745, %v748
          %v750 = vrot.slane %v749, 4
          %v752 = vshll.u32 %v608, 16
          %v754 = vrot.slane %v752, 5
          %v755 = vsel %vm645, %v750, %v754
          %v756 = vshrl.u32 %v608, 16
          %v758 = vrot.slane %v756, 4
          %v759 = vor.u32 %v758, %v754
          %v760 = vrot.slane %v759, 4
          %v762 = vshll.u32 %v609, 16
          %v764 = vrot.slane %v762, 5
          %v765 = vsel %vm645, %v760, %v764
          %v767 = vshrl.u32 %v610, 16
          %v769 = vrot.slane %v767, 4
          %v770 = vshll.u32 %v610, 16
          %v772 = vrot.slane %v770, 5
          %v773 = vor.u32 %v769, %v772
          %v774 = vrot.slane %v773, 4
          %v776 = vshll.u32 %v611, 16
          %v778 = vrot.slane %v776, 5
          %v779 = vsel %vm645, %v774, %v778
          %v780 = vshrl.u32 %v611, 16
          %v782 = vrot.slane %v780, 4
          %v783 = vor.u32 %v782, %v778
          %v784 = vrot.slane %v783, 4
          %v786 = vshll.u32 %v612, 16
          %v788 = vrot.slane %v786, 5
          %v789 = vsel %vm645, %v784, %v788
          %v791 = vshrl.u32 %v613, 16
          %v793 = vrot.slane %v791, 4
          %v794 = vshll.u32 %v613, 16
          %v796 = vrot.slane %v794, 5
          %v797 = vor.u32 %v793, %v796
          %v798 = vrot.slane %v797, 4
          %v800 = vshll.u32 %v614, 16
          %v802 = vrot.slane %v800, 5
          %v803 = vsel %vm645, %v798, %v802
          %v804 = vshrl.u32 %v614, 16
          %v806 = vrot.slane %v804, 4
          %v807 = vor.u32 %v806, %v802
          %v808 = vrot.slane %v807, 4
          %v810 = vshll.u32 %v615, 16
          %v812 = vrot.slane %v810, 5
          %v813 = vsel %vm645, %v808, %v812
          %v815 = vshrl.u32 %v616, 16
          %v817 = vrot.slane %v815, 4
          %v818 = vshll.u32 %v616, 16
          %v820 = vrot.slane %v818, 5
          %v821 = vor.u32 %v817, %v820
          %v822 = vrot.slane %v821, 4
          %v824 = vshll.u32 %v617, 16
          %v826 = vrot.slane %v824, 5
          %v827 = vsel %vm645, %v822, %v826
          %v828 = vshrl.u32 %v617, 16
          %v830 = vrot.slane %v828, 4
          %v831 = vor.u32 %v830, %v826
          %v832 = vrot.slane %v831, 4
          %v834 = vshll.u32 %v618, 16
          %v836 = vrot.slane %v834, 5
          %v837 = vsel %vm645, %v832, %v836
          %v839 = vshrl.u32 %v619, 16
          %v841 = vrot.slane %v839, 4
          %v842 = vshll.u32 %v619, 16
          %v844 = vrot.slane %v842, 5
          %v845 = vor.u32 %v841, %v844
          %v846 = vrot.slane %v845, 4
          %v848 = vshll.u32 %v620, 16
          %v850 = vrot.slane %v848, 5
          %v851 = vsel %vm645, %v846, %v850
          %v852 = vshrl.u32 %v620, 16
          %v854 = vrot.slane %v852, 4
          %v855 = vor.u32 %v854, %v850
          %v856 = vrot.slane %v855, 4
          %v858 = vshll.u32 %v621, 16
          %v860 = vrot.slane %v858, 5
          %v861 = vsel %vm645, %v856, %v860
          %v863 = vshrl.u32 %v622, 16
          %v865 = vrot.slane %v863, 4
          %v866 = vshll.u32 %v622, 16
          %v868 = vrot.slane %v866, 5
          %v869 = vor.u32 %v865, %v868
          %v870 = vrot.slane %v869, 4
          %v872 = vshll.u32 %v623, 16
          %v874 = vrot.slane %v872, 5
          %v875 = vsel %vm645, %v870, %v874
          %v876 = vshrl.u32 %v623, 16
          %v878 = vrot.slane %v876, 4
          %v879 = vor.u32 %v878, %v874
          %v880 = vrot.slane %v879, 4
          %v882 = vshll.u32 %v624, 16
          %v884 = vrot.slane %v882, 5
          %v885 = vsel %vm645, %v880, %v884
          %v887 = vshrl.u32 %v625, 16
          %v889 = vrot.slane %v887, 4
          %v890 = vshll.u32 %v625, 16
          %v892 = vrot.slane %v890, 5
          %v893 = vor.u32 %v889, %v892
          %v894 = vrot.slane %v893, 4
          %v896 = vshll.u32 %v626, 16
          %v898 = vrot.slane %v896, 5
          %v899 = vsel %vm645, %v894, %v898
          %v900 = vshrl.u32 %v626, 16
          %v902 = vrot.slane %v900, 4
          %v903 = vor.u32 %v902, %v898
          %v904 = vrot.slane %v903, 4
          %v906 = vshll.u32 %v627, 16
          %v908 = vrot.slane %v906, 5
          %v909 = vsel %vm645, %v904, %v908
          %v911 = vshrl.u32 %v628, 16
          %v913 = vrot.slane %v911, 4
          %v914 = vshll.u32 %v628, 16
          %v916 = vrot.slane %v914, 5
          %v917 = vor.u32 %v913, %v916
          %v918 = vrot.slane %v917, 4
          %v920 = vshll.u32 %v629, 16
          %v922 = vrot.slane %v920, 5
          %v923 = vsel %vm645, %v918, %v922
          %v924 = vshrl.u32 %v629, 16
          %v926 = vrot.slane %v924, 4
          %v927 = vor.u32 %v926, %v922
          %v928 = vrot.slane %v927, 4
          %v930 = vshll.u32 %v630, 16
          %v932 = vrot.slane %v930, 5
          %v933 = vsel %vm645, %v928, %v932
          %v935 = vshrl.u32 %v631, 16
          %v937 = vrot.slane %v935, 4
          %v938 = vshll.u32 %v631, 16
          %v940 = vrot.slane %v938, 5
          %v941 = vor.u32 %v937, %v940
          %v942 = vrot.slane %v941, 4
          %v944 = vshll.u32 %v632, 16
          %v946 = vrot.slane %v944, 5
          %v947 = vsel %vm645, %v942, %v946
          %v948 = vshrl.u32 %v632, 16
          %v950 = vrot.slane %v948, 4
          %v951 = vor.u32 %v950, %v946
          %v952 = vrot.slane %v951, 4
          %v954 = vshll.u32 %v633, 16
          %v956 = vrot.slane %v954, 5
          %v957 = vsel %vm645, %v952, %v956
          %v959 = vshrl.u32 %v634, 16
          %v961 = vrot.slane %v959, 4
          %v962 = vshll.u32 %v634, 16
          %v964 = vrot.slane %v962, 5
          %v965 = vor.u32 %v961, %v964
          %v966 = vrot.slane %v965, 4
          %v968 = vshll.u32 %v635, 16
          %v970 = vrot.slane %v968, 5
          %v971 = vsel %vm645, %v966, %v970
          %v972 = vshrl.u32 %v635, 16
          %v974 = vrot.slane %v972, 4
          %v975 = vor.u32 %v974, %v970
          %v976 = vrot.slane %v975, 4
          %v978 = vshll.u32 %v636, 16
          %v980 = vrot.slane %v978, 5
          %v981 = vsel %vm645, %v976, %v980
          %v983 = vshrl.u32 %v637, 16
          %v985 = vrot.slane %v983, 4
          %v986 = vshll.u32 %v637, 16
          %v988 = vrot.slane %v986, 5
          %v989 = vor.u32 %v985, %v988
          %v990 = vrot.slane %v989, 4
          %v992 = vshll.u32 %v638, 16
          %v994 = vrot.slane %v992, 5
          %v995 = vsel %vm645, %v990, %v994
          %v996 = vshrl.u32 %v638, 16
          %v998 = vrot.slane %v996, 4
          %v999 = vor.u32 %v998, %v994
          %v1000 = vrot.slane %v999, 4
          %v1002 = vshll.u32 %v639, 16
          %v1004 = vrot.slane %v1002, 5
          %v1005 = vsel %vm645, %v1000, %v1004
          %v1007 = vshrl.u32 %v640, 16
          %v1009 = vrot.slane %v1007, 4
          %v1010 = vshll.u32 %v640, 16
          %v1012 = vrot.slane %v1010, 5
          %v1013 = vor.u32 %v1009, %v1012
          %v1014 = vrot.slane %v1013, 4
          %v1016 = vshll.u32 %v641, 16
          %v1018 = vrot.slane %v1016, 5
          %v1019 = vsel %vm645, %v1014, %v1018
          %v1020 = vshrl.u32 %v641, 16
          %v1022 = vrot.slane %v1020, 4
          %v1023 = vor.u32 %v1022, %v1018
          %v1024 = vrot.slane %v1023, 4
          %v1026 = vshll.u32 %v642, 16
          %v1028 = vrot.slane %v1026, 5
          %v1029 = vsel %vm645, %v1024, %v1028
          %v1030 = vunpack.c.l.b16 %v659
          %v1031 = vunpack.c.l.b16 %v669
          %v1032 = vunpack.c.l.b16 %v683
          %v1033 = vunpack.c.l.b16 %v693
          %v1034 = vunpack.c.l.b16 %v707
          %v1035 = vunpack.c.l.b16 %v717
          %v1036 = vunpack.c.l.b16 %v731
          %v1037 = vunpack.c.l.b16 %v741
          %v1038 = vunpack.c.l.b16 %v755
          %v1039 = vunpack.c.l.b16 %v765
          %v1040 = vunpack.c.l.b16 %v779
          %v1041 = vunpack.c.l.b16 %v789
          %v1042 = vunpack.c.l.b16 %v803
          %v1043 = vunpack.c.l.b16 %v813
          %v1044 = vunpack.c.l.b16 %v827
          %v1045 = vunpack.c.l.b16 %v837
          %v1046 = vunpack.c.l.b16 %v851
          %v1047 = vunpack.c.l.b16 %v861
          %v1048 = vunpack.c.l.b16 %v875
          %v1049 = vunpack.c.l.b16 %v885
          %v1050 = vunpack.c.l.b16 %v899
          %v1051 = vunpack.c.l.b16 %v909
          %v1052 = vunpack.c.l.b16 %v923
          %v1053 = vunpack.c.l.b16 %v933
          %v1054 = vunpack.c.l.b16 %v947
          %v1055 = vunpack.c.l.b16 %v957
          %v1056 = vunpack.c.l.b16 %v971
          %v1057 = vunpack.c.l.b16 %v981
          %v1058 = vunpack.c.l.b16 %v995
          %v1059 = vunpack.c.l.b16 %v1005
          %v1060 = vunpack.c.l.b16 %v1019
          %v1061 = vunpack.c.l.b16 %v1029
          %v1062 = vpack.c.b16 %v1031, %v1030
          %v1063 = vpack.c.b16 %v1033, %v1032
          %v1064 = vpack.c.b16 %v1035, %v1034
          %v1065 = vpack.c.b16 %v1037, %v1036
          %v1066 = vpack.c.b16 %v1039, %v1038
          %v1067 = vpack.c.b16 %v1041, %v1040
          %v1068 = vpack.c.b16 %v1043, %v1042
          %v1069 = vpack.c.b16 %v1045, %v1044
          %v1070 = vpack.c.b16 %v1047, %v1046
          %v1071 = vpack.c.b16 %v1049, %v1048
          %v1072 = vpack.c.b16 %v1051, %v1050
          %v1073 = vpack.c.b16 %v1053, %v1052
          %v1074 = vpack.c.b16 %v1055, %v1054
          %v1075 = vpack.c.b16 %v1057, %v1056
          %v1076 = vpack.c.b16 %v1059, %v1058
          %v1077 = vpack.c.b16 %v1061, %v1060
          %1078 = vrot.lane.b32.xlu0 %v1062, 8
          %v1079 = vpop.permute.xlu0 %1078
          %1080 = vrot.lane.b32.xlu0 %v1063, 8
          %v1081 = vpop.permute.xlu0 %1080
          %1082 = vrot.lane.b32.xlu0 %v1064, 8
          %v1083 = vpop.permute.xlu0 %1082
          %1084 = vrot.lane.b32.xlu0 %v1065, 8
          %v1085 = vpop.permute.xlu0 %1084
          %1086 = vrot.lane.b32.xlu0 %v1066, 8
          %v1087 = vpop.permute.xlu0 %1086
          %1088 = vrot.lane.b32.xlu0 %v1067, 8
          %v1089 = vpop.permute.xlu0 %1088
          %1090 = vrot.lane.b32.xlu0 %v1068, 8
          %v1091 = vpop.permute.xlu0 %1090
          %1092 = vrot.lane.b32.xlu0 %v1069, 8
          %v1093 = vpop.permute.xlu0 %1092
          %1094 = vrot.lane.b32.xlu0 %v1070, 8
          %v1095 = vpop.permute.xlu0 %1094
          %1096 = vrot.lane.b32.xlu0 %v1071, 8
          %v1097 = vpop.permute.xlu0 %1096
          %1098 = vrot.lane.b32.xlu0 %v1072, 8
          %v1099 = vpop.permute.xlu0 %1098
          %1100 = vrot.lane.b32.xlu0 %v1073, 8
          %v1101 = vpop.permute.xlu0 %1100
          %1102 = vrot.lane.b32.xlu0 %v1074, 8
          %v1103 = vpop.permute.xlu0 %1102
          %1104 = vrot.lane.b32.xlu0 %v1075, 8
          %v1105 = vpop.permute.xlu0 %1104
          %1106 = vrot.lane.b32.xlu0 %v1076, 8
          %v1107 = vpop.permute.xlu0 %1106
          %1108 = vrot.lane.b32.xlu0 %v1077, 8
          %v1109 = vpop.permute.xlu0 %1108
          %vm1126 = vcmask 130112
          %1127 = vst.msk [vmem:[#allocation3] sm:$0xff] %vm1126, %v1079
          %1128 = vst.msk [vmem:[#allocation3 + $0x8] sm:$0xff] %vm1126, %v1081
          %1129 = vst.msk [vmem:[#allocation3 + $0x10] sm:$0xff] %vm1126, %v1083
          %1130 = vst.msk [vmem:[#allocation3 + $0x18] sm:$0xff] %vm1126, %v1085
          %1131 = vst.msk [vmem:[#allocation3 + $0x20] sm:$0xff] %vm1126, %v1087
          %1132 = vst.msk [vmem:[#allocation3 + $0x28] sm:$0xff] %vm1126, %v1089
          %1133 = vst.msk [vmem:[#allocation3 + $0x30] sm:$0xff] %vm1126, %v1091
          %1134 = vst.msk [vmem:[#allocation3 + $0x38] sm:$0xff] %vm1126, %v1093
          %1135 = vst.msk [vmem:[#allocation3 + $0x40] sm:$0xff] %vm1126, %v1095
          %1136 = vst.msk [vmem:[#allocation3 + $0x48] sm:$0xff] %vm1126, %v1097
          %1137 = vst.msk [vmem:[#allocation3 + $0x50] sm:$0xff] %vm1126, %v1099
          %1138 = vst.msk [vmem:[#allocation3 + $0x58] sm:$0xff] %vm1126, %v1101
          %1139 = vst.msk [vmem:[#allocation3 + $0x60] sm:$0xff] %vm1126, %v1103
          %1140 = vst.msk [vmem:[#allocation3 + $0x68] sm:$0xff] %vm1126, %v1105
          %1141 = vst.msk [vmem:[#allocation3 + $0x70] sm:$0xff] %vm1126, %v1107
          %1142 = vst.msk [vmem:[#allocation3 + $0x78] sm:$0xff] %vm1126, %v1109
          %v1143 = vld [vmem:[%s449] sm:$0xe]
          %v1144 = vld [vmem:[%s449 + $0x4] sm:$0xf]
          %v1145 = vld [vmem:[%s449 + $0x8] sm:$0x1]
          %v1146 = vld [vmem:[%s449 + $0xc] sm:$0xe]
          %v1147 = vld [vmem:[%s449 + $0x10] sm:$0xf]
          %v1148 = vld [vmem:[%s449 + $0x14] sm:$0x1]
          %v1149 = vld [vmem:[%s449 + $0x18] sm:$0xe]
          %v1150 = vld [vmem:[%s449 + $0x1c] sm:$0xf]
          %v1151 = vld [vmem:[%s449 + $0x20] sm:$0x1]
          %v1152 = vld [vmem:[%s449 + $0x24] sm:$0xe]
          %v1153 = vld [vmem:[%s449 + $0x28] sm:$0xf]
          %v1154 = vld [vmem:[%s449 + $0x2c] sm:$0x1]
          %v1155 = vld [vmem:[%s449 + $0x30] sm:$0xe]
          %v1156 = vld [vmem:[%s449 + $0x34] sm:$0xf]
          %v1157 = vld [vmem:[%s449 + $0x38] sm:$0x1]
          %v1158 = vld [vmem:[%s449 + $0x3c] sm:$0xe]
          %v1159 = vld [vmem:[%s449 + $0x40] sm:$0xf]
          %v1160 = vld [vmem:[%s449 + $0x44] sm:$0x1]
          %v1161 = vld [vmem:[%s449 + $0x48] sm:$0xe]
          %v1162 = vld [vmem:[%s449 + $0x4c] sm:$0xf]
          %v1163 = vld [vmem:[%s449 + $0x50] sm:$0x1]
          %v1164 = vld [vmem:[%s449 + $0x54] sm:$0xe]
          %v1165 = vld [vmem:[%s449 + $0x58] sm:$0xf]
          %v1166 = vld [vmem:[%s449 + $0x5c] sm:$0x1]
          %v1167 = vld [vmem:[%s449 + $0x60] sm:$0xe]
          %v1168 = vld [vmem:[%s449 + $0x64] sm:$0xf]
          %v1169 = vld [vmem:[%s449 + $0x68] sm:$0x1]
          %v1170 = vld [vmem:[%s449 + $0x6c] sm:$0xe]
          %v1171 = vld [vmem:[%s449 + $0x70] sm:$0xf]
          %v1172 = vld [vmem:[%s449 + $0x74] sm:$0x1]
          %v1173 = vld [vmem:[%s449 + $0x78] sm:$0xe]
          %v1174 = vld [vmem:[%s449 + $0x7c] sm:$0xf]
          %v1175 = vld [vmem:[%s449 + $0x80] sm:$0x1]
          %v1176 = vld [vmem:[%s449 + $0x84] sm:$0xe]
          %v1177 = vld [vmem:[%s449 + $0x88] sm:$0xf]
          %v1178 = vld [vmem:[%s449 + $0x8c] sm:$0x1]
          %v1179 = vld [vmem:[%s449 + $0x90] sm:$0xe]
          %v1180 = vld [vmem:[%s449 + $0x94] sm:$0xf]
          %v1181 = vld [vmem:[%s449 + $0x98] sm:$0x1]
          %v1182 = vld [vmem:[%s449 + $0x9c] sm:$0xe]
          %v1183 = vld [vmem:[%s449 + $0xa0] sm:$0xf]
          %v1184 = vld [vmem:[%s449 + $0xa4] sm:$0x1]
          %v1185 = vld [vmem:[%s449 + $0xa8] sm:$0xe]
          %v1186 = vld [vmem:[%s449 + $0xac] sm:$0xf]
          %v1187 = vld [vmem:[%s449 + $0xb0] sm:$0x1]
          %v1188 = vld [vmem:[%s449 + $0xb4] sm:$0xe]
          %v1189 = vld [vmem:[%s449 + $0xb8] sm:$0xf]
          %v1190 = vld [vmem:[%s449 + $0xbc] sm:$0x1]
          %vm1239 = vcmask 1042432
          %vm1240 = vcmask 1046532
          %vm1241 = vmor %vm1239, %vm1240
          %v1242 = vrot.slane %v1143, 5
          %v1243 = vrot.slane %v1242, 4
          %v1244 = vrot.slane %v1144, 5
          %v1245 = vsel %vm1241, %v1243, %v1244
          %v1246 = vrot.slane %v1244, 4
          %v1247 = vrot.slane %v1145, 5
          %v1248 = vsel %vm1241, %v1246, %v1247
          %v1249 = vrot.slane %v1146, 5
          %v1250 = vrot.slane %v1249, 4
          %v1251 = vrot.slane %v1147, 5
          %v1252 = vsel %vm1241, %v1250, %v1251
          %v1253 = vrot.slane %v1251, 4
          %v1254 = vrot.slane %v1148, 5
          %v1255 = vsel %vm1241, %v1253, %v1254
          %v1256 = vrot.slane %v1149, 5
          %v1257 = vrot.slane %v1256, 4
          %v1258 = vrot.slane %v1150, 5
          %v1259 = vsel %vm1241, %v1257, %v1258
          %v1260 = vrot.slane %v1258, 4
          %v1261 = vrot.slane %v1151, 5
          %v1262 = vsel %vm1241, %v1260, %v1261
          %v1263 = vrot.slane %v1152, 5
          %v1264 = vrot.slane %v1263, 4
          %v1265 = vrot.slane %v1153, 5
          %v1266 = vsel %vm1241, %v1264, %v1265
          %v1267 = vrot.slane %v1265, 4
          %v1268 = vrot.slane %v1154, 5
          %v1269 = vsel %vm1241, %v1267, %v1268
          %v1270 = vrot.slane %v1155, 5
          %v1271 = vrot.slane %v1270, 4
          %v1272 = vrot.slane %v1156, 5
          %v1273 = vsel %vm1241, %v1271, %v1272
          %v1274 = vrot.slane %v1272, 4
          %v1275 = vrot.slane %v1157, 5
          %v1276 = vsel %vm1241, %v1274, %v1275
          %v1277 = vrot.slane %v1158, 5
          %v1278 = vrot.slane %v1277, 4
          %v1279 = vrot.slane %v1159, 5
          %v1280 = vsel %vm1241, %v1278, %v1279
          %v1281 = vrot.slane %v1279, 4
          %v1282 = vrot.slane %v1160, 5
          %v1283 = vsel %vm1241, %v1281, %v1282
          %v1284 = vrot.slane %v1161, 5
          %v1285 = vrot.slane %v1284, 4
          %v1286 = vrot.slane %v1162, 5
          %v1287 = vsel %vm1241, %v1285, %v1286
          %v1288 = vrot.slane %v1286, 4
          %v1289 = vrot.slane %v1163, 5
          %v1290 = vsel %vm1241, %v1288, %v1289
          %v1291 = vrot.slane %v1164, 5
          %v1292 = vrot.slane %v1291, 4
          %v1293 = vrot.slane %v1165, 5
          %v1294 = vsel %vm1241, %v1292, %v1293
          %v1295 = vrot.slane %v1293, 4
          %v1296 = vrot.slane %v1166, 5
          %v1297 = vsel %vm1241, %v1295, %v1296
          %v1298 = vrot.slane %v1167, 5
          %v1299 = vrot.slane %v1298, 4
          %v1300 = vrot.slane %v1168, 5
          %v1301 = vsel %vm1241, %v1299, %v1300
          %v1302 = vrot.slane %v1300, 4
          %v1303 = vrot.slane %v1169, 5
          %v1304 = vsel %vm1241, %v1302, %v1303
          %v1305 = vrot.slane %v1170, 5
          %v1306 = vrot.slane %v1305, 4
          %v1307 = vrot.slane %v1171, 5
          %v1308 = vsel %vm1241, %v1306, %v1307
          %v1309 = vrot.slane %v1307, 4
          %v1310 = vrot.slane %v1172, 5
          %v1311 = vsel %vm1241, %v1309, %v1310
          %v1312 = vrot.slane %v1173, 5
          %v1313 = vrot.slane %v1312, 4
          %v1314 = vrot.slane %v1174, 5
          %v1315 = vsel %vm1241, %v1313, %v1314
          %v1316 = vrot.slane %v1314, 4
          %v1317 = vrot.slane %v1175, 5
          %v1318 = vsel %vm1241, %v1316, %v1317
          %v1319 = vrot.slane %v1176, 5
          %v1320 = vrot.slane %v1319, 4
          %v1321 = vrot.slane %v1177, 5
          %v1322 = vsel %vm1241, %v1320, %v1321
          %v1323 = vrot.slane %v1321, 4
          %v1324 = vrot.slane %v1178, 5
          %v1325 = vsel %vm1241, %v1323, %v1324
          %v1326 = vrot.slane %v1179, 5
          %v1327 = vrot.slane %v1326, 4
          %v1328 = vrot.slane %v1180, 5
          %v1329 = vsel %vm1241, %v1327, %v1328
          %v1330 = vrot.slane %v1328, 4
          %v1331 = vrot.slane %v1181, 5
          %v1332 = vsel %vm1241, %v1330, %v1331
          %v1333 = vrot.slane %v1182, 5
          %v1334 = vrot.slane %v1333, 4
          %v1335 = vrot.slane %v1183, 5
          %v1336 = vsel %vm1241, %v1334, %v1335
          %v1337 = vrot.slane %v1335, 4
          %v1338 = vrot.slane %v1184, 5
          %v1339 = vsel %vm1241, %v1337, %v1338
          %v1340 = vrot.slane %v1185, 5
          %v1341 = vrot.slane %v1340, 4
          %v1342 = vrot.slane %v1186, 5
          %v1343 = vsel %vm1241, %v1341, %v1342
          %v1344 = vrot.slane %v1342, 4
          %v1345 = vrot.slane %v1187, 5
          %v1346 = vsel %vm1241, %v1344, %v1345
          %v1347 = vrot.slane %v1188, 5
          %v1348 = vrot.slane %v1347, 4
          %v1349 = vrot.slane %v1189, 5
          %v1350 = vsel %vm1241, %v1348, %v1349
          %v1351 = vrot.slane %v1349, 4
          %v1352 = vrot.slane %v1190, 5
          %v1353 = vsel %vm1241, %v1351, %v1352
          %v1354 = vunpack.c.l.b16 %v1245
          %v1355 = vunpack.c.l.b16 %v1248
          %v1356 = vunpack.c.l.b16 %v1252
          %v1357 = vunpack.c.l.b16 %v1255
          %v1358 = vunpack.c.l.b16 %v1259
          %v1359 = vunpack.c.l.b16 %v1262
          %v1360 = vunpack.c.l.b16 %v1266
          %v1361 = vunpack.c.l.b16 %v1269
          %v1362 = vunpack.c.l.b16 %v1273
          %v1363 = vunpack.c.l.b16 %v1276
          %v1364 = vunpack.c.l.b16 %v1280
          %v1365 = vunpack.c.l.b16 %v1283
          %v1366 = vunpack.c.l.b16 %v1287
          %v1367 = vunpack.c.l.b16 %v1290
          %v1368 = vunpack.c.l.b16 %v1294
          %v1369 = vunpack.c.l.b16 %v1297
          %v1370 = vunpack.c.l.b16 %v1301
          %v1371 = vunpack.c.l.b16 %v1304
          %v1372 = vunpack.c.l.b16 %v1308
          %v1373 = vunpack.c.l.b16 %v1311
          %v1374 = vunpack.c.l.b16 %v1315
          %v1375 = vunpack.c.l.b16 %v1318
          %v1376 = vunpack.c.l.b16 %v1322
          %v1377 = vunpack.c.l.b16 %v1325
          %v1378 = vunpack.c.l.b16 %v1329
          %v1379 = vunpack.c.l.b16 %v1332
          %v1380 = vunpack.c.l.b16 %v1336
          %v1381 = vunpack.c.l.b16 %v1339
          %v1382 = vunpack.c.l.b16 %v1343
          %v1383 = vunpack.c.l.b16 %v1346
          %v1384 = vunpack.c.l.b16 %v1350
          %v1385 = vunpack.c.l.b16 %v1353
          %v1386 = vpack.c.b16 %v1355, %v1354
          %v1387 = vpack.c.b16 %v1357, %v1356
          %v1388 = vpack.c.b16 %v1359, %v1358
          %v1389 = vpack.c.b16 %v1361, %v1360
          %v1390 = vpack.c.b16 %v1363, %v1362
          %v1391 = vpack.c.b16 %v1365, %v1364
          %v1392 = vpack.c.b16 %v1367, %v1366
          %v1393 = vpack.c.b16 %v1369, %v1368
          %v1394 = vpack.c.b16 %v1371, %v1370
          %v1395 = vpack.c.b16 %v1373, %v1372
          %v1396 = vpack.c.b16 %v1375, %v1374
          %v1397 = vpack.c.b16 %v1377, %v1376
          %v1398 = vpack.c.b16 %v1379, %v1378
          %v1399 = vpack.c.b16 %v1381, %v1380
          %v1400 = vpack.c.b16 %v1383, %v1382
          %v1401 = vpack.c.b16 %v1385, %v1384
          %1402 = vrot.lane.b32.xlu0 %v1386, 16
          %v1403 = vpop.permute.xlu0 %1402
          %1404 = vrot.lane.b32.xlu0 %v1387, 16
          %v1405 = vpop.permute.xlu0 %1404
          %1406 = vrot.lane.b32.xlu0 %v1388, 16
          %v1407 = vpop.permute.xlu0 %1406
          %1408 = vrot.lane.b32.xlu0 %v1389, 16
          %v1409 = vpop.permute.xlu0 %1408
          %1410 = vrot.lane.b32.xlu0 %v1390, 16
          %v1411 = vpop.permute.xlu0 %1410
          %1412 = vrot.lane.b32.xlu0 %v1391, 16
          %v1413 = vpop.permute.xlu0 %1412
          %1414 = vrot.lane.b32.xlu0 %v1392, 16
          %v1415 = vpop.permute.xlu0 %1414
          %1416 = vrot.lane.b32.xlu0 %v1393, 16
          %v1417 = vpop.permute.xlu0 %1416
          %1418 = vrot.lane.b32.xlu0 %v1394, 16
          %v1419 = vpop.permute.xlu0 %1418
          %1420 = vrot.lane.b32.xlu0 %v1395, 16
          %v1421 = vpop.permute.xlu0 %1420
          %1422 = vrot.lane.b32.xlu0 %v1396, 16
          %v1423 = vpop.permute.xlu0 %1422
          %1424 = vrot.lane.b32.xlu0 %v1397, 16
          %v1425 = vpop.permute.xlu0 %1424
          %1426 = vrot.lane.b32.xlu0 %v1398, 16
          %v1427 = vpop.permute.xlu0 %1426
          %1428 = vrot.lane.b32.xlu0 %v1399, 16
          %v1429 = vpop.permute.xlu0 %1428
          %1430 = vrot.lane.b32.xlu0 %v1400, 16
          %v1431 = vpop.permute.xlu0 %1430
          %1432 = vrot.lane.b32.xlu0 %v1401, 16
          %v1433 = vpop.permute.xlu0 %1432
          %vm1450 = vcmask 195712
          %1451 = vst.msk [vmem:[#allocation3] sm:$0xff] %vm1450, %v1403
          %1452 = vst.msk [vmem:[#allocation3 + $0x8] sm:$0xff] %vm1450, %v1405
          %1453 = vst.msk [vmem:[#allocation3 + $0x10] sm:$0xff] %vm1450, %v1407
          %1454 = vst.msk [vmem:[#allocation3 + $0x18] sm:$0xff] %vm1450, %v1409
          %1455 = vst.msk [vmem:[#allocation3 + $0x20] sm:$0xff] %vm1450, %v1411
          %1456 = vst.msk [vmem:[#allocation3 + $0x28] sm:$0xff] %vm1450, %v1413
          %1457 = vst.msk [vmem:[#allocation3 + $0x30] sm:$0xff] %vm1450, %v1415
          %1458 = vst.msk [vmem:[#allocation3 + $0x38] sm:$0xff] %vm1450, %v1417
          %1459 = vst.msk [vmem:[#allocation3 + $0x40] sm:$0xff] %vm1450, %v1419
          %1460 = vst.msk [vmem:[#allocation3 + $0x48] sm:$0xff] %vm1450, %v1421
          %1461 = vst.msk [vmem:[#allocation3 + $0x50] sm:$0xff] %vm1450, %v1423
          %1462 = vst.msk [vmem:[#allocation3 + $0x58] sm:$0xff] %vm1450, %v1425
          %1463 = vst.msk [vmem:[#allocation3 + $0x60] sm:$0xff] %vm1450, %v1427
          %1464 = vst.msk [vmem:[#allocation3 + $0x68] sm:$0xff] %vm1450, %v1429
          %1465 = vst.msk [vmem:[#allocation3 + $0x70] sm:$0xff] %vm1450, %v1431
          %1466 = vst.msk [vmem:[#allocation3 + $0x78] sm:$0xff] %vm1450, %v1433
          %s1467 = sadd.s32 3, %s447
          %s1468 = smul.addr %s1467, 4
          %s1469 = scalar_lea.vmem [#allocation2], %s1468
          %v1470 = vld [vmem:[%s1469] sm:$0xf]
          %v1471 = vld [vmem:[%s1469 + $0x4] sm:$0xf]
          %v1472 = vld [vmem:[%s1469 + $0xc] sm:$0xf]
          %v1473 = vld [vmem:[%s1469 + $0x10] sm:$0xf]
          %v1474 = vld [vmem:[%s1469 + $0x18] sm:$0xf]
          %v1475 = vld [vmem:[%s1469 + $0x1c] sm:$0xf]
          %v1476 = vld [vmem:[%s1469 + $0x24] sm:$0xf]
          %v1477 = vld [vmem:[%s1469 + $0x28] sm:$0xf]
          %v1478 = vld [vmem:[%s1469 + $0x30] sm:$0xf]
          %v1479 = vld [vmem:[%s1469 + $0x34] sm:$0xf]
          %v1480 = vld [vmem:[%s1469 + $0x3c] sm:$0xf]
          %v1481 = vld [vmem:[%s1469 + $0x40] sm:$0xf]
          %v1482 = vld [vmem:[%s1469 + $0x48] sm:$0xf]
          %v1483 = vld [vmem:[%s1469 + $0x4c] sm:$0xf]
          %v1484 = vld [vmem:[%s1469 + $0x54] sm:$0xf]
          %v1485 = vld [vmem:[%s1469 + $0x58] sm:$0xf]
          %v1486 = vld [vmem:[%s1469 + $0x60] sm:$0xf]
          %v1487 = vld [vmem:[%s1469 + $0x64] sm:$0xf]
          %v1488 = vld [vmem:[%s1469 + $0x6c] sm:$0xf]
          %v1489 = vld [vmem:[%s1469 + $0x70] sm:$0xf]
          %v1490 = vld [vmem:[%s1469 + $0x78] sm:$0xf]
          %v1491 = vld [vmem:[%s1469 + $0x7c] sm:$0xf]
          %v1492 = vld [vmem:[%s1469 + $0x84] sm:$0xf]
          %v1493 = vld [vmem:[%s1469 + $0x88] sm:$0xf]
          %v1494 = vld [vmem:[%s1469 + $0x90] sm:$0xf]
          %v1495 = vld [vmem:[%s1469 + $0x94] sm:$0xf]
          %v1496 = vld [vmem:[%s1469 + $0x9c] sm:$0xf]
          %v1497 = vld [vmem:[%s1469 + $0xa0] sm:$0xf]
          %v1498 = vld [vmem:[%s1469 + $0xa8] sm:$0xf]
          %v1499 = vld [vmem:[%s1469 + $0xac] sm:$0xf]
          %v1500 = vld [vmem:[%s1469 + $0xb4] sm:$0xf]
          %v1501 = vld [vmem:[%s1469 + $0xb8] sm:$0xf]
          %v1534 = vunpack.c.l.b16 %v1470
          %v1535 = vunpack.c.l.b16 %v1471
          %v1536 = vunpack.c.l.b16 %v1472
          %v1537 = vunpack.c.l.b16 %v1473
          %v1538 = vunpack.c.l.b16 %v1474
          %v1539 = vunpack.c.l.b16 %v1475
          %v1540 = vunpack.c.l.b16 %v1476
          %v1541 = vunpack.c.l.b16 %v1477
          %v1542 = vunpack.c.l.b16 %v1478
          %v1543 = vunpack.c.l.b16 %v1479
          %v1544 = vunpack.c.l.b16 %v1480
          %v1545 = vunpack.c.l.b16 %v1481
          %v1546 = vunpack.c.l.b16 %v1482
          %v1547 = vunpack.c.l.b16 %v1483
          %v1548 = vunpack.c.l.b16 %v1484
          %v1549 = vunpack.c.l.b16 %v1485
          %v1550 = vunpack.c.l.b16 %v1486
          %v1551 = vunpack.c.l.b16 %v1487
          %v1552 = vunpack.c.l.b16 %v1488
          %v1553 = vunpack.c.l.b16 %v1489
          %v1554 = vunpack.c.l.b16 %v1490
          %v1555 = vunpack.c.l.b16 %v1491
          %v1556 = vunpack.c.l.b16 %v1492
          %v1557 = vunpack.c.l.b16 %v1493
          %v1558 = vunpack.c.l.b16 %v1494
          %v1559 = vunpack.c.l.b16 %v1495
          %v1560 = vunpack.c.l.b16 %v1496
          %v1561 = vunpack.c.l.b16 %v1497
          %v1562 = vunpack.c.l.b16 %v1498
          %v1563 = vunpack.c.l.b16 %v1499
          %v1564 = vunpack.c.l.b16 %v1500
          %v1565 = vunpack.c.l.b16 %v1501
          %v1566 = vpack.c.b16 %v1535, %v1534
          %v1567 = vpack.c.b16 %v1537, %v1536
          %v1568 = vpack.c.b16 %v1539, %v1538
          %v1569 = vpack.c.b16 %v1541, %v1540
          %v1570 = vpack.c.b16 %v1543, %v1542
          %v1571 = vpack.c.b16 %v1545, %v1544
          %v1572 = vpack.c.b16 %v1547, %v1546
          %v1573 = vpack.c.b16 %v1549, %v1548
          %v1574 = vpack.c.b16 %v1551, %v1550
          %v1575 = vpack.c.b16 %v1553, %v1552
          %v1576 = vpack.c.b16 %v1555, %v1554
          %v1577 = vpack.c.b16 %v1557, %v1556
          %v1578 = vpack.c.b16 %v1559, %v1558
          %v1579 = vpack.c.b16 %v1561, %v1560
          %v1580 = vpack.c.b16 %v1563, %v1562
          %v1581 = vpack.c.b16 %v1565, %v1564
          %1582 = vrot.lane.b32.xlu0 %v1566, 24
          %v1583 = vpop.permute.xlu0 %1582
          %1584 = vrot.lane.b32.xlu0 %v1567, 24
          %v1585 = vpop.permute.xlu0 %1584
          %1586 = vrot.lane.b32.xlu0 %v1568, 24
          %v1587 = vpop.permute.xlu0 %1586
          %1588 = vrot.lane.b32.xlu0 %v1569, 24
          %v1589 = vpop.permute.xlu0 %1588
          %1590 = vrot.lane.b32.xlu0 %v1570, 24
          %v1591 = vpop.permute.xlu0 %1590
          %1592 = vrot.lane.b32.xlu0 %v1571, 24
          %v1593 = vpop.permute.xlu0 %1592
          %1594 = vrot.lane.b32.xlu0 %v1572, 24
          %v1595 = vpop.permute.xlu0 %1594
          %1596 = vrot.lane.b32.xlu0 %v1573, 24
          %v1597 = vpop.permute.xlu0 %1596
          %1598 = vrot.lane.b32.xlu0 %v1574, 24
          %v1599 = vpop.permute.xlu0 %1598
          %1600 = vrot.lane.b32.xlu0 %v1575, 24
          %v1601 = vpop.permute.xlu0 %1600
          %1602 = vrot.lane.b32.xlu0 %v1576, 24
          %v1603 = vpop.permute.xlu0 %1602
          %1604 = vrot.lane.b32.xlu0 %v1577, 24
          %v1605 = vpop.permute.xlu0 %1604
          %1606 = vrot.lane.b32.xlu0 %v1578, 24
          %v1607 = vpop.permute.xlu0 %1606
          %1608 = vrot.lane.b32.xlu0 %v1579, 24
          %v1609 = vpop.permute.xlu0 %1608
          %1610 = vrot.lane.b32.xlu0 %v1580, 24
          %v1611 = vpop.permute.xlu0 %1610
          %1612 = vrot.lane.b32.xlu0 %v1581, 24
          %v1613 = vpop.permute.xlu0 %1612
          %vm1630 = vcmask 261312
          %1631 = vst.msk [vmem:[#allocation3] sm:$0xff] %vm1630, %v1583
          %1632 = vst.msk [vmem:[#allocation3 + $0x8] sm:$0xff] %vm1630, %v1585
          %1633 = vst.msk [vmem:[#allocation3 + $0x10] sm:$0xff] %vm1630, %v1587
          %1634 = vst.msk [vmem:[#allocation3 + $0x18] sm:$0xff] %vm1630, %v1589
          %1635 = vst.msk [vmem:[#allocation3 + $0x20] sm:$0xff] %vm1630, %v1591
          %1636 = vst.msk [vmem:[#allocation3 + $0x28] sm:$0xff] %vm1630, %v1593
          %1637 = vst.msk [vmem:[#allocation3 + $0x30] sm:$0xff] %vm1630, %v1595
          %1638 = vst.msk [vmem:[#allocation3 + $0x38] sm:$0xff] %vm1630, %v1597
          %1639 = vst.msk [vmem:[#allocation3 + $0x40] sm:$0xff] %vm1630, %v1599
          %1640 = vst.msk [vmem:[#allocation3 + $0x48] sm:$0xff] %vm1630, %v1601
          %1641 = vst.msk [vmem:[#allocation3 + $0x50] sm:$0xff] %vm1630, %v1603
          %1642 = vst.msk [vmem:[#allocation3 + $0x58] sm:$0xff] %vm1630, %v1605
          %1643 = vst.msk [vmem:[#allocation3 + $0x60] sm:$0xff] %vm1630, %v1607
          %1644 = vst.msk [vmem:[#allocation3 + $0x68] sm:$0xff] %vm1630, %v1609
          %1645 = vst.msk [vmem:[#allocation3 + $0x70] sm:$0xff] %vm1630, %v1611
          %1646 = vst.msk [vmem:[#allocation3 + $0x78] sm:$0xff] %vm1630, %v1613
          %v1647 = vld [vmem:[%s1469] sm:$0xf]
          %v1648 = vld [vmem:[%s1469 + $0x4] sm:$0xf]
          %v1649 = vld [vmem:[%s1469 + $0x8] sm:$0x1]
          %v1650 = vld [vmem:[%s1469 + $0xc] sm:$0xf]
          %v1651 = vld [vmem:[%s1469 + $0x10] sm:$0xf]
          %v1652 = vld [vmem:[%s1469 + $0x14] sm:$0x1]
          %v1653 = vld [vmem:[%s1469 + $0x18] sm:$0xf]
          %v1654 = vld [vmem:[%s1469 + $0x1c] sm:$0xf]
          %v1655 = vld [vmem:[%s1469 + $0x20] sm:$0x1]
          %v1656 = vld [vmem:[%s1469 + $0x24] sm:$0xf]
          %v1657 = vld [vmem:[%s1469 + $0x28] sm:$0xf]
          %v1658 = vld [vmem:[%s1469 + $0x2c] sm:$0x1]
          %v1659 = vld [vmem:[%s1469 + $0x30] sm:$0xf]
          %v1660 = vld [vmem:[%s1469 + $0x34] sm:$0xf]
          %v1661 = vld [vmem:[%s1469 + $0x38] sm:$0x1]
          %v1662 = vld [vmem:[%s1469 + $0x3c] sm:$0xf]
          %v1663 = vld [vmem:[%s1469 + $0x40] sm:$0xf]
          %v1664 = vld [vmem:[%s1469 + $0x44] sm:$0x1]
          %v1665 = vld [vmem:[%s1469 + $0x48] sm:$0xf]
          %v1666 = vld [vmem:[%s1469 + $0x4c] sm:$0xf]
          %v1667 = vld [vmem:[%s1469 + $0x50] sm:$0x1]
          %v1668 = vld [vmem:[%s1469 + $0x54] sm:$0xf]
          %v1669 = vld [vmem:[%s1469 + $0x58] sm:$0xf]
          %v1670 = vld [vmem:[%s1469 + $0x5c] sm:$0x1]
          %v1671 = vld [vmem:[%s1469 + $0x60] sm:$0xf]
          %v1672 = vld [vmem:[%s1469 + $0x64] sm:$0xf]
          %v1673 = vld [vmem:[%s1469 + $0x68] sm:$0x1]
          %v1674 = vld [vmem:[%s1469 + $0x6c] sm:$0xf]
          %v1675 = vld [vmem:[%s1469 + $0x70] sm:$0xf]
          %v1676 = vld [vmem:[%s1469 + $0x74] sm:$0x1]
          %v1677 = vld [vmem:[%s1469 + $0x78] sm:$0xf]
          %v1678 = vld [vmem:[%s1469 + $0x7c] sm:$0xf]
          %v1679 = vld [vmem:[%s1469 + $0x80] sm:$0x1]
          %v1680 = vld [vmem:[%s1469 + $0x84] sm:$0xf]
          %v1681 = vld [vmem:[%s1469 + $0x88] sm:$0xf]
          %v1682 = vld [vmem:[%s1469 + $0x8c] sm:$0x1]
          %v1683 = vld [vmem:[%s1469 + $0x90] sm:$0xf]
          %v1684 = vld [vmem:[%s1469 + $0x94] sm:$0xf]
          %v1685 = vld [vmem:[%s1469 + $0x98] sm:$0x1]
          %v1686 = vld [vmem:[%s1469 + $0x9c] sm:$0xf]
          %v1687 = vld [vmem:[%s1469 + $0xa0] sm:$0xf]
          %v1688 = vld [vmem:[%s1469 + $0xa4] sm:$0x1]
          %v1689 = vld [vmem:[%s1469 + $0xa8] sm:$0xf]
          %v1690 = vld [vmem:[%s1469 + $0xac] sm:$0xf]
          %v1691 = vld [vmem:[%s1469 + $0xb0] sm:$0x1]
          %v1692 = vld [vmem:[%s1469 + $0xb4] sm:$0xf]
          %v1693 = vld [vmem:[%s1469 + $0xb8] sm:$0xf]
          %v1694 = vld [vmem:[%s1469 + $0xbc] sm:$0x1]
          %v1696 = vshrl.u32 %v1647, 16
          %v1698 = vrot.slane %v1696, 4
          %v1699 = vshll.u32 %v1647, 16
          %v1701 = vrot.slane %v1699, 5
          %v1702 = vor.u32 %v1698, %v1701
          %v1703 = vrot.slane %v1702, 4
          %v1705 = vshll.u32 %v1648, 16
          %v1707 = vrot.slane %v1705, 5
          %v1708 = vsel %vm645, %v1703, %v1707
          %v1709 = vshrl.u32 %v1648, 16
          %v1711 = vrot.slane %v1709, 4
          %v1712 = vor.u32 %v1711, %v1707
          %v1713 = vrot.slane %v1712, 4
          %v1715 = vshll.u32 %v1649, 16
          %v1717 = vrot.slane %v1715, 5
          %v1718 = vsel %vm645, %v1713, %v1717
          %v1720 = vshrl.u32 %v1650, 16
          %v1722 = vrot.slane %v1720, 4
          %v1723 = vshll.u32 %v1650, 16
          %v1725 = vrot.slane %v1723, 5
          %v1726 = vor.u32 %v1722, %v1725
          %v1727 = vrot.slane %v1726, 4
          %v1729 = vshll.u32 %v1651, 16
          %v1731 = vrot.slane %v1729, 5
          %v1732 = vsel %vm645, %v1727, %v1731
          %v1733 = vshrl.u32 %v1651, 16
          %v1735 = vrot.slane %v1733, 4
          %v1736 = vor.u32 %v1735, %v1731
          %v1737 = vrot.slane %v1736, 4
          %v1739 = vshll.u32 %v1652, 16
          %v1741 = vrot.slane %v1739, 5
          %v1742 = vsel %vm645, %v1737, %v1741
          %v1744 = vshrl.u32 %v1653, 16
          %v1746 = vrot.slane %v1744, 4
          %v1747 = vshll.u32 %v1653, 16
          %v1749 = vrot.slane %v1747, 5
          %v1750 = vor.u32 %v1746, %v1749
          %v1751 = vrot.slane %v1750, 4
          %v1753 = vshll.u32 %v1654, 16
          %v1755 = vrot.slane %v1753, 5
          %v1756 = vsel %vm645, %v1751, %v1755
          %v1757 = vshrl.u32 %v1654, 16
          %v1759 = vrot.slane %v1757, 4
          %v1760 = vor.u32 %v1759, %v1755
          %v1761 = vrot.slane %v1760, 4
          %v1763 = vshll.u32 %v1655, 16
          %v1765 = vrot.slane %v1763, 5
          %v1766 = vsel %vm645, %v1761, %v1765
          %v1768 = vshrl.u32 %v1656, 16
          %v1770 = vrot.slane %v1768, 4
          %v1771 = vshll.u32 %v1656, 16
          %v1773 = vrot.slane %v1771, 5
          %v1774 = vor.u32 %v1770, %v1773
          %v1775 = vrot.slane %v1774, 4
          %v1777 = vshll.u32 %v1657, 16
          %v1779 = vrot.slane %v1777, 5
          %v1780 = vsel %vm645, %v1775, %v1779
          %v1781 = vshrl.u32 %v1657, 16
          %v1783 = vrot.slane %v1781, 4
          %v1784 = vor.u32 %v1783, %v1779
          %v1785 = vrot.slane %v1784, 4
          %v1787 = vshll.u32 %v1658, 16
          %v1789 = vrot.slane %v1787, 5
          %v1790 = vsel %vm645, %v1785, %v1789
          %v1792 = vshrl.u32 %v1659, 16
          %v1794 = vrot.slane %v1792, 4
          %v1795 = vshll.u32 %v1659, 16
          %v1797 = vrot.slane %v1795, 5
          %v1798 = vor.u32 %v1794, %v1797
          %v1799 = vrot.slane %v1798, 4
          %v1801 = vshll.u32 %v1660, 16
          %v1803 = vrot.slane %v1801, 5
          %v1804 = vsel %vm645, %v1799, %v1803
          %v1805 = vshrl.u32 %v1660, 16
          %v1807 = vrot.slane %v1805, 4
          %v1808 = vor.u32 %v1807, %v1803
          %v1809 = vrot.slane %v1808, 4
          %v1811 = vshll.u32 %v1661, 16
          %v1813 = vrot.slane %v1811, 5
          %v1814 = vsel %vm645, %v1809, %v1813
          %v1816 = vshrl.u32 %v1662, 16
          %v1818 = vrot.slane %v1816, 4
          %v1819 = vshll.u32 %v1662, 16
          %v1821 = vrot.slane %v1819, 5
          %v1822 = vor.u32 %v1818, %v1821
          %v1823 = vrot.slane %v1822, 4
          %v1825 = vshll.u32 %v1663, 16
          %v1827 = vrot.slane %v1825, 5
          %v1828 = vsel %vm645, %v1823, %v1827
          %v1829 = vshrl.u32 %v1663, 16
          %v1831 = vrot.slane %v1829, 4
          %v1832 = vor.u32 %v1831, %v1827
          %v1833 = vrot.slane %v1832, 4
          %v1835 = vshll.u32 %v1664, 16
          %v1837 = vrot.slane %v1835, 5
          %v1838 = vsel %vm645, %v1833, %v1837
          %v1840 = vshrl.u32 %v1665, 16
          %v1842 = vrot.slane %v1840, 4
          %v1843 = vshll.u32 %v1665, 16
          %v1845 = vrot.slane %v1843, 5
          %v1846 = vor.u32 %v1842, %v1845
          %v1847 = vrot.slane %v1846, 4
          %v1849 = vshll.u32 %v1666, 16
          %v1851 = vrot.slane %v1849, 5
          %v1852 = vsel %vm645, %v1847, %v1851
          %v1853 = vshrl.u32 %v1666, 16
          %v1855 = vrot.slane %v1853, 4
          %v1856 = vor.u32 %v1855, %v1851
          %v1857 = vrot.slane %v1856, 4
          %v1859 = vshll.u32 %v1667, 16
          %v1861 = vrot.slane %v1859, 5
          %v1862 = vsel %vm645, %v1857, %v1861
          %v1864 = vshrl.u32 %v1668, 16
          %v1866 = vrot.slane %v1864, 4
          %v1867 = vshll.u32 %v1668, 16
          %v1869 = vrot.slane %v1867, 5
          %v1870 = vor.u32 %v1866, %v1869
          %v1871 = vrot.slane %v1870, 4
          %v1873 = vshll.u32 %v1669, 16
          %v1875 = vrot.slane %v1873, 5
          %v1876 = vsel %vm645, %v1871, %v1875
          %v1877 = vshrl.u32 %v1669, 16
          %v1879 = vrot.slane %v1877, 4
          %v1880 = vor.u32 %v1879, %v1875
          %v1881 = vrot.slane %v1880, 4
          %v1883 = vshll.u32 %v1670, 16
          %v1885 = vrot.slane %v1883, 5
          %v1886 = vsel %vm645, %v1881, %v1885
          %v1888 = vshrl.u32 %v1671, 16
          %v1890 = vrot.slane %v1888, 4
          %v1891 = vshll.u32 %v1671, 16
          %v1893 = vrot.slane %v1891, 5
          %v1894 = vor.u32 %v1890, %v1893
          %v1895 = vrot.slane %v1894, 4
          %v1897 = vshll.u32 %v1672, 16
          %v1899 = vrot.slane %v1897, 5
          %v1900 = vsel %vm645, %v1895, %v1899
          %v1901 = vshrl.u32 %v1672, 16
          %v1903 = vrot.slane %v1901, 4
          %v1904 = vor.u32 %v1903, %v1899
          %v1905 = vrot.slane %v1904, 4
          %v1907 = vshll.u32 %v1673, 16
          %v1909 = vrot.slane %v1907, 5
          %v1910 = vsel %vm645, %v1905, %v1909
          %v1912 = vshrl.u32 %v1674, 16
          %v1914 = vrot.slane %v1912, 4
          %v1915 = vshll.u32 %v1674, 16
          %v1917 = vrot.slane %v1915, 5
          %v1918 = vor.u32 %v1914, %v1917
          %v1919 = vrot.slane %v1918, 4
          %v1921 = vshll.u32 %v1675, 16
          %v1923 = vrot.slane %v1921, 5
          %v1924 = vsel %vm645, %v1919, %v1923
          %v1925 = vshrl.u32 %v1675, 16
          %v1927 = vrot.slane %v1925, 4
          %v1928 = vor.u32 %v1927, %v1923
          %v1929 = vrot.slane %v1928, 4
          %v1931 = vshll.u32 %v1676, 16
          %v1933 = vrot.slane %v1931, 5
          %v1934 = vsel %vm645, %v1929, %v1933
          %v1936 = vshrl.u32 %v1677, 16
          %v1938 = vrot.slane %v1936, 4
          %v1939 = vshll.u32 %v1677, 16
          %v1941 = vrot.slane %v1939, 5
          %v1942 = vor.u32 %v1938, %v1941
          %v1943 = vrot.slane %v1942, 4
          %v1945 = vshll.u32 %v1678, 16
          %v1947 = vrot.slane %v1945, 5
          %v1948 = vsel %vm645, %v1943, %v1947
          %v1949 = vshrl.u32 %v1678, 16
          %v1951 = vrot.slane %v1949, 4
          %v1952 = vor.u32 %v1951, %v1947
          %v1953 = vrot.slane %v1952, 4
          %v1955 = vshll.u32 %v1679, 16
          %v1957 = vrot.slane %v1955, 5
          %v1958 = vsel %vm645, %v1953, %v1957
          %v1960 = vshrl.u32 %v1680, 16
          %v1962 = vrot.slane %v1960, 4
          %v1963 = vshll.u32 %v1680, 16
          %v1965 = vrot.slane %v1963, 5
          %v1966 = vor.u32 %v1962, %v1965
          %v1967 = vrot.slane %v1966, 4
          %v1969 = vshll.u32 %v1681, 16
          %v1971 = vrot.slane %v1969, 5
          %v1972 = vsel %vm645, %v1967, %v1971
          %v1973 = vshrl.u32 %v1681, 16
          %v1975 = vrot.slane %v1973, 4
          %v1976 = vor.u32 %v1975, %v1971
          %v1977 = vrot.slane %v1976, 4
          %v1979 = vshll.u32 %v1682, 16
          %v1981 = vrot.slane %v1979, 5
          %v1982 = vsel %vm645, %v1977, %v1981
          %v1984 = vshrl.u32 %v1683, 16
          %v1986 = vrot.slane %v1984, 4
          %v1987 = vshll.u32 %v1683, 16
          %v1989 = vrot.slane %v1987, 5
          %v1990 = vor.u32 %v1986, %v1989
          %v1991 = vrot.slane %v1990, 4
          %v1993 = vshll.u32 %v1684, 16
          %v1995 = vrot.slane %v1993, 5
          %v1996 = vsel %vm645, %v1991, %v1995
          %v1997 = vshrl.u32 %v1684, 16
          %v1999 = vrot.slane %v1997, 4
          %v2000 = vor.u32 %v1999, %v1995
          %v2001 = vrot.slane %v2000, 4
          %v2003 = vshll.u32 %v1685, 16
          %v2005 = vrot.slane %v2003, 5
          %v2006 = vsel %vm645, %v2001, %v2005
          %v2008 = vshrl.u32 %v1686, 16
          %v2010 = vrot.slane %v2008, 4
          %v2011 = vshll.u32 %v1686, 16
          %v2013 = vrot.slane %v2011, 5
          %v2014 = vor.u32 %v2010, %v2013
          %v2015 = vrot.slane %v2014, 4
          %v2017 = vshll.u32 %v1687, 16
          %v2019 = vrot.slane %v2017, 5
          %v2020 = vsel %vm645, %v2015, %v2019
          %v2021 = vshrl.u32 %v1687, 16
          %v2023 = vrot.slane %v2021, 4
          %v2024 = vor.u32 %v2023, %v2019
          %v2025 = vrot.slane %v2024, 4
          %v2027 = vshll.u32 %v1688, 16
          %v2029 = vrot.slane %v2027, 5
          %v2030 = vsel %vm645, %v2025, %v2029
          %v2032 = vshrl.u32 %v1689, 16
          %v2034 = vrot.slane %v2032, 4
          %v2035 = vshll.u32 %v1689, 16
          %v2037 = vrot.slane %v2035, 5
          %v2038 = vor.u32 %v2034, %v2037
          %v2039 = vrot.slane %v2038, 4
          %v2041 = vshll.u32 %v1690, 16
          %v2043 = vrot.slane %v2041, 5
          %v2044 = vsel %vm645, %v2039, %v2043
          %v2045 = vshrl.u32 %v1690, 16
          %v2047 = vrot.slane %v2045, 4
          %v2048 = vor.u32 %v2047, %v2043
          %v2049 = vrot.slane %v2048, 4
          %v2051 = vshll.u32 %v1691, 16
          %v2053 = vrot.slane %v2051, 5
          %v2054 = vsel %vm645, %v2049, %v2053
          %v2056 = vshrl.u32 %v1692, 16
          %v2058 = vrot.slane %v2056, 4
          %v2059 = vshll.u32 %v1692, 16
          %v2061 = vrot.slane %v2059, 5
          %v2062 = vor.u32 %v2058, %v2061
          %v2063 = vrot.slane %v2062, 4
          %v2065 = vshll.u32 %v1693, 16
          %v2067 = vrot.slane %v2065, 5
          %v2068 = vsel %vm645, %v2063, %v2067
          %v2069 = vshrl.u32 %v1693, 16
          %v2071 = vrot.slane %v2069, 4
          %v2072 = vor.u32 %v2071, %v2067
          %v2073 = vrot.slane %v2072, 4
          %v2075 = vshll.u32 %v1694, 16
          %v2077 = vrot.slane %v2075, 5
          %v2078 = vsel %vm645, %v2073, %v2077
          %v2079 = vunpack.c.l.b16 %v1708
          %v2080 = vunpack.c.l.b16 %v1718
          %v2081 = vunpack.c.l.b16 %v1732
          %v2082 = vunpack.c.l.b16 %v1742
          %v2083 = vunpack.c.l.b16 %v1756
          %v2084 = vunpack.c.l.b16 %v1766
          %v2085 = vunpack.c.l.b16 %v1780
          %v2086 = vunpack.c.l.b16 %v1790
          %v2087 = vunpack.c.l.b16 %v1804
          %v2088 = vunpack.c.l.b16 %v1814
          %v2089 = vunpack.c.l.b16 %v1828
          %v2090 = vunpack.c.l.b16 %v1838
          %v2091 = vunpack.c.l.b16 %v1852
          %v2092 = vunpack.c.l.b16 %v1862
          %v2093 = vunpack.c.l.b16 %v1876
          %v2094 = vunpack.c.l.b16 %v1886
          %v2095 = vunpack.c.l.b16 %v1900
          %v2096 = vunpack.c.l.b16 %v1910
          %v2097 = vunpack.c.l.b16 %v1924
          %v2098 = vunpack.c.l.b16 %v1934
          %v2099 = vunpack.c.l.b16 %v1948
          %v2100 = vunpack.c.l.b16 %v1958
          %v2101 = vunpack.c.l.b16 %v1972
          %v2102 = vunpack.c.l.b16 %v1982
          %v2103 = vunpack.c.l.b16 %v1996
          %v2104 = vunpack.c.l.b16 %v2006
          %v2105 = vunpack.c.l.b16 %v2020
          %v2106 = vunpack.c.l.b16 %v2030
          %v2107 = vunpack.c.l.b16 %v2044
          %v2108 = vunpack.c.l.b16 %v2054
          %v2109 = vunpack.c.l.b16 %v2068
          %v2110 = vunpack.c.l.b16 %v2078
          %v2111 = vpack.c.b16 %v2080, %v2079
          %v2112 = vpack.c.b16 %v2082, %v2081
          %v2113 = vpack.c.b16 %v2084, %v2083
          %v2114 = vpack.c.b16 %v2086, %v2085
          %v2115 = vpack.c.b16 %v2088, %v2087
          %v2116 = vpack.c.b16 %v2090, %v2089
          %v2117 = vpack.c.b16 %v2092, %v2091
          %v2118 = vpack.c.b16 %v2094, %v2093
          %v2119 = vpack.c.b16 %v2096, %v2095
          %v2120 = vpack.c.b16 %v2098, %v2097
          %v2121 = vpack.c.b16 %v2100, %v2099
          %v2122 = vpack.c.b16 %v2102, %v2101
          %v2123 = vpack.c.b16 %v2104, %v2103
          %v2124 = vpack.c.b16 %v2106, %v2105
          %v2125 = vpack.c.b16 %v2108, %v2107
          %v2126 = vpack.c.b16 %v2110, %v2109
          %2127 = vrot.lane.b32.xlu0 %v2111, 32
          %v2128 = vpop.permute.xlu0 %2127
          %2129 = vrot.lane.b32.xlu0 %v2112, 32
          %v2130 = vpop.permute.xlu0 %2129
          %2131 = vrot.lane.b32.xlu0 %v2113, 32
          %v2132 = vpop.permute.xlu0 %2131
          %2133 = vrot.lane.b32.xlu0 %v2114, 32
          %v2134 = vpop.permute.xlu0 %2133
          %2135 = vrot.lane.b32.xlu0 %v2115, 32
          %v2136 = vpop.permute.xlu0 %2135
          %2137 = vrot.lane.b32.xlu0 %v2116, 32
          %v2138 = vpop.permute.xlu0 %2137
          %2139 = vrot.lane.b32.xlu0 %v2117, 32
          %v2140 = vpop.permute.xlu0 %2139
          %2141 = vrot.lane.b32.xlu0 %v2118, 32
          %v2142 = vpop.permute.xlu0 %2141
          %2143 = vrot.lane.b32.xlu0 %v2119, 32
          %v2144 = vpop.permute.xlu0 %2143
          %2145 = vrot.lane.b32.xlu0 %v2120, 32
          %v2146 = vpop.permute.xlu0 %2145
          %2147 = vrot.lane.b32.xlu0 %v2121, 32
          %v2148 = vpop.permute.xlu0 %2147
          %2149 = vrot.lane.b32.xlu0 %v2122, 32
          %v2150 = vpop.permute.xlu0 %2149
          %2151 = vrot.lane.b32.xlu0 %v2123, 32
          %v2152 = vpop.permute.xlu0 %2151
          %2153 = vrot.lane.b32.xlu0 %v2124, 32
          %v2154 = vpop.permute.xlu0 %2153
          %2155 = vrot.lane.b32.xlu0 %v2125, 32
          %v2156 = vpop.permute.xlu0 %2155
          %2157 = vrot.lane.b32.xlu0 %v2126, 32
          %v2158 = vpop.permute.xlu0 %2157
          %vm2175 = vcmask 326912
          %2176 = vst.msk [vmem:[#allocation3] sm:$0xff] %vm2175, %v2128
          %2177 = vst.msk [vmem:[#allocation3 + $0x8] sm:$0xff] %vm2175, %v2130
          %2178 = vst.msk [vmem:[#allocation3 + $0x10] sm:$0xff] %vm2175, %v2132
          %2179 = vst.msk [vmem:[#allocation3 + $0x18] sm:$0xff] %vm2175, %v2134
          %2180 = vst.msk [vmem:[#allocation3 + $0x20] sm:$0xff] %vm2175, %v2136
          %2181 = vst.msk [vmem:[#allocation3 + $0x28] sm:$0xff] %vm2175, %v2138
          %2182 = vst.msk [vmem:[#allocation3 + $0x30] sm:$0xff] %vm2175, %v2140
          %2183 = vst.msk [vmem:[#allocation3 + $0x38] sm:$0xff] %vm2175, %v2142
          %2184 = vst.msk [vmem:[#allocation3 + $0x40] sm:$0xff] %vm2175, %v2144
          %2185 = vst.msk [vmem:[#allocation3 + $0x48] sm:$0xff] %vm2175, %v2146
          %2186 = vst.msk [vmem:[#allocation3 + $0x50] sm:$0xff] %vm2175, %v2148
          %2187 = vst.msk [vmem:[#allocation3 + $0x58] sm:$0xff] %vm2175, %v2150
          %2188 = vst.msk [vmem:[#allocation3 + $0x60] sm:$0xff] %vm2175, %v2152
          %2189 = vst.msk [vmem:[#allocation3 + $0x68] sm:$0xff] %vm2175, %v2154
          %2190 = vst.msk [vmem:[#allocation3 + $0x70] sm:$0xff] %vm2175, %v2156
          %2191 = vst.msk [vmem:[#allocation3 + $0x78] sm:$0xff] %vm2175, %v2158
          %v2192 = vld [vmem:[%s1469] sm:$0xe]
          %v2193 = vld [vmem:[%s1469 + $0x4] sm:$0xf]
          %v2194 = vld [vmem:[%s1469 + $0x8] sm:$0x1]
          %v2195 = vld [vmem:[%s1469 + $0xc] sm:$0xe]
          %v2196 = vld [vmem:[%s1469 + $0x10] sm:$0xf]
          %v2197 = vld [vmem:[%s1469 + $0x14] sm:$0x1]
          %v2198 = vld [vmem:[%s1469 + $0x18] sm:$0xe]
          %v2199 = vld [vmem:[%s1469 + $0x1c] sm:$0xf]
          %v2200 = vld [vmem:[%s1469 + $0x20] sm:$0x1]
          %v2201 = vld [vmem:[%s1469 + $0x24] sm:$0xe]
          %v2202 = vld [vmem:[%s1469 + $0x28] sm:$0xf]
          %v2203 = vld [vmem:[%s1469 + $0x2c] sm:$0x1]
          %v2204 = vld [vmem:[%s1469 + $0x30] sm:$0xe]
          %v2205 = vld [vmem:[%s1469 + $0x34] sm:$0xf]
          %v2206 = vld [vmem:[%s1469 + $0x38] sm:$0x1]
          %v2207 = vld [vmem:[%s1469 + $0x3c] sm:$0xe]
          %v2208 = vld [vmem:[%s1469 + $0x40] sm:$0xf]
          %v2209 = vld [vmem:[%s1469 + $0x44] sm:$0x1]
          %v2210 = vld [vmem:[%s1469 + $0x48] sm:$0xe]
          %v2211 = vld [vmem:[%s1469 + $0x4c] sm:$0xf]
          %v2212 = vld [vmem:[%s1469 + $0x50] sm:$0x1]
          %v2213 = vld [vmem:[%s1469 + $0x54] sm:$0xe]
          %v2214 = vld [vmem:[%s1469 + $0x58] sm:$0xf]
          %v2215 = vld [vmem:[%s1469 + $0x5c] sm:$0x1]
          %v2216 = vld [vmem:[%s1469 + $0x60] sm:$0xe]
          %v2217 = vld [vmem:[%s1469 + $0x64] sm:$0xf]
          %v2218 = vld [vmem:[%s1469 + $0x68] sm:$0x1]
          %v2219 = vld [vmem:[%s1469 + $0x6c] sm:$0xe]
          %v2220 = vld [vmem:[%s1469 + $0x70] sm:$0xf]
          %v2221 = vld [vmem:[%s1469 + $0x74] sm:$0x1]
          %v2222 = vld [vmem:[%s1469 + $0x78] sm:$0xe]
          %v2223 = vld [vmem:[%s1469 + $0x7c] sm:$0xf]
          %v2224 = vld [vmem:[%s1469 + $0x80] sm:$0x1]
          %v2225 = vld [vmem:[%s1469 + $0x84] sm:$0xe]
          %v2226 = vld [vmem:[%s1469 + $0x88] sm:$0xf]
          %v2227 = vld [vmem:[%s1469 + $0x8c] sm:$0x1]
          %v2228 = vld [vmem:[%s1469 + $0x90] sm:$0xe]
          %v2229 = vld [vmem:[%s1469 + $0x94] sm:$0xf]
          %v2230 = vld [vmem:[%s1469 + $0x98] sm:$0x1]
          %v2231 = vld [vmem:[%s1469 + $0x9c] sm:$0xe]
          %v2232 = vld [vmem:[%s1469 + $0xa0] sm:$0xf]
          %v2233 = vld [vmem:[%s1469 + $0xa4] sm:$0x1]
          %v2234 = vld [vmem:[%s1469 + $0xa8] sm:$0xe]
          %v2235 = vld [vmem:[%s1469 + $0xac] sm:$0xf]
          %v2236 = vld [vmem:[%s1469 + $0xb0] sm:$0x1]
          %v2237 = vld [vmem:[%s1469 + $0xb4] sm:$0xe]
          %v2238 = vld [vmem:[%s1469 + $0xb8] sm:$0xf]
          %v2239 = vld [vmem:[%s1469 + $0xbc] sm:$0x1]
          %v2288 = vrot.slane %v2192, 5
          %v2289 = vrot.slane %v2288, 4
          %v2290 = vrot.slane %v2193, 5
          %v2291 = vsel %vm1241, %v2289, %v2290
          %v2292 = vrot.slane %v2290, 4
          %v2293 = vrot.slane %v2194, 5
          %v2294 = vsel %vm1241, %v2292, %v2293
          %v2295 = vrot.slane %v2195, 5
          %v2296 = vrot.slane %v2295, 4
          %v2297 = vrot.slane %v2196, 5
          %v2298 = vsel %vm1241, %v2296, %v2297
          %v2299 = vrot.slane %v2297, 4
          %v2300 = vrot.slane %v2197, 5
          %v2301 = vsel %vm1241, %v2299, %v2300
          %v2302 = vrot.slane %v2198, 5
          %v2303 = vrot.slane %v2302, 4
          %v2304 = vrot.slane %v2199, 5
          %v2305 = vsel %vm1241, %v2303, %v2304
          %v2306 = vrot.slane %v2304, 4
          %v2307 = vrot.slane %v2200, 5
          %v2308 = vsel %vm1241, %v2306, %v2307
          %v2309 = vrot.slane %v2201, 5
          %v2310 = vrot.slane %v2309, 4
          %v2311 = vrot.slane %v2202, 5
          %v2312 = vsel %vm1241, %v2310, %v2311
          %v2313 = vrot.slane %v2311, 4
          %v2314 = vrot.slane %v2203, 5
          %v2315 = vsel %vm1241, %v2313, %v2314
          %v2316 = vrot.slane %v2204, 5
          %v2317 = vrot.slane %v2316, 4
          %v2318 = vrot.slane %v2205, 5
          %v2319 = vsel %vm1241, %v2317, %v2318
          %v2320 = vrot.slane %v2318, 4
          %v2321 = vrot.slane %v2206, 5
          %v2322 = vsel %vm1241, %v2320, %v2321
          %v2323 = vrot.slane %v2207, 5
          %v2324 = vrot.slane %v2323, 4
          %v2325 = vrot.slane %v2208, 5
          %v2326 = vsel %vm1241, %v2324, %v2325
          %v2327 = vrot.slane %v2325, 4
          %v2328 = vrot.slane %v2209, 5
          %v2329 = vsel %vm1241, %v2327, %v2328
          %v2330 = vrot.slane %v2210, 5
          %v2331 = vrot.slane %v2330, 4
          %v2332 = vrot.slane %v2211, 5
          %v2333 = vsel %vm1241, %v2331, %v2332
          %v2334 = vrot.slane %v2332, 4
          %v2335 = vrot.slane %v2212, 5
          %v2336 = vsel %vm1241, %v2334, %v2335
          %v2337 = vrot.slane %v2213, 5
          %v2338 = vrot.slane %v2337, 4
          %v2339 = vrot.slane %v2214, 5
          %v2340 = vsel %vm1241, %v2338, %v2339
          %v2341 = vrot.slane %v2339, 4
          %v2342 = vrot.slane %v2215, 5
          %v2343 = vsel %vm1241, %v2341, %v2342
          %v2344 = vrot.slane %v2216, 5
          %v2345 = vrot.slane %v2344, 4
          %v2346 = vrot.slane %v2217, 5
          %v2347 = vsel %vm1241, %v2345, %v2346
          %v2348 = vrot.slane %v2346, 4
          %v2349 = vrot.slane %v2218, 5
          %v2350 = vsel %vm1241, %v2348, %v2349
          %v2351 = vrot.slane %v2219, 5
          %v2352 = vrot.slane %v2351, 4
          %v2353 = vrot.slane %v2220, 5
          %v2354 = vsel %vm1241, %v2352, %v2353
          %v2355 = vrot.slane %v2353, 4
          %v2356 = vrot.slane %v2221, 5
          %v2357 = vsel %vm1241, %v2355, %v2356
          %v2358 = vrot.slane %v2222, 5
          %v2359 = vrot.slane %v2358, 4
          %v2360 = vrot.slane %v2223, 5
          %v2361 = vsel %vm1241, %v2359, %v2360
          %v2362 = vrot.slane %v2360, 4
          %v2363 = vrot.slane %v2224, 5
          %v2364 = vsel %vm1241, %v2362, %v2363
          %v2365 = vrot.slane %v2225, 5
          %v2366 = vrot.slane %v2365, 4
          %v2367 = vrot.slane %v2226, 5
          %v2368 = vsel %vm1241, %v2366, %v2367
          %v2369 = vrot.slane %v2367, 4
          %v2370 = vrot.slane %v2227, 5
          %v2371 = vsel %vm1241, %v2369, %v2370
          %v2372 = vrot.slane %v2228, 5
          %v2373 = vrot.slane %v2372, 4
          %v2374 = vrot.slane %v2229, 5
          %v2375 = vsel %vm1241, %v2373, %v2374
          %v2376 = vrot.slane %v2374, 4
          %v2377 = vrot.slane %v2230, 5
          %v2378 = vsel %vm1241, %v2376, %v2377
          %v2379 = vrot.slane %v2231, 5
          %v2380 = vrot.slane %v2379, 4
          %v2381 = vrot.slane %v2232, 5
          %v2382 = vsel %vm1241, %v2380, %v2381
          %v2383 = vrot.slane %v2381, 4
          %v2384 = vrot.slane %v2233, 5
          %v2385 = vsel %vm1241, %v2383, %v2384
          %v2386 = vrot.slane %v2234, 5
          %v2387 = vrot.slane %v2386, 4
          %v2388 = vrot.slane %v2235, 5
          %v2389 = vsel %vm1241, %v2387, %v2388
          %v2390 = vrot.slane %v2388, 4
          %v2391 = vrot.slane %v2236, 5
          %v2392 = vsel %vm1241, %v2390, %v2391
          %v2393 = vrot.slane %v2237, 5
          %v2394 = vrot.slane %v2393, 4
          %v2395 = vrot.slane %v2238, 5
          %v2396 = vsel %vm1241, %v2394, %v2395
          %v2397 = vrot.slane %v2395, 4
          %v2398 = vrot.slane %v2239, 5
          %v2399 = vsel %vm1241, %v2397, %v2398
          %v2400 = vunpack.c.l.b16 %v2291
          %v2401 = vunpack.c.l.b16 %v2294
          %v2402 = vunpack.c.l.b16 %v2298
          %v2403 = vunpack.c.l.b16 %v2301
          %v2404 = vunpack.c.l.b16 %v2305
          %v2405 = vunpack.c.l.b16 %v2308
          %v2406 = vunpack.c.l.b16 %v2312
          %v2407 = vunpack.c.l.b16 %v2315
          %v2408 = vunpack.c.l.b16 %v2319
          %v2409 = vunpack.c.l.b16 %v2322
          %v2410 = vunpack.c.l.b16 %v2326
          %v2411 = vunpack.c.l.b16 %v2329
          %v2412 = vunpack.c.l.b16 %v2333
          %v2413 = vunpack.c.l.b16 %v2336
          %v2414 = vunpack.c.l.b16 %v2340
          %v2415 = vunpack.c.l.b16 %v2343
          %v2416 = vunpack.c.l.b16 %v2347
          %v2417 = vunpack.c.l.b16 %v2350
          %v2418 = vunpack.c.l.b16 %v2354
          %v2419 = vunpack.c.l.b16 %v2357
          %v2420 = vunpack.c.l.b16 %v2361
          %v2421 = vunpack.c.l.b16 %v2364
          %v2422 = vunpack.c.l.b16 %v2368
          %v2423 = vunpack.c.l.b16 %v2371
          %v2424 = vunpack.c.l.b16 %v2375
          %v2425 = vunpack.c.l.b16 %v2378
          %v2426 = vunpack.c.l.b16 %v2382
          %v2427 = vunpack.c.l.b16 %v2385
          %v2428 = vunpack.c.l.b16 %v2389
          %v2429 = vunpack.c.l.b16 %v2392
          %v2430 = vunpack.c.l.b16 %v2396
          %v2431 = vunpack.c.l.b16 %v2399
          %v2432 = vpack.c.b16 %v2401, %v2400
          %v2433 = vpack.c.b16 %v2403, %v2402
          %v2434 = vpack.c.b16 %v2405, %v2404
          %v2435 = vpack.c.b16 %v2407, %v2406
          %v2436 = vpack.c.b16 %v2409, %v2408
          %v2437 = vpack.c.b16 %v2411, %v2410
          %v2438 = vpack.c.b16 %v2413, %v2412
          %v2439 = vpack.c.b16 %v2415, %v2414
          %v2440 = vpack.c.b16 %v2417, %v2416
          %v2441 = vpack.c.b16 %v2419, %v2418
          %v2442 = vpack.c.b16 %v2421, %v2420
          %v2443 = vpack.c.b16 %v2423, %v2422
          %v2444 = vpack.c.b16 %v2425, %v2424
          %v2445 = vpack.c.b16 %v2427, %v2426
          %v2446 = vpack.c.b16 %v2429, %v2428
          %v2447 = vpack.c.b16 %v2431, %v2430
          %2448 = vrot.lane.b32.xlu0 %v2432, 40
          %v2449 = vpop.permute.xlu0 %2448
          %2450 = vrot.lane.b32.xlu0 %v2433, 40
          %v2451 = vpop.permute.xlu0 %2450
          %2452 = vrot.lane.b32.xlu0 %v2434, 40
          %v2453 = vpop.permute.xlu0 %2452
          %2454 = vrot.lane.b32.xlu0 %v2435, 40
          %v2455 = vpop.permute.xlu0 %2454
          %2456 = vrot.lane.b32.xlu0 %v2436, 40
          %v2457 = vpop.permute.xlu0 %2456
          %2458 = vrot.lane.b32.xlu0 %v2437, 40
          %v2459 = vpop.permute.xlu0 %2458
          %2460 = vrot.lane.b32.xlu0 %v2438, 40
          %v2461 = vpop.permute.xlu0 %2460
          %2462 = vrot.lane.b32.xlu0 %v2439, 40
          %v2463 = vpop.permute.xlu0 %2462
          %2464 = vrot.lane.b32.xlu0 %v2440, 40
          %v2465 = vpop.permute.xlu0 %2464
          %2466 = vrot.lane.b32.xlu0 %v2441, 40
          %v2467 = vpop.permute.xlu0 %2466
          %2468 = vrot.lane.b32.xlu0 %v2442, 40
          %v2469 = vpop.permute.xlu0 %2468
          %2470 = vrot.lane.b32.xlu0 %v2443, 40
          %v2471 = vpop.permute.xlu0 %2470
          %2472 = vrot.lane.b32.xlu0 %v2444, 40
          %v2473 = vpop.permute.xlu0 %2472
          %2474 = vrot.lane.b32.xlu0 %v2445, 40
          %v2475 = vpop.permute.xlu0 %2474
          %2476 = vrot.lane.b32.xlu0 %v2446, 40
          %v2477 = vpop.permute.xlu0 %2476
          %2478 = vrot.lane.b32.xlu0 %v2447, 40
          %v2479 = vpop.permute.xlu0 %2478
          %vm2496 = vcmask 392512
          %2497 = vst.msk [vmem:[#allocation3] sm:$0xff] %vm2496, %v2449
          %2498 = vst.msk [vmem:[#allocation3 + $0x8] sm:$0xff] %vm2496, %v2451
          %2499 = vst.msk [vmem:[#allocation3 + $0x10] sm:$0xff] %vm2496, %v2453
          %2500 = vst.msk [vmem:[#allocation3 + $0x18] sm:$0xff] %vm2496, %v2455
          %2501 = vst.msk [vmem:[#allocation3 + $0x20] sm:$0xff] %vm2496, %v2457
          %2502 = vst.msk [vmem:[#allocation3 + $0x28] sm:$0xff] %vm2496, %v2459
          %2503 = vst.msk [vmem:[#allocation3 + $0x30] sm:$0xff] %vm2496, %v2461
          %2504 = vst.msk [vmem:[#allocation3 + $0x38] sm:$0xff] %vm2496, %v2463
          %2505 = vst.msk [vmem:[#allocation3 + $0x40] sm:$0xff] %vm2496, %v2465
          %2506 = vst.msk [vmem:[#allocation3 + $0x48] sm:$0xff] %vm2496, %v2467
          %2507 = vst.msk [vmem:[#allocation3 + $0x50] sm:$0xff] %vm2496, %v2469
          %2508 = vst.msk [vmem:[#allocation3 + $0x58] sm:$0xff] %vm2496, %v2471
          %2509 = vst.msk [vmem:[#allocation3 + $0x60] sm:$0xff] %vm2496, %v2473
          %2510 = vst.msk [vmem:[#allocation3 + $0x68] sm:$0xff] %vm2496, %v2475
          %2511 = vst.msk [vmem:[#allocation3 + $0x70] sm:$0xff] %vm2496, %v2477
          %2512 = vst.msk [vmem:[#allocation3 + $0x78] sm:$0xff] %vm2496, %v2479
          %s2513 = sadd.s32 6, %s447
          %s2514 = smul.addr %s2513, 4
          %s2515 = scalar_lea.vmem [#allocation2], %s2514
          %v2516 = vld [vmem:[%s2515] sm:$0xf]
          %v2517 = vld [vmem:[%s2515 + $0x4] sm:$0xf]
          %v2518 = vld [vmem:[%s2515 + $0xc] sm:$0xf]
          %v2519 = vld [vmem:[%s2515 + $0x10] sm:$0xf]
          %v2520 = vld [vmem:[%s2515 + $0x18] sm:$0xf]
          %v2521 = vld [vmem:[%s2515 + $0x1c] sm:$0xf]
          %v2522 = vld [vmem:[%s2515 + $0x24] sm:$0xf]
          %v2523 = vld [vmem:[%s2515 + $0x28] sm:$0xf]
          %v2524 = vld [vmem:[%s2515 + $0x30] sm:$0xf]
          %v2525 = vld [vmem:[%s2515 + $0x34] sm:$0xf]
          %v2526 = vld [vmem:[%s2515 + $0x3c] sm:$0xf]
          %v2527 = vld [vmem:[%s2515 + $0x40] sm:$0xf]
          %v2528 = vld [vmem:[%s2515 + $0x48] sm:$0xf]
          %v2529 = vld [vmem:[%s2515 + $0x4c] sm:$0xf]
          %v2530 = vld [vmem:[%s2515 + $0x54] sm:$0xf]
          %v2531 = vld [vmem:[%s2515 + $0x58] sm:$0xf]
          %v2532 = vld [vmem:[%s2515 + $0x60] sm:$0xf]
          %v2533 = vld [vmem:[%s2515 + $0x64] sm:$0xf]
          %v2534 = vld [vmem:[%s2515 + $0x6c] sm:$0xf]
          %v2535 = vld [vmem:[%s2515 + $0x70] sm:$0xf]
          %v2536 = vld [vmem:[%s2515 + $0x78] sm:$0xf]
          %v2537 = vld [vmem:[%s2515 + $0x7c] sm:$0xf]
          %v2538 = vld [vmem:[%s2515 + $0x84] sm:$0xf]
          %v2539 = vld [vmem:[%s2515 + $0x88] sm:$0xf]
          %v2540 = vld [vmem:[%s2515 + $0x90] sm:$0xf]
          %v2541 = vld [vmem:[%s2515 + $0x94] sm:$0xf]
          %v2542 = vld [vmem:[%s2515 + $0x9c] sm:$0xf]
          %v2543 = vld [vmem:[%s2515 + $0xa0] sm:$0xf]
          %v2544 = vld [vmem:[%s2515 + $0xa8] sm:$0xf]
          %v2545 = vld [vmem:[%s2515 + $0xac] sm:$0xf]
          %v2546 = vld [vmem:[%s2515 + $0xb4] sm:$0xf]
          %v2547 = vld [vmem:[%s2515 + $0xb8] sm:$0xf]
          %v2580 = vunpack.c.l.b16 %v2516
          %v2581 = vunpack.c.l.b16 %v2517
          %v2582 = vunpack.c.l.b16 %v2518
          %v2583 = vunpack.c.l.b16 %v2519
          %v2584 = vunpack.c.l.b16 %v2520
          %v2585 = vunpack.c.l.b16 %v2521
          %v2586 = vunpack.c.l.b16 %v2522
          %v2587 = vunpack.c.l.b16 %v2523
          %v2588 = vunpack.c.l.b16 %v2524
          %v2589 = vunpack.c.l.b16 %v2525
          %v2590 = vunpack.c.l.b16 %v2526
          %v2591 = vunpack.c.l.b16 %v2527
          %v2592 = vunpack.c.l.b16 %v2528
          %v2593 = vunpack.c.l.b16 %v2529
          %v2594 = vunpack.c.l.b16 %v2530
          %v2595 = vunpack.c.l.b16 %v2531
          %v2596 = vunpack.c.l.b16 %v2532
          %v2597 = vunpack.c.l.b16 %v2533
          %v2598 = vunpack.c.l.b16 %v2534
          %v2599 = vunpack.c.l.b16 %v2535
          %v2600 = vunpack.c.l.b16 %v2536
          %v2601 = vunpack.c.l.b16 %v2537
          %v2602 = vunpack.c.l.b16 %v2538
          %v2603 = vunpack.c.l.b16 %v2539
          %v2604 = vunpack.c.l.b16 %v2540
          %v2605 = vunpack.c.l.b16 %v2541
          %v2606 = vunpack.c.l.b16 %v2542
          %v2607 = vunpack.c.l.b16 %v2543
          %v2608 = vunpack.c.l.b16 %v2544
          %v2609 = vunpack.c.l.b16 %v2545
          %v2610 = vunpack.c.l.b16 %v2546
          %v2611 = vunpack.c.l.b16 %v2547
          %v2612 = vpack.c.b16 %v2581, %v2580
          %v2613 = vpack.c.b16 %v2583, %v2582
          %v2614 = vpack.c.b16 %v2585, %v2584
          %v2615 = vpack.c.b16 %v2587, %v2586
          %v2616 = vpack.c.b16 %v2589, %v2588
          %v2617 = vpack.c.b16 %v2591, %v2590
          %v2618 = vpack.c.b16 %v2593, %v2592
          %v2619 = vpack.c.b16 %v2595, %v2594
          %v2620 = vpack.c.b16 %v2597, %v2596
          %v2621 = vpack.c.b16 %v2599, %v2598
          %v2622 = vpack.c.b16 %v2601, %v2600
          %v2623 = vpack.c.b16 %v2603, %v2602
          %v2624 = vpack.c.b16 %v2605, %v2604
          %v2625 = vpack.c.b16 %v2607, %v2606
          %v2626 = vpack.c.b16 %v2609, %v2608
          %v2627 = vpack.c.b16 %v2611, %v2610
          %2628 = vrot.lane.b32.xlu0 %v2612, 48
          %v2629 = vpop.permute.xlu0 %2628
          %2630 = vrot.lane.b32.xlu0 %v2613, 48
          %v2631 = vpop.permute.xlu0 %2630
          %2632 = vrot.lane.b32.xlu0 %v2614, 48
          %v2633 = vpop.permute.xlu0 %2632
          %2634 = vrot.lane.b32.xlu0 %v2615, 48
          %v2635 = vpop.permute.xlu0 %2634
          %2636 = vrot.lane.b32.xlu0 %v2616, 48
          %v2637 = vpop.permute.xlu0 %2636
          %2638 = vrot.lane.b32.xlu0 %v2617, 48
          %v2639 = vpop.permute.xlu0 %2638
          %2640 = vrot.lane.b32.xlu0 %v2618, 48
          %v2641 = vpop.permute.xlu0 %2640
          %2642 = vrot.lane.b32.xlu0 %v2619, 48
          %v2643 = vpop.permute.xlu0 %2642
          %2644 = vrot.lane.b32.xlu0 %v2620, 48
          %v2645 = vpop.permute.xlu0 %2644
          %2646 = vrot.lane.b32.xlu0 %v2621, 48
          %v2647 = vpop.permute.xlu0 %2646
          %2648 = vrot.lane.b32.xlu0 %v2622, 48
          %v2649 = vpop.permute.xlu0 %2648
          %2650 = vrot.lane.b32.xlu0 %v2623, 48
          %v2651 = vpop.permute.xlu0 %2650
          %2652 = vrot.lane.b32.xlu0 %v2624, 48
          %v2653 = vpop.permute.xlu0 %2652
          %2654 = vrot.lane.b32.xlu0 %v2625, 48
          %v2655 = vpop.permute.xlu0 %2654
          %2656 = vrot.lane.b32.xlu0 %v2626, 48
          %v2657 = vpop.permute.xlu0 %2656
          %2658 = vrot.lane.b32.xlu0 %v2627, 48
          %v2659 = vpop.permute.xlu0 %2658
          %vm2676 = vcmask 458112
          %2677 = vst.msk [vmem:[#allocation3] sm:$0xff] %vm2676, %v2629
          %2678 = vst.msk [vmem:[#allocation3 + $0x8] sm:$0xff] %vm2676, %v2631
          %2679 = vst.msk [vmem:[#allocation3 + $0x10] sm:$0xff] %vm2676, %v2633
          %2680 = vst.msk [vmem:[#allocation3 + $0x18] sm:$0xff] %vm2676, %v2635
          %2681 = vst.msk [vmem:[#allocation3 + $0x20] sm:$0xff] %vm2676, %v2637
          %2682 = vst.msk [vmem:[#allocation3 + $0x28] sm:$0xff] %vm2676, %v2639
          %2683 = vst.msk [vmem:[#allocation3 + $0x30] sm:$0xff] %vm2676, %v2641
          %2684 = vst.msk [vmem:[#allocation3 + $0x38] sm:$0xff] %vm2676, %v2643
          %2685 = vst.msk [vmem:[#allocation3 + $0x40] sm:$0xff] %vm2676, %v2645
          %2686 = vst.msk [vmem:[#allocation3 + $0x48] sm:$0xff] %vm2676, %v2647
          %2687 = vst.msk [vmem:[#allocation3 + $0x50] sm:$0xff] %vm2676, %v2649
          %2688 = vst.msk [vmem:[#allocation3 + $0x58] sm:$0xff] %vm2676, %v2651
          %2689 = vst.msk [vmem:[#allocation3 + $0x60] sm:$0xff] %vm2676, %v2653
          %2690 = vst.msk [vmem:[#allocation3 + $0x68] sm:$0xff] %vm2676, %v2655
          %2691 = vst.msk [vmem:[#allocation3 + $0x70] sm:$0xff] %vm2676, %v2657
          %2692 = vst.msk [vmem:[#allocation3 + $0x78] sm:$0xff] %vm2676, %v2659
          %v2693 = vld [vmem:[%s2515] sm:$0xf]
          %v2694 = vld [vmem:[%s2515 + $0x4] sm:$0xf]
          %v2695 = vld [vmem:[%s2515 + $0x8] sm:$0x1]
          %v2696 = vld [vmem:[%s2515 + $0xc] sm:$0xf]
          %v2697 = vld [vmem:[%s2515 + $0x10] sm:$0xf]
          %v2698 = vld [vmem:[%s2515 + $0x14] sm:$0x1]
          %v2699 = vld [vmem:[%s2515 + $0x18] sm:$0xf]
          %v2700 = vld [vmem:[%s2515 + $0x1c] sm:$0xf]
          %v2701 = vld [vmem:[%s2515 + $0x20] sm:$0x1]
          %v2702 = vld [vmem:[%s2515 + $0x24] sm:$0xf]
          %v2703 = vld [vmem:[%s2515 + $0x28] sm:$0xf]
          %v2704 = vld [vmem:[%s2515 + $0x2c] sm:$0x1]
          %v2705 = vld [vmem:[%s2515 + $0x30] sm:$0xf]
          %v2706 = vld [vmem:[%s2515 + $0x34] sm:$0xf]
          %v2707 = vld [vmem:[%s2515 + $0x38] sm:$0x1]
          %v2708 = vld [vmem:[%s2515 + $0x3c] sm:$0xf]
          %v2709 = vld [vmem:[%s2515 + $0x40] sm:$0xf]
          %v2710 = vld [vmem:[%s2515 + $0x44] sm:$0x1]
          %v2711 = vld [vmem:[%s2515 + $0x48] sm:$0xf]
          %v2712 = vld [vmem:[%s2515 + $0x4c] sm:$0xf]
          %v2713 = vld [vmem:[%s2515 + $0x50] sm:$0x1]
          %v2714 = vld [vmem:[%s2515 + $0x54] sm:$0xf]
          %v2715 = vld [vmem:[%s2515 + $0x58] sm:$0xf]
          %v2716 = vld [vmem:[%s2515 + $0x5c] sm:$0x1]
          %v2717 = vld [vmem:[%s2515 + $0x60] sm:$0xf]
          %v2718 = vld [vmem:[%s2515 + $0x64] sm:$0xf]
          %v2719 = vld [vmem:[%s2515 + $0x68] sm:$0x1]
          %v2720 = vld [vmem:[%s2515 + $0x6c] sm:$0xf]
          %v2721 = vld [vmem:[%s2515 + $0x70] sm:$0xf]
          %v2722 = vld [vmem:[%s2515 + $0x74] sm:$0x1]
          %v2723 = vld [vmem:[%s2515 + $0x78] sm:$0xf]
          %v2724 = vld [vmem:[%s2515 + $0x7c] sm:$0xf]
          %v2725 = vld [vmem:[%s2515 + $0x80] sm:$0x1]
          %v2726 = vld [vmem:[%s2515 + $0x84] sm:$0xf]
          %v2727 = vld [vmem:[%s2515 + $0x88] sm:$0xf]
          %v2728 = vld [vmem:[%s2515 + $0x8c] sm:$0x1]
          %v2729 = vld [vmem:[%s2515 + $0x90] sm:$0xf]
          %v2730 = vld [vmem:[%s2515 + $0x94] sm:$0xf]
          %v2731 = vld [vmem:[%s2515 + $0x98] sm:$0x1]
          %v2732 = vld [vmem:[%s2515 + $0x9c] sm:$0xf]
          %v2733 = vld [vmem:[%s2515 + $0xa0] sm:$0xf]
          %v2734 = vld [vmem:[%s2515 + $0xa4] sm:$0x1]
          %v2735 = vld [vmem:[%s2515 + $0xa8] sm:$0xf]
          %v2736 = vld [vmem:[%s2515 + $0xac] sm:$0xf]
          %v2737 = vld [vmem:[%s2515 + $0xb0] sm:$0x1]
          %v2738 = vld [vmem:[%s2515 + $0xb4] sm:$0xf]
          %v2739 = vld [vmem:[%s2515 + $0xb8] sm:$0xf]
          %v2740 = vld [vmem:[%s2515 + $0xbc] sm:$0x1]
          %v2742 = vshrl.u32 %v2693, 16
          %v2744 = vrot.slane %v2742, 4
          %v2745 = vshll.u32 %v2693, 16
          %v2747 = vrot.slane %v2745, 5
          %v2748 = vor.u32 %v2744, %v2747
          %v2749 = vrot.slane %v2748, 4
          %v2751 = vshll.u32 %v2694, 16
          %v2753 = vrot.slane %v2751, 5
          %v2754 = vsel %vm645, %v2749, %v2753
          %v2755 = vshrl.u32 %v2694, 16
          %v2757 = vrot.slane %v2755, 4
          %v2758 = vor.u32 %v2757, %v2753
          %v2759 = vrot.slane %v2758, 4
          %v2761 = vshll.u32 %v2695, 16
          %v2763 = vrot.slane %v2761, 5
          %v2764 = vsel %vm645, %v2759, %v2763
          %v2766 = vshrl.u32 %v2696, 16
          %v2768 = vrot.slane %v2766, 4
          %v2769 = vshll.u32 %v2696, 16
          %v2771 = vrot.slane %v2769, 5
          %v2772 = vor.u32 %v2768, %v2771
          %v2773 = vrot.slane %v2772, 4
          %v2775 = vshll.u32 %v2697, 16
          %v2777 = vrot.slane %v2775, 5
          %v2778 = vsel %vm645, %v2773, %v2777
          %v2779 = vshrl.u32 %v2697, 16
          %v2781 = vrot.slane %v2779, 4
          %v2782 = vor.u32 %v2781, %v2777
          %v2783 = vrot.slane %v2782, 4
          %v2785 = vshll.u32 %v2698, 16
          %v2787 = vrot.slane %v2785, 5
          %v2788 = vsel %vm645, %v2783, %v2787
          %v2790 = vshrl.u32 %v2699, 16
          %v2792 = vrot.slane %v2790, 4
          %v2793 = vshll.u32 %v2699, 16
          %v2795 = vrot.slane %v2793, 5
          %v2796 = vor.u32 %v2792, %v2795
          %v2797 = vrot.slane %v2796, 4
          %v2799 = vshll.u32 %v2700, 16
          %v2801 = vrot.slane %v2799, 5
          %v2802 = vsel %vm645, %v2797, %v2801
          %v2803 = vshrl.u32 %v2700, 16
          %v2805 = vrot.slane %v2803, 4
          %v2806 = vor.u32 %v2805, %v2801
          %v2807 = vrot.slane %v2806, 4
          %v2809 = vshll.u32 %v2701, 16
          %v2811 = vrot.slane %v2809, 5
          %v2812 = vsel %vm645, %v2807, %v2811
          %v2814 = vshrl.u32 %v2702, 16
          %v2816 = vrot.slane %v2814, 4
          %v2817 = vshll.u32 %v2702, 16
          %v2819 = vrot.slane %v2817, 5
          %v2820 = vor.u32 %v2816, %v2819
          %v2821 = vrot.slane %v2820, 4
          %v2823 = vshll.u32 %v2703, 16
          %v2825 = vrot.slane %v2823, 5
          %v2826 = vsel %vm645, %v2821, %v2825
          %v2827 = vshrl.u32 %v2703, 16
          %v2829 = vrot.slane %v2827, 4
          %v2830 = vor.u32 %v2829, %v2825
          %v2831 = vrot.slane %v2830, 4
          %v2833 = vshll.u32 %v2704, 16
          %v2835 = vrot.slane %v2833, 5
          %v2836 = vsel %vm645, %v2831, %v2835
          %v2838 = vshrl.u32 %v2705, 16
          %v2840 = vrot.slane %v2838, 4
          %v2841 = vshll.u32 %v2705, 16
          %v2843 = vrot.slane %v2841, 5
          %v2844 = vor.u32 %v2840, %v2843
          %v2845 = vrot.slane %v2844, 4
          %v2847 = vshll.u32 %v2706, 16
          %v2849 = vrot.slane %v2847, 5
          %v2850 = vsel %vm645, %v2845, %v2849
          %v2851 = vshrl.u32 %v2706, 16
          %v2853 = vrot.slane %v2851, 4
          %v2854 = vor.u32 %v2853, %v2849
          %v2855 = vrot.slane %v2854, 4
          %v2857 = vshll.u32 %v2707, 16
          %v2859 = vrot.slane %v2857, 5
          %v2860 = vsel %vm645, %v2855, %v2859
          %v2862 = vshrl.u32 %v2708, 16
          %v2864 = vrot.slane %v2862, 4
          %v2865 = vshll.u32 %v2708, 16
          %v2867 = vrot.slane %v2865, 5
          %v2868 = vor.u32 %v2864, %v2867
          %v2869 = vrot.slane %v2868, 4
          %v2871 = vshll.u32 %v2709, 16
          %v2873 = vrot.slane %v2871, 5
          %v2874 = vsel %vm645, %v2869, %v2873
          %v2875 = vshrl.u32 %v2709, 16
          %v2877 = vrot.slane %v2875, 4
          %v2878 = vor.u32 %v2877, %v2873
          %v2879 = vrot.slane %v2878, 4
          %v2881 = vshll.u32 %v2710, 16
          %v2883 = vrot.slane %v2881, 5
          %v2884 = vsel %vm645, %v2879, %v2883
          %v2886 = vshrl.u32 %v2711, 16
          %v2888 = vrot.slane %v2886, 4
          %v2889 = vshll.u32 %v2711, 16
          %v2891 = vrot.slane %v2889, 5
          %v2892 = vor.u32 %v2888, %v2891
          %v2893 = vrot.slane %v2892, 4
          %v2895 = vshll.u32 %v2712, 16
          %v2897 = vrot.slane %v2895, 5
          %v2898 = vsel %vm645, %v2893, %v2897
          %v2899 = vshrl.u32 %v2712, 16
          %v2901 = vrot.slane %v2899, 4
          %v2902 = vor.u32 %v2901, %v2897
          %v2903 = vrot.slane %v2902, 4
          %v2905 = vshll.u32 %v2713, 16
          %v2907 = vrot.slane %v2905, 5
          %v2908 = vsel %vm645, %v2903, %v2907
          %v2910 = vshrl.u32 %v2714, 16
          %v2912 = vrot.slane %v2910, 4
          %v2913 = vshll.u32 %v2714, 16
          %v2915 = vrot.slane %v2913, 5
          %v2916 = vor.u32 %v2912, %v2915
          %v2917 = vrot.slane %v2916, 4
          %v2919 = vshll.u32 %v2715, 16
          %v2921 = vrot.slane %v2919, 5
          %v2922 = vsel %vm645, %v2917, %v2921
          %v2923 = vshrl.u32 %v2715, 16
          %v2925 = vrot.slane %v2923, 4
          %v2926 = vor.u32 %v2925, %v2921
          %v2927 = vrot.slane %v2926, 4
          %v2929 = vshll.u32 %v2716, 16
          %v2931 = vrot.slane %v2929, 5
          %v2932 = vsel %vm645, %v2927, %v2931
          %v2934 = vshrl.u32 %v2717, 16
          %v2936 = vrot.slane %v2934, 4
          %v2937 = vshll.u32 %v2717, 16
          %v2939 = vrot.slane %v2937, 5
          %v2940 = vor.u32 %v2936, %v2939
          %v2941 = vrot.slane %v2940, 4
          %v2943 = vshll.u32 %v2718, 16
          %v2945 = vrot.slane %v2943, 5
          %v2946 = vsel %vm645, %v2941, %v2945
          %v2947 = vshrl.u32 %v2718, 16
          %v2949 = vrot.slane %v2947, 4
          %v2950 = vor.u32 %v2949, %v2945
          %v2951 = vrot.slane %v2950, 4
          %v2953 = vshll.u32 %v2719, 16
          %v2955 = vrot.slane %v2953, 5
          %v2956 = vsel %vm645, %v2951, %v2955
          %v2958 = vshrl.u32 %v2720, 16
          %v2960 = vrot.slane %v2958, 4
          %v2961 = vshll.u32 %v2720, 16
          %v2963 = vrot.slane %v2961, 5
          %v2964 = vor.u32 %v2960, %v2963
          %v2965 = vrot.slane %v2964, 4
          %v2967 = vshll.u32 %v2721, 16
          %v2969 = vrot.slane %v2967, 5
          %v2970 = vsel %vm645, %v2965, %v2969
          %v2971 = vshrl.u32 %v2721, 16
          %v2973 = vrot.slane %v2971, 4
          %v2974 = vor.u32 %v2973, %v2969
          %v2975 = vrot.slane %v2974, 4
          %v2977 = vshll.u32 %v2722, 16
          %v2979 = vrot.slane %v2977, 5
          %v2980 = vsel %vm645, %v2975, %v2979
          %v2982 = vshrl.u32 %v2723, 16
          %v2984 = vrot.slane %v2982, 4
          %v2985 = vshll.u32 %v2723, 16
          %v2987 = vrot.slane %v2985, 5
          %v2988 = vor.u32 %v2984, %v2987
          %v2989 = vrot.slane %v2988, 4
          %v2991 = vshll.u32 %v2724, 16
          %v2993 = vrot.slane %v2991, 5
          %v2994 = vsel %vm645, %v2989, %v2993
          %v2995 = vshrl.u32 %v2724, 16
          %v2997 = vrot.slane %v2995, 4
          %v2998 = vor.u32 %v2997, %v2993
          %v2999 = vrot.slane %v2998, 4
          %v3001 = vshll.u32 %v2725, 16
          %v3003 = vrot.slane %v3001, 5
          %v3004 = vsel %vm645, %v2999, %v3003
          %v3006 = vshrl.u32 %v2726, 16
          %v3008 = vrot.slane %v3006, 4
          %v3009 = vshll.u32 %v2726, 16
          %v3011 = vrot.slane %v3009, 5
          %v3012 = vor.u32 %v3008, %v3011
          %v3013 = vrot.slane %v3012, 4
          %v3015 = vshll.u32 %v2727, 16
          %v3017 = vrot.slane %v3015, 5
          %v3018 = vsel %vm645, %v3013, %v3017
          %v3019 = vshrl.u32 %v2727, 16
          %v3021 = vrot.slane %v3019, 4
          %v3022 = vor.u32 %v3021, %v3017
          %v3023 = vrot.slane %v3022, 4
          %v3025 = vshll.u32 %v2728, 16
          %v3027 = vrot.slane %v3025, 5
          %v3028 = vsel %vm645, %v3023, %v3027
          %v3030 = vshrl.u32 %v2729, 16
          %v3032 = vrot.slane %v3030, 4
          %v3033 = vshll.u32 %v2729, 16
          %v3035 = vrot.slane %v3033, 5
          %v3036 = vor.u32 %v3032, %v3035
          %v3037 = vrot.slane %v3036, 4
          %v3039 = vshll.u32 %v2730, 16
          %v3041 = vrot.slane %v3039, 5
          %v3042 = vsel %vm645, %v3037, %v3041
          %v3043 = vshrl.u32 %v2730, 16
          %v3045 = vrot.slane %v3043, 4
          %v3046 = vor.u32 %v3045, %v3041
          %v3047 = vrot.slane %v3046, 4
          %v3049 = vshll.u32 %v2731, 16
          %v3051 = vrot.slane %v3049, 5
          %v3052 = vsel %vm645, %v3047, %v3051
          %v3054 = vshrl.u32 %v2732, 16
          %v3056 = vrot.slane %v3054, 4
          %v3057 = vshll.u32 %v2732, 16
          %v3059 = vrot.slane %v3057, 5
          %v3060 = vor.u32 %v3056, %v3059
          %v3061 = vrot.slane %v3060, 4
          %v3063 = vshll.u32 %v2733, 16
          %v3065 = vrot.slane %v3063, 5
          %v3066 = vsel %vm645, %v3061, %v3065
          %v3067 = vshrl.u32 %v2733, 16
          %v3069 = vrot.slane %v3067, 4
          %v3070 = vor.u32 %v3069, %v3065
          %v3071 = vrot.slane %v3070, 4
          %v3073 = vshll.u32 %v2734, 16
          %v3075 = vrot.slane %v3073, 5
          %v3076 = vsel %vm645, %v3071, %v3075
          %v3078 = vshrl.u32 %v2735, 16
          %v3080 = vrot.slane %v3078, 4
          %v3081 = vshll.u32 %v2735, 16
          %v3083 = vrot.slane %v3081, 5
          %v3084 = vor.u32 %v3080, %v3083
          %v3085 = vrot.slane %v3084, 4
          %v3087 = vshll.u32 %v2736, 16
          %v3089 = vrot.slane %v3087, 5
          %v3090 = vsel %vm645, %v3085, %v3089
          %v3091 = vshrl.u32 %v2736, 16
          %v3093 = vrot.slane %v3091, 4
          %v3094 = vor.u32 %v3093, %v3089
          %v3095 = vrot.slane %v3094, 4
          %v3097 = vshll.u32 %v2737, 16
          %v3099 = vrot.slane %v3097, 5
          %v3100 = vsel %vm645, %v3095, %v3099
          %v3102 = vshrl.u32 %v2738, 16
          %v3104 = vrot.slane %v3102, 4
          %v3105 = vshll.u32 %v2738, 16
          %v3107 = vrot.slane %v3105, 5
          %v3108 = vor.u32 %v3104, %v3107
          %v3109 = vrot.slane %v3108, 4
          %v3111 = vshll.u32 %v2739, 16
          %v3113 = vrot.slane %v3111, 5
          %v3114 = vsel %vm645, %v3109, %v3113
          %v3115 = vshrl.u32 %v2739, 16
          %v3117 = vrot.slane %v3115, 4
          %v3118 = vor.u32 %v3117, %v3113
          %v3119 = vrot.slane %v3118, 4
          %v3121 = vshll.u32 %v2740, 16
          %v3123 = vrot.slane %v3121, 5
          %v3124 = vsel %vm645, %v3119, %v3123
          %v3125 = vunpack.c.l.b16 %v2754
          %v3126 = vunpack.c.l.b16 %v2764
          %v3127 = vunpack.c.l.b16 %v2778
          %v3128 = vunpack.c.l.b16 %v2788
          %v3129 = vunpack.c.l.b16 %v2802
          %v3130 = vunpack.c.l.b16 %v2812
          %v3131 = vunpack.c.l.b16 %v2826
          %v3132 = vunpack.c.l.b16 %v2836
          %v3133 = vunpack.c.l.b16 %v2850
          %v3134 = vunpack.c.l.b16 %v2860
          %v3135 = vunpack.c.l.b16 %v2874
          %v3136 = vunpack.c.l.b16 %v2884
          %v3137 = vunpack.c.l.b16 %v2898
          %v3138 = vunpack.c.l.b16 %v2908
          %v3139 = vunpack.c.l.b16 %v2922
          %v3140 = vunpack.c.l.b16 %v2932
          %v3141 = vunpack.c.l.b16 %v2946
          %v3142 = vunpack.c.l.b16 %v2956
          %v3143 = vunpack.c.l.b16 %v2970
          %v3144 = vunpack.c.l.b16 %v2980
          %v3145 = vunpack.c.l.b16 %v2994
          %v3146 = vunpack.c.l.b16 %v3004
          %v3147 = vunpack.c.l.b16 %v3018
          %v3148 = vunpack.c.l.b16 %v3028
          %v3149 = vunpack.c.l.b16 %v3042
          %v3150 = vunpack.c.l.b16 %v3052
          %v3151 = vunpack.c.l.b16 %v3066
          %v3152 = vunpack.c.l.b16 %v3076
          %v3153 = vunpack.c.l.b16 %v3090
          %v3154 = vunpack.c.l.b16 %v3100
          %v3155 = vunpack.c.l.b16 %v3114
          %v3156 = vunpack.c.l.b16 %v3124
          %v3157 = vpack.c.b16 %v3126, %v3125
          %v3158 = vpack.c.b16 %v3128, %v3127
          %v3159 = vpack.c.b16 %v3130, %v3129
          %v3160 = vpack.c.b16 %v3132, %v3131
          %v3161 = vpack.c.b16 %v3134, %v3133
          %v3162 = vpack.c.b16 %v3136, %v3135
          %v3163 = vpack.c.b16 %v3138, %v3137
          %v3164 = vpack.c.b16 %v3140, %v3139
          %v3165 = vpack.c.b16 %v3142, %v3141
          %v3166 = vpack.c.b16 %v3144, %v3143
          %v3167 = vpack.c.b16 %v3146, %v3145
          %v3168 = vpack.c.b16 %v3148, %v3147
          %v3169 = vpack.c.b16 %v3150, %v3149
          %v3170 = vpack.c.b16 %v3152, %v3151
          %v3171 = vpack.c.b16 %v3154, %v3153
          %v3172 = vpack.c.b16 %v3156, %v3155
          %3173 = vrot.lane.b32.xlu0 %v3157, 56
          %v3174 = vpop.permute.xlu0 %3173
          %3175 = vrot.lane.b32.xlu0 %v3158, 56
          %v3176 = vpop.permute.xlu0 %3175
          %3177 = vrot.lane.b32.xlu0 %v3159, 56
          %v3178 = vpop.permute.xlu0 %3177
          %3179 = vrot.lane.b32.xlu0 %v3160, 56
          %v3180 = vpop.permute.xlu0 %3179
          %3181 = vrot.lane.b32.xlu0 %v3161, 56
          %v3182 = vpop.permute.xlu0 %3181
          %3183 = vrot.lane.b32.xlu0 %v3162, 56
          %v3184 = vpop.permute.xlu0 %3183
          %3185 = vrot.lane.b32.xlu0 %v3163, 56
          %v3186 = vpop.permute.xlu0 %3185
          %3187 = vrot.lane.b32.xlu0 %v3164, 56
          %v3188 = vpop.permute.xlu0 %3187
          %3189 = vrot.lane.b32.xlu0 %v3165, 56
          %v3190 = vpop.permute.xlu0 %3189
          %3191 = vrot.lane.b32.xlu0 %v3166, 56
          %v3192 = vpop.permute.xlu0 %3191
          %3193 = vrot.lane.b32.xlu0 %v3167, 56
          %v3194 = vpop.permute.xlu0 %3193
          %3195 = vrot.lane.b32.xlu0 %v3168, 56
          %v3196 = vpop.permute.xlu0 %3195
          %3197 = vrot.lane.b32.xlu0 %v3169, 56
          %v3198 = vpop.permute.xlu0 %3197
          %3199 = vrot.lane.b32.xlu0 %v3170, 56
          %v3200 = vpop.permute.xlu0 %3199
          %3201 = vrot.lane.b32.xlu0 %v3171, 56
          %v3202 = vpop.permute.xlu0 %3201
          %3203 = vrot.lane.b32.xlu0 %v3172, 56
          %v3204 = vpop.permute.xlu0 %3203
          %vm3221 = vcmask 523712
          %3222 = vst.msk [vmem:[#allocation3] sm:$0xff] %vm3221, %v3174
          %3223 = vst.msk [vmem:[#allocation3 + $0x8] sm:$0xff] %vm3221, %v3176
          %3224 = vst.msk [vmem:[#allocation3 + $0x10] sm:$0xff] %vm3221, %v3178
          %3225 = vst.msk [vmem:[#allocation3 + $0x18] sm:$0xff] %vm3221, %v3180
          %3226 = vst.msk [vmem:[#allocation3 + $0x20] sm:$0xff] %vm3221, %v3182
          %3227 = vst.msk [vmem:[#allocation3 + $0x28] sm:$0xff] %vm3221, %v3184
          %3228 = vst.msk [vmem:[#allocation3 + $0x30] sm:$0xff] %vm3221, %v3186
          %3229 = vst.msk [vmem:[#allocation3 + $0x38] sm:$0xff] %vm3221, %v3188
          %3230 = vst.msk [vmem:[#allocation3 + $0x40] sm:$0xff] %vm3221, %v3190
          %3231 = vst.msk [vmem:[#allocation3 + $0x48] sm:$0xff] %vm3221, %v3192
          %3232 = vst.msk [vmem:[#allocation3 + $0x50] sm:$0xff] %vm3221, %v3194
          %3233 = vst.msk [vmem:[#allocation3 + $0x58] sm:$0xff] %vm3221, %v3196
          %3234 = vst.msk [vmem:[#allocation3 + $0x60] sm:$0xff] %vm3221, %v3198
          %3235 = vst.msk [vmem:[#allocation3 + $0x68] sm:$0xff] %vm3221, %v3200
          %3236 = vst.msk [vmem:[#allocation3 + $0x70] sm:$0xff] %vm3221, %v3202
          %3237 = vst.msk [vmem:[#allocation3 + $0x78] sm:$0xff] %vm3221, %v3204
          %v3238 = vld [vmem:[%s2515] sm:$0xe]
          %v3239 = vld [vmem:[%s2515 + $0x4] sm:$0xf]
          %v3240 = vld [vmem:[%s2515 + $0x8] sm:$0x1]
          %v3241 = vld [vmem:[%s2515 + $0xc] sm:$0xe]
          %v3242 = vld [vmem:[%s2515 + $0x10] sm:$0xf]
          %v3243 = vld [vmem:[%s2515 + $0x14] sm:$0x1]
          %v3244 = vld [vmem:[%s2515 + $0x18] sm:$0xe]
          %v3245 = vld [vmem:[%s2515 + $0x1c] sm:$0xf]
          %v3246 = vld [vmem:[%s2515 + $0x20] sm:$0x1]
          %v3247 = vld [vmem:[%s2515 + $0x24] sm:$0xe]
          %v3248 = vld [vmem:[%s2515 + $0x28] sm:$0xf]
          %v3249 = vld [vmem:[%s2515 + $0x2c] sm:$0x1]
          %v3250 = vld [vmem:[%s2515 + $0x30] sm:$0xe]
          %v3251 = vld [vmem:[%s2515 + $0x34] sm:$0xf]
          %v3252 = vld [vmem:[%s2515 + $0x38] sm:$0x1]
          %v3253 = vld [vmem:[%s2515 + $0x3c] sm:$0xe]
          %v3254 = vld [vmem:[%s2515 + $0x40] sm:$0xf]
          %v3255 = vld [vmem:[%s2515 + $0x44] sm:$0x1]
          %v3256 = vld [vmem:[%s2515 + $0x48] sm:$0xe]
          %v3257 = vld [vmem:[%s2515 + $0x4c] sm:$0xf]
          %v3258 = vld [vmem:[%s2515 + $0x50] sm:$0x1]
          %v3259 = vld [vmem:[%s2515 + $0x54] sm:$0xe]
          %v3260 = vld [vmem:[%s2515 + $0x58] sm:$0xf]
          %v3261 = vld [vmem:[%s2515 + $0x5c] sm:$0x1]
          %v3262 = vld [vmem:[%s2515 + $0x60] sm:$0xe]
          %v3263 = vld [vmem:[%s2515 + $0x64] sm:$0xf]
          %v3264 = vld [vmem:[%s2515 + $0x68] sm:$0x1]
          %v3265 = vld [vmem:[%s2515 + $0x6c] sm:$0xe]
          %v3266 = vld [vmem:[%s2515 + $0x70] sm:$0xf]
          %v3267 = vld [vmem:[%s2515 + $0x74] sm:$0x1]
          %v3268 = vld [vmem:[%s2515 + $0x78] sm:$0xe]
          %v3269 = vld [vmem:[%s2515 + $0x7c] sm:$0xf]
          %v3270 = vld [vmem:[%s2515 + $0x80] sm:$0x1]
          %v3271 = vld [vmem:[%s2515 + $0x84] sm:$0xe]
          %v3272 = vld [vmem:[%s2515 + $0x88] sm:$0xf]
          %v3273 = vld [vmem:[%s2515 + $0x8c] sm:$0x1]
          %v3274 = vld [vmem:[%s2515 + $0x90] sm:$0xe]
          %v3275 = vld [vmem:[%s2515 + $0x94] sm:$0xf]
          %v3276 = vld [vmem:[%s2515 + $0x98] sm:$0x1]
          %v3277 = vld [vmem:[%s2515 + $0x9c] sm:$0xe]
          %v3278 = vld [vmem:[%s2515 + $0xa0] sm:$0xf]
          %v3279 = vld [vmem:[%s2515 + $0xa4] sm:$0x1]
          %v3280 = vld [vmem:[%s2515 + $0xa8] sm:$0xe]
          %v3281 = vld [vmem:[%s2515 + $0xac] sm:$0xf]
          %v3282 = vld [vmem:[%s2515 + $0xb0] sm:$0x1]
          %v3283 = vld [vmem:[%s2515 + $0xb4] sm:$0xe]
          %v3284 = vld [vmem:[%s2515 + $0xb8] sm:$0xf]
          %v3285 = vld [vmem:[%s2515 + $0xbc] sm:$0x1]
          %v3334 = vrot.slane %v3238, 5
          %v3335 = vrot.slane %v3334, 4
          %v3336 = vrot.slane %v3239, 5
          %v3337 = vsel %vm1241, %v3335, %v3336
          %v3338 = vrot.slane %v3336, 4
          %v3339 = vrot.slane %v3240, 5
          %v3340 = vsel %vm1241, %v3338, %v3339
          %v3341 = vrot.slane %v3241, 5
          %v3342 = vrot.slane %v3341, 4
          %v3343 = vrot.slane %v3242, 5
          %v3344 = vsel %vm1241, %v3342, %v3343
          %v3345 = vrot.slane %v3343, 4
          %v3346 = vrot.slane %v3243, 5
          %v3347 = vsel %vm1241, %v3345, %v3346
          %v3348 = vrot.slane %v3244, 5
          %v3349 = vrot.slane %v3348, 4
          %v3350 = vrot.slane %v3245, 5
          %v3351 = vsel %vm1241, %v3349, %v3350
          %v3352 = vrot.slane %v3350, 4
          %v3353 = vrot.slane %v3246, 5
          %v3354 = vsel %vm1241, %v3352, %v3353
          %v3355 = vrot.slane %v3247, 5
          %v3356 = vrot.slane %v3355, 4
          %v3357 = vrot.slane %v3248, 5
          %v3358 = vsel %vm1241, %v3356, %v3357
          %v3359 = vrot.slane %v3357, 4
          %v3360 = vrot.slane %v3249, 5
          %v3361 = vsel %vm1241, %v3359, %v3360
          %v3362 = vrot.slane %v3250, 5
          %v3363 = vrot.slane %v3362, 4
          %v3364 = vrot.slane %v3251, 5
          %v3365 = vsel %vm1241, %v3363, %v3364
          %v3366 = vrot.slane %v3364, 4
          %v3367 = vrot.slane %v3252, 5
          %v3368 = vsel %vm1241, %v3366, %v3367
          %v3369 = vrot.slane %v3253, 5
          %v3370 = vrot.slane %v3369, 4
          %v3371 = vrot.slane %v3254, 5
          %v3372 = vsel %vm1241, %v3370, %v3371
          %v3373 = vrot.slane %v3371, 4
          %v3374 = vrot.slane %v3255, 5
          %v3375 = vsel %vm1241, %v3373, %v3374
          %v3376 = vrot.slane %v3256, 5
          %v3377 = vrot.slane %v3376, 4
          %v3378 = vrot.slane %v3257, 5
          %v3379 = vsel %vm1241, %v3377, %v3378
          %v3380 = vrot.slane %v3378, 4
          %v3381 = vrot.slane %v3258, 5
          %v3382 = vsel %vm1241, %v3380, %v3381
          %v3383 = vrot.slane %v3259, 5
          %v3384 = vrot.slane %v3383, 4
          %v3385 = vrot.slane %v3260, 5
          %v3386 = vsel %vm1241, %v3384, %v3385
          %v3387 = vrot.slane %v3385, 4
          %v3388 = vrot.slane %v3261, 5
          %v3389 = vsel %vm1241, %v3387, %v3388
          %v3390 = vrot.slane %v3262, 5
          %v3391 = vrot.slane %v3390, 4
          %v3392 = vrot.slane %v3263, 5
          %v3393 = vsel %vm1241, %v3391, %v3392
          %v3394 = vrot.slane %v3392, 4
          %v3395 = vrot.slane %v3264, 5
          %v3396 = vsel %vm1241, %v3394, %v3395
          %v3397 = vrot.slane %v3265, 5
          %v3398 = vrot.slane %v3397, 4
          %v3399 = vrot.slane %v3266, 5
          %v3400 = vsel %vm1241, %v3398, %v3399
          %v3401 = vrot.slane %v3399, 4
          %v3402 = vrot.slane %v3267, 5
          %v3403 = vsel %vm1241, %v3401, %v3402
          %v3404 = vrot.slane %v3268, 5
          %v3405 = vrot.slane %v3404, 4
          %v3406 = vrot.slane %v3269, 5
          %v3407 = vsel %vm1241, %v3405, %v3406
          %v3408 = vrot.slane %v3406, 4
          %v3409 = vrot.slane %v3270, 5
          %v3410 = vsel %vm1241, %v3408, %v3409
          %v3411 = vrot.slane %v3271, 5
          %v3412 = vrot.slane %v3411, 4
          %v3413 = vrot.slane %v3272, 5
          %v3414 = vsel %vm1241, %v3412, %v3413
          %v3415 = vrot.slane %v3413, 4
          %v3416 = vrot.slane %v3273, 5
          %v3417 = vsel %vm1241, %v3415, %v3416
          %v3418 = vrot.slane %v3274, 5
          %v3419 = vrot.slane %v3418, 4
          %v3420 = vrot.slane %v3275, 5
          %v3421 = vsel %vm1241, %v3419, %v3420
          %v3422 = vrot.slane %v3420, 4
          %v3423 = vrot.slane %v3276, 5
          %v3424 = vsel %vm1241, %v3422, %v3423
          %v3425 = vrot.slane %v3277, 5
          %v3426 = vrot.slane %v3425, 4
          %v3427 = vrot.slane %v3278, 5
          %v3428 = vsel %vm1241, %v3426, %v3427
          %v3429 = vrot.slane %v3427, 4
          %v3430 = vrot.slane %v3279, 5
          %v3431 = vsel %vm1241, %v3429, %v3430
          %v3432 = vrot.slane %v3280, 5
          %v3433 = vrot.slane %v3432, 4
          %v3434 = vrot.slane %v3281, 5
          %v3435 = vsel %vm1241, %v3433, %v3434
          %v3436 = vrot.slane %v3434, 4
          %v3437 = vrot.slane %v3282, 5
          %v3438 = vsel %vm1241, %v3436, %v3437
          %v3439 = vrot.slane %v3283, 5
          %v3440 = vrot.slane %v3439, 4
          %v3441 = vrot.slane %v3284, 5
          %v3442 = vsel %vm1241, %v3440, %v3441
          %v3443 = vrot.slane %v3441, 4
          %v3444 = vrot.slane %v3285, 5
          %v3445 = vsel %vm1241, %v3443, %v3444
          %v3446 = vunpack.c.l.b16 %v3337
          %v3447 = vunpack.c.l.b16 %v3340
          %v3448 = vunpack.c.l.b16 %v3344
          %v3449 = vunpack.c.l.b16 %v3347
          %v3450 = vunpack.c.l.b16 %v3351
          %v3451 = vunpack.c.l.b16 %v3354
          %v3452 = vunpack.c.l.b16 %v3358
          %v3453 = vunpack.c.l.b16 %v3361
          %v3454 = vunpack.c.l.b16 %v3365
          %v3455 = vunpack.c.l.b16 %v3368
          %v3456 = vunpack.c.l.b16 %v3372
          %v3457 = vunpack.c.l.b16 %v3375
          %v3458 = vunpack.c.l.b16 %v3379
          %v3459 = vunpack.c.l.b16 %v3382
          %v3460 = vunpack.c.l.b16 %v3386
          %v3461 = vunpack.c.l.b16 %v3389
          %v3462 = vunpack.c.l.b16 %v3393
          %v3463 = vunpack.c.l.b16 %v3396
          %v3464 = vunpack.c.l.b16 %v3400
          %v3465 = vunpack.c.l.b16 %v3403
          %v3466 = vunpack.c.l.b16 %v3407
          %v3467 = vunpack.c.l.b16 %v3410
          %v3468 = vunpack.c.l.b16 %v3414
          %v3469 = vunpack.c.l.b16 %v3417
          %v3470 = vunpack.c.l.b16 %v3421
          %v3471 = vunpack.c.l.b16 %v3424
          %v3472 = vunpack.c.l.b16 %v3428
          %v3473 = vunpack.c.l.b16 %v3431
          %v3474 = vunpack.c.l.b16 %v3435
          %v3475 = vunpack.c.l.b16 %v3438
          %v3476 = vunpack.c.l.b16 %v3442
          %v3477 = vunpack.c.l.b16 %v3445
          %v3478 = vpack.c.b16 %v3447, %v3446
          %v3479 = vpack.c.b16 %v3449, %v3448
          %v3480 = vpack.c.b16 %v3451, %v3450
          %v3481 = vpack.c.b16 %v3453, %v3452
          %v3482 = vpack.c.b16 %v3455, %v3454
          %v3483 = vpack.c.b16 %v3457, %v3456
          %v3484 = vpack.c.b16 %v3459, %v3458
          %v3485 = vpack.c.b16 %v3461, %v3460
          %v3486 = vpack.c.b16 %v3463, %v3462
          %v3487 = vpack.c.b16 %v3465, %v3464
          %v3488 = vpack.c.b16 %v3467, %v3466
          %v3489 = vpack.c.b16 %v3469, %v3468
          %v3490 = vpack.c.b16 %v3471, %v3470
          %v3491 = vpack.c.b16 %v3473, %v3472
          %v3492 = vpack.c.b16 %v3475, %v3474
          %v3493 = vpack.c.b16 %v3477, %v3476
          %3494 = vrot.lane.b32.xlu0 %v3478, 64
          %v3495 = vpop.permute.xlu0 %3494
          %3496 = vrot.lane.b32.xlu0 %v3479, 64
          %v3497 = vpop.permute.xlu0 %3496
          %3498 = vrot.lane.b32.xlu0 %v3480, 64
          %v3499 = vpop.permute.xlu0 %3498
          %3500 = vrot.lane.b32.xlu0 %v3481, 64
          %v3501 = vpop.permute.xlu0 %3500
          %3502 = vrot.lane.b32.xlu0 %v3482, 64
          %v3503 = vpop.permute.xlu0 %3502
          %3504 = vrot.lane.b32.xlu0 %v3483, 64
          %v3505 = vpop.permute.xlu0 %3504
          %3506 = vrot.lane.b32.xlu0 %v3484, 64
          %v3507 = vpop.permute.xlu0 %3506
          %3508 = vrot.lane.b32.xlu0 %v3485, 64
          %v3509 = vpop.permute.xlu0 %3508
          %3510 = vrot.lane.b32.xlu0 %v3486, 64
          %v3511 = vpop.permute.xlu0 %3510
          %3512 = vrot.lane.b32.xlu0 %v3487, 64
          %v3513 = vpop.permute.xlu0 %3512
          %3514 = vrot.lane.b32.xlu0 %v3488, 64
          %v3515 = vpop.permute.xlu0 %3514
          %3516 = vrot.lane.b32.xlu0 %v3489, 64
          %v3517 = vpop.permute.xlu0 %3516
          %3518 = vrot.lane.b32.xlu0 %v3490, 64
          %v3519 = vpop.permute.xlu0 %3518
          %3520 = vrot.lane.b32.xlu0 %v3491, 64
          %v3521 = vpop.permute.xlu0 %3520
          %3522 = vrot.lane.b32.xlu0 %v3492, 64
          %v3523 = vpop.permute.xlu0 %3522
          %3524 = vrot.lane.b32.xlu0 %v3493, 64
          %v3525 = vpop.permute.xlu0 %3524
          %vm3542 = vcmask 589312
          %3543 = vst.msk [vmem:[#allocation3] sm:$0xff] %vm3542, %v3495
          %3544 = vst.msk [vmem:[#allocation3 + $0x8] sm:$0xff] %vm3542, %v3497
          %3545 = vst.msk [vmem:[#allocation3 + $0x10] sm:$0xff] %vm3542, %v3499
          %3546 = vst.msk [vmem:[#allocation3 + $0x18] sm:$0xff] %vm3542, %v3501
          %3547 = vst.msk [vmem:[#allocation3 + $0x20] sm:$0xff] %vm3542, %v3503
          %3548 = vst.msk [vmem:[#allocation3 + $0x28] sm:$0xff] %vm3542, %v3505
          %3549 = vst.msk [vmem:[#allocation3 + $0x30] sm:$0xff] %vm3542, %v3507
          %3550 = vst.msk [vmem:[#allocation3 + $0x38] sm:$0xff] %vm3542, %v3509
          %3551 = vst.msk [vmem:[#allocation3 + $0x40] sm:$0xff] %vm3542, %v3511
          %3552 = vst.msk [vmem:[#allocation3 + $0x48] sm:$0xff] %vm3542, %v3513
          %3553 = vst.msk [vmem:[#allocation3 + $0x50] sm:$0xff] %vm3542, %v3515
          %3554 = vst.msk [vmem:[#allocation3 + $0x58] sm:$0xff] %vm3542, %v3517
          %3555 = vst.msk [vmem:[#allocation3 + $0x60] sm:$0xff] %vm3542, %v3519
          %3556 = vst.msk [vmem:[#allocation3 + $0x68] sm:$0xff] %vm3542, %v3521
          %3557 = vst.msk [vmem:[#allocation3 + $0x70] sm:$0xff] %vm3542, %v3523
          %3558 = vst.msk [vmem:[#allocation3 + $0x78] sm:$0xff] %vm3542, %v3525
          %v3559 = vld [vmem:[#allocation3] sm:$0xff]
          %v3560 = vld [vmem:[#allocation3 + $0x8] sm:$0xff]
          %v3561 = vld [vmem:[#allocation3 + $0x10] sm:$0xff]
          %v3562 = vld [vmem:[#allocation3 + $0x18] sm:$0xff]
          %v3563 = vld [vmem:[#allocation3 + $0x20] sm:$0xff]
          %v3564 = vld [vmem:[#allocation3 + $0x28] sm:$0xff]
          %v3565 = vld [vmem:[#allocation3 + $0x30] sm:$0xff]
          %v3566 = vld [vmem:[#allocation3 + $0x38] sm:$0xff]
          %v3567 = vld [vmem:[#allocation3 + $0x40] sm:$0xff]
          %v3568 = vld [vmem:[#allocation3 + $0x48] sm:$0xff]
          %v3569 = vld [vmem:[#allocation3 + $0x50] sm:$0xff]
          %v3570 = vld [vmem:[#allocation3 + $0x58] sm:$0xff]
          %v3571 = vld [vmem:[#allocation3 + $0x60] sm:$0xff]
          %v3572 = vld [vmem:[#allocation3 + $0x68] sm:$0xff]
          %v3573 = vld [vmem:[#allocation3 + $0x70] sm:$0xff]
          %v3574 = vld [vmem:[#allocation3 + $0x78] sm:$0xff]
          %s3575 = smul.u32 %s429, 9
          %s3576 = smul.addr %s3575, 4
          %s3577 = scalar_lea.vmem %s1, %s3576
          %v3578 = vld [vmem:[%s3577] sm:$0xf]
          %v3579 = vld [vmem:[%s3577 + $0x4] sm:$0xf]
          %v3580 = vld [vmem:[%s3577 + $0x8] sm:$0xf]
          %v3581 = vld [vmem:[%s3577 + $0xc] sm:$0xf]
          %v3582 = vld [vmem:[%s3577 + $0x10] sm:$0xf]
          %v3583 = vld [vmem:[%s3577 + $0x14] sm:$0xf]
          %v3584 = vld [vmem:[%s3577 + $0x18] sm:$0xf]
          %v3585 = vld [vmem:[%s3577 + $0x1c] sm:$0xf]
          %v3586 = vld [vmem:[%s3577 + $0x20] sm:$0xf]
          %s3587 = scalar_lea.vmem %s2, %s429
          %v3588 = vld [vmem:[%s3587] sm:$0x1]
          %v3590 = vlaneseq
          %v3591 = vshrl.u32 %v3590, 7
          %v3592 = vsub.s32 0, %v3591
          %v3593 = vrot.slane %v3588, %v3592
          %v3604 = vunpack.c.l.b16 %v3578
          %v3605 = vunpack.c.l.b16 %v3579
          %v3606 = vunpack.c.l.b16 %v3580
          %v3607 = vunpack.c.l.b16 %v3581
          %v3608 = vunpack.c.l.b16 %v3582
          %v3609 = vunpack.c.l.b16 %v3583
          %v3610 = vunpack.c.l.b16 %v3584
          %v3611 = vunpack.c.l.b16 %v3585
          %v3612 = vunpack.c.l.b16 %v3586
          %v3613 = vpack.c.b16 %v3605, %v3604
          %v3614 = vpack.c.b16 %v3607, %v3606
          %v3615 = vpack.c.b16 %v3609, %v3608
          %v3616 = vpack.c.b16 %v3611, %v3610
          %v3617 = vpack.c.b16 %v3612, %v3612
          %vm3622 = vcmask 588800
          %v3624 = vsel %vm3622, %v3559, 0
          %v3627 = vsel %vm3622, %v3560, 0
          %v3630 = vsel %vm3622, %v3561, 0
          %v3633 = vsel %vm3622, %v3562, 0
          %v3636 = vsel %vm3622, %v3563, 0
          %v3639 = vsel %vm3622, %v3564, 0
          %v3642 = vsel %vm3622, %v3565, 0
          %v3645 = vsel %vm3622, %v3566, 0
          %v3648 = vsel %vm3622, %v3567, 0
          %v3651 = vsel %vm3622, %v3568, 0
          %v3654 = vsel %vm3622, %v3569, 0
          %v3657 = vsel %vm3622, %v3570, 0
          %v3660 = vsel %vm3622, %v3571, 0
          %v3663 = vsel %vm3622, %v3572, 0
          %v3666 = vsel %vm3622, %v3573, 0
          %v3669 = vsel %vm3622, %v3574, 0
          %vm3671 = vcmask 1043456
          %v3673 = vsel %vm3671, %v3617, 0
          %3675 = vmatprep.subr.bf16.mxu0 0
          %3676 = vmatpush1.bf16.msra.mxu0 %v3613
          %3677 = vmatprep.subr.bf16.mxu0 0
          %3678 = vmatpush1.bf16.msra.mxu0 %v3614
          %3679 = vmatprep.subr.bf16.mxu0 0
          %3680 = vmatpush1.bf16.msra.mxu0 %v3615
          %3681 = vmatprep.subr.bf16.mxu0 0
          %3682 = vmatpush1.bf16.msra.mxu0 %v3616
          %3683 = vmatprep.subr.bf16.mxu0 0
          %3684 = vmatpush1.bf16.msra.mxu0 %v3673
          %3685 = vmatprep.subr.bf16.mxu0 0
          %3686 = vmatpush1.bf16.msra.mxu0 0
          %3687 = vmatprep.subr.bf16.mxu0 0
          %3688 = vmatpush1.bf16.msra.mxu0 0
          %3689 = vmatprep.subr.bf16.mxu0 0
          %3690 = vmatpush1.bf16.msra.mxu0 0
          %3691 = vmatprep.subr.bf16.mxu0 0
          %3692 = vmatpush1.bf16.msra.mxu0 0
          %3693 = vmatprep.subr.bf16.mxu0 0
          %3694 = vmatpush1.bf16.msra.mxu0 0
          %3695 = vmatprep.subr.bf16.mxu0 0
          %3696 = vmatpush1.bf16.msra.mxu0 0
          %3697 = vmatprep.subr.bf16.mxu0 0
          %3698 = vmatpush1.bf16.msra.mxu0 0
          %3699 = vmatprep.subr.bf16.mxu0 0
          %3700 = vmatpush1.bf16.msra.mxu0 0
          %3701 = vmatprep.subr.bf16.mxu0 0
          %3702 = vmatpush1.bf16.msra.mxu0 0
          %3703 = vmatprep.subr.bf16.mxu0 0
          %3704 = vmatpush1.bf16.msra.mxu0 0
          %3705 = vmatprep.subr.bf16.mxu0 0
          %3706 = vmatpush1.bf16.msra.mxu0 0
          %3707 = vmatprep.mubr.bf16.mxu0 0
          %3708 = vmatmul.mubr.bf16.gmra.mrb[0].mxu0 %v3624
          %v3709 = vpop.f32.mrb[0].mxu0
          %v3710 = vadd.f32 %v3593, %v3709
          %v3711 = vpop.f32.mrb[0].mxu0
          %v3712 = vpop.f32.mrb[0].mxu0
          %v3713 = vadd.f32 %v3593, %v3712
          %v3714 = vpop.f32.mrb[0].mxu0
          %3715 = vmatprep.mubr.bf16.mxu0 0
          %3716 = vmatmul.mubr.bf16.gmra.mrb[0].mxu0 %v3627
          %v3717 = vpop.f32.mrb[0].mxu0
          %v3718 = vadd.f32 %v3593, %v3717
          %v3719 = vpop.f32.mrb[0].mxu0
          %v3720 = vpop.f32.mrb[0].mxu0
          %v3721 = vadd.f32 %v3593, %v3720
          %v3722 = vpop.f32.mrb[0].mxu0
          %3723 = vmatprep.mubr.bf16.mxu0 0
          %3724 = vmatmul.mubr.bf16.gmra.mrb[0].mxu0 %v3630
          %v3725 = vpop.f32.mrb[0].mxu0
          %v3726 = vadd.f32 %v3593, %v3725
          %v3727 = vpop.f32.mrb[0].mxu0
          %v3728 = vpop.f32.mrb[0].mxu0
          %v3729 = vadd.f32 %v3593, %v3728
          %v3730 = vpop.f32.mrb[0].mxu0
          %3731 = vmatprep.mubr.bf16.mxu0 0
          %3732 = vmatmul.mubr.bf16.gmra.mrb[0].mxu0 %v3633
          %v3733 = vpop.f32.mrb[0].mxu0
          %v3734 = vadd.f32 %v3593, %v3733
          %v3735 = vpop.f32.mrb[0].mxu0
          %v3736 = vpop.f32.mrb[0].mxu0
          %v3737 = vadd.f32 %v3593, %v3736
          %v3738 = vpop.f32.mrb[0].mxu0
          %3739 = vmatprep.mubr.bf16.mxu0 0
          %3740 = vmatmul.mubr.bf16.gmra.mrb[0].mxu0 %v3636
          %v3741 = vpop.f32.mrb[0].mxu0
          %v3742 = vadd.f32 %v3593, %v3741
          %v3743 = vpop.f32.mrb[0].mxu0
          %v3744 = vpop.f32.mrb[0].mxu0
          %v3745 = vadd.f32 %v3593, %v3744
          %v3746 = vpop.f32.mrb[0].mxu0
          %3747 = vmatprep.mubr.bf16.mxu0 0
          %3748 = vmatmul.mubr.bf16.gmra.mrb[0].mxu0 %v3639
          %v3749 = vpop.f32.mrb[0].mxu0
          %v3750 = vadd.f32 %v3593, %v3749
          %v3751 = vpop.f32.mrb[0].mxu0
          %v3752 = vpop.f32.mrb[0].mxu0
          %v3753 = vadd.f32 %v3593, %v3752
          %v3754 = vpop.f32.mrb[0].mxu0
          %3755 = vmatprep.mubr.bf16.mxu0 0
          %3756 = vmatmul.mubr.bf16.gmra.mrb[0].mxu0 %v3642
          %v3757 = vpop.f32.mrb[0].mxu0
          %v3758 = vadd.f32 %v3593, %v3757
          %v3759 = vpop.f32.mrb[0].mxu0
          %v3760 = vpop.f32.mrb[0].mxu0
          %v3761 = vadd.f32 %v3593, %v3760
          %v3762 = vpop.f32.mrb[0].mxu0
          %3763 = vmatprep.mubr.bf16.mxu0 0
          %3764 = vmatmul.mubr.bf16.gmra.mrb[0].mxu0 %v3645
          %v3765 = vpop.f32.mrb[0].mxu0
          %v3766 = vadd.f32 %v3593, %v3765
          %v3767 = vpop.f32.mrb[0].mxu0
          %v3768 = vpop.f32.mrb[0].mxu0
          %v3769 = vadd.f32 %v3593, %v3768
          %v3770 = vpop.f32.mrb[0].mxu0
          %3771 = vmatprep.mubr.bf16.mxu0 0
          %3772 = vmatmul.mubr.bf16.gmra.mrb[0].mxu0 %v3648
          %v3773 = vpop.f32.mrb[0].mxu0
          %v3774 = vadd.f32 %v3593, %v3773
          %v3775 = vpop.f32.mrb[0].mxu0
          %v3776 = vpop.f32.mrb[0].mxu0
          %v3777 = vadd.f32 %v3593, %v3776
          %v3778 = vpop.f32.mrb[0].mxu0
          %3779 = vmatprep.mubr.bf16.mxu0 0
          %3780 = vmatmul.mubr.bf16.gmra.mrb[0].mxu0 %v3651
          %v3781 = vpop.f32.mrb[0].mxu0
          %v3782 = vadd.f32 %v3593, %v3781
          %v3783 = vpop.f32.mrb[0].mxu0
          %v3784 = vpop.f32.mrb[0].mxu0
          %v3785 = vadd.f32 %v3593, %v3784
          %v3786 = vpop.f32.mrb[0].mxu0
          %3787 = vmatprep.mubr.bf16.mxu0 0
          %3788 = vmatmul.mubr.bf16.gmra.mrb[0].mxu0 %v3654
          %v3789 = vpop.f32.mrb[0].mxu0
          %v3790 = vadd.f32 %v3593, %v3789
          %v3791 = vpop.f32.mrb[0].mxu0
          %v3792 = vpop.f32.mrb[0].mxu0
          %v3793 = vadd.f32 %v3593, %v3792
          %v3794 = vpop.f32.mrb[0].mxu0
          %3795 = vmatprep.mubr.bf16.mxu0 0
          %3796 = vmatmul.mubr.bf16.gmra.mrb[0].mxu0 %v3657
          %v3797 = vpop.f32.mrb[0].mxu0
          %v3798 = vadd.f32 %v3593, %v3797
          %v3799 = vpop.f32.mrb[0].mxu0
          %v3800 = vpop.f32.mrb[0].mxu0
          %v3801 = vadd.f32 %v3593, %v3800
          %v3802 = vpop.f32.mrb[0].mxu0
          %3803 = vmatprep.mubr.bf16.mxu0 0
          %3804 = vmatmul.mubr.bf16.gmra.mrb[0].mxu0 %v3660
          %v3805 = vpop.f32.mrb[0].mxu0
          %v3806 = vadd.f32 %v3593, %v3805
          %v3807 = vpop.f32.mrb[0].mxu0
          %v3808 = vpop.f32.mrb[0].mxu0
          %v3809 = vadd.f32 %v3593, %v3808
          %v3810 = vpop.f32.mrb[0].mxu0
          %3811 = vmatprep.mubr.bf16.mxu0 0
          %3812 = vmatmul.mubr.bf16.gmra.mrb[0].mxu0 %v3663
          %v3813 = vpop.f32.mrb[0].mxu0
          %v3814 = vadd.f32 %v3593, %v3813
          %v3815 = vpop.f32.mrb[0].mxu0
          %v3816 = vpop.f32.mrb[0].mxu0
          %v3817 = vadd.f32 %v3593, %v3816
          %v3818 = vpop.f32.mrb[0].mxu0
          %3819 = vmatprep.mubr.bf16.mxu0 0
          %3820 = vmatmul.mubr.bf16.gmra.mrb[0].mxu0 %v3666
          %v3821 = vpop.f32.mrb[0].mxu0
          %v3822 = vadd.f32 %v3593, %v3821
          %v3823 = vpop.f32.mrb[0].mxu0
          %v3824 = vpop.f32.mrb[0].mxu0
          %v3825 = vadd.f32 %v3593, %v3824
          %v3826 = vpop.f32.mrb[0].mxu0
          %3827 = vmatprep.mubr.bf16.mxu0 0
          %3828 = vmatmul.mubr.bf16.gmra.mrb[0].mxu0 %v3669
          %v3829 = vpop.f32.mrb[0].mxu0
          %v3830 = vadd.f32 %v3593, %v3829
          %v3831 = vpop.f32.mrb[0].mxu0
          %v3832 = vpop.f32.mrb[0].mxu0
          %v3833 = vadd.f32 %v3593, %v3832
          %v3834 = vpop.f32.mrb[0].mxu0
          %3835 = vdwg.mxu0
          %v3836 = vmax.f32 %v3710, 0.0
          %v3837 = vmax.f32 %v3713, 0.0
          %v3838 = vmax.f32 %v3718, 0.0
          %v3839 = vmax.f32 %v3721, 0.0
          %v3840 = vmax.f32 %v3726, 0.0
          %v3841 = vmax.f32 %v3729, 0.0
          %v3842 = vmax.f32 %v3734, 0.0
          %v3843 = vmax.f32 %v3737, 0.0
          %v3844 = vmax.f32 %v3742, 0.0
          %v3845 = vmax.f32 %v3745, 0.0
          %v3846 = vmax.f32 %v3750, 0.0
          %v3847 = vmax.f32 %v3753, 0.0
          %v3848 = vmax.f32 %v3758, 0.0
          %v3849 = vmax.f32 %v3761, 0.0
          %v3850 = vmax.f32 %v3766, 0.0
          %v3851 = vmax.f32 %v3769, 0.0
          %v3852 = vmax.f32 %v3774, 0.0
          %v3853 = vmax.f32 %v3777, 0.0
          %v3854 = vmax.f32 %v3782, 0.0
          %v3855 = vmax.f32 %v3785, 0.0
          %v3856 = vmax.f32 %v3790, 0.0
          %v3857 = vmax.f32 %v3793, 0.0
          %v3858 = vmax.f32 %v3798, 0.0
          %v3859 = vmax.f32 %v3801, 0.0
          %v3860 = vmax.f32 %v3806, 0.0
          %v3861 = vmax.f32 %v3809, 0.0
          %v3862 = vmax.f32 %v3814, 0.0
          %v3863 = vmax.f32 %v3817, 0.0
          %v3864 = vmax.f32 %v3822, 0.0
          %v3865 = vmax.f32 %v3825, 0.0
          %v3866 = vmax.f32 %v3830, 0.0
          %v3867 = vmax.f32 %v3833, 0.0
          %v3868 = vpack.c.bf16 %v3837, %v3836
          %v3869 = vpack.c.bf16 %v3839, %v3838
          %v3870 = vpack.c.bf16 %v3841, %v3840
          %v3871 = vpack.c.bf16 %v3843, %v3842
          %v3872 = vpack.c.bf16 %v3845, %v3844
          %v3873 = vpack.c.bf16 %v3847, %v3846
          %v3874 = vpack.c.bf16 %v3849, %v3848
          %v3875 = vpack.c.bf16 %v3851, %v3850
          %v3876 = vpack.c.bf16 %v3853, %v3852
          %v3877 = vpack.c.bf16 %v3855, %v3854
          %v3878 = vpack.c.bf16 %v3857, %v3856
          %v3879 = vpack.c.bf16 %v3859, %v3858
          %v3880 = vpack.c.bf16 %v3861, %v3860
          %v3881 = vpack.c.bf16 %v3863, %v3862
          %v3882 = vpack.c.bf16 %v3865, %v3864
          %v3883 = vpack.c.bf16 %v3867, %v3866
          %v3900 = vunpack.c.l.b16 %v3868
          %v3901 = vunpack.c.h.b16 %v3868
          %v3902 = vunpack.c.l.b16 %v3869
          %v3903 = vunpack.c.h.b16 %v3869
          %v3904 = vunpack.c.l.b16 %v3870
          %v3905 = vunpack.c.h.b16 %v3870
          %v3906 = vunpack.c.l.b16 %v3871
          %v3907 = vunpack.c.h.b16 %v3871
          %v3908 = vunpack.c.l.b16 %v3872
          %v3909 = vunpack.c.h.b16 %v3872
          %v3910 = vunpack.c.l.b16 %v3873
          %v3911 = vunpack.c.h.b16 %v3873
          %v3912 = vunpack.c.l.b16 %v3874
          %v3913 = vunpack.c.h.b16 %v3874
          %v3914 = vunpack.c.l.b16 %v3875
          %v3915 = vunpack.c.h.b16 %v3875
          %v3916 = vunpack.c.l.b16 %v3876
          %v3917 = vunpack.c.h.b16 %v3876
          %v3918 = vunpack.c.l.b16 %v3877
          %v3919 = vunpack.c.h.b16 %v3877
          %v3920 = vunpack.c.l.b16 %v3878
          %v3921 = vunpack.c.h.b16 %v3878
          %v3922 = vunpack.c.l.b16 %v3879
          %v3923 = vunpack.c.h.b16 %v3879
          %v3924 = vunpack.c.l.b16 %v3880
          %v3925 = vunpack.c.h.b16 %v3880
          %v3926 = vunpack.c.l.b16 %v3881
          %v3927 = vunpack.c.h.b16 %v3881
          %v3928 = vunpack.c.l.b16 %v3882
          %v3929 = vunpack.c.h.b16 %v3882
          %v3930 = vunpack.c.l.b16 %v3883
          %v3931 = vunpack.c.h.b16 %v3883
          %v3932 = vpack.c.b16 %v3900, %v3900
          %v3933 = vpack.c.b16 %v3901, %v3901
          %v3934 = vpack.c.b16 %v3902, %v3902
          %v3935 = vpack.c.b16 %v3903, %v3903
          %v3936 = vpack.c.b16 %v3904, %v3904
          %v3937 = vpack.c.b16 %v3905, %v3905
          %v3938 = vpack.c.b16 %v3906, %v3906
          %v3939 = vpack.c.b16 %v3907, %v3907
          %v3940 = vpack.c.b16 %v3908, %v3908
          %v3941 = vpack.c.b16 %v3909, %v3909
          %v3942 = vpack.c.b16 %v3910, %v3910
          %v3943 = vpack.c.b16 %v3911, %v3911
          %v3944 = vpack.c.b16 %v3912, %v3912
          %v3945 = vpack.c.b16 %v3913, %v3913
          %v3946 = vpack.c.b16 %v3914, %v3914
          %v3947 = vpack.c.b16 %v3915, %v3915
          %v3948 = vpack.c.b16 %v3916, %v3916
          %v3949 = vpack.c.b16 %v3917, %v3917
          %v3950 = vpack.c.b16 %v3918, %v3918
          %v3951 = vpack.c.b16 %v3919, %v3919
          %v3952 = vpack.c.b16 %v3920, %v3920
          %v3953 = vpack.c.b16 %v3921, %v3921
          %v3954 = vpack.c.b16 %v3922, %v3922
          %v3955 = vpack.c.b16 %v3923, %v3923
          %v3956 = vpack.c.b16 %v3924, %v3924
          %v3957 = vpack.c.b16 %v3925, %v3925
          %v3958 = vpack.c.b16 %v3926, %v3926
          %v3959 = vpack.c.b16 %v3927, %v3927
          %v3960 = vpack.c.b16 %v3928, %v3928
          %v3961 = vpack.c.b16 %v3929, %v3929
          %v3962 = vpack.c.b16 %v3930, %v3930
          %v3963 = vpack.c.b16 %v3931, %v3931
          %vm3964 = vsmask.f32 4368
          %vm3965 = vmor %vm316, %vm3964
          %v3967 = vshrl.u32 %v3932, 16
          %v3969 = vrot.slane %v3967, 7
          %v3970 = vshll.u32 %v3932, 16
          %v3972 = vor.u32 %v3969, %v3970
          %v3973 = vrot.slane %v3969, 4
          %v3975 = vshrl.u32 %v3933, 16
          %v3977 = vrot.slane %v3975, 7
          %v3978 = vshll.u32 %v3933, 16
          %v3980 = vor.u32 %v3977, %v3978
          %v3981 = vsel %vm3965, %v3973, %v3980
          %v3982 = vrot.slane %v3977, 4
          %v3984 = vshrl.u32 %v3934, 16
          %v3986 = vrot.slane %v3984, 7
          %v3987 = vshll.u32 %v3934, 16
          %v3989 = vor.u32 %v3986, %v3987
          %v3990 = vrot.slane %v3986, 4
          %v3992 = vshrl.u32 %v3935, 16
          %v3994 = vrot.slane %v3992, 7
          %v3995 = vshll.u32 %v3935, 16
          %v3997 = vor.u32 %v3994, %v3995
          %v3998 = vsel %vm3965, %v3990, %v3997
          %v3999 = vrot.slane %v3994, 4
          %v4001 = vshrl.u32 %v3936, 16
          %v4003 = vrot.slane %v4001, 7
          %v4004 = vshll.u32 %v3936, 16
          %v4006 = vor.u32 %v4003, %v4004
          %v4007 = vrot.slane %v4003, 4
          %v4009 = vshrl.u32 %v3937, 16
          %v4011 = vrot.slane %v4009, 7
          %v4012 = vshll.u32 %v3937, 16
          %v4014 = vor.u32 %v4011, %v4012
          %v4015 = vsel %vm3965, %v4007, %v4014
          %v4016 = vrot.slane %v4011, 4
          %v4018 = vshrl.u32 %v3938, 16
          %v4020 = vrot.slane %v4018, 7
          %v4021 = vshll.u32 %v3938, 16
          %v4023 = vor.u32 %v4020, %v4021
          %v4024 = vrot.slane %v4020, 4
          %v4026 = vshrl.u32 %v3939, 16
          %v4028 = vrot.slane %v4026, 7
          %v4029 = vshll.u32 %v3939, 16
          %v4031 = vor.u32 %v4028, %v4029
          %v4032 = vsel %vm3965, %v4024, %v4031
          %v4033 = vrot.slane %v4028, 4
          %v4035 = vshrl.u32 %v3940, 16
          %v4037 = vrot.slane %v4035, 7
          %v4038 = vshll.u32 %v3940, 16
          %v4040 = vor.u32 %v4037, %v4038
          %v4041 = vrot.slane %v4037, 4
          %v4043 = vshrl.u32 %v3941, 16
          %v4045 = vrot.slane %v4043, 7
          %v4046 = vshll.u32 %v3941, 16
          %v4048 = vor.u32 %v4045, %v4046
          %v4049 = vsel %vm3965, %v4041, %v4048
          %v4050 = vrot.slane %v4045, 4
          %v4052 = vshrl.u32 %v3942, 16
          %v4054 = vrot.slane %v4052, 7
          %v4055 = vshll.u32 %v3942, 16
          %v4057 = vor.u32 %v4054, %v4055
          %v4058 = vrot.slane %v4054, 4
          %v4060 = vshrl.u32 %v3943, 16
          %v4062 = vrot.slane %v4060, 7
          %v4063 = vshll.u32 %v3943, 16
          %v4065 = vor.u32 %v4062, %v4063
          %v4066 = vsel %vm3965, %v4058, %v4065
          %v4067 = vrot.slane %v4062, 4
          %v4069 = vshrl.u32 %v3944, 16
          %v4071 = vrot.slane %v4069, 7
          %v4072 = vshll.u32 %v3944, 16
          %v4074 = vor.u32 %v4071, %v4072
          %v4075 = vrot.slane %v4071, 4
          %v4077 = vshrl.u32 %v3945, 16
          %v4079 = vrot.slane %v4077, 7
          %v4080 = vshll.u32 %v3945, 16
          %v4082 = vor.u32 %v4079, %v4080
          %v4083 = vsel %vm3965, %v4075, %v4082
          %v4084 = vrot.slane %v4079, 4
          %v4086 = vshrl.u32 %v3946, 16
          %v4088 = vrot.slane %v4086, 7
          %v4089 = vshll.u32 %v3946, 16
          %v4091 = vor.u32 %v4088, %v4089
          %v4092 = vrot.slane %v4088, 4
          %v4094 = vshrl.u32 %v3947, 16
          %v4096 = vrot.slane %v4094, 7
          %v4097 = vshll.u32 %v3947, 16
          %v4099 = vor.u32 %v4096, %v4097
          %v4100 = vsel %vm3965, %v4092, %v4099
          %v4101 = vrot.slane %v4096, 4
          %v4103 = vshrl.u32 %v3948, 16
          %v4105 = vrot.slane %v4103, 7
          %v4106 = vshll.u32 %v3948, 16
          %v4108 = vor.u32 %v4105, %v4106
          %v4109 = vrot.slane %v4105, 4
          %v4111 = vshrl.u32 %v3949, 16
          %v4113 = vrot.slane %v4111, 7
          %v4114 = vshll.u32 %v3949, 16
          %v4116 = vor.u32 %v4113, %v4114
          %v4117 = vsel %vm3965, %v4109, %v4116
          %v4118 = vrot.slane %v4113, 4
          %v4120 = vshrl.u32 %v3950, 16
          %v4122 = vrot.slane %v4120, 7
          %v4123 = vshll.u32 %v3950, 16
          %v4125 = vor.u32 %v4122, %v4123
          %v4126 = vrot.slane %v4122, 4
          %v4128 = vshrl.u32 %v3951, 16
          %v4130 = vrot.slane %v4128, 7
          %v4131 = vshll.u32 %v3951, 16
          %v4133 = vor.u32 %v4130, %v4131
          %v4134 = vsel %vm3965, %v4126, %v4133
          %v4135 = vrot.slane %v4130, 4
          %v4137 = vshrl.u32 %v3952, 16
          %v4139 = vrot.slane %v4137, 7
          %v4140 = vshll.u32 %v3952, 16
          %v4142 = vor.u32 %v4139, %v4140
          %v4143 = vrot.slane %v4139, 4
          %v4145 = vshrl.u32 %v3953, 16
          %v4147 = vrot.slane %v4145, 7
          %v4148 = vshll.u32 %v3953, 16
          %v4150 = vor.u32 %v4147, %v4148
          %v4151 = vsel %vm3965, %v4143, %v4150
          %v4152 = vrot.slane %v4147, 4
          %v4154 = vshrl.u32 %v3954, 16
          %v4156 = vrot.slane %v4154, 7
          %v4157 = vshll.u32 %v3954, 16
          %v4159 = vor.u32 %v4156, %v4157
          %v4160 = vrot.slane %v4156, 4
          %v4162 = vshrl.u32 %v3955, 16
          %v4164 = vrot.slane %v4162, 7
          %v4165 = vshll.u32 %v3955, 16
          %v4167 = vor.u32 %v4164, %v4165
          %v4168 = vsel %vm3965, %v4160, %v4167
          %v4169 = vrot.slane %v4164, 4
          %v4171 = vshrl.u32 %v3956, 16
          %v4173 = vrot.slane %v4171, 7
          %v4174 = vshll.u32 %v3956, 16
          %v4176 = vor.u32 %v4173, %v4174
          %v4177 = vrot.slane %v4173, 4
          %v4179 = vshrl.u32 %v3957, 16
          %v4181 = vrot.slane %v4179, 7
          %v4182 = vshll.u32 %v3957, 16
          %v4184 = vor.u32 %v4181, %v4182
          %v4185 = vsel %vm3965, %v4177, %v4184
          %v4186 = vrot.slane %v4181, 4
          %v4188 = vshrl.u32 %v3958, 16
          %v4190 = vrot.slane %v4188, 7
          %v4191 = vshll.u32 %v3958, 16
          %v4193 = vor.u32 %v4190, %v4191
          %v4194 = vrot.slane %v4190, 4
          %v4196 = vshrl.u32 %v3959, 16
          %v4198 = vrot.slane %v4196, 7
          %v4199 = vshll.u32 %v3959, 16
          %v4201 = vor.u32 %v4198, %v4199
          %v4202 = vsel %vm3965, %v4194, %v4201
          %v4203 = vrot.slane %v4198, 4
          %v4205 = vshrl.u32 %v3960, 16
          %v4207 = vrot.slane %v4205, 7
          %v4208 = vshll.u32 %v3960, 16
          %v4210 = vor.u32 %v4207, %v4208
          %v4211 = vrot.slane %v4207, 4
          %v4213 = vshrl.u32 %v3961, 16
          %v4215 = vrot.slane %v4213, 7
          %v4216 = vshll.u32 %v3961, 16
          %v4218 = vor.u32 %v4215, %v4216
          %v4219 = vsel %vm3965, %v4211, %v4218
          %v4220 = vrot.slane %v4215, 4
          %v4222 = vshrl.u32 %v3962, 16
          %v4224 = vrot.slane %v4222, 7
          %v4225 = vshll.u32 %v3962, 16
          %v4227 = vor.u32 %v4224, %v4225
          %v4228 = vrot.slane %v4224, 4
          %v4230 = vshrl.u32 %v3963, 16
          %v4232 = vrot.slane %v4230, 7
          %v4233 = vshll.u32 %v3963, 16
          %v4235 = vor.u32 %v4232, %v4233
          %v4236 = vsel %vm3965, %v4228, %v4235
          %v4237 = vrot.slane %v4232, 4
          %s4286 = smul.u32 %s446, 54
          %s4287 = sadd.s32 3, %s4286
          %s4288 = smul.addr %s4287, 4
          %s4289 = scalar_lea.vmem [#allocation2], %s4288
          %vm4290 = vcmask 60416
          %vm4291 = vmand %vm4290, %vm372
          %v4292 = vld [vmem:[%s4289] sm:$0xf]
          %v4293 = vsel %vm4291, %v3972, %v4292
          %4294 = vst [vmem:[%s4289] sm:$0xf] %v4293
          %4295 = vst.msk [vmem:[%s4289 + $0x4] sm:$0xf] %vm251, %v3981
          %v4296 = vld [vmem:[%s4289 + $0x8] sm:$0x1]
          %v4297 = vsel %vm317, %v3982, %v4296
          %4298 = vst [vmem:[%s4289 + $0x8] sm:$0x1] %v4297
          %v4299 = vld [vmem:[%s4289 + $0xc] sm:$0xf]
          %v4300 = vsel %vm4291, %v3989, %v4299
          %4301 = vst [vmem:[%s4289 + $0xc] sm:$0xf] %v4300
          %4302 = vst.msk [vmem:[%s4289 + $0x10] sm:$0xf] %vm251, %v3998
          %v4303 = vld [vmem:[%s4289 + $0x14] sm:$0x1]
          %v4304 = vsel %vm317, %v3999, %v4303
          %4305 = vst [vmem:[%s4289 + $0x14] sm:$0x1] %v4304
          %v4306 = vld [vmem:[%s4289 + $0x18] sm:$0xf]
          %v4307 = vsel %vm4291, %v4006, %v4306
          %4308 = vst [vmem:[%s4289 + $0x18] sm:$0xf] %v4307
          %4309 = vst.msk [vmem:[%s4289 + $0x1c] sm:$0xf] %vm251, %v4015
          %v4310 = vld [vmem:[%s4289 + $0x20] sm:$0x1]
          %v4311 = vsel %vm317, %v4016, %v4310
          %4312 = vst [vmem:[%s4289 + $0x20] sm:$0x1] %v4311
          %v4313 = vld [vmem:[%s4289 + $0x24] sm:$0xf]
          %v4314 = vsel %vm4291, %v4023, %v4313
          %4315 = vst [vmem:[%s4289 + $0x24] sm:$0xf] %v4314
          %4316 = vst.msk [vmem:[%s4289 + $0x28] sm:$0xf] %vm251, %v4032
          %v4317 = vld [vmem:[%s4289 + $0x2c] sm:$0x1]
          %v4318 = vsel %vm317, %v4033, %v4317
          %4319 = vst [vmem:[%s4289 + $0x2c] sm:$0x1] %v4318
          %v4320 = vld [vmem:[%s4289 + $0x30] sm:$0xf]
          %v4321 = vsel %vm4291, %v4040, %v4320
          %4322 = vst [vmem:[%s4289 + $0x30] sm:$0xf] %v4321
          %4323 = vst.msk [vmem:[%s4289 + $0x34] sm:$0xf] %vm251, %v4049
          %v4324 = vld [vmem:[%s4289 + $0x38] sm:$0x1]
          %v4325 = vsel %vm317, %v4050, %v4324
          %4326 = vst [vmem:[%s4289 + $0x38] sm:$0x1] %v4325
          %v4327 = vld [vmem:[%s4289 + $0x3c] sm:$0xf]
          %v4328 = vsel %vm4291, %v4057, %v4327
          %4329 = vst [vmem:[%s4289 + $0x3c] sm:$0xf] %v4328
          %4330 = vst.msk [vmem:[%s4289 + $0x40] sm:$0xf] %vm251, %v4066
          %v4331 = vld [vmem:[%s4289 + $0x44] sm:$0x1]
          %v4332 = vsel %vm317, %v4067, %v4331
          %4333 = vst [vmem:[%s4289 + $0x44] sm:$0x1] %v4332
          %v4334 = vld [vmem:[%s4289 + $0x48] sm:$0xf]
          %v4335 = vsel %vm4291, %v4074, %v4334
          %4336 = vst [vmem:[%s4289 + $0x48] sm:$0xf] %v4335
          %4337 = vst.msk [vmem:[%s4289 + $0x4c] sm:$0xf] %vm251, %v4083
          %v4338 = vld [vmem:[%s4289 + $0x50] sm:$0x1]
          %v4339 = vsel %vm317, %v4084, %v4338
          %4340 = vst [vmem:[%s4289 + $0x50] sm:$0x1] %v4339
          %v4341 = vld [vmem:[%s4289 + $0x54] sm:$0xf]
          %v4342 = vsel %vm4291, %v4091, %v4341
          %4343 = vst [vmem:[%s4289 + $0x54] sm:$0xf] %v4342
          %4344 = vst.msk [vmem:[%s4289 + $0x58] sm:$0xf] %vm251, %v4100
          %v4345 = vld [vmem:[%s4289 + $0x5c] sm:$0x1]
          %v4346 = vsel %vm317, %v4101, %v4345
          %4347 = vst [vmem:[%s4289 + $0x5c] sm:$0x1] %v4346
          %v4348 = vld [vmem:[%s4289 + $0x60] sm:$0xf]
          %v4349 = vsel %vm4291, %v4108, %v4348
          %4350 = vst [vmem:[%s4289 + $0x60] sm:$0xf] %v4349
          %4351 = vst.msk [vmem:[%s4289 + $0x64] sm:$0xf] %vm251, %v4117
          %v4352 = vld [vmem:[%s4289 + $0x68] sm:$0x1]
          %v4353 = vsel %vm317, %v4118, %v4352
          %4354 = vst [vmem:[%s4289 + $0x68] sm:$0x1] %v4353
          %v4355 = vld [vmem:[%s4289 + $0x6c] sm:$0xf]
          %v4356 = vsel %vm4291, %v4125, %v4355
          %4357 = vst [vmem:[%s4289 + $0x6c] sm:$0xf] %v4356
          %4358 = vst.msk [vmem:[%s4289 + $0x70] sm:$0xf] %vm251, %v4134
          %v4359 = vld [vmem:[%s4289 + $0x74] sm:$0x1]
          %v4360 = vsel %vm317, %v4135, %v4359
          %4361 = vst [vmem:[%s4289 + $0x74] sm:$0x1] %v4360
          %v4362 = vld [vmem:[%s4289 + $0x78] sm:$0xf]
          %v4363 = vsel %vm4291, %v4142, %v4362
          %4364 = vst [vmem:[%s4289 + $0x78] sm:$0xf] %v4363
          %4365 = vst.msk [vmem:[%s4289 + $0x7c] sm:$0xf] %vm251, %v4151
          %v4366 = vld [vmem:[%s4289 + $0x80] sm:$0x1]
          %v4367 = vsel %vm317, %v4152, %v4366
          %4368 = vst [vmem:[%s4289 + $0x80] sm:$0x1] %v4367
          %v4369 = vld [vmem:[%s4289 + $0x84] sm:$0xf]
          %v4370 = vsel %vm4291, %v4159, %v4369
          %4371 = vst [vmem:[%s4289 + $0x84] sm:$0xf] %v4370
          %4372 = vst.msk [vmem:[%s4289 + $0x88] sm:$0xf] %vm251, %v4168
          %v4373 = vld [vmem:[%s4289 + $0x8c] sm:$0x1]
          %v4374 = vsel %vm317, %v4169, %v4373
          %4375 = vst [vmem:[%s4289 + $0x8c] sm:$0x1] %v4374
          %v4376 = vld [vmem:[%s4289 + $0x90] sm:$0xf]
          %v4377 = vsel %vm4291, %v4176, %v4376
          %4378 = vst [vmem:[%s4289 + $0x90] sm:$0xf] %v4377
          %4379 = vst.msk [vmem:[%s4289 + $0x94] sm:$0xf] %vm251, %v4185
          %v4380 = vld [vmem:[%s4289 + $0x98] sm:$0x1]
          %v4381 = vsel %vm317, %v4186, %v4380
          %4382 = vst [vmem:[%s4289 + $0x98] sm:$0x1] %v4381
          %v4383 = vld [vmem:[%s4289 + $0x9c] sm:$0xf]
          %v4384 = vsel %vm4291, %v4193, %v4383
          %4385 = vst [vmem:[%s4289 + $0x9c] sm:$0xf] %v4384
          %4386 = vst.msk [vmem:[%s4289 + $0xa0] sm:$0xf] %vm251, %v4202
          %v4387 = vld [vmem:[%s4289 + $0xa4] sm:$0x1]
          %v4388 = vsel %vm317, %v4203, %v4387
          %4389 = vst [vmem:[%s4289 + $0xa4] sm:$0x1] %v4388
          %v4390 = vld [vmem:[%s4289 + $0xa8] sm:$0xf]
          %v4391 = vsel %vm4291, %v4210, %v4390
          %4392 = vst [vmem:[%s4289 + $0xa8] sm:$0xf] %v4391
          %4393 = vst.msk [vmem:[%s4289 + $0xac] sm:$0xf] %vm251, %v4219
          %v4394 = vld [vmem:[%s4289 + $0xb0] sm:$0x1]
          %v4395 = vsel %vm317, %v4220, %v4394
          %4396 = vst [vmem:[%s4289 + $0xb0] sm:$0x1] %v4395
          %v4397 = vld [vmem:[%s4289 + $0xb4] sm:$0xf]
          %v4398 = vsel %vm4291, %v4227, %v4397
          %4399 = vst [vmem:[%s4289 + $0xb4] sm:$0xf] %v4398
          %4400 = vst.msk [vmem:[%s4289 + $0xb8] sm:$0xf] %vm251, %v4236
          %v4401 = vld [vmem:[%s4289 + $0xbc] sm:$0x1]
          %v4402 = vsel %vm317, %v4237, %v4401
          %4403 = vst [vmem:[%s4289 + $0xbc] sm:$0x1] %v4402
        $region41: #{denoising_cnn_forward.1} parent=35 // loop_footer
          %s433 = sadd.s32 1, %s429
        $region42: #{denoising_cnn_forward.1} parent=35 // loop_footer_branch
          %428 = sbr.rel target = $region38
        $region43: #{denoising_cnn_forward.1} parent=35 // loop_exit
          _
        %v4404 = vld [vmem:[%s3] sm:$0xff]
        %v4405 = vld [vmem:[%s3 + $0x8] sm:$0x1]
        %v4406 = vld [vmem:[%s307] sm:$0xf]
        %v4407 = vld [vmem:[%s307 + $0x4] sm:$0xf]
        %v4408 = vld [vmem:[%s307 + $0xc] sm:$0xf]
        %v4409 = vld [vmem:[%s307 + $0x10] sm:$0xf]
        %v4410 = vld [vmem:[%s307 + $0x18] sm:$0xf]
        %v4411 = vld [vmem:[%s307 + $0x1c] sm:$0xf]
        %v4412 = vld [vmem:[%s307 + $0x24] sm:$0xf]
        %v4413 = vld [vmem:[%s307 + $0x28] sm:$0xf]
        %v4414 = vld [vmem:[%s307 + $0x30] sm:$0xf]
        %v4415 = vld [vmem:[%s307 + $0x34] sm:$0xf]
        %v4416 = vld [vmem:[%s307 + $0x3c] sm:$0xf]
        %v4417 = vld [vmem:[%s307 + $0x40] sm:$0xf]
        %v4418 = vld [vmem:[%s307 + $0x48] sm:$0xf]
        %v4419 = vld [vmem:[%s307 + $0x4c] sm:$0xf]
        %v4420 = vld [vmem:[%s307 + $0x54] sm:$0xf]
        %v4421 = vld [vmem:[%s307 + $0x58] sm:$0xf]
        %v4422 = vld [vmem:[%s307 + $0x60] sm:$0xf]
        %v4423 = vld [vmem:[%s307 + $0x64] sm:$0xf]
        %v4424 = vld [vmem:[%s307 + $0x6c] sm:$0xf]
        %v4425 = vld [vmem:[%s307 + $0x70] sm:$0xf]
        %v4426 = vld [vmem:[%s307 + $0x78] sm:$0xf]
        %v4427 = vld [vmem:[%s307 + $0x7c] sm:$0xf]
        %v4428 = vld [vmem:[%s307 + $0x84] sm:$0xf]
        %v4429 = vld [vmem:[%s307 + $0x88] sm:$0xf]
        %v4430 = vld [vmem:[%s307 + $0x90] sm:$0xf]
        %v4431 = vld [vmem:[%s307 + $0x94] sm:$0xf]
        %v4432 = vld [vmem:[%s307 + $0x9c] sm:$0xf]
        %v4433 = vld [vmem:[%s307 + $0xa0] sm:$0xf]
        %v4434 = vld [vmem:[%s307 + $0xa8] sm:$0xf]
        %v4435 = vld [vmem:[%s307 + $0xac] sm:$0xf]
        %v4436 = vld [vmem:[%s307 + $0xb4] sm:$0xf]
        %v4437 = vld [vmem:[%s307 + $0xb8] sm:$0xf]
        %v4438 = vunpack.c.l.bf16 %v4406
        %v4439 = vunpack.c.l.bf16 %v4407
        %v4440 = vunpack.c.l.bf16 %v4408
        %v4441 = vunpack.c.l.bf16 %v4409
        %v4442 = vunpack.c.l.bf16 %v4410
        %v4443 = vunpack.c.l.bf16 %v4411
        %v4444 = vunpack.c.l.bf16 %v4412
        %v4445 = vunpack.c.l.bf16 %v4413
        %v4446 = vunpack.c.l.bf16 %v4414
        %v4447 = vunpack.c.l.bf16 %v4415
        %v4448 = vunpack.c.l.bf16 %v4416
        %v4449 = vunpack.c.l.bf16 %v4417
        %v4450 = vunpack.c.l.bf16 %v4418
        %v4451 = vunpack.c.l.bf16 %v4419
        %v4452 = vunpack.c.l.bf16 %v4420
        %v4453 = vunpack.c.l.bf16 %v4421
        %v4454 = vunpack.c.l.bf16 %v4422
        %v4455 = vunpack.c.l.bf16 %v4423
        %v4456 = vunpack.c.l.bf16 %v4424
        %v4457 = vunpack.c.l.bf16 %v4425
        %v4458 = vunpack.c.l.bf16 %v4426
        %v4459 = vunpack.c.l.bf16 %v4427
        %v4460 = vunpack.c.l.bf16 %v4428
        %v4461 = vunpack.c.l.bf16 %v4429
        %v4462 = vunpack.c.l.bf16 %v4430
        %v4463 = vunpack.c.l.bf16 %v4431
        %v4464 = vunpack.c.l.bf16 %v4432
        %v4465 = vunpack.c.l.bf16 %v4433
        %v4466 = vunpack.c.l.bf16 %v4434
        %v4467 = vunpack.c.l.bf16 %v4435
        %v4468 = vunpack.c.l.bf16 %v4436
        %v4469 = vunpack.c.l.bf16 %v4437
        %v4470 = vlaneseq
        %v4471 = vshrl.u32 %v4470, 7
        %v4472 = vsub.s32 0, %v4471
        %v4473 = vrot.slane %v4404, %v4472
        %v4474 = vmul.f32 %v4438, %v4473
        %v4475 = vmul.f32 %v4439, %v4473
        %v4476 = vmul.f32 %v4440, %v4473
        %v4477 = vmul.f32 %v4441, %v4473
        %v4478 = vmul.f32 %v4442, %v4473
        %v4479 = vmul.f32 %v4443, %v4473
        %v4480 = vmul.f32 %v4444, %v4473
        %v4481 = vmul.f32 %v4445, %v4473
        %v4482 = vmul.f32 %v4446, %v4473
        %v4483 = vmul.f32 %v4447, %v4473
        %v4484 = vmul.f32 %v4448, %v4473
        %v4485 = vmul.f32 %v4449, %v4473
        %v4486 = vmul.f32 %v4450, %v4473
        %v4487 = vmul.f32 %v4451, %v4473
        %v4488 = vmul.f32 %v4452, %v4473
        %v4489 = vmul.f32 %v4453, %v4473
        %v4490 = vmul.f32 %v4454, %v4473
        %v4491 = vmul.f32 %v4455, %v4473
        %v4492 = vmul.f32 %v4456, %v4473
        %v4493 = vmul.f32 %v4457, %v4473
        %v4494 = vmul.f32 %v4458, %v4473
        %v4495 = vmul.f32 %v4459, %v4473
        %v4496 = vmul.f32 %v4460, %v4473
        %v4497 = vmul.f32 %v4461, %v4473
        %v4498 = vmul.f32 %v4462, %v4473
        %v4499 = vmul.f32 %v4463, %v4473
        %v4500 = vmul.f32 %v4464, %v4473
        %v4501 = vmul.f32 %v4465, %v4473
        %v4502 = vmul.f32 %v4466, %v4473
        %v4503 = vmul.f32 %v4467, %v4473
        %v4504 = vmul.f32 %v4468, %v4473
        %v4505 = vmul.f32 %v4469, %v4473
        %vm4506 = vcmask 64512
        %v4507 = vsel %vm4506, %v4474, 0.0
        %4508 = vadd.xlane.f32.xlu0 %v4507
        %v4509 = vpop.xlane.xlu0 %4508
        %v4510 = vsel %vm4506, %v4475, 0.0
        %4511 = vadd.xlane.f32.xlu0 %v4510
        %v4512 = vpop.xlane.xlu0 %4511
        %v4513 = vsel %vm4506, %v4476, 0.0
        %4514 = vadd.xlane.f32.xlu0 %v4513
        %v4515 = vpop.xlane.xlu0 %4514
        %v4516 = vsel %vm4506, %v4477, 0.0
        %4517 = vadd.xlane.f32.xlu0 %v4516
        %v4518 = vpop.xlane.xlu0 %4517
        %v4519 = vsel %vm4506, %v4478, 0.0
        %4520 = vadd.xlane.f32.xlu0 %v4519
        %v4521 = vpop.xlane.xlu0 %4520
        %v4522 = vsel %vm4506, %v4479, 0.0
        %4523 = vadd.xlane.f32.xlu0 %v4522
        %v4524 = vpop.xlane.xlu0 %4523
        %v4525 = vsel %vm4506, %v4480, 0.0
        %4526 = vadd.xlane.f32.xlu0 %v4525
        %v4527 = vpop.xlane.xlu0 %4526
        %v4528 = vsel %vm4506, %v4481, 0.0
        %4529 = vadd.xlane.f32.xlu0 %v4528
        %v4530 = vpop.xlane.xlu0 %4529
        %v4531 = vsel %vm4506, %v4482, 0.0
        %4532 = vadd.xlane.f32.xlu0 %v4531
        %v4533 = vpop.xlane.xlu0 %4532
        %v4534 = vsel %vm4506, %v4483, 0.0
        %4535 = vadd.xlane.f32.xlu0 %v4534
        %v4536 = vpop.xlane.xlu0 %4535
        %v4537 = vsel %vm4506, %v4484, 0.0
        %4538 = vadd.xlane.f32.xlu0 %v4537
        %v4539 = vpop.xlane.xlu0 %4538
        %v4540 = vsel %vm4506, %v4485, 0.0
        %4541 = vadd.xlane.f32.xlu0 %v4540
        %v4542 = vpop.xlane.xlu0 %4541
        %v4543 = vsel %vm4506, %v4486, 0.0
        %4544 = vadd.xlane.f32.xlu0 %v4543
        %v4545 = vpop.xlane.xlu0 %4544
        %v4546 = vsel %vm4506, %v4487, 0.0
        %4547 = vadd.xlane.f32.xlu0 %v4546
        %v4548 = vpop.xlane.xlu0 %4547
        %v4549 = vsel %vm4506, %v4488, 0.0
        %4550 = vadd.xlane.f32.xlu0 %v4549
        %v4551 = vpop.xlane.xlu0 %4550
        %v4552 = vsel %vm4506, %v4489, 0.0
        %4553 = vadd.xlane.f32.xlu0 %v4552
        %v4554 = vpop.xlane.xlu0 %4553
        %v4555 = vsel %vm4506, %v4490, 0.0
        %4556 = vadd.xlane.f32.xlu0 %v4555
        %v4557 = vpop.xlane.xlu0 %4556
        %v4558 = vsel %vm4506, %v4491, 0.0
        %4559 = vadd.xlane.f32.xlu0 %v4558
        %v4560 = vpop.xlane.xlu0 %4559
        %v4561 = vsel %vm4506, %v4492, 0.0
        %4562 = vadd.xlane.f32.xlu0 %v4561
        %v4563 = vpop.xlane.xlu0 %4562
        %v4564 = vsel %vm4506, %v4493, 0.0
        %4565 = vadd.xlane.f32.xlu0 %v4564
        %v4566 = vpop.xlane.xlu0 %4565
        %v4567 = vsel %vm4506, %v4494, 0.0
        %4568 = vadd.xlane.f32.xlu0 %v4567
        %v4569 = vpop.xlane.xlu0 %4568
        %v4570 = vsel %vm4506, %v4495, 0.0
        %4571 = vadd.xlane.f32.xlu0 %v4570
        %v4572 = vpop.xlane.xlu0 %4571
        %v4573 = vsel %vm4506, %v4496, 0.0
        %4574 = vadd.xlane.f32.xlu0 %v4573
        %v4575 = vpop.xlane.xlu0 %4574
        %v4576 = vsel %vm4506, %v4497, 0.0
        %4577 = vadd.xlane.f32.xlu0 %v4576
        %v4578 = vpop.xlane.xlu0 %4577
        %v4579 = vsel %vm4506, %v4498, 0.0
        %4580 = vadd.xlane.f32.xlu0 %v4579
        %v4581 = vpop.xlane.xlu0 %4580
        %v4582 = vsel %vm4506, %v4499, 0.0
        %4583 = vadd.xlane.f32.xlu0 %v4582
        %v4584 = vpop.xlane.xlu0 %4583
        %v4585 = vsel %vm4506, %v4500, 0.0
        %4586 = vadd.xlane.f32.xlu0 %v4585
        %v4587 = vpop.xlane.xlu0 %4586
        %v4588 = vsel %vm4506, %v4501, 0.0
        %4589 = vadd.xlane.f32.xlu0 %v4588
        %v4590 = vpop.xlane.xlu0 %4589
        %v4591 = vsel %vm4506, %v4502, 0.0
        %4592 = vadd.xlane.f32.xlu0 %v4591
        %v4593 = vpop.xlane.xlu0 %4592
        %v4594 = vsel %vm4506, %v4503, 0.0
        %4595 = vadd.xlane.f32.xlu0 %v4594
        %v4596 = vpop.xlane.xlu0 %4595
        %v4597 = vsel %vm4506, %v4504, 0.0
        %4598 = vadd.xlane.f32.xlu0 %v4597
        %v4599 = vpop.xlane.xlu0 %4598
        %v4600 = vsel %vm4506, %v4505, 0.0
        %4601 = vadd.xlane.f32.xlu0 %v4600
        %v4602 = vpop.xlane.xlu0 %4601
        %v4603 = vadd.f32 %v4509, 0.0
        %v4604 = vadd.f32 %v4512, 0.0
        %v4605 = vadd.f32 %v4515, 0.0
        %v4606 = vadd.f32 %v4518, 0.0
        %v4607 = vadd.f32 %v4521, 0.0
        %v4608 = vadd.f32 %v4524, 0.0
        %v4609 = vadd.f32 %v4527, 0.0
        %v4610 = vadd.f32 %v4530, 0.0
        %v4611 = vadd.f32 %v4533, 0.0
        %v4612 = vadd.f32 %v4536, 0.0
        %v4613 = vadd.f32 %v4539, 0.0
        %v4614 = vadd.f32 %v4542, 0.0
        %v4615 = vadd.f32 %v4545, 0.0
        %v4616 = vadd.f32 %v4548, 0.0
        %v4617 = vadd.f32 %v4551, 0.0
        %v4618 = vadd.f32 %v4554, 0.0
        %v4619 = vadd.f32 %v4557, 0.0
        %v4620 = vadd.f32 %v4560, 0.0
        %v4621 = vadd.f32 %v4563, 0.0
        %v4622 = vadd.f32 %v4566, 0.0
        %v4623 = vadd.f32 %v4569, 0.0
        %v4624 = vadd.f32 %v4572, 0.0
        %v4625 = vadd.f32 %v4575, 0.0
        %v4626 = vadd.f32 %v4578, 0.0
        %v4627 = vadd.f32 %v4581, 0.0
        %v4628 = vadd.f32 %v4584, 0.0
        %v4629 = vadd.f32 %v4587, 0.0
        %v4630 = vadd.f32 %v4590, 0.0
        %v4631 = vadd.f32 %v4593, 0.0
        %v4632 = vadd.f32 %v4596, 0.0
        %v4633 = vadd.f32 %v4599, 0.0
        %v4634 = vadd.f32 %v4602, 0.0
        %v4635 = vld [vmem:[%s307 + $0x8] sm:$0x1]
        %v4636 = vld [vmem:[%s307 + $0x14] sm:$0x1]
        %v4637 = vld [vmem:[%s307 + $0x20] sm:$0x1]
        %v4638 = vld [vmem:[%s307 + $0x2c] sm:$0x1]
        %v4639 = vld [vmem:[%s307 + $0x38] sm:$0x1]
        %v4640 = vld [vmem:[%s307 + $0x44] sm:$0x1]
        %v4641 = vld [vmem:[%s307 + $0x50] sm:$0x1]
        %v4642 = vld [vmem:[%s307 + $0x5c] sm:$0x1]
        %v4643 = vld [vmem:[%s307 + $0x68] sm:$0x1]
        %v4644 = vld [vmem:[%s307 + $0x74] sm:$0x1]
        %v4645 = vld [vmem:[%s307 + $0x80] sm:$0x1]
        %v4646 = vld [vmem:[%s307 + $0x8c] sm:$0x1]
        %v4647 = vld [vmem:[%s307 + $0x98] sm:$0x1]
        %v4648 = vld [vmem:[%s307 + $0xa4] sm:$0x1]
        %v4649 = vld [vmem:[%s307 + $0xb0] sm:$0x1]
        %v4650 = vld [vmem:[%s307 + $0xbc] sm:$0x1]
        %v4651 = vunpack.c.l.bf16 %v4635
        %v4652 = vunpack.c.l.bf16 %v4636
        %v4653 = vunpack.c.l.bf16 %v4637
        %v4654 = vunpack.c.l.bf16 %v4638
        %v4655 = vunpack.c.l.bf16 %v4639
        %v4656 = vunpack.c.l.bf16 %v4640
        %v4657 = vunpack.c.l.bf16 %v4641
        %v4658 = vunpack.c.l.bf16 %v4642
        %v4659 = vunpack.c.l.bf16 %v4643
        %v4660 = vunpack.c.l.bf16 %v4644
        %v4661 = vunpack.c.l.bf16 %v4645
        %v4662 = vunpack.c.l.bf16 %v4646
        %v4663 = vunpack.c.l.bf16 %v4647
        %v4664 = vunpack.c.l.bf16 %v4648
        %v4665 = vunpack.c.l.bf16 %v4649
        %v4666 = vunpack.c.l.bf16 %v4650
        %v4667 = vlaneseq
        %v4668 = vshrl.u32 %v4667, 7
        %v4669 = vsub.s32 1, %v4668
        %v4670 = vrot.slane %v4404, %v4669
        %v4671 = vmul.f32 %v4438, %v4670
        %v4672 = vmul.f32 %v4439, %v4670
        %v4673 = vmul.f32 %v4651, %v4670
        %v4674 = vmul.f32 %v4440, %v4670
        %v4675 = vmul.f32 %v4441, %v4670
        %v4676 = vmul.f32 %v4652, %v4670
        %v4677 = vmul.f32 %v4442, %v4670
        %v4678 = vmul.f32 %v4443, %v4670
        %v4679 = vmul.f32 %v4653, %v4670
        %v4680 = vmul.f32 %v4444, %v4670
        %v4681 = vmul.f32 %v4445, %v4670
        %v4682 = vmul.f32 %v4654, %v4670
        %v4683 = vmul.f32 %v4446, %v4670
        %v4684 = vmul.f32 %v4447, %v4670
        %v4685 = vmul.f32 %v4655, %v4670
        %v4686 = vmul.f32 %v4448, %v4670
        %v4687 = vmul.f32 %v4449, %v4670
        %v4688 = vmul.f32 %v4656, %v4670
        %v4689 = vmul.f32 %v4450, %v4670
        %v4690 = vmul.f32 %v4451, %v4670
        %v4691 = vmul.f32 %v4657, %v4670
        %v4692 = vmul.f32 %v4452, %v4670
        %v4693 = vmul.f32 %v4453, %v4670
        %v4694 = vmul.f32 %v4658, %v4670
        %v4695 = vmul.f32 %v4454, %v4670
        %v4696 = vmul.f32 %v4455, %v4670
        %v4697 = vmul.f32 %v4659, %v4670
        %v4698 = vmul.f32 %v4456, %v4670
        %v4699 = vmul.f32 %v4457, %v4670
        %v4700 = vmul.f32 %v4660, %v4670
        %v4701 = vmul.f32 %v4458, %v4670
        %v4702 = vmul.f32 %v4459, %v4670
        %v4703 = vmul.f32 %v4661, %v4670
        %v4704 = vmul.f32 %v4460, %v4670
        %v4705 = vmul.f32 %v4461, %v4670
        %v4706 = vmul.f32 %v4662, %v4670
        %v4707 = vmul.f32 %v4462, %v4670
        %v4708 = vmul.f32 %v4463, %v4670
        %v4709 = vmul.f32 %v4663, %v4670
        %v4710 = vmul.f32 %v4464, %v4670
        %v4711 = vmul.f32 %v4465, %v4670
        %v4712 = vmul.f32 %v4664, %v4670
        %v4713 = vmul.f32 %v4466, %v4670
        %v4714 = vmul.f32 %v4467, %v4670
        %v4715 = vmul.f32 %v4665, %v4670
        %v4716 = vmul.f32 %v4468, %v4670
        %v4717 = vmul.f32 %v4469, %v4670
        %v4718 = vmul.f32 %v4666, %v4670
        %vm4719 = vcmask 64513
        %v4720 = vsel %vm4719, %v4671, 0.0
        %4721 = vadd.xlane.f32.xlu0 %v4720
        %v4722 = vpop.xlane.xlu0 %4721
        %v4723 = vsel %vm4506, %v4672, 0.0
        %4724 = vadd.xlane.f32.xlu0 %v4723
        %v4725 = vpop.xlane.xlu0 %4724
        %v4726 = vsel %vm254, %v4673, 0.0
        %4727 = vadd.xlane.f32.xlu0 %v4726
        %v4728 = vpop.xlane.xlu0 %4727
        %v4729 = vsel %vm4719, %v4674, 0.0
        %4730 = vadd.xlane.f32.xlu0 %v4729
        %v4731 = vpop.xlane.xlu0 %4730
        %v4732 = vsel %vm4506, %v4675, 0.0
        %4733 = vadd.xlane.f32.xlu0 %v4732
        %v4734 = vpop.xlane.xlu0 %4733
        %v4735 = vsel %vm254, %v4676, 0.0
        %4736 = vadd.xlane.f32.xlu0 %v4735
        %v4737 = vpop.xlane.xlu0 %4736
        %v4738 = vsel %vm4719, %v4677, 0.0
        %4739 = vadd.xlane.f32.xlu0 %v4738
        %v4740 = vpop.xlane.xlu0 %4739
        %v4741 = vsel %vm4506, %v4678, 0.0
        %4742 = vadd.xlane.f32.xlu0 %v4741
        %v4743 = vpop.xlane.xlu0 %4742
        %v4744 = vsel %vm254, %v4679, 0.0
        %4745 = vadd.xlane.f32.xlu0 %v4744
        %v4746 = vpop.xlane.xlu0 %4745
        %v4747 = vsel %vm4719, %v4680, 0.0
        %4748 = vadd.xlane.f32.xlu0 %v4747
        %v4749 = vpop.xlane.xlu0 %4748
        %v4750 = vsel %vm4506, %v4681, 0.0
        %4751 = vadd.xlane.f32.xlu0 %v4750
        %v4752 = vpop.xlane.xlu0 %4751
        %v4753 = vsel %vm254, %v4682, 0.0
        %4754 = vadd.xlane.f32.xlu0 %v4753
        %v4755 = vpop.xlane.xlu0 %4754
        %v4756 = vsel %vm4719, %v4683, 0.0
        %4757 = vadd.xlane.f32.xlu0 %v4756
        %v4758 = vpop.xlane.xlu0 %4757
        %v4759 = vsel %vm4506, %v4684, 0.0
        %4760 = vadd.xlane.f32.xlu0 %v4759
        %v4761 = vpop.xlane.xlu0 %4760
        %v4762 = vsel %vm254, %v4685, 0.0
        %4763 = vadd.xlane.f32.xlu0 %v4762
        %v4764 = vpop.xlane.xlu0 %4763
        %v4765 = vsel %vm4719, %v4686, 0.0
        %4766 = vadd.xlane.f32.xlu0 %v4765
        %v4767 = vpop.xlane.xlu0 %4766
        %v4768 = vsel %vm4506, %v4687, 0.0
        %4769 = vadd.xlane.f32.xlu0 %v4768
        %v4770 = vpop.xlane.xlu0 %4769
        %v4771 = vsel %vm254, %v4688, 0.0
        %4772 = vadd.xlane.f32.xlu0 %v4771
        %v4773 = vpop.xlane.xlu0 %4772
        %v4774 = vsel %vm4719, %v4689, 0.0
        %4775 = vadd.xlane.f32.xlu0 %v4774
        %v4776 = vpop.xlane.xlu0 %4775
        %v4777 = vsel %vm4506, %v4690, 0.0
        %4778 = vadd.xlane.f32.xlu0 %v4777
        %v4779 = vpop.xlane.xlu0 %4778
        %v4780 = vsel %vm254, %v4691, 0.0
        %4781 = vadd.xlane.f32.xlu0 %v4780
        %v4782 = vpop.xlane.xlu0 %4781
        %v4783 = vsel %vm4719, %v4692, 0.0
        %4784 = vadd.xlane.f32.xlu0 %v4783
        %v4785 = vpop.xlane.xlu0 %4784
        %v4786 = vsel %vm4506, %v4693, 0.0
        %4787 = vadd.xlane.f32.xlu0 %v4786
        %v4788 = vpop.xlane.xlu0 %4787
        %v4789 = vsel %vm254, %v4694, 0.0
        %4790 = vadd.xlane.f32.xlu0 %v4789
        %v4791 = vpop.xlane.xlu0 %4790
        %v4792 = vsel %vm4719, %v4695, 0.0
        %4793 = vadd.xlane.f32.xlu0 %v4792
        %v4794 = vpop.xlane.xlu0 %4793
        %v4795 = vsel %vm4506, %v4696, 0.0
        %4796 = vadd.xlane.f32.xlu0 %v4795
        %v4797 = vpop.xlane.xlu0 %4796
        %v4798 = vsel %vm254, %v4697, 0.0
        %4799 = vadd.xlane.f32.xlu0 %v4798
        %v4800 = vpop.xlane.xlu0 %4799
        %v4801 = vsel %vm4719, %v4698, 0.0
        %4802 = vadd.xlane.f32.xlu0 %v4801
        %v4803 = vpop.xlane.xlu0 %4802
        %v4804 = vsel %vm4506, %v4699, 0.0
        %4805 = vadd.xlane.f32.xlu0 %v4804
        %v4806 = vpop.xlane.xlu0 %4805
        %v4807 = vsel %vm254, %v4700, 0.0
        %4808 = vadd.xlane.f32.xlu0 %v4807
        %v4809 = vpop.xlane.xlu0 %4808
        %v4810 = vsel %vm4719, %v4701, 0.0
        %4811 = vadd.xlane.f32.xlu0 %v4810
        %v4812 = vpop.xlane.xlu0 %4811
        %v4813 = vsel %vm4506, %v4702, 0.0
        %4814 = vadd.xlane.f32.xlu0 %v4813
        %v4815 = vpop.xlane.xlu0 %4814
        %v4816 = vsel %vm254, %v4703, 0.0
        %4817 = vadd.xlane.f32.xlu0 %v4816
        %v4818 = vpop.xlane.xlu0 %4817
        %v4819 = vsel %vm4719, %v4704, 0.0
        %4820 = vadd.xlane.f32.xlu0 %v4819
        %v4821 = vpop.xlane.xlu0 %4820
        %v4822 = vsel %vm4506, %v4705, 0.0
        %4823 = vadd.xlane.f32.xlu0 %v4822
        %v4824 = vpop.xlane.xlu0 %4823
        %v4825 = vsel %vm254, %v4706, 0.0
        %4826 = vadd.xlane.f32.xlu0 %v4825
        %v4827 = vpop.xlane.xlu0 %4826
        %v4828 = vsel %vm4719, %v4707, 0.0
        %4829 = vadd.xlane.f32.xlu0 %v4828
        %v4830 = vpop.xlane.xlu0 %4829
        %v4831 = vsel %vm4506, %v4708, 0.0
        %4832 = vadd.xlane.f32.xlu0 %v4831
        %v4833 = vpop.xlane.xlu0 %4832
        %v4834 = vsel %vm254, %v4709, 0.0
        %4835 = vadd.xlane.f32.xlu0 %v4834
        %v4836 = vpop.xlane.xlu0 %4835
        %v4837 = vsel %vm4719, %v4710, 0.0
        %4838 = vadd.xlane.f32.xlu0 %v4837
        %v4839 = vpop.xlane.xlu0 %4838
        %v4840 = vsel %vm4506, %v4711, 0.0
        %4841 = vadd.xlane.f32.xlu0 %v4840
        %v4842 = vpop.xlane.xlu0 %4841
        %v4843 = vsel %vm254, %v4712, 0.0
        %4844 = vadd.xlane.f32.xlu0 %v4843
        %v4845 = vpop.xlane.xlu0 %4844
        %v4846 = vsel %vm4719, %v4713, 0.0
        %4847 = vadd.xlane.f32.xlu0 %v4846
        %v4848 = vpop.xlane.xlu0 %4847
        %v4849 = vsel %vm4506, %v4714, 0.0
        %4850 = vadd.xlane.f32.xlu0 %v4849
        %v4851 = vpop.xlane.xlu0 %4850
        %v4852 = vsel %vm254, %v4715, 0.0
        %4853 = vadd.xlane.f32.xlu0 %v4852
        %v4854 = vpop.xlane.xlu0 %4853
        %v4855 = vsel %vm4719, %v4716, 0.0
        %4856 = vadd.xlane.f32.xlu0 %v4855
        %v4857 = vpop.xlane.xlu0 %4856
        %v4858 = vsel %vm4506, %v4717, 0.0
        %4859 = vadd.xlane.f32.xlu0 %v4858
        %v4860 = vpop.xlane.xlu0 %4859
        %v4861 = vsel %vm254, %v4718, 0.0
        %4862 = vadd.xlane.f32.xlu0 %v4861
        %v4863 = vpop.xlane.xlu0 %4862
        %vm4912 = vcmask 1046528
        %v4913 = vrot.slane %v4722, 1
        %v4914 = vrot.slane %v4725, 1
        %v4915 = vsel %vm4912, %v4913, %v4914
        %v4916 = vrot.slane %v4728, 1
        %v4917 = vsel %vm4912, %v4914, %v4916
        %v4918 = vrot.slane %v4731, 1
        %v4919 = vrot.slane %v4734, 1
        %v4920 = vsel %vm4912, %v4918, %v4919
        %v4921 = vrot.slane %v4737, 1
        %v4922 = vsel %vm4912, %v4919, %v4921
        %v4923 = vrot.slane %v4740, 1
        %v4924 = vrot.slane %v4743, 1
        %v4925 = vsel %vm4912, %v4923, %v4924
        %v4926 = vrot.slane %v4746, 1
        %v4927 = vsel %vm4912, %v4924, %v4926
        %v4928 = vrot.slane %v4749, 1
        %v4929 = vrot.slane %v4752, 1
        %v4930 = vsel %vm4912, %v4928, %v4929
        %v4931 = vrot.slane %v4755, 1
        %v4932 = vsel %vm4912, %v4929, %v4931
        %v4933 = vrot.slane %v4758, 1
        %v4934 = vrot.slane %v4761, 1
        %v4935 = vsel %vm4912, %v4933, %v4934
        %v4936 = vrot.slane %v4764, 1
        %v4937 = vsel %vm4912, %v4934, %v4936
        %v4938 = vrot.slane %v4767, 1
        %v4939 = vrot.slane %v4770, 1
        %v4940 = vsel %vm4912, %v4938, %v4939
        %v4941 = vrot.slane %v4773, 1
        %v4942 = vsel %vm4912, %v4939, %v4941
        %v4943 = vrot.slane %v4776, 1
        %v4944 = vrot.slane %v4779, 1
        %v4945 = vsel %vm4912, %v4943, %v4944
        %v4946 = vrot.slane %v4782, 1
        %v4947 = vsel %vm4912, %v4944, %v4946
        %v4948 = vrot.slane %v4785, 1
        %v4949 = vrot.slane %v4788, 1
        %v4950 = vsel %vm4912, %v4948, %v4949
        %v4951 = vrot.slane %v4791, 1
        %v4952 = vsel %vm4912, %v4949, %v4951
        %v4953 = vrot.slane %v4794, 1
        %v4954 = vrot.slane %v4797, 1
        %v4955 = vsel %vm4912, %v4953, %v4954
        %v4956 = vrot.slane %v4800, 1
        %v4957 = vsel %vm4912, %v4954, %v4956
        %v4958 = vrot.slane %v4803, 1
        %v4959 = vrot.slane %v4806, 1
        %v4960 = vsel %vm4912, %v4958, %v4959
        %v4961 = vrot.slane %v4809, 1
        %v4962 = vsel %vm4912, %v4959, %v4961
        %v4963 = vrot.slane %v4812, 1
        %v4964 = vrot.slane %v4815, 1
        %v4965 = vsel %vm4912, %v4963, %v4964
        %v4966 = vrot.slane %v4818, 1
        %v4967 = vsel %vm4912, %v4964, %v4966
        %v4968 = vrot.slane %v4821, 1
        %v4969 = vrot.slane %v4824, 1
        %v4970 = vsel %vm4912, %v4968, %v4969
        %v4971 = vrot.slane %v4827, 1
        %v4972 = vsel %vm4912, %v4969, %v4971
        %v4973 = vrot.slane %v4830, 1
        %v4974 = vrot.slane %v4833, 1
        %v4975 = vsel %vm4912, %v4973, %v4974
        %v4976 = vrot.slane %v4836, 1
        %v4977 = vsel %vm4912, %v4974, %v4976
        %v4978 = vrot.slane %v4839, 1
        %v4979 = vrot.slane %v4842, 1
        %v4980 = vsel %vm4912, %v4978, %v4979
        %v4981 = vrot.slane %v4845, 1
        %v4982 = vsel %vm4912, %v4979, %v4981
        %v4983 = vrot.slane %v4848, 1
        %v4984 = vrot.slane %v4851, 1
        %v4985 = vsel %vm4912, %v4983, %v4984
        %v4986 = vrot.slane %v4854, 1
        %v4987 = vsel %vm4912, %v4984, %v4986
        %v4988 = vrot.slane %v4857, 1
        %v4989 = vrot.slane %v4860, 1
        %v4990 = vsel %vm4912, %v4988, %v4989
        %v4991 = vrot.slane %v4863, 1
        %v4992 = vsel %vm4912, %v4989, %v4991
        %v5025 = vadd.f32 %v4603, %v4915
        %v5026 = vadd.f32 %v4604, %v4917
        %v5027 = vadd.f32 %v4605, %v4920
        %v5028 = vadd.f32 %v4606, %v4922
        %v5029 = vadd.f32 %v4607, %v4925
        %v5030 = vadd.f32 %v4608, %v4927
        %v5031 = vadd.f32 %v4609, %v4930
        %v5032 = vadd.f32 %v4610, %v4932
        %v5033 = vadd.f32 %v4611, %v4935
        %v5034 = vadd.f32 %v4612, %v4937
        %v5035 = vadd.f32 %v4613, %v4940
        %v5036 = vadd.f32 %v4614, %v4942
        %v5037 = vadd.f32 %v4615, %v4945
        %v5038 = vadd.f32 %v4616, %v4947
        %v5039 = vadd.f32 %v4617, %v4950
        %v5040 = vadd.f32 %v4618, %v4952
        %v5041 = vadd.f32 %v4619, %v4955
        %v5042 = vadd.f32 %v4620, %v4957
        %v5043 = vadd.f32 %v4621, %v4960
        %v5044 = vadd.f32 %v4622, %v4962
        %v5045 = vadd.f32 %v4623, %v4965
        %v5046 = vadd.f32 %v4624, %v4967
        %v5047 = vadd.f32 %v4625, %v4970
        %v5048 = vadd.f32 %v4626, %v4972
        %v5049 = vadd.f32 %v4627, %v4975
        %v5050 = vadd.f32 %v4628, %v4977
        %v5051 = vadd.f32 %v4629, %v4980
        %v5052 = vadd.f32 %v4630, %v4982
        %v5053 = vadd.f32 %v4631, %v4985
        %v5054 = vadd.f32 %v4632, %v4987
        %v5055 = vadd.f32 %v4633, %v4990
        %v5056 = vadd.f32 %v4634, %v4992
        %v5057 = vld [vmem:[%s307] sm:$0xe]
        %v5058 = vld [vmem:[%s307 + $0xc] sm:$0xe]
        %v5059 = vld [vmem:[%s307 + $0x18] sm:$0xe]
        %v5060 = vld [vmem:[%s307 + $0x24] sm:$0xe]
        %v5061 = vld [vmem:[%s307 + $0x30] sm:$0xe]
        %v5062 = vld [vmem:[%s307 + $0x3c] sm:$0xe]
        %v5063 = vld [vmem:[%s307 + $0x48] sm:$0xe]
        %v5064 = vld [vmem:[%s307 + $0x54] sm:$0xe]
        %v5065 = vld [vmem:[%s307 + $0x60] sm:$0xe]
        %v5066 = vld [vmem:[%s307 + $0x6c] sm:$0xe]
        %v5067 = vld [vmem:[%s307 + $0x78] sm:$0xe]
        %v5068 = vld [vmem:[%s307 + $0x84] sm:$0xe]
        %v5069 = vld [vmem:[%s307 + $0x90] sm:$0xe]
        %v5070 = vld [vmem:[%s307 + $0x9c] sm:$0xe]
        %v5071 = vld [vmem:[%s307 + $0xa8] sm:$0xe]
        %v5072 = vld [vmem:[%s307 + $0xb4] sm:$0xe]
        %v5073 = vunpack.c.l.bf16 %v5057
        %v5074 = vunpack.c.l.bf16 %v5058
        %v5075 = vunpack.c.l.bf16 %v5059
        %v5076 = vunpack.c.l.bf16 %v5060
        %v5077 = vunpack.c.l.bf16 %v5061
        %v5078 = vunpack.c.l.bf16 %v5062
        %v5079 = vunpack.c.l.bf16 %v5063
        %v5080 = vunpack.c.l.bf16 %v5064
        %v5081 = vunpack.c.l.bf16 %v5065
        %v5082 = vunpack.c.l.bf16 %v5066
        %v5083 = vunpack.c.l.bf16 %v5067
        %v5084 = vunpack.c.l.bf16 %v5068
        %v5085 = vunpack.c.l.bf16 %v5069
        %v5086 = vunpack.c.l.bf16 %v5070
        %v5087 = vunpack.c.l.bf16 %v5071
        %v5088 = vunpack.c.l.bf16 %v5072
        %v5089 = vlaneseq
        %v5090 = vshrl.u32 %v5089, 7
        %v5091 = vsub.s32 2, %v5090
        %v5092 = vrot.slane %v4404, %v5091
        %v5093 = vmul.f32 %v5073, %v5092
        %v5094 = vmul.f32 %v4439, %v5092
        %v5095 = vmul.f32 %v4651, %v5092
        %v5096 = vmul.f32 %v5074, %v5092
        %v5097 = vmul.f32 %v4441, %v5092
        %v5098 = vmul.f32 %v4652, %v5092
        %v5099 = vmul.f32 %v5075, %v5092
        %v5100 = vmul.f32 %v4443, %v5092
        %v5101 = vmul.f32 %v4653, %v5092
        %v5102 = vmul.f32 %v5076, %v5092
        %v5103 = vmul.f32 %v4445, %v5092
        %v5104 = vmul.f32 %v4654, %v5092
        %v5105 = vmul.f32 %v5077, %v5092
        %v5106 = vmul.f32 %v4447, %v5092
        %v5107 = vmul.f32 %v4655, %v5092
        %v5108 = vmul.f32 %v5078, %v5092
        %v5109 = vmul.f32 %v4449, %v5092
        %v5110 = vmul.f32 %v4656, %v5092
        %v5111 = vmul.f32 %v5079, %v5092
        %v5112 = vmul.f32 %v4451, %v5092
        %v5113 = vmul.f32 %v4657, %v5092
        %v5114 = vmul.f32 %v5080, %v5092
        %v5115 = vmul.f32 %v4453, %v5092
        %v5116 = vmul.f32 %v4658, %v5092
        %v5117 = vmul.f32 %v5081, %v5092
        %v5118 = vmul.f32 %v4455, %v5092
        %v5119 = vmul.f32 %v4659, %v5092
        %v5120 = vmul.f32 %v5082, %v5092
        %v5121 = vmul.f32 %v4457, %v5092
        %v5122 = vmul.f32 %v4660, %v5092
        %v5123 = vmul.f32 %v5083, %v5092
        %v5124 = vmul.f32 %v4459, %v5092
        %v5125 = vmul.f32 %v4661, %v5092
        %v5126 = vmul.f32 %v5084, %v5092
        %v5127 = vmul.f32 %v4461, %v5092
        %v5128 = vmul.f32 %v4662, %v5092
        %v5129 = vmul.f32 %v5085, %v5092
        %v5130 = vmul.f32 %v4463, %v5092
        %v5131 = vmul.f32 %v4663, %v5092
        %v5132 = vmul.f32 %v5086, %v5092
        %v5133 = vmul.f32 %v4465, %v5092
        %v5134 = vmul.f32 %v4664, %v5092
        %v5135 = vmul.f32 %v5087, %v5092
        %v5136 = vmul.f32 %v4467, %v5092
        %v5137 = vmul.f32 %v4665, %v5092
        %v5138 = vmul.f32 %v5088, %v5092
        %v5139 = vmul.f32 %v4469, %v5092
        %v5140 = vmul.f32 %v4666, %v5092
        %vm5141 = vcmask 64514
        %v5142 = vsel %vm5141, %v5093, 0.0
        %5143 = vadd.xlane.f32.xlu0 %v5142
        %v5144 = vpop.xlane.xlu0 %5143
        %v5145 = vsel %vm4506, %v5094, 0.0
        %5146 = vadd.xlane.f32.xlu0 %v5145
        %v5147 = vpop.xlane.xlu0 %5146
        %vm5148 = vcmask 58368
        %v5149 = vsel %vm5148, %v5095, 0.0
        %5150 = vadd.xlane.f32.xlu0 %v5149
        %v5151 = vpop.xlane.xlu0 %5150
        %v5152 = vsel %vm5141, %v5096, 0.0
        %5153 = vadd.xlane.f32.xlu0 %v5152
        %v5154 = vpop.xlane.xlu0 %5153
        %v5155 = vsel %vm4506, %v5097, 0.0
        %5156 = vadd.xlane.f32.xlu0 %v5155
        %v5157 = vpop.xlane.xlu0 %5156
        %v5158 = vsel %vm5148, %v5098, 0.0
        %5159 = vadd.xlane.f32.xlu0 %v5158
        %v5160 = vpop.xlane.xlu0 %5159
        %v5161 = vsel %vm5141, %v5099, 0.0
        %5162 = vadd.xlane.f32.xlu0 %v5161
        %v5163 = vpop.xlane.xlu0 %5162
        %v5164 = vsel %vm4506, %v5100, 0.0
        %5165 = vadd.xlane.f32.xlu0 %v5164
        %v5166 = vpop.xlane.xlu0 %5165
        %v5167 = vsel %vm5148, %v5101, 0.0
        %5168 = vadd.xlane.f32.xlu0 %v5167
        %v5169 = vpop.xlane.xlu0 %5168
        %v5170 = vsel %vm5141, %v5102, 0.0
        %5171 = vadd.xlane.f32.xlu0 %v5170
        %v5172 = vpop.xlane.xlu0 %5171
        %v5173 = vsel %vm4506, %v5103, 0.0
        %5174 = vadd.xlane.f32.xlu0 %v5173
        %v5175 = vpop.xlane.xlu0 %5174
        %v5176 = vsel %vm5148, %v5104, 0.0
        %5177 = vadd.xlane.f32.xlu0 %v5176
        %v5178 = vpop.xlane.xlu0 %5177
        %v5179 = vsel %vm5141, %v5105, 0.0
        %5180 = vadd.xlane.f32.xlu0 %v5179
        %v5181 = vpop.xlane.xlu0 %5180
        %v5182 = vsel %vm4506, %v5106, 0.0
        %5183 = vadd.xlane.f32.xlu0 %v5182
        %v5184 = vpop.xlane.xlu0 %5183
        %v5185 = vsel %vm5148, %v5107, 0.0
        %5186 = vadd.xlane.f32.xlu0 %v5185
        %v5187 = vpop.xlane.xlu0 %5186
        %v5188 = vsel %vm5141, %v5108, 0.0
        %5189 = vadd.xlane.f32.xlu0 %v5188
        %v5190 = vpop.xlane.xlu0 %5189
        %v5191 = vsel %vm4506, %v5109, 0.0
        %5192 = vadd.xlane.f32.xlu0 %v5191
        %v5193 = vpop.xlane.xlu0 %5192
        %v5194 = vsel %vm5148, %v5110, 0.0
        %5195 = vadd.xlane.f32.xlu0 %v5194
        %v5196 = vpop.xlane.xlu0 %5195
        %v5197 = vsel %vm5141, %v5111, 0.0
        %5198 = vadd.xlane.f32.xlu0 %v5197
        %v5199 = vpop.xlane.xlu0 %5198
        %v5200 = vsel %vm4506, %v5112, 0.0
        %5201 = vadd.xlane.f32.xlu0 %v5200
        %v5202 = vpop.xlane.xlu0 %5201
        %v5203 = vsel %vm5148, %v5113, 0.0
        %5204 = vadd.xlane.f32.xlu0 %v5203
        %v5205 = vpop.xlane.xlu0 %5204
        %v5206 = vsel %vm5141, %v5114, 0.0
        %5207 = vadd.xlane.f32.xlu0 %v5206
        %v5208 = vpop.xlane.xlu0 %5207
        %v5209 = vsel %vm4506, %v5115, 0.0
        %5210 = vadd.xlane.f32.xlu0 %v5209
        %v5211 = vpop.xlane.xlu0 %5210
        %v5212 = vsel %vm5148, %v5116, 0.0
        %5213 = vadd.xlane.f32.xlu0 %v5212
        %v5214 = vpop.xlane.xlu0 %5213
        %v5215 = vsel %vm5141, %v5117, 0.0
        %5216 = vadd.xlane.f32.xlu0 %v5215
        %v5217 = vpop.xlane.xlu0 %5216
        %v5218 = vsel %vm4506, %v5118, 0.0
        %5219 = vadd.xlane.f32.xlu0 %v5218
        %v5220 = vpop.xlane.xlu0 %5219
        %v5221 = vsel %vm5148, %v5119, 0.0
        %5222 = vadd.xlane.f32.xlu0 %v5221
        %v5223 = vpop.xlane.xlu0 %5222
        %v5224 = vsel %vm5141, %v5120, 0.0
        %5225 = vadd.xlane.f32.xlu0 %v5224
        %v5226 = vpop.xlane.xlu0 %5225
        %v5227 = vsel %vm4506, %v5121, 0.0
        %5228 = vadd.xlane.f32.xlu0 %v5227
        %v5229 = vpop.xlane.xlu0 %5228
        %v5230 = vsel %vm5148, %v5122, 0.0
        %5231 = vadd.xlane.f32.xlu0 %v5230
        %v5232 = vpop.xlane.xlu0 %5231
        %v5233 = vsel %vm5141, %v5123, 0.0
        %5234 = vadd.xlane.f32.xlu0 %v5233
        %v5235 = vpop.xlane.xlu0 %5234
        %v5236 = vsel %vm4506, %v5124, 0.0
        %5237 = vadd.xlane.f32.xlu0 %v5236
        %v5238 = vpop.xlane.xlu0 %5237
        %v5239 = vsel %vm5148, %v5125, 0.0
        %5240 = vadd.xlane.f32.xlu0 %v5239
        %v5241 = vpop.xlane.xlu0 %5240
        %v5242 = vsel %vm5141, %v5126, 0.0
        %5243 = vadd.xlane.f32.xlu0 %v5242
        %v5244 = vpop.xlane.xlu0 %5243
        %v5245 = vsel %vm4506, %v5127, 0.0
        %5246 = vadd.xlane.f32.xlu0 %v5245
        %v5247 = vpop.xlane.xlu0 %5246
        %v5248 = vsel %vm5148, %v5128, 0.0
        %5249 = vadd.xlane.f32.xlu0 %v5248
        %v5250 = vpop.xlane.xlu0 %5249
        %v5251 = vsel %vm5141, %v5129, 0.0
        %5252 = vadd.xlane.f32.xlu0 %v5251
        %v5253 = vpop.xlane.xlu0 %5252
        %v5254 = vsel %vm4506, %v5130, 0.0
        %5255 = vadd.xlane.f32.xlu0 %v5254
        %v5256 = vpop.xlane.xlu0 %5255
        %v5257 = vsel %vm5148, %v5131, 0.0
        %5258 = vadd.xlane.f32.xlu0 %v5257
        %v5259 = vpop.xlane.xlu0 %5258
        %v5260 = vsel %vm5141, %v5132, 0.0
        %5261 = vadd.xlane.f32.xlu0 %v5260
        %v5262 = vpop.xlane.xlu0 %5261
        %v5263 = vsel %vm4506, %v5133, 0.0
        %5264 = vadd.xlane.f32.xlu0 %v5263
        %v5265 = vpop.xlane.xlu0 %5264
        %v5266 = vsel %vm5148, %v5134, 0.0
        %5267 = vadd.xlane.f32.xlu0 %v5266
        %v5268 = vpop.xlane.xlu0 %5267
        %v5269 = vsel %vm5141, %v5135, 0.0
        %5270 = vadd.xlane.f32.xlu0 %v5269
        %v5271 = vpop.xlane.xlu0 %5270
        %v5272 = vsel %vm4506, %v5136, 0.0
        %5273 = vadd.xlane.f32.xlu0 %v5272
        %v5274 = vpop.xlane.xlu0 %5273
        %v5275 = vsel %vm5148, %v5137, 0.0
        %5276 = vadd.xlane.f32.xlu0 %v5275
        %v5277 = vpop.xlane.xlu0 %5276
        %v5278 = vsel %vm5141, %v5138, 0.0
        %5279 = vadd.xlane.f32.xlu0 %v5278
        %v5280 = vpop.xlane.xlu0 %5279
        %v5281 = vsel %vm4506, %v5139, 0.0
        %5282 = vadd.xlane.f32.xlu0 %v5281
        %v5283 = vpop.xlane.xlu0 %5282
        %v5284 = vsel %vm5148, %v5140, 0.0
        %5285 = vadd.xlane.f32.xlu0 %v5284
        %v5286 = vpop.xlane.xlu0 %5285
        %vm5335 = vcmask 1045504
        %v5336 = vrot.slane %v5144, 2
        %v5337 = vrot.slane %v5147, 2
        %v5338 = vsel %vm5335, %v5336, %v5337
        %v5339 = vrot.slane %v5151, 2
        %v5340 = vsel %vm5335, %v5337, %v5339
        %v5341 = vrot.slane %v5154, 2
        %v5342 = vrot.slane %v5157, 2
        %v5343 = vsel %vm5335, %v5341, %v5342
        %v5344 = vrot.slane %v5160, 2
        %v5345 = vsel %vm5335, %v5342, %v5344
        %v5346 = vrot.slane %v5163, 2
        %v5347 = vrot.slane %v5166, 2
        %v5348 = vsel %vm5335, %v5346, %v5347
        %v5349 = vrot.slane %v5169, 2
        %v5350 = vsel %vm5335, %v5347, %v5349
        %v5351 = vrot.slane %v5172, 2
        %v5352 = vrot.slane %v5175, 2
        %v5353 = vsel %vm5335, %v5351, %v5352
        %v5354 = vrot.slane %v5178, 2
        %v5355 = vsel %vm5335, %v5352, %v5354
        %v5356 = vrot.slane %v5181, 2
        %v5357 = vrot.slane %v5184, 2
        %v5358 = vsel %vm5335, %v5356, %v5357
        %v5359 = vrot.slane %v5187, 2
        %v5360 = vsel %vm5335, %v5357, %v5359
        %v5361 = vrot.slane %v5190, 2
        %v5362 = vrot.slane %v5193, 2
        %v5363 = vsel %vm5335, %v5361, %v5362
        %v5364 = vrot.slane %v5196, 2
        %v5365 = vsel %vm5335, %v5362, %v5364
        %v5366 = vrot.slane %v5199, 2
        %v5367 = vrot.slane %v5202, 2
        %v5368 = vsel %vm5335, %v5366, %v5367
        %v5369 = vrot.slane %v5205, 2
        %v5370 = vsel %vm5335, %v5367, %v5369
        %v5371 = vrot.slane %v5208, 2
        %v5372 = vrot.slane %v5211, 2
        %v5373 = vsel %vm5335, %v5371, %v5372
        %v5374 = vrot.slane %v5214, 2
        %v5375 = vsel %vm5335, %v5372, %v5374
        %v5376 = vrot.slane %v5217, 2
        %v5377 = vrot.slane %v5220, 2
        %v5378 = vsel %vm5335, %v5376, %v5377
        %v5379 = vrot.slane %v5223, 2
        %v5380 = vsel %vm5335, %v5377, %v5379
        %v5381 = vrot.slane %v5226, 2
        %v5382 = vrot.slane %v5229, 2
        %v5383 = vsel %vm5335, %v5381, %v5382
        %v5384 = vrot.slane %v5232, 2
        %v5385 = vsel %vm5335, %v5382, %v5384
        %v5386 = vrot.slane %v5235, 2
        %v5387 = vrot.slane %v5238, 2
        %v5388 = vsel %vm5335, %v5386, %v5387
        %v5389 = vrot.slane %v5241, 2
        %v5390 = vsel %vm5335, %v5387, %v5389
        %v5391 = vrot.slane %v5244, 2
        %v5392 = vrot.slane %v5247, 2
        %v5393 = vsel %vm5335, %v5391, %v5392
        %v5394 = vrot.slane %v5250, 2
        %v5395 = vsel %vm5335, %v5392, %v5394
        %v5396 = vrot.slane %v5253, 2
        %v5397 = vrot.slane %v5256, 2
        %v5398 = vsel %vm5335, %v5396, %v5397
        %v5399 = vrot.slane %v5259, 2
        %v5400 = vsel %vm5335, %v5397, %v5399
        %v5401 = vrot.slane %v5262, 2
        %v5402 = vrot.slane %v5265, 2
        %v5403 = vsel %vm5335, %v5401, %v5402
        %v5404 = vrot.slane %v5268, 2
        %v5405 = vsel %vm5335, %v5402, %v5404
        %v5406 = vrot.slane %v5271, 2
        %v5407 = vrot.slane %v5274, 2
        %v5408 = vsel %vm5335, %v5406, %v5407
        %v5409 = vrot.slane %v5277, 2
        %v5410 = vsel %vm5335, %v5407, %v5409
        %v5411 = vrot.slane %v5280, 2
        %v5412 = vrot.slane %v5283, 2
        %v5413 = vsel %vm5335, %v5411, %v5412
        %v5414 = vrot.slane %v5286, 2
        %v5415 = vsel %vm5335, %v5412, %v5414
        %v5448 = vadd.f32 %v5025, %v5338
        %v5449 = vadd.f32 %v5026, %v5340
        %v5450 = vadd.f32 %v5027, %v5343
        %v5451 = vadd.f32 %v5028, %v5345
        %v5452 = vadd.f32 %v5029, %v5348
        %v5453 = vadd.f32 %v5030, %v5350
        %v5454 = vadd.f32 %v5031, %v5353
        %v5455 = vadd.f32 %v5032, %v5355
        %v5456 = vadd.f32 %v5033, %v5358
        %v5457 = vadd.f32 %v5034, %v5360
        %v5458 = vadd.f32 %v5035, %v5363
        %v5459 = vadd.f32 %v5036, %v5365
        %v5460 = vadd.f32 %v5037, %v5368
        %v5461 = vadd.f32 %v5038, %v5370
        %v5462 = vadd.f32 %v5039, %v5373
        %v5463 = vadd.f32 %v5040, %v5375
        %v5464 = vadd.f32 %v5041, %v5378
        %v5465 = vadd.f32 %v5042, %v5380
        %v5466 = vadd.f32 %v5043, %v5383
        %v5467 = vadd.f32 %v5044, %v5385
        %v5468 = vadd.f32 %v5045, %v5388
        %v5469 = vadd.f32 %v5046, %v5390
        %v5470 = vadd.f32 %v5047, %v5393
        %v5471 = vadd.f32 %v5048, %v5395
        %v5472 = vadd.f32 %v5049, %v5398
        %v5473 = vadd.f32 %v5050, %v5400
        %v5474 = vadd.f32 %v5051, %v5403
        %v5475 = vadd.f32 %v5052, %v5405
        %v5476 = vadd.f32 %v5053, %v5408
        %v5477 = vadd.f32 %v5054, %v5410
        %v5478 = vadd.f32 %v5055, %v5413
        %v5479 = vadd.f32 %v5056, %v5415
        %s5480 = scalar_lea.vmem [#allocation2], 228
        %v5481 = vld [vmem:[%s5480] sm:$0xf]
        %v5482 = vld [vmem:[%s5480 + $0x4] sm:$0xf]
        %v5483 = vld [vmem:[%s5480 + $0xc] sm:$0xf]
        %v5484 = vld [vmem:[%s5480 + $0x10] sm:$0xf]
        %v5485 = vld [vmem:[%s5480 + $0x18] sm:$0xf]
        %v5486 = vld [vmem:[%s5480 + $0x1c] sm:$0xf]
        %v5487 = vld [vmem:[%s5480 + $0x24] sm:$0xf]
        %v5488 = vld [vmem:[%s5480 + $0x28] sm:$0xf]
        %v5489 = vld [vmem:[%s5480 + $0x30] sm:$0xf]
        %v5490 = vld [vmem:[%s5480 + $0x34] sm:$0xf]
        %v5491 = vld [vmem:[%s5480 + $0x3c] sm:$0xf]
        %v5492 = vld [vmem:[%s5480 + $0x40] sm:$0xf]
        %v5493 = vld [vmem:[%s5480 + $0x48] sm:$0xf]
        %v5494 = vld [vmem:[%s5480 + $0x4c] sm:$0xf]
        %v5495 = vld [vmem:[%s5480 + $0x54] sm:$0xf]
        %v5496 = vld [vmem:[%s5480 + $0x58] sm:$0xf]
        %v5497 = vld [vmem:[%s5480 + $0x60] sm:$0xf]
        %v5498 = vld [vmem:[%s5480 + $0x64] sm:$0xf]
        %v5499 = vld [vmem:[%s5480 + $0x6c] sm:$0xf]
        %v5500 = vld [vmem:[%s5480 + $0x70] sm:$0xf]
        %v5501 = vld [vmem:[%s5480 + $0x78] sm:$0xf]
        %v5502 = vld [vmem:[%s5480 + $0x7c] sm:$0xf]
        %v5503 = vld [vmem:[%s5480 + $0x84] sm:$0xf]
        %v5504 = vld [vmem:[%s5480 + $0x88] sm:$0xf]
        %v5505 = vld [vmem:[%s5480 + $0x90] sm:$0xf]
        %v5506 = vld [vmem:[%s5480 + $0x94] sm:$0xf]
        %v5507 = vld [vmem:[%s5480 + $0x9c] sm:$0xf]
        %v5508 = vld [vmem:[%s5480 + $0xa0] sm:$0xf]
        %v5509 = vld [vmem:[%s5480 + $0xa8] sm:$0xf]
        %v5510 = vld [vmem:[%s5480 + $0xac] sm:$0xf]
        %v5511 = vld [vmem:[%s5480 + $0xb4] sm:$0xf]
        %v5512 = vld [vmem:[%s5480 + $0xb8] sm:$0xf]
        %v5513 = vunpack.c.l.bf16 %v5481
        %v5514 = vunpack.c.l.bf16 %v5482
        %v5515 = vunpack.c.l.bf16 %v5483
        %v5516 = vunpack.c.l.bf16 %v5484
        %v5517 = vunpack.c.l.bf16 %v5485
        %v5518 = vunpack.c.l.bf16 %v5486
        %v5519 = vunpack.c.l.bf16 %v5487
        %v5520 = vunpack.c.l.bf16 %v5488
        %v5521 = vunpack.c.l.bf16 %v5489
        %v5522 = vunpack.c.l.bf16 %v5490
        %v5523 = vunpack.c.l.bf16 %v5491
        %v5524 = vunpack.c.l.bf16 %v5492
        %v5525 = vunpack.c.l.bf16 %v5493
        %v5526 = vunpack.c.l.bf16 %v5494
        %v5527 = vunpack.c.l.bf16 %v5495
        %v5528 = vunpack.c.l.bf16 %v5496
        %v5529 = vunpack.c.l.bf16 %v5497
        %v5530 = vunpack.c.l.bf16 %v5498
        %v5531 = vunpack.c.l.bf16 %v5499
        %v5532 = vunpack.c.l.bf16 %v5500
        %v5533 = vunpack.c.l.bf16 %v5501
        %v5534 = vunpack.c.l.bf16 %v5502
        %v5535 = vunpack.c.l.bf16 %v5503
        %v5536 = vunpack.c.l.bf16 %v5504
        %v5537 = vunpack.c.l.bf16 %v5505
        %v5538 = vunpack.c.l.bf16 %v5506
        %v5539 = vunpack.c.l.bf16 %v5507
        %v5540 = vunpack.c.l.bf16 %v5508
        %v5541 = vunpack.c.l.bf16 %v5509
        %v5542 = vunpack.c.l.bf16 %v5510
        %v5543 = vunpack.c.l.bf16 %v5511
        %v5544 = vunpack.c.l.bf16 %v5512
        %v5545 = vlaneseq
        %v5546 = vshrl.u32 %v5545, 7
        %v5547 = vsub.s32 3, %v5546
        %v5548 = vrot.slane %v4404, %v5547
        %v5549 = vmul.f32 %v5513, %v5548
        %v5550 = vmul.f32 %v5514, %v5548
        %v5551 = vmul.f32 %v5515, %v5548
        %v5552 = vmul.f32 %v5516, %v5548
        %v5553 = vmul.f32 %v5517, %v5548
        %v5554 = vmul.f32 %v5518, %v5548
        %v5555 = vmul.f32 %v5519, %v5548
        %v5556 = vmul.f32 %v5520, %v5548
        %v5557 = vmul.f32 %v5521, %v5548
        %v5558 = vmul.f32 %v5522, %v5548
        %v5559 = vmul.f32 %v5523, %v5548
        %v5560 = vmul.f32 %v5524, %v5548
        %v5561 = vmul.f32 %v5525, %v5548
        %v5562 = vmul.f32 %v5526, %v5548
        %v5563 = vmul.f32 %v5527, %v5548
        %v5564 = vmul.f32 %v5528, %v5548
        %v5565 = vmul.f32 %v5529, %v5548
        %v5566 = vmul.f32 %v5530, %v5548
        %v5567 = vmul.f32 %v5531, %v5548
        %v5568 = vmul.f32 %v5532, %v5548
        %v5569 = vmul.f32 %v5533, %v5548
        %v5570 = vmul.f32 %v5534, %v5548
        %v5571 = vmul.f32 %v5535, %v5548
        %v5572 = vmul.f32 %v5536, %v5548
        %v5573 = vmul.f32 %v5537, %v5548
        %v5574 = vmul.f32 %v5538, %v5548
        %v5575 = vmul.f32 %v5539, %v5548
        %v5576 = vmul.f32 %v5540, %v5548
        %v5577 = vmul.f32 %v5541, %v5548
        %v5578 = vmul.f32 %v5542, %v5548
        %v5579 = vmul.f32 %v5543, %v5548
        %v5580 = vmul.f32 %v5544, %v5548
        %v5581 = vsel %vm4506, %v5549, 0.0
        %5582 = vadd.xlane.f32.xlu0 %v5581
        %v5583 = vpop.xlane.xlu0 %5582
        %v5584 = vsel %vm4506, %v5550, 0.0
        %5585 = vadd.xlane.f32.xlu0 %v5584
        %v5586 = vpop.xlane.xlu0 %5585
        %v5587 = vsel %vm4506, %v5551, 0.0
        %5588 = vadd.xlane.f32.xlu0 %v5587
        %v5589 = vpop.xlane.xlu0 %5588
        %v5590 = vsel %vm4506, %v5552, 0.0
        %5591 = vadd.xlane.f32.xlu0 %v5590
        %v5592 = vpop.xlane.xlu0 %5591
        %v5593 = vsel %vm4506, %v5553, 0.0
        %5594 = vadd.xlane.f32.xlu0 %v5593
        %v5595 = vpop.xlane.xlu0 %5594
        %v5596 = vsel %vm4506, %v5554, 0.0
        %5597 = vadd.xlane.f32.xlu0 %v5596
        %v5598 = vpop.xlane.xlu0 %5597
        %v5599 = vsel %vm4506, %v5555, 0.0
        %5600 = vadd.xlane.f32.xlu0 %v5599
        %v5601 = vpop.xlane.xlu0 %5600
        %v5602 = vsel %vm4506, %v5556, 0.0
        %5603 = vadd.xlane.f32.xlu0 %v5602
        %v5604 = vpop.xlane.xlu0 %5603
        %v5605 = vsel %vm4506, %v5557, 0.0
        %5606 = vadd.xlane.f32.xlu0 %v5605
        %v5607 = vpop.xlane.xlu0 %5606
        %v5608 = vsel %vm4506, %v5558, 0.0
        %5609 = vadd.xlane.f32.xlu0 %v5608
        %v5610 = vpop.xlane.xlu0 %5609
        %v5611 = vsel %vm4506, %v5559, 0.0
        %5612 = vadd.xlane.f32.xlu0 %v5611
        %v5613 = vpop.xlane.xlu0 %5612
        %v5614 = vsel %vm4506, %v5560, 0.0
        %5615 = vadd.xlane.f32.xlu0 %v5614
        %v5616 = vpop.xlane.xlu0 %5615
        %v5617 = vsel %vm4506, %v5561, 0.0
        %5618 = vadd.xlane.f32.xlu0 %v5617
        %v5619 = vpop.xlane.xlu0 %5618
        %v5620 = vsel %vm4506, %v5562, 0.0
        %5621 = vadd.xlane.f32.xlu0 %v5620
        %v5622 = vpop.xlane.xlu0 %5621
        %v5623 = vsel %vm4506, %v5563, 0.0
        %5624 = vadd.xlane.f32.xlu0 %v5623
        %v5625 = vpop.xlane.xlu0 %5624
        %v5626 = vsel %vm4506, %v5564, 0.0
        %5627 = vadd.xlane.f32.xlu0 %v5626
        %v5628 = vpop.xlane.xlu0 %5627
        %v5629 = vsel %vm4506, %v5565, 0.0
        %5630 = vadd.xlane.f32.xlu0 %v5629
        %v5631 = vpop.xlane.xlu0 %5630
        %v5632 = vsel %vm4506, %v5566, 0.0
        %5633 = vadd.xlane.f32.xlu0 %v5632
        %v5634 = vpop.xlane.xlu0 %5633
        %v5635 = vsel %vm4506, %v5567, 0.0
        %5636 = vadd.xlane.f32.xlu0 %v5635
        %v5637 = vpop.xlane.xlu0 %5636
        %v5638 = vsel %vm4506, %v5568, 0.0
        %5639 = vadd.xlane.f32.xlu0 %v5638
        %v5640 = vpop.xlane.xlu0 %5639
        %v5641 = vsel %vm4506, %v5569, 0.0
        %5642 = vadd.xlane.f32.xlu0 %v5641
        %v5643 = vpop.xlane.xlu0 %5642
        %v5644 = vsel %vm4506, %v5570, 0.0
        %5645 = vadd.xlane.f32.xlu0 %v5644
        %v5646 = vpop.xlane.xlu0 %5645
        %v5647 = vsel %vm4506, %v5571, 0.0
        %5648 = vadd.xlane.f32.xlu0 %v5647
        %v5649 = vpop.xlane.xlu0 %5648
        %v5650 = vsel %vm4506, %v5572, 0.0
        %5651 = vadd.xlane.f32.xlu0 %v5650
        %v5652 = vpop.xlane.xlu0 %5651
        %v5653 = vsel %vm4506, %v5573, 0.0
        %5654 = vadd.xlane.f32.xlu0 %v5653
        %v5655 = vpop.xlane.xlu0 %5654
        %v5656 = vsel %vm4506, %v5574, 0.0
        %5657 = vadd.xlane.f32.xlu0 %v5656
        %v5658 = vpop.xlane.xlu0 %5657
        %v5659 = vsel %vm4506, %v5575, 0.0
        %5660 = vadd.xlane.f32.xlu0 %v5659
        %v5661 = vpop.xlane.xlu0 %5660
        %v5662 = vsel %vm4506, %v5576, 0.0
        %5663 = vadd.xlane.f32.xlu0 %v5662
        %v5664 = vpop.xlane.xlu0 %5663
        %v5665 = vsel %vm4506, %v5577, 0.0
        %5666 = vadd.xlane.f32.xlu0 %v5665
        %v5667 = vpop.xlane.xlu0 %5666
        %v5668 = vsel %vm4506, %v5578, 0.0
        %5669 = vadd.xlane.f32.xlu0 %v5668
        %v5670 = vpop.xlane.xlu0 %5669
        %v5671 = vsel %vm4506, %v5579, 0.0
        %5672 = vadd.xlane.f32.xlu0 %v5671
        %v5673 = vpop.xlane.xlu0 %5672
        %v5674 = vsel %vm4506, %v5580, 0.0
        %5675 = vadd.xlane.f32.xlu0 %v5674
        %v5676 = vpop.xlane.xlu0 %5675
        %v5677 = vadd.f32 %v5448, %v5583
        %v5678 = vadd.f32 %v5449, %v5586
        %v5679 = vadd.f32 %v5450, %v5589
        %v5680 = vadd.f32 %v5451, %v5592
        %v5681 = vadd.f32 %v5452, %v5595
        %v5682 = vadd.f32 %v5453, %v5598
        %v5683 = vadd.f32 %v5454, %v5601
        %v5684 = vadd.f32 %v5455, %v5604
        %v5685 = vadd.f32 %v5456, %v5607
        %v5686 = vadd.f32 %v5457, %v5610
        %v5687 = vadd.f32 %v5458, %v5613
        %v5688 = vadd.f32 %v5459, %v5616
        %v5689 = vadd.f32 %v5460, %v5619
        %v5690 = vadd.f32 %v5461, %v5622
        %v5691 = vadd.f32 %v5462, %v5625
        %v5692 = vadd.f32 %v5463, %v5628
        %v5693 = vadd.f32 %v5464, %v5631
        %v5694 = vadd.f32 %v5465, %v5634
        %v5695 = vadd.f32 %v5466, %v5637
        %v5696 = vadd.f32 %v5467, %v5640
        %v5697 = vadd.f32 %v5468, %v5643
        %v5698 = vadd.f32 %v5469, %v5646
        %v5699 = vadd.f32 %v5470, %v5649
        %v5700 = vadd.f32 %v5471, %v5652
        %v5701 = vadd.f32 %v5472, %v5655
        %v5702 = vadd.f32 %v5473, %v5658
        %v5703 = vadd.f32 %v5474, %v5661
        %v5704 = vadd.f32 %v5475, %v5664
        %v5705 = vadd.f32 %v5476, %v5667
        %v5706 = vadd.f32 %v5477, %v5670
        %v5707 = vadd.f32 %v5478, %v5673
        %v5708 = vadd.f32 %v5479, %v5676
        %v5709 = vld [vmem:[%s5480 + $0x8] sm:$0x1]
        %v5710 = vld [vmem:[%s5480 + $0x14] sm:$0x1]
        %v5711 = vld [vmem:[%s5480 + $0x20] sm:$0x1]
        %v5712 = vld [vmem:[%s5480 + $0x2c] sm:$0x1]
        %v5713 = vld [vmem:[%s5480 + $0x38] sm:$0x1]
        %v5714 = vld [vmem:[%s5480 + $0x44] sm:$0x1]
        %v5715 = vld [vmem:[%s5480 + $0x50] sm:$0x1]
        %v5716 = vld [vmem:[%s5480 + $0x5c] sm:$0x1]
        %v5717 = vld [vmem:[%s5480 + $0x68] sm:$0x1]
        %v5718 = vld [vmem:[%s5480 + $0x74] sm:$0x1]
        %v5719 = vld [vmem:[%s5480 + $0x80] sm:$0x1]
        %v5720 = vld [vmem:[%s5480 + $0x8c] sm:$0x1]
        %v5721 = vld [vmem:[%s5480 + $0x98] sm:$0x1]
        %v5722 = vld [vmem:[%s5480 + $0xa4] sm:$0x1]
        %v5723 = vld [vmem:[%s5480 + $0xb0] sm:$0x1]
        %v5724 = vld [vmem:[%s5480 + $0xbc] sm:$0x1]
        %v5725 = vunpack.c.l.bf16 %v5709
        %v5726 = vunpack.c.l.bf16 %v5710
        %v5727 = vunpack.c.l.bf16 %v5711
        %v5728 = vunpack.c.l.bf16 %v5712
        %v5729 = vunpack.c.l.bf16 %v5713
        %v5730 = vunpack.c.l.bf16 %v5714
        %v5731 = vunpack.c.l.bf16 %v5715
        %v5732 = vunpack.c.l.bf16 %v5716
        %v5733 = vunpack.c.l.bf16 %v5717
        %v5734 = vunpack.c.l.bf16 %v5718
        %v5735 = vunpack.c.l.bf16 %v5719
        %v5736 = vunpack.c.l.bf16 %v5720
        %v5737 = vunpack.c.l.bf16 %v5721
        %v5738 = vunpack.c.l.bf16 %v5722
        %v5739 = vunpack.c.l.bf16 %v5723
        %v5740 = vunpack.c.l.bf16 %v5724
        %v5741 = vlaneseq
        %v5742 = vshrl.u32 %v5741, 7
        %v5743 = vsub.s32 4, %v5742
        %v5744 = vrot.slane %v4404, %v5743
        %v5745 = vmul.f32 %v5513, %v5744
        %v5746 = vmul.f32 %v5514, %v5744
        %v5747 = vmul.f32 %v5725, %v5744
        %v5748 = vmul.f32 %v5515, %v5744
        %v5749 = vmul.f32 %v5516, %v5744
        %v5750 = vmul.f32 %v5726, %v5744
        %v5751 = vmul.f32 %v5517, %v5744
        %v5752 = vmul.f32 %v5518, %v5744
        %v5753 = vmul.f32 %v5727, %v5744
        %v5754 = vmul.f32 %v5519, %v5744
        %v5755 = vmul.f32 %v5520, %v5744
        %v5756 = vmul.f32 %v5728, %v5744
        %v5757 = vmul.f32 %v5521, %v5744
        %v5758 = vmul.f32 %v5522, %v5744
        %v5759 = vmul.f32 %v5729, %v5744
        %v5760 = vmul.f32 %v5523, %v5744
        %v5761 = vmul.f32 %v5524, %v5744
        %v5762 = vmul.f32 %v5730, %v5744
        %v5763 = vmul.f32 %v5525, %v5744
        %v5764 = vmul.f32 %v5526, %v5744
        %v5765 = vmul.f32 %v5731, %v5744
        %v5766 = vmul.f32 %v5527, %v5744
        %v5767 = vmul.f32 %v5528, %v5744
        %v5768 = vmul.f32 %v5732, %v5744
        %v5769 = vmul.f32 %v5529, %v5744
        %v5770 = vmul.f32 %v5530, %v5744
        %v5771 = vmul.f32 %v5733, %v5744
        %v5772 = vmul.f32 %v5531, %v5744
        %v5773 = vmul.f32 %v5532, %v5744
        %v5774 = vmul.f32 %v5734, %v5744
        %v5775 = vmul.f32 %v5533, %v5744
        %v5776 = vmul.f32 %v5534, %v5744
        %v5777 = vmul.f32 %v5735, %v5744
        %v5778 = vmul.f32 %v5535, %v5744
        %v5779 = vmul.f32 %v5536, %v5744
        %v5780 = vmul.f32 %v5736, %v5744
        %v5781 = vmul.f32 %v5537, %v5744
        %v5782 = vmul.f32 %v5538, %v5744
        %v5783 = vmul.f32 %v5737, %v5744
        %v5784 = vmul.f32 %v5539, %v5744
        %v5785 = vmul.f32 %v5540, %v5744
        %v5786 = vmul.f32 %v5738, %v5744
        %v5787 = vmul.f32 %v5541, %v5744
        %v5788 = vmul.f32 %v5542, %v5744
        %v5789 = vmul.f32 %v5739, %v5744
        %v5790 = vmul.f32 %v5543, %v5744
        %v5791 = vmul.f32 %v5544, %v5744
        %v5792 = vmul.f32 %v5740, %v5744
        %v5793 = vsel %vm4719, %v5745, 0.0
        %5794 = vadd.xlane.f32.xlu0 %v5793
        %v5795 = vpop.xlane.xlu0 %5794
        %v5796 = vsel %vm4506, %v5746, 0.0
        %5797 = vadd.xlane.f32.xlu0 %v5796
        %v5798 = vpop.xlane.xlu0 %5797
        %v5799 = vsel %vm254, %v5747, 0.0
        %5800 = vadd.xlane.f32.xlu0 %v5799
        %v5801 = vpop.xlane.xlu0 %5800
        %v5802 = vsel %vm4719, %v5748, 0.0
        %5803 = vadd.xlane.f32.xlu0 %v5802
        %v5804 = vpop.xlane.xlu0 %5803
        %v5805 = vsel %vm4506, %v5749, 0.0
        %5806 = vadd.xlane.f32.xlu0 %v5805
        %v5807 = vpop.xlane.xlu0 %5806
        %v5808 = vsel %vm254, %v5750, 0.0
        %5809 = vadd.xlane.f32.xlu0 %v5808
        %v5810 = vpop.xlane.xlu0 %5809
        %v5811 = vsel %vm4719, %v5751, 0.0
        %5812 = vadd.xlane.f32.xlu0 %v5811
        %v5813 = vpop.xlane.xlu0 %5812
        %v5814 = vsel %vm4506, %v5752, 0.0
        %5815 = vadd.xlane.f32.xlu0 %v5814
        %v5816 = vpop.xlane.xlu0 %5815
        %v5817 = vsel %vm254, %v5753, 0.0
        %5818 = vadd.xlane.f32.xlu0 %v5817
        %v5819 = vpop.xlane.xlu0 %5818
        %v5820 = vsel %vm4719, %v5754, 0.0
        %5821 = vadd.xlane.f32.xlu0 %v5820
        %v5822 = vpop.xlane.xlu0 %5821
        %v5823 = vsel %vm4506, %v5755, 0.0
        %5824 = vadd.xlane.f32.xlu0 %v5823
        %v5825 = vpop.xlane.xlu0 %5824
        %v5826 = vsel %vm254, %v5756, 0.0
        %5827 = vadd.xlane.f32.xlu0 %v5826
        %v5828 = vpop.xlane.xlu0 %5827
        %v5829 = vsel %vm4719, %v5757, 0.0
        %5830 = vadd.xlane.f32.xlu0 %v5829
        %v5831 = vpop.xlane.xlu0 %5830
        %v5832 = vsel %vm4506, %v5758, 0.0
        %5833 = vadd.xlane.f32.xlu0 %v5832
        %v5834 = vpop.xlane.xlu0 %5833
        %v5835 = vsel %vm254, %v5759, 0.0
        %5836 = vadd.xlane.f32.xlu0 %v5835
        %v5837 = vpop.xlane.xlu0 %5836
        %v5838 = vsel %vm4719, %v5760, 0.0
        %5839 = vadd.xlane.f32.xlu0 %v5838
        %v5840 = vpop.xlane.xlu0 %5839
        %v5841 = vsel %vm4506, %v5761, 0.0
        %5842 = vadd.xlane.f32.xlu0 %v5841
        %v5843 = vpop.xlane.xlu0 %5842
        %v5844 = vsel %vm254, %v5762, 0.0
        %5845 = vadd.xlane.f32.xlu0 %v5844
        %v5846 = vpop.xlane.xlu0 %5845
        %v5847 = vsel %vm4719, %v5763, 0.0
        %5848 = vadd.xlane.f32.xlu0 %v5847
        %v5849 = vpop.xlane.xlu0 %5848
        %v5850 = vsel %vm4506, %v5764, 0.0
        %5851 = vadd.xlane.f32.xlu0 %v5850
        %v5852 = vpop.xlane.xlu0 %5851
        %v5853 = vsel %vm254, %v5765, 0.0
        %5854 = vadd.xlane.f32.xlu0 %v5853
        %v5855 = vpop.xlane.xlu0 %5854
        %v5856 = vsel %vm4719, %v5766, 0.0
        %5857 = vadd.xlane.f32.xlu0 %v5856
        %v5858 = vpop.xlane.xlu0 %5857
        %v5859 = vsel %vm4506, %v5767, 0.0
        %5860 = vadd.xlane.f32.xlu0 %v5859
        %v5861 = vpop.xlane.xlu0 %5860
        %v5862 = vsel %vm254, %v5768, 0.0
        %5863 = vadd.xlane.f32.xlu0 %v5862
        %v5864 = vpop.xlane.xlu0 %5863
        %v5865 = vsel %vm4719, %v5769, 0.0
        %5866 = vadd.xlane.f32.xlu0 %v5865
        %v5867 = vpop.xlane.xlu0 %5866
        %v5868 = vsel %vm4506, %v5770, 0.0
        %5869 = vadd.xlane.f32.xlu0 %v5868
        %v5870 = vpop.xlane.xlu0 %5869
        %v5871 = vsel %vm254, %v5771, 0.0
        %5872 = vadd.xlane.f32.xlu0 %v5871
        %v5873 = vpop.xlane.xlu0 %5872
        %v5874 = vsel %vm4719, %v5772, 0.0
        %5875 = vadd.xlane.f32.xlu0 %v5874
        %v5876 = vpop.xlane.xlu0 %5875
        %v5877 = vsel %vm4506, %v5773, 0.0
        %5878 = vadd.xlane.f32.xlu0 %v5877
        %v5879 = vpop.xlane.xlu0 %5878
        %v5880 = vsel %vm254, %v5774, 0.0
        %5881 = vadd.xlane.f32.xlu0 %v5880
        %v5882 = vpop.xlane.xlu0 %5881
        %v5883 = vsel %vm4719, %v5775, 0.0
        %5884 = vadd.xlane.f32.xlu0 %v5883
        %v5885 = vpop.xlane.xlu0 %5884
        %v5886 = vsel %vm4506, %v5776, 0.0
        %5887 = vadd.xlane.f32.xlu0 %v5886
        %v5888 = vpop.xlane.xlu0 %5887
        %v5889 = vsel %vm254, %v5777, 0.0
        %5890 = vadd.xlane.f32.xlu0 %v5889
        %v5891 = vpop.xlane.xlu0 %5890
        %v5892 = vsel %vm4719, %v5778, 0.0
        %5893 = vadd.xlane.f32.xlu0 %v5892
        %v5894 = vpop.xlane.xlu0 %5893
        %v5895 = vsel %vm4506, %v5779, 0.0
        %5896 = vadd.xlane.f32.xlu0 %v5895
        %v5897 = vpop.xlane.xlu0 %5896
        %v5898 = vsel %vm254, %v5780, 0.0
        %5899 = vadd.xlane.f32.xlu0 %v5898
        %v5900 = vpop.xlane.xlu0 %5899
        %v5901 = vsel %vm4719, %v5781, 0.0
        %5902 = vadd.xlane.f32.xlu0 %v5901
        %v5903 = vpop.xlane.xlu0 %5902
        %v5904 = vsel %vm4506, %v5782, 0.0
        %5905 = vadd.xlane.f32.xlu0 %v5904
        %v5906 = vpop.xlane.xlu0 %5905
        %v5907 = vsel %vm254, %v5783, 0.0
        %5908 = vadd.xlane.f32.xlu0 %v5907
        %v5909 = vpop.xlane.xlu0 %5908
        %v5910 = vsel %vm4719, %v5784, 0.0
        %5911 = vadd.xlane.f32.xlu0 %v5910
        %v5912 = vpop.xlane.xlu0 %5911
        %v5913 = vsel %vm4506, %v5785, 0.0
        %5914 = vadd.xlane.f32.xlu0 %v5913
        %v5915 = vpop.xlane.xlu0 %5914
        %v5916 = vsel %vm254, %v5786, 0.0
        %5917 = vadd.xlane.f32.xlu0 %v5916
        %v5918 = vpop.xlane.xlu0 %5917
        %v5919 = vsel %vm4719, %v5787, 0.0
        %5920 = vadd.xlane.f32.xlu0 %v5919
        %v5921 = vpop.xlane.xlu0 %5920
        %v5922 = vsel %vm4506, %v5788, 0.0
        %5923 = vadd.xlane.f32.xlu0 %v5922
        %v5924 = vpop.xlane.xlu0 %5923
        %v5925 = vsel %vm254, %v5789, 0.0
        %5926 = vadd.xlane.f32.xlu0 %v5925
        %v5927 = vpop.xlane.xlu0 %5926
        %v5928 = vsel %vm4719, %v5790, 0.0
        %5929 = vadd.xlane.f32.xlu0 %v5928
        %v5930 = vpop.xlane.xlu0 %5929
        %v5931 = vsel %vm4506, %v5791, 0.0
        %5932 = vadd.xlane.f32.xlu0 %v5931
        %v5933 = vpop.xlane.xlu0 %5932
        %v5934 = vsel %vm254, %v5792, 0.0
        %5935 = vadd.xlane.f32.xlu0 %v5934
        %v5936 = vpop.xlane.xlu0 %5935
        %v5985 = vrot.slane %v5795, 1
        %v5986 = vrot.slane %v5798, 1
        %v5987 = vsel %vm4912, %v5985, %v5986
        %v5988 = vrot.slane %v5801, 1
        %v5989 = vsel %vm4912, %v5986, %v5988
        %v5990 = vrot.slane %v5804, 1
        %v5991 = vrot.slane %v5807, 1
        %v5992 = vsel %vm4912, %v5990, %v5991
        %v5993 = vrot.slane %v5810, 1
        %v5994 = vsel %vm4912, %v5991, %v5993
        %v5995 = vrot.slane %v5813, 1
        %v5996 = vrot.slane %v5816, 1
        %v5997 = vsel %vm4912, %v5995, %v5996
        %v5998 = vrot.slane %v5819, 1
        %v5999 = vsel %vm4912, %v5996, %v5998
        %v6000 = vrot.slane %v5822, 1
        %v6001 = vrot.slane %v5825, 1
        %v6002 = vsel %vm4912, %v6000, %v6001
        %v6003 = vrot.slane %v5828, 1
        %v6004 = vsel %vm4912, %v6001, %v6003
        %v6005 = vrot.slane %v5831, 1
        %v6006 = vrot.slane %v5834, 1
        %v6007 = vsel %vm4912, %v6005, %v6006
        %v6008 = vrot.slane %v5837, 1
        %v6009 = vsel %vm4912, %v6006, %v6008
        %v6010 = vrot.slane %v5840, 1
        %v6011 = vrot.slane %v5843, 1
        %v6012 = vsel %vm4912, %v6010, %v6011
        %v6013 = vrot.slane %v5846, 1
        %v6014 = vsel %vm4912, %v6011, %v6013
        %v6015 = vrot.slane %v5849, 1
        %v6016 = vrot.slane %v5852, 1
        %v6017 = vsel %vm4912, %v6015, %v6016
        %v6018 = vrot.slane %v5855, 1
        %v6019 = vsel %vm4912, %v6016, %v6018
        %v6020 = vrot.slane %v5858, 1
        %v6021 = vrot.slane %v5861, 1
        %v6022 = vsel %vm4912, %v6020, %v6021
        %v6023 = vrot.slane %v5864, 1
        %v6024 = vsel %vm4912, %v6021, %v6023
        %v6025 = vrot.slane %v5867, 1
        %v6026 = vrot.slane %v5870, 1
        %v6027 = vsel %vm4912, %v6025, %v6026
        %v6028 = vrot.slane %v5873, 1
        %v6029 = vsel %vm4912, %v6026, %v6028
        %v6030 = vrot.slane %v5876, 1
        %v6031 = vrot.slane %v5879, 1
        %v6032 = vsel %vm4912, %v6030, %v6031
        %v6033 = vrot.slane %v5882, 1
        %v6034 = vsel %vm4912, %v6031, %v6033
        %v6035 = vrot.slane %v5885, 1
        %v6036 = vrot.slane %v5888, 1
        %v6037 = vsel %vm4912, %v6035, %v6036
        %v6038 = vrot.slane %v5891, 1
        %v6039 = vsel %vm4912, %v6036, %v6038
        %v6040 = vrot.slane %v5894, 1
        %v6041 = vrot.slane %v5897, 1
        %v6042 = vsel %vm4912, %v6040, %v6041
        %v6043 = vrot.slane %v5900, 1
        %v6044 = vsel %vm4912, %v6041, %v6043
        %v6045 = vrot.slane %v5903, 1
        %v6046 = vrot.slane %v5906, 1
        %v6047 = vsel %vm4912, %v6045, %v6046
        %v6048 = vrot.slane %v5909, 1
        %v6049 = vsel %vm4912, %v6046, %v6048
        %v6050 = vrot.slane %v5912, 1
        %v6051 = vrot.slane %v5915, 1
        %v6052 = vsel %vm4912, %v6050, %v6051
        %v6053 = vrot.slane %v5918, 1
        %v6054 = vsel %vm4912, %v6051, %v6053
        %v6055 = vrot.slane %v5921, 1
        %v6056 = vrot.slane %v5924, 1
        %v6057 = vsel %vm4912, %v6055, %v6056
        %v6058 = vrot.slane %v5927, 1
        %v6059 = vsel %vm4912, %v6056, %v6058
        %v6060 = vrot.slane %v5930, 1
        %v6061 = vrot.slane %v5933, 1
        %v6062 = vsel %vm4912, %v6060, %v6061
        %v6063 = vrot.slane %v5936, 1
        %v6064 = vsel %vm4912, %v6061, %v6063
        %v6097 = vadd.f32 %v5677, %v5987
        %v6098 = vadd.f32 %v5678, %v5989
        %v6099 = vadd.f32 %v5679, %v5992
        %v6100 = vadd.f32 %v5680, %v5994
        %v6101 = vadd.f32 %v5681, %v5997
        %v6102 = vadd.f32 %v5682, %v5999
        %v6103 = vadd.f32 %v5683, %v6002
        %v6104 = vadd.f32 %v5684, %v6004
        %v6105 = vadd.f32 %v5685, %v6007
        %v6106 = vadd.f32 %v5686, %v6009
        %v6107 = vadd.f32 %v5687, %v6012
        %v6108 = vadd.f32 %v5688, %v6014
        %v6109 = vadd.f32 %v5689, %v6017
        %v6110 = vadd.f32 %v5690, %v6019
        %v6111 = vadd.f32 %v5691, %v6022
        %v6112 = vadd.f32 %v5692, %v6024
        %v6113 = vadd.f32 %v5693, %v6027
        %v6114 = vadd.f32 %v5694, %v6029
        %v6115 = vadd.f32 %v5695, %v6032
        %v6116 = vadd.f32 %v5696, %v6034
        %v6117 = vadd.f32 %v5697, %v6037
        %v6118 = vadd.f32 %v5698, %v6039
        %v6119 = vadd.f32 %v5699, %v6042
        %v6120 = vadd.f32 %v5700, %v6044
        %v6121 = vadd.f32 %v5701, %v6047
        %v6122 = vadd.f32 %v5702, %v6049
        %v6123 = vadd.f32 %v5703, %v6052
        %v6124 = vadd.f32 %v5704, %v6054
        %v6125 = vadd.f32 %v5705, %v6057
        %v6126 = vadd.f32 %v5706, %v6059
        %v6127 = vadd.f32 %v5707, %v6062
        %v6128 = vadd.f32 %v5708, %v6064
        %v6129 = vld [vmem:[%s5480] sm:$0xe]
        %v6130 = vld [vmem:[%s5480 + $0xc] sm:$0xe]
        %v6131 = vld [vmem:[%s5480 + $0x18] sm:$0xe]
        %v6132 = vld [vmem:[%s5480 + $0x24] sm:$0xe]
        %v6133 = vld [vmem:[%s5480 + $0x30] sm:$0xe]
        %v6134 = vld [vmem:[%s5480 + $0x3c] sm:$0xe]
        %v6135 = vld [vmem:[%s5480 + $0x48] sm:$0xe]
        %v6136 = vld [vmem:[%s5480 + $0x54] sm:$0xe]
        %v6137 = vld [vmem:[%s5480 + $0x60] sm:$0xe]
        %v6138 = vld [vmem:[%s5480 + $0x6c] sm:$0xe]
        %v6139 = vld [vmem:[%s5480 + $0x78] sm:$0xe]
        %v6140 = vld [vmem:[%s5480 + $0x84] sm:$0xe]
        %v6141 = vld [vmem:[%s5480 + $0x90] sm:$0xe]
        %v6142 = vld [vmem:[%s5480 + $0x9c] sm:$0xe]
        %v6143 = vld [vmem:[%s5480 + $0xa8] sm:$0xe]
        %v6144 = vld [vmem:[%s5480 + $0xb4] sm:$0xe]
        %v6145 = vunpack.c.l.bf16 %v6129
        %v6146 = vunpack.c.l.bf16 %v6130
        %v6147 = vunpack.c.l.bf16 %v6131
        %v6148 = vunpack.c.l.bf16 %v6132
        %v6149 = vunpack.c.l.bf16 %v6133
        %v6150 = vunpack.c.l.bf16 %v6134
        %v6151 = vunpack.c.l.bf16 %v6135
        %v6152 = vunpack.c.l.bf16 %v6136
        %v6153 = vunpack.c.l.bf16 %v6137
        %v6154 = vunpack.c.l.bf16 %v6138
        %v6155 = vunpack.c.l.bf16 %v6139
        %v6156 = vunpack.c.l.bf16 %v6140
        %v6157 = vunpack.c.l.bf16 %v6141
        %v6158 = vunpack.c.l.bf16 %v6142
        %v6159 = vunpack.c.l.bf16 %v6143
        %v6160 = vunpack.c.l.bf16 %v6144
        %v6161 = vlaneseq
        %v6162 = vshrl.u32 %v6161, 7
        %v6163 = vsub.s32 5, %v6162
        %v6164 = vrot.slane %v4404, %v6163
        %v6165 = vmul.f32 %v6145, %v6164
        %v6166 = vmul.f32 %v5514, %v6164
        %v6167 = vmul.f32 %v5725, %v6164
        %v6168 = vmul.f32 %v6146, %v6164
        %v6169 = vmul.f32 %v5516, %v6164
        %v6170 = vmul.f32 %v5726, %v6164
        %v6171 = vmul.f32 %v6147, %v6164
        %v6172 = vmul.f32 %v5518, %v6164
        %v6173 = vmul.f32 %v5727, %v6164
        %v6174 = vmul.f32 %v6148, %v6164
        %v6175 = vmul.f32 %v5520, %v6164
        %v6176 = vmul.f32 %v5728, %v6164
        %v6177 = vmul.f32 %v6149, %v6164
        %v6178 = vmul.f32 %v5522, %v6164
        %v6179 = vmul.f32 %v5729, %v6164
        %v6180 = vmul.f32 %v6150, %v6164
        %v6181 = vmul.f32 %v5524, %v6164
        %v6182 = vmul.f32 %v5730, %v6164
        %v6183 = vmul.f32 %v6151, %v6164
        %v6184 = vmul.f32 %v5526, %v6164
        %v6185 = vmul.f32 %v5731, %v6164
        %v6186 = vmul.f32 %v6152, %v6164
        %v6187 = vmul.f32 %v5528, %v6164
        %v6188 = vmul.f32 %v5732, %v6164
        %v6189 = vmul.f32 %v6153, %v6164
        %v6190 = vmul.f32 %v5530, %v6164
        %v6191 = vmul.f32 %v5733, %v6164
        %v6192 = vmul.f32 %v6154, %v6164
        %v6193 = vmul.f32 %v5532, %v6164
        %v6194 = vmul.f32 %v5734, %v6164
        %v6195 = vmul.f32 %v6155, %v6164
        %v6196 = vmul.f32 %v5534, %v6164
        %v6197 = vmul.f32 %v5735, %v6164
        %v6198 = vmul.f32 %v6156, %v6164
        %v6199 = vmul.f32 %v5536, %v6164
        %v6200 = vmul.f32 %v5736, %v6164
        %v6201 = vmul.f32 %v6157, %v6164
        %v6202 = vmul.f32 %v5538, %v6164
        %v6203 = vmul.f32 %v5737, %v6164
        %v6204 = vmul.f32 %v6158, %v6164
        %v6205 = vmul.f32 %v5540, %v6164
        %v6206 = vmul.f32 %v5738, %v6164
        %v6207 = vmul.f32 %v6159, %v6164
        %v6208 = vmul.f32 %v5542, %v6164
        %v6209 = vmul.f32 %v5739, %v6164
        %v6210 = vmul.f32 %v6160, %v6164
        %v6211 = vmul.f32 %v5544, %v6164
        %v6212 = vmul.f32 %v5740, %v6164
        %v6213 = vsel %vm5141, %v6165, 0.0
        %6214 = vadd.xlane.f32.xlu0 %v6213
        %v6215 = vpop.xlane.xlu0 %6214
        %v6216 = vsel %vm4506, %v6166, 0.0
        %6217 = vadd.xlane.f32.xlu0 %v6216
        %v6218 = vpop.xlane.xlu0 %6217
        %v6219 = vsel %vm5148, %v6167, 0.0
        %6220 = vadd.xlane.f32.xlu0 %v6219
        %v6221 = vpop.xlane.xlu0 %6220
        %v6222 = vsel %vm5141, %v6168, 0.0
        %6223 = vadd.xlane.f32.xlu0 %v6222
        %v6224 = vpop.xlane.xlu0 %6223
        %v6225 = vsel %vm4506, %v6169, 0.0
        %6226 = vadd.xlane.f32.xlu0 %v6225
        %v6227 = vpop.xlane.xlu0 %6226
        %v6228 = vsel %vm5148, %v6170, 0.0
        %6229 = vadd.xlane.f32.xlu0 %v6228
        %v6230 = vpop.xlane.xlu0 %6229
        %v6231 = vsel %vm5141, %v6171, 0.0
        %6232 = vadd.xlane.f32.xlu0 %v6231
        %v6233 = vpop.xlane.xlu0 %6232
        %v6234 = vsel %vm4506, %v6172, 0.0
        %6235 = vadd.xlane.f32.xlu0 %v6234
        %v6236 = vpop.xlane.xlu0 %6235
        %v6237 = vsel %vm5148, %v6173, 0.0
        %6238 = vadd.xlane.f32.xlu0 %v6237
        %v6239 = vpop.xlane.xlu0 %6238
        %v6240 = vsel %vm5141, %v6174, 0.0
        %6241 = vadd.xlane.f32.xlu0 %v6240
        %v6242 = vpop.xlane.xlu0 %6241
        %v6243 = vsel %vm4506, %v6175, 0.0
        %6244 = vadd.xlane.f32.xlu0 %v6243
        %v6245 = vpop.xlane.xlu0 %6244
        %v6246 = vsel %vm5148, %v6176, 0.0
        %6247 = vadd.xlane.f32.xlu0 %v6246
        %v6248 = vpop.xlane.xlu0 %6247
        %v6249 = vsel %vm5141, %v6177, 0.0
        %6250 = vadd.xlane.f32.xlu0 %v6249
        %v6251 = vpop.xlane.xlu0 %6250
        %v6252 = vsel %vm4506, %v6178, 0.0
        %6253 = vadd.xlane.f32.xlu0 %v6252
        %v6254 = vpop.xlane.xlu0 %6253
        %v6255 = vsel %vm5148, %v6179, 0.0
        %6256 = vadd.xlane.f32.xlu0 %v6255
        %v6257 = vpop.xlane.xlu0 %6256
        %v6258 = vsel %vm5141, %v6180, 0.0
        %6259 = vadd.xlane.f32.xlu0 %v6258
        %v6260 = vpop.xlane.xlu0 %6259
        %v6261 = vsel %vm4506, %v6181, 0.0
        %6262 = vadd.xlane.f32.xlu0 %v6261
        %v6263 = vpop.xlane.xlu0 %6262
        %v6264 = vsel %vm5148, %v6182, 0.0
        %6265 = vadd.xlane.f32.xlu0 %v6264
        %v6266 = vpop.xlane.xlu0 %6265
        %v6267 = vsel %vm5141, %v6183, 0.0
        %6268 = vadd.xlane.f32.xlu0 %v6267
        %v6269 = vpop.xlane.xlu0 %6268
        %v6270 = vsel %vm4506, %v6184, 0.0
        %6271 = vadd.xlane.f32.xlu0 %v6270
        %v6272 = vpop.xlane.xlu0 %6271
        %v6273 = vsel %vm5148, %v6185, 0.0
        %6274 = vadd.xlane.f32.xlu0 %v6273
        %v6275 = vpop.xlane.xlu0 %6274
        %v6276 = vsel %vm5141, %v6186, 0.0
        %6277 = vadd.xlane.f32.xlu0 %v6276
        %v6278 = vpop.xlane.xlu0 %6277
        %v6279 = vsel %vm4506, %v6187, 0.0
        %6280 = vadd.xlane.f32.xlu0 %v6279
        %v6281 = vpop.xlane.xlu0 %6280
        %v6282 = vsel %vm5148, %v6188, 0.0
        %6283 = vadd.xlane.f32.xlu0 %v6282
        %v6284 = vpop.xlane.xlu0 %6283
        %v6285 = vsel %vm5141, %v6189, 0.0
        %6286 = vadd.xlane.f32.xlu0 %v6285
        %v6287 = vpop.xlane.xlu0 %6286
        %v6288 = vsel %vm4506, %v6190, 0.0
        %6289 = vadd.xlane.f32.xlu0 %v6288
        %v6290 = vpop.xlane.xlu0 %6289
        %v6291 = vsel %vm5148, %v6191, 0.0
        %6292 = vadd.xlane.f32.xlu0 %v6291
        %v6293 = vpop.xlane.xlu0 %6292
        %v6294 = vsel %vm5141, %v6192, 0.0
        %6295 = vadd.xlane.f32.xlu0 %v6294
        %v6296 = vpop.xlane.xlu0 %6295
        %v6297 = vsel %vm4506, %v6193, 0.0
        %6298 = vadd.xlane.f32.xlu0 %v6297
        %v6299 = vpop.xlane.xlu0 %6298
        %v6300 = vsel %vm5148, %v6194, 0.0
        %6301 = vadd.xlane.f32.xlu0 %v6300
        %v6302 = vpop.xlane.xlu0 %6301
        %v6303 = vsel %vm5141, %v6195, 0.0
        %6304 = vadd.xlane.f32.xlu0 %v6303
        %v6305 = vpop.xlane.xlu0 %6304
        %v6306 = vsel %vm4506, %v6196, 0.0
        %6307 = vadd.xlane.f32.xlu0 %v6306
        %v6308 = vpop.xlane.xlu0 %6307
        %v6309 = vsel %vm5148, %v6197, 0.0
        %6310 = vadd.xlane.f32.xlu0 %v6309
        %v6311 = vpop.xlane.xlu0 %6310
        %v6312 = vsel %vm5141, %v6198, 0.0
        %6313 = vadd.xlane.f32.xlu0 %v6312
        %v6314 = vpop.xlane.xlu0 %6313
        %v6315 = vsel %vm4506, %v6199, 0.0
        %6316 = vadd.xlane.f32.xlu0 %v6315
        %v6317 = vpop.xlane.xlu0 %6316
        %v6318 = vsel %vm5148, %v6200, 0.0
        %6319 = vadd.xlane.f32.xlu0 %v6318
        %v6320 = vpop.xlane.xlu0 %6319
        %v6321 = vsel %vm5141, %v6201, 0.0
        %6322 = vadd.xlane.f32.xlu0 %v6321
        %v6323 = vpop.xlane.xlu0 %6322
        %v6324 = vsel %vm4506, %v6202, 0.0
        %6325 = vadd.xlane.f32.xlu0 %v6324
        %v6326 = vpop.xlane.xlu0 %6325
        %v6327 = vsel %vm5148, %v6203, 0.0
        %6328 = vadd.xlane.f32.xlu0 %v6327
        %v6329 = vpop.xlane.xlu0 %6328
        %v6330 = vsel %vm5141, %v6204, 0.0
        %6331 = vadd.xlane.f32.xlu0 %v6330
        %v6332 = vpop.xlane.xlu0 %6331
        %v6333 = vsel %vm4506, %v6205, 0.0
        %6334 = vadd.xlane.f32.xlu0 %v6333
        %v6335 = vpop.xlane.xlu0 %6334
        %v6336 = vsel %vm5148, %v6206, 0.0
        %6337 = vadd.xlane.f32.xlu0 %v6336
        %v6338 = vpop.xlane.xlu0 %6337
        %v6339 = vsel %vm5141, %v6207, 0.0
        %6340 = vadd.xlane.f32.xlu0 %v6339
        %v6341 = vpop.xlane.xlu0 %6340
        %v6342 = vsel %vm4506, %v6208, 0.0
        %6343 = vadd.xlane.f32.xlu0 %v6342
        %v6344 = vpop.xlane.xlu0 %6343
        %v6345 = vsel %vm5148, %v6209, 0.0
        %6346 = vadd.xlane.f32.xlu0 %v6345
        %v6347 = vpop.xlane.xlu0 %6346
        %v6348 = vsel %vm5141, %v6210, 0.0
        %6349 = vadd.xlane.f32.xlu0 %v6348
        %v6350 = vpop.xlane.xlu0 %6349
        %v6351 = vsel %vm4506, %v6211, 0.0
        %6352 = vadd.xlane.f32.xlu0 %v6351
        %v6353 = vpop.xlane.xlu0 %6352
        %v6354 = vsel %vm5148, %v6212, 0.0
        %6355 = vadd.xlane.f32.xlu0 %v6354
        %v6356 = vpop.xlane.xlu0 %6355
        %v6405 = vrot.slane %v6215, 2
        %v6406 = vrot.slane %v6218, 2
        %v6407 = vsel %vm5335, %v6405, %v6406
        %v6408 = vrot.slane %v6221, 2
        %v6409 = vsel %vm5335, %v6406, %v6408
        %v6410 = vrot.slane %v6224, 2
        %v6411 = vrot.slane %v6227, 2
        %v6412 = vsel %vm5335, %v6410, %v6411
        %v6413 = vrot.slane %v6230, 2
        %v6414 = vsel %vm5335, %v6411, %v6413
        %v6415 = vrot.slane %v6233, 2
        %v6416 = vrot.slane %v6236, 2
        %v6417 = vsel %vm5335, %v6415, %v6416
        %v6418 = vrot.slane %v6239, 2
        %v6419 = vsel %vm5335, %v6416, %v6418
        %v6420 = vrot.slane %v6242, 2
        %v6421 = vrot.slane %v6245, 2
        %v6422 = vsel %vm5335, %v6420, %v6421
        %v6423 = vrot.slane %v6248, 2
        %v6424 = vsel %vm5335, %v6421, %v6423
        %v6425 = vrot.slane %v6251, 2
        %v6426 = vrot.slane %v6254, 2
        %v6427 = vsel %vm5335, %v6425, %v6426
        %v6428 = vrot.slane %v6257, 2
        %v6429 = vsel %vm5335, %v6426, %v6428
        %v6430 = vrot.slane %v6260, 2
        %v6431 = vrot.slane %v6263, 2
        %v6432 = vsel %vm5335, %v6430, %v6431
        %v6433 = vrot.slane %v6266, 2
        %v6434 = vsel %vm5335, %v6431, %v6433
        %v6435 = vrot.slane %v6269, 2
        %v6436 = vrot.slane %v6272, 2
        %v6437 = vsel %vm5335, %v6435, %v6436
        %v6438 = vrot.slane %v6275, 2
        %v6439 = vsel %vm5335, %v6436, %v6438
        %v6440 = vrot.slane %v6278, 2
        %v6441 = vrot.slane %v6281, 2
        %v6442 = vsel %vm5335, %v6440, %v6441
        %v6443 = vrot.slane %v6284, 2
        %v6444 = vsel %vm5335, %v6441, %v6443
        %v6445 = vrot.slane %v6287, 2
        %v6446 = vrot.slane %v6290, 2
        %v6447 = vsel %vm5335, %v6445, %v6446
        %v6448 = vrot.slane %v6293, 2
        %v6449 = vsel %vm5335, %v6446, %v6448
        %v6450 = vrot.slane %v6296, 2
        %v6451 = vrot.slane %v6299, 2
        %v6452 = vsel %vm5335, %v6450, %v6451
        %v6453 = vrot.slane %v6302, 2
        %v6454 = vsel %vm5335, %v6451, %v6453
        %v6455 = vrot.slane %v6305, 2
        %v6456 = vrot.slane %v6308, 2
        %v6457 = vsel %vm5335, %v6455, %v6456
        %v6458 = vrot.slane %v6311, 2
        %v6459 = vsel %vm5335, %v6456, %v6458
        %v6460 = vrot.slane %v6314, 2
        %v6461 = vrot.slane %v6317, 2
        %v6462 = vsel %vm5335, %v6460, %v6461
        %v6463 = vrot.slane %v6320, 2
        %v6464 = vsel %vm5335, %v6461, %v6463
        %v6465 = vrot.slane %v6323, 2
        %v6466 = vrot.slane %v6326, 2
        %v6467 = vsel %vm5335, %v6465, %v6466
        %v6468 = vrot.slane %v6329, 2
        %v6469 = vsel %vm5335, %v6466, %v6468
        %v6470 = vrot.slane %v6332, 2
        %v6471 = vrot.slane %v6335, 2
        %v6472 = vsel %vm5335, %v6470, %v6471
        %v6473 = vrot.slane %v6338, 2
        %v6474 = vsel %vm5335, %v6471, %v6473
        %v6475 = vrot.slane %v6341, 2
        %v6476 = vrot.slane %v6344, 2
        %v6477 = vsel %vm5335, %v6475, %v6476
        %v6478 = vrot.slane %v6347, 2
        %v6479 = vsel %vm5335, %v6476, %v6478
        %v6480 = vrot.slane %v6350, 2
        %v6481 = vrot.slane %v6353, 2
        %v6482 = vsel %vm5335, %v6480, %v6481
        %v6483 = vrot.slane %v6356, 2
        %v6484 = vsel %vm5335, %v6481, %v6483
        %v6517 = vadd.f32 %v6097, %v6407
        %v6518 = vadd.f32 %v6098, %v6409
        %v6519 = vadd.f32 %v6099, %v6412
        %v6520 = vadd.f32 %v6100, %v6414
        %v6521 = vadd.f32 %v6101, %v6417
        %v6522 = vadd.f32 %v6102, %v6419
        %v6523 = vadd.f32 %v6103, %v6422
        %v6524 = vadd.f32 %v6104, %v6424
        %v6525 = vadd.f32 %v6105, %v6427
        %v6526 = vadd.f32 %v6106, %v6429
        %v6527 = vadd.f32 %v6107, %v6432
        %v6528 = vadd.f32 %v6108, %v6434
        %v6529 = vadd.f32 %v6109, %v6437
        %v6530 = vadd.f32 %v6110, %v6439
        %v6531 = vadd.f32 %v6111, %v6442
        %v6532 = vadd.f32 %v6112, %v6444
        %v6533 = vadd.f32 %v6113, %v6447
        %v6534 = vadd.f32 %v6114, %v6449
        %v6535 = vadd.f32 %v6115, %v6452
        %v6536 = vadd.f32 %v6116, %v6454
        %v6537 = vadd.f32 %v6117, %v6457
        %v6538 = vadd.f32 %v6118, %v6459
        %v6539 = vadd.f32 %v6119, %v6462
        %v6540 = vadd.f32 %v6120, %v6464
        %v6541 = vadd.f32 %v6121, %v6467
        %v6542 = vadd.f32 %v6122, %v6469
        %v6543 = vadd.f32 %v6123, %v6472
        %v6544 = vadd.f32 %v6124, %v6474
        %v6545 = vadd.f32 %v6125, %v6477
        %v6546 = vadd.f32 %v6126, %v6479
        %v6547 = vadd.f32 %v6127, %v6482
        %v6548 = vadd.f32 %v6128, %v6484
        %s6549 = scalar_lea.vmem [#allocation2], 240
        %v6550 = vld [vmem:[%s6549] sm:$0xf]
        %v6551 = vld [vmem:[%s6549 + $0x4] sm:$0xf]
        %v6552 = vld [vmem:[%s6549 + $0xc] sm:$0xf]
        %v6553 = vld [vmem:[%s6549 + $0x10] sm:$0xf]
        %v6554 = vld [vmem:[%s6549 + $0x18] sm:$0xf]
        %v6555 = vld [vmem:[%s6549 + $0x1c] sm:$0xf]
        %v6556 = vld [vmem:[%s6549 + $0x24] sm:$0xf]
        %v6557 = vld [vmem:[%s6549 + $0x28] sm:$0xf]
        %v6558 = vld [vmem:[%s6549 + $0x30] sm:$0xf]
        %v6559 = vld [vmem:[%s6549 + $0x34] sm:$0xf]
        %v6560 = vld [vmem:[%s6549 + $0x3c] sm:$0xf]
        %v6561 = vld [vmem:[%s6549 + $0x40] sm:$0xf]
        %v6562 = vld [vmem:[%s6549 + $0x48] sm:$0xf]
        %v6563 = vld [vmem:[%s6549 + $0x4c] sm:$0xf]
        %v6564 = vld [vmem:[%s6549 + $0x54] sm:$0xf]
        %v6565 = vld [vmem:[%s6549 + $0x58] sm:$0xf]
        %v6566 = vld [vmem:[%s6549 + $0x60] sm:$0xf]
        %v6567 = vld [vmem:[%s6549 + $0x64] sm:$0xf]
        %v6568 = vld [vmem:[%s6549 + $0x6c] sm:$0xf]
        %v6569 = vld [vmem:[%s6549 + $0x70] sm:$0xf]
        %v6570 = vld [vmem:[%s6549 + $0x78] sm:$0xf]
        %v6571 = vld [vmem:[%s6549 + $0x7c] sm:$0xf]
        %v6572 = vld [vmem:[%s6549 + $0x84] sm:$0xf]
        %v6573 = vld [vmem:[%s6549 + $0x88] sm:$0xf]
        %v6574 = vld [vmem:[%s6549 + $0x90] sm:$0xf]
        %v6575 = vld [vmem:[%s6549 + $0x94] sm:$0xf]
        %v6576 = vld [vmem:[%s6549 + $0x9c] sm:$0xf]
        %v6577 = vld [vmem:[%s6549 + $0xa0] sm:$0xf]
        %v6578 = vld [vmem:[%s6549 + $0xa8] sm:$0xf]
        %v6579 = vld [vmem:[%s6549 + $0xac] sm:$0xf]
        %v6580 = vld [vmem:[%s6549 + $0xb4] sm:$0xf]
        %v6581 = vld [vmem:[%s6549 + $0xb8] sm:$0xf]
        %v6582 = vunpack.c.l.bf16 %v6550
        %v6583 = vunpack.c.l.bf16 %v6551
        %v6584 = vunpack.c.l.bf16 %v6552
        %v6585 = vunpack.c.l.bf16 %v6553
        %v6586 = vunpack.c.l.bf16 %v6554
        %v6587 = vunpack.c.l.bf16 %v6555
        %v6588 = vunpack.c.l.bf16 %v6556
        %v6589 = vunpack.c.l.bf16 %v6557
        %v6590 = vunpack.c.l.bf16 %v6558
        %v6591 = vunpack.c.l.bf16 %v6559
        %v6592 = vunpack.c.l.bf16 %v6560
        %v6593 = vunpack.c.l.bf16 %v6561
        %v6594 = vunpack.c.l.bf16 %v6562
        %v6595 = vunpack.c.l.bf16 %v6563
        %v6596 = vunpack.c.l.bf16 %v6564
        %v6597 = vunpack.c.l.bf16 %v6565
        %v6598 = vunpack.c.l.bf16 %v6566
        %v6599 = vunpack.c.l.bf16 %v6567
        %v6600 = vunpack.c.l.bf16 %v6568
        %v6601 = vunpack.c.l.bf16 %v6569
        %v6602 = vunpack.c.l.bf16 %v6570
        %v6603 = vunpack.c.l.bf16 %v6571
        %v6604 = vunpack.c.l.bf16 %v6572
        %v6605 = vunpack.c.l.bf16 %v6573
        %v6606 = vunpack.c.l.bf16 %v6574
        %v6607 = vunpack.c.l.bf16 %v6575
        %v6608 = vunpack.c.l.bf16 %v6576
        %v6609 = vunpack.c.l.bf16 %v6577
        %v6610 = vunpack.c.l.bf16 %v6578
        %v6611 = vunpack.c.l.bf16 %v6579
        %v6612 = vunpack.c.l.bf16 %v6580
        %v6613 = vunpack.c.l.bf16 %v6581
        %v6614 = vlaneseq
        %v6615 = vshrl.u32 %v6614, 7
        %v6616 = vsub.s32 6, %v6615
        %v6617 = vrot.slane %v4404, %v6616
        %v6618 = vmul.f32 %v6582, %v6617
        %v6619 = vmul.f32 %v6583, %v6617
        %v6620 = vmul.f32 %v6584, %v6617
        %v6621 = vmul.f32 %v6585, %v6617
        %v6622 = vmul.f32 %v6586, %v6617
        %v6623 = vmul.f32 %v6587, %v6617
        %v6624 = vmul.f32 %v6588, %v6617
        %v6625 = vmul.f32 %v6589, %v6617
        %v6626 = vmul.f32 %v6590, %v6617
        %v6627 = vmul.f32 %v6591, %v6617
        %v6628 = vmul.f32 %v6592, %v6617
        %v6629 = vmul.f32 %v6593, %v6617
        %v6630 = vmul.f32 %v6594, %v6617
        %v6631 = vmul.f32 %v6595, %v6617
        %v6632 = vmul.f32 %v6596, %v6617
        %v6633 = vmul.f32 %v6597, %v6617
        %v6634 = vmul.f32 %v6598, %v6617
        %v6635 = vmul.f32 %v6599, %v6617
        %v6636 = vmul.f32 %v6600, %v6617
        %v6637 = vmul.f32 %v6601, %v6617
        %v6638 = vmul.f32 %v6602, %v6617
        %v6639 = vmul.f32 %v6603, %v6617
        %v6640 = vmul.f32 %v6604, %v6617
        %v6641 = vmul.f32 %v6605, %v6617
        %v6642 = vmul.f32 %v6606, %v6617
        %v6643 = vmul.f32 %v6607, %v6617
        %v6644 = vmul.f32 %v6608, %v6617
        %v6645 = vmul.f32 %v6609, %v6617
        %v6646 = vmul.f32 %v6610, %v6617
        %v6647 = vmul.f32 %v6611, %v6617
        %v6648 = vmul.f32 %v6612, %v6617
        %v6649 = vmul.f32 %v6613, %v6617
        %v6650 = vsel %vm4506, %v6618, 0.0
        %6651 = vadd.xlane.f32.xlu0 %v6650
        %v6652 = vpop.xlane.xlu0 %6651
        %v6653 = vsel %vm4506, %v6619, 0.0
        %6654 = vadd.xlane.f32.xlu0 %v6653
        %v6655 = vpop.xlane.xlu0 %6654
        %v6656 = vsel %vm4506, %v6620, 0.0
        %6657 = vadd.xlane.f32.xlu0 %v6656
        %v6658 = vpop.xlane.xlu0 %6657
        %v6659 = vsel %vm4506, %v6621, 0.0
        %6660 = vadd.xlane.f32.xlu0 %v6659
        %v6661 = vpop.xlane.xlu0 %6660
        %v6662 = vsel %vm4506, %v6622, 0.0
        %6663 = vadd.xlane.f32.xlu0 %v6662
        %v6664 = vpop.xlane.xlu0 %6663
        %v6665 = vsel %vm4506, %v6623, 0.0
        %6666 = vadd.xlane.f32.xlu0 %v6665
        %v6667 = vpop.xlane.xlu0 %6666
        %v6668 = vsel %vm4506, %v6624, 0.0
        %6669 = vadd.xlane.f32.xlu0 %v6668
        %v6670 = vpop.xlane.xlu0 %6669
        %v6671 = vsel %vm4506, %v6625, 0.0
        %6672 = vadd.xlane.f32.xlu0 %v6671
        %v6673 = vpop.xlane.xlu0 %6672
        %v6674 = vsel %vm4506, %v6626, 0.0
        %6675 = vadd.xlane.f32.xlu0 %v6674
        %v6676 = vpop.xlane.xlu0 %6675
        %v6677 = vsel %vm4506, %v6627, 0.0
        %6678 = vadd.xlane.f32.xlu0 %v6677
        %v6679 = vpop.xlane.xlu0 %6678
        %v6680 = vsel %vm4506, %v6628, 0.0
        %6681 = vadd.xlane.f32.xlu0 %v6680
        %v6682 = vpop.xlane.xlu0 %6681
        %v6683 = vsel %vm4506, %v6629, 0.0
        %6684 = vadd.xlane.f32.xlu0 %v6683
        %v6685 = vpop.xlane.xlu0 %6684
        %v6686 = vsel %vm4506, %v6630, 0.0
        %6687 = vadd.xlane.f32.xlu0 %v6686
        %v6688 = vpop.xlane.xlu0 %6687
        %v6689 = vsel %vm4506, %v6631, 0.0
        %6690 = vadd.xlane.f32.xlu0 %v6689
        %v6691 = vpop.xlane.xlu0 %6690
        %v6692 = vsel %vm4506, %v6632, 0.0
        %6693 = vadd.xlane.f32.xlu0 %v6692
        %v6694 = vpop.xlane.xlu0 %6693
        %v6695 = vsel %vm4506, %v6633, 0.0
        %6696 = vadd.xlane.f32.xlu0 %v6695
        %v6697 = vpop.xlane.xlu0 %6696
        %v6698 = vsel %vm4506, %v6634, 0.0
        %6699 = vadd.xlane.f32.xlu0 %v6698
        %v6700 = vpop.xlane.xlu0 %6699
        %v6701 = vsel %vm4506, %v6635, 0.0
        %6702 = vadd.xlane.f32.xlu0 %v6701
        %v6703 = vpop.xlane.xlu0 %6702
        %v6704 = vsel %vm4506, %v6636, 0.0
        %6705 = vadd.xlane.f32.xlu0 %v6704
        %v6706 = vpop.xlane.xlu0 %6705
        %v6707 = vsel %vm4506, %v6637, 0.0
        %6708 = vadd.xlane.f32.xlu0 %v6707
        %v6709 = vpop.xlane.xlu0 %6708
        %v6710 = vsel %vm4506, %v6638, 0.0
        %6711 = vadd.xlane.f32.xlu0 %v6710
        %v6712 = vpop.xlane.xlu0 %6711
        %v6713 = vsel %vm4506, %v6639, 0.0
        %6714 = vadd.xlane.f32.xlu0 %v6713
        %v6715 = vpop.xlane.xlu0 %6714
        %v6716 = vsel %vm4506, %v6640, 0.0
        %6717 = vadd.xlane.f32.xlu0 %v6716
        %v6718 = vpop.xlane.xlu0 %6717
        %v6719 = vsel %vm4506, %v6641, 0.0
        %6720 = vadd.xlane.f32.xlu0 %v6719
        %v6721 = vpop.xlane.xlu0 %6720
        %v6722 = vsel %vm4506, %v6642, 0.0
        %6723 = vadd.xlane.f32.xlu0 %v6722
        %v6724 = vpop.xlane.xlu0 %6723
        %v6725 = vsel %vm4506, %v6643, 0.0
        %6726 = vadd.xlane.f32.xlu0 %v6725
        %v6727 = vpop.xlane.xlu0 %6726
        %v6728 = vsel %vm4506, %v6644, 0.0
        %6729 = vadd.xlane.f32.xlu0 %v6728
        %v6730 = vpop.xlane.xlu0 %6729
        %v6731 = vsel %vm4506, %v6645, 0.0
        %6732 = vadd.xlane.f32.xlu0 %v6731
        %v6733 = vpop.xlane.xlu0 %6732
        %v6734 = vsel %vm4506, %v6646, 0.0
        %6735 = vadd.xlane.f32.xlu0 %v6734
        %v6736 = vpop.xlane.xlu0 %6735
        %v6737 = vsel %vm4506, %v6647, 0.0
        %6738 = vadd.xlane.f32.xlu0 %v6737
        %v6739 = vpop.xlane.xlu0 %6738
        %v6740 = vsel %vm4506, %v6648, 0.0
        %6741 = vadd.xlane.f32.xlu0 %v6740
        %v6742 = vpop.xlane.xlu0 %6741
        %v6743 = vsel %vm4506, %v6649, 0.0
        %6744 = vadd.xlane.f32.xlu0 %v6743
        %v6745 = vpop.xlane.xlu0 %6744
        %v6746 = vadd.f32 %v6517, %v6652
        %v6747 = vadd.f32 %v6518, %v6655
        %v6748 = vadd.f32 %v6519, %v6658
        %v6749 = vadd.f32 %v6520, %v6661
        %v6750 = vadd.f32 %v6521, %v6664
        %v6751 = vadd.f32 %v6522, %v6667
        %v6752 = vadd.f32 %v6523, %v6670
        %v6753 = vadd.f32 %v6524, %v6673
        %v6754 = vadd.f32 %v6525, %v6676
        %v6755 = vadd.f32 %v6526, %v6679
        %v6756 = vadd.f32 %v6527, %v6682
        %v6757 = vadd.f32 %v6528, %v6685
        %v6758 = vadd.f32 %v6529, %v6688
        %v6759 = vadd.f32 %v6530, %v6691
        %v6760 = vadd.f32 %v6531, %v6694
        %v6761 = vadd.f32 %v6532, %v6697
        %v6762 = vadd.f32 %v6533, %v6700
        %v6763 = vadd.f32 %v6534, %v6703
        %v6764 = vadd.f32 %v6535, %v6706
        %v6765 = vadd.f32 %v6536, %v6709
        %v6766 = vadd.f32 %v6537, %v6712
        %v6767 = vadd.f32 %v6538, %v6715
        %v6768 = vadd.f32 %v6539, %v6718
        %v6769 = vadd.f32 %v6540, %v6721
        %v6770 = vadd.f32 %v6541, %v6724
        %v6771 = vadd.f32 %v6542, %v6727
        %v6772 = vadd.f32 %v6543, %v6730
        %v6773 = vadd.f32 %v6544, %v6733
        %v6774 = vadd.f32 %v6545, %v6736
        %v6775 = vadd.f32 %v6546, %v6739
        %v6776 = vadd.f32 %v6547, %v6742
        %v6777 = vadd.f32 %v6548, %v6745
        %v6778 = vld [vmem:[%s6549 + $0x8] sm:$0x1]
        %v6779 = vld [vmem:[%s6549 + $0x14] sm:$0x1]
        %v6780 = vld [vmem:[%s6549 + $0x20] sm:$0x1]
        %v6781 = vld [vmem:[%s6549 + $0x2c] sm:$0x1]
        %v6782 = vld [vmem:[%s6549 + $0x38] sm:$0x1]
        %v6783 = vld [vmem:[%s6549 + $0x44] sm:$0x1]
        %v6784 = vld [vmem:[%s6549 + $0x50] sm:$0x1]
        %v6785 = vld [vmem:[%s6549 + $0x5c] sm:$0x1]
        %v6786 = vld [vmem:[%s6549 + $0x68] sm:$0x1]
        %v6787 = vld [vmem:[%s6549 + $0x74] sm:$0x1]
        %v6788 = vld [vmem:[%s6549 + $0x80] sm:$0x1]
        %v6789 = vld [vmem:[%s6549 + $0x8c] sm:$0x1]
        %v6790 = vld [vmem:[%s6549 + $0x98] sm:$0x1]
        %v6791 = vld [vmem:[%s6549 + $0xa4] sm:$0x1]
        %v6792 = vld [vmem:[%s6549 + $0xb0] sm:$0x1]
        %v6793 = vld [vmem:[%s6549 + $0xbc] sm:$0x1]
        %v6794 = vunpack.c.l.bf16 %v6778
        %v6795 = vunpack.c.l.bf16 %v6779
        %v6796 = vunpack.c.l.bf16 %v6780
        %v6797 = vunpack.c.l.bf16 %v6781
        %v6798 = vunpack.c.l.bf16 %v6782
        %v6799 = vunpack.c.l.bf16 %v6783
        %v6800 = vunpack.c.l.bf16 %v6784
        %v6801 = vunpack.c.l.bf16 %v6785
        %v6802 = vunpack.c.l.bf16 %v6786
        %v6803 = vunpack.c.l.bf16 %v6787
        %v6804 = vunpack.c.l.bf16 %v6788
        %v6805 = vunpack.c.l.bf16 %v6789
        %v6806 = vunpack.c.l.bf16 %v6790
        %v6807 = vunpack.c.l.bf16 %v6791
        %v6808 = vunpack.c.l.bf16 %v6792
        %v6809 = vunpack.c.l.bf16 %v6793
        %v6810 = vlaneseq
        %v6811 = vshrl.u32 %v6810, 7
        %v6812 = vsub.s32 7, %v6811
        %v6813 = vrot.slane %v4404, %v6812
        %v6814 = vmul.f32 %v6582, %v6813
        %v6815 = vmul.f32 %v6583, %v6813
        %v6816 = vmul.f32 %v6794, %v6813
        %v6817 = vmul.f32 %v6584, %v6813
        %v6818 = vmul.f32 %v6585, %v6813
        %v6819 = vmul.f32 %v6795, %v6813
        %v6820 = vmul.f32 %v6586, %v6813
        %v6821 = vmul.f32 %v6587, %v6813
        %v6822 = vmul.f32 %v6796, %v6813
        %v6823 = vmul.f32 %v6588, %v6813
        %v6824 = vmul.f32 %v6589, %v6813
        %v6825 = vmul.f32 %v6797, %v6813
        %v6826 = vmul.f32 %v6590, %v6813
        %v6827 = vmul.f32 %v6591, %v6813
        %v6828 = vmul.f32 %v6798, %v6813
        %v6829 = vmul.f32 %v6592, %v6813
        %v6830 = vmul.f32 %v6593, %v6813
        %v6831 = vmul.f32 %v6799, %v6813
        %v6832 = vmul.f32 %v6594, %v6813
        %v6833 = vmul.f32 %v6595, %v6813
        %v6834 = vmul.f32 %v6800, %v6813
        %v6835 = vmul.f32 %v6596, %v6813
        %v6836 = vmul.f32 %v6597, %v6813
        %v6837 = vmul.f32 %v6801, %v6813
        %v6838 = vmul.f32 %v6598, %v6813
        %v6839 = vmul.f32 %v6599, %v6813
        %v6840 = vmul.f32 %v6802, %v6813
        %v6841 = vmul.f32 %v6600, %v6813
        %v6842 = vmul.f32 %v6601, %v6813
        %v6843 = vmul.f32 %v6803, %v6813
        %v6844 = vmul.f32 %v6602, %v6813
        %v6845 = vmul.f32 %v6603, %v6813
        %v6846 = vmul.f32 %v6804, %v6813
        %v6847 = vmul.f32 %v6604, %v6813
        %v6848 = vmul.f32 %v6605, %v6813
        %v6849 = vmul.f32 %v6805, %v6813
        %v6850 = vmul.f32 %v6606, %v6813
        %v6851 = vmul.f32 %v6607, %v6813
        %v6852 = vmul.f32 %v6806, %v6813
        %v6853 = vmul.f32 %v6608, %v6813
        %v6854 = vmul.f32 %v6609, %v6813
        %v6855 = vmul.f32 %v6807, %v6813
        %v6856 = vmul.f32 %v6610, %v6813
        %v6857 = vmul.f32 %v6611, %v6813
        %v6858 = vmul.f32 %v6808, %v6813
        %v6859 = vmul.f32 %v6612, %v6813
        %v6860 = vmul.f32 %v6613, %v6813
        %v6861 = vmul.f32 %v6809, %v6813
        %v6862 = vsel %vm4719, %v6814, 0.0
        %6863 = vadd.xlane.f32.xlu0 %v6862
        %v6864 = vpop.xlane.xlu0 %6863
        %v6865 = vsel %vm4506, %v6815, 0.0
        %6866 = vadd.xlane.f32.xlu0 %v6865
        %v6867 = vpop.xlane.xlu0 %6866
        %v6868 = vsel %vm254, %v6816, 0.0
        %6869 = vadd.xlane.f32.xlu0 %v6868
        %v6870 = vpop.xlane.xlu0 %6869
        %v6871 = vsel %vm4719, %v6817, 0.0
        %6872 = vadd.xlane.f32.xlu0 %v6871
        %v6873 = vpop.xlane.xlu0 %6872
        %v6874 = vsel %vm4506, %v6818, 0.0
        %6875 = vadd.xlane.f32.xlu0 %v6874
        %v6876 = vpop.xlane.xlu0 %6875
        %v6877 = vsel %vm254, %v6819, 0.0
        %6878 = vadd.xlane.f32.xlu0 %v6877
        %v6879 = vpop.xlane.xlu0 %6878
        %v6880 = vsel %vm4719, %v6820, 0.0
        %6881 = vadd.xlane.f32.xlu0 %v6880
        %v6882 = vpop.xlane.xlu0 %6881
        %v6883 = vsel %vm4506, %v6821, 0.0
        %6884 = vadd.xlane.f32.xlu0 %v6883
        %v6885 = vpop.xlane.xlu0 %6884
        %v6886 = vsel %vm254, %v6822, 0.0
        %6887 = vadd.xlane.f32.xlu0 %v6886
        %v6888 = vpop.xlane.xlu0 %6887
        %v6889 = vsel %vm4719, %v6823, 0.0
        %6890 = vadd.xlane.f32.xlu0 %v6889
        %v6891 = vpop.xlane.xlu0 %6890
        %v6892 = vsel %vm4506, %v6824, 0.0
        %6893 = vadd.xlane.f32.xlu0 %v6892
        %v6894 = vpop.xlane.xlu0 %6893
        %v6895 = vsel %vm254, %v6825, 0.0
        %6896 = vadd.xlane.f32.xlu0 %v6895
        %v6897 = vpop.xlane.xlu0 %6896
        %v6898 = vsel %vm4719, %v6826, 0.0
        %6899 = vadd.xlane.f32.xlu0 %v6898
        %v6900 = vpop.xlane.xlu0 %6899
        %v6901 = vsel %vm4506, %v6827, 0.0
        %6902 = vadd.xlane.f32.xlu0 %v6901
        %v6903 = vpop.xlane.xlu0 %6902
        %v6904 = vsel %vm254, %v6828, 0.0
        %6905 = vadd.xlane.f32.xlu0 %v6904
        %v6906 = vpop.xlane.xlu0 %6905
        %v6907 = vsel %vm4719, %v6829, 0.0
        %6908 = vadd.xlane.f32.xlu0 %v6907
        %v6909 = vpop.xlane.xlu0 %6908
        %v6910 = vsel %vm4506, %v6830, 0.0
        %6911 = vadd.xlane.f32.xlu0 %v6910
        %v6912 = vpop.xlane.xlu0 %6911
        %v6913 = vsel %vm254, %v6831, 0.0
        %6914 = vadd.xlane.f32.xlu0 %v6913
        %v6915 = vpop.xlane.xlu0 %6914
        %v6916 = vsel %vm4719, %v6832, 0.0
        %6917 = vadd.xlane.f32.xlu0 %v6916
        %v6918 = vpop.xlane.xlu0 %6917
        %v6919 = vsel %vm4506, %v6833, 0.0
        %6920 = vadd.xlane.f32.xlu0 %v6919
        %v6921 = vpop.xlane.xlu0 %6920
        %v6922 = vsel %vm254, %v6834, 0.0
        %6923 = vadd.xlane.f32.xlu0 %v6922
        %v6924 = vpop.xlane.xlu0 %6923
        %v6925 = vsel %vm4719, %v6835, 0.0
        %6926 = vadd.xlane.f32.xlu0 %v6925
        %v6927 = vpop.xlane.xlu0 %6926
        %v6928 = vsel %vm4506, %v6836, 0.0
        %6929 = vadd.xlane.f32.xlu0 %v6928
        %v6930 = vpop.xlane.xlu0 %6929
        %v6931 = vsel %vm254, %v6837, 0.0
        %6932 = vadd.xlane.f32.xlu0 %v6931
        %v6933 = vpop.xlane.xlu0 %6932
        %v6934 = vsel %vm4719, %v6838, 0.0
        %6935 = vadd.xlane.f32.xlu0 %v6934
        %v6936 = vpop.xlane.xlu0 %6935
        %v6937 = vsel %vm4506, %v6839, 0.0
        %6938 = vadd.xlane.f32.xlu0 %v6937
        %v6939 = vpop.xlane.xlu0 %6938
        %v6940 = vsel %vm254, %v6840, 0.0
        %6941 = vadd.xlane.f32.xlu0 %v6940
        %v6942 = vpop.xlane.xlu0 %6941
        %v6943 = vsel %vm4719, %v6841, 0.0
        %6944 = vadd.xlane.f32.xlu0 %v6943
        %v6945 = vpop.xlane.xlu0 %6944
        %v6946 = vsel %vm4506, %v6842, 0.0
        %6947 = vadd.xlane.f32.xlu0 %v6946
        %v6948 = vpop.xlane.xlu0 %6947
        %v6949 = vsel %vm254, %v6843, 0.0
        %6950 = vadd.xlane.f32.xlu0 %v6949
        %v6951 = vpop.xlane.xlu0 %6950
        %v6952 = vsel %vm4719, %v6844, 0.0
        %6953 = vadd.xlane.f32.xlu0 %v6952
        %v6954 = vpop.xlane.xlu0 %6953
        %v6955 = vsel %vm4506, %v6845, 0.0
        %6956 = vadd.xlane.f32.xlu0 %v6955
        %v6957 = vpop.xlane.xlu0 %6956
        %v6958 = vsel %vm254, %v6846, 0.0
        %6959 = vadd.xlane.f32.xlu0 %v6958
        %v6960 = vpop.xlane.xlu0 %6959
        %v6961 = vsel %vm4719, %v6847, 0.0
        %6962 = vadd.xlane.f32.xlu0 %v6961
        %v6963 = vpop.xlane.xlu0 %6962
        %v6964 = vsel %vm4506, %v6848, 0.0
        %6965 = vadd.xlane.f32.xlu0 %v6964
        %v6966 = vpop.xlane.xlu0 %6965
        %v6967 = vsel %vm254, %v6849, 0.0
        %6968 = vadd.xlane.f32.xlu0 %v6967
        %v6969 = vpop.xlane.xlu0 %6968
        %v6970 = vsel %vm4719, %v6850, 0.0
        %6971 = vadd.xlane.f32.xlu0 %v6970
        %v6972 = vpop.xlane.xlu0 %6971
        %v6973 = vsel %vm4506, %v6851, 0.0
        %6974 = vadd.xlane.f32.xlu0 %v6973
        %v6975 = vpop.xlane.xlu0 %6974
        %v6976 = vsel %vm254, %v6852, 0.0
        %6977 = vadd.xlane.f32.xlu0 %v6976
        %v6978 = vpop.xlane.xlu0 %6977
        %v6979 = vsel %vm4719, %v6853, 0.0
        %6980 = vadd.xlane.f32.xlu0 %v6979
        %v6981 = vpop.xlane.xlu0 %6980
        %v6982 = vsel %vm4506, %v6854, 0.0
        %6983 = vadd.xlane.f32.xlu0 %v6982
        %v6984 = vpop.xlane.xlu0 %6983
        %v6985 = vsel %vm254, %v6855, 0.0
        %6986 = vadd.xlane.f32.xlu0 %v6985
        %v6987 = vpop.xlane.xlu0 %6986
        %v6988 = vsel %vm4719, %v6856, 0.0
        %6989 = vadd.xlane.f32.xlu0 %v6988
        %v6990 = vpop.xlane.xlu0 %6989
        %v6991 = vsel %vm4506, %v6857, 0.0
        %6992 = vadd.xlane.f32.xlu0 %v6991
        %v6993 = vpop.xlane.xlu0 %6992
        %v6994 = vsel %vm254, %v6858, 0.0
        %6995 = vadd.xlane.f32.xlu0 %v6994
        %v6996 = vpop.xlane.xlu0 %6995
        %v6997 = vsel %vm4719, %v6859, 0.0
        %6998 = vadd.xlane.f32.xlu0 %v6997
        %v6999 = vpop.xlane.xlu0 %6998
        %v7000 = vsel %vm4506, %v6860, 0.0
        %7001 = vadd.xlane.f32.xlu0 %v7000
        %v7002 = vpop.xlane.xlu0 %7001
        %v7003 = vsel %vm254, %v6861, 0.0
        %7004 = vadd.xlane.f32.xlu0 %v7003
        %v7005 = vpop.xlane.xlu0 %7004
        %v7054 = vrot.slane %v6864, 1
        %v7055 = vrot.slane %v6867, 1
        %v7056 = vsel %vm4912, %v7054, %v7055
        %v7057 = vrot.slane %v6870, 1
        %v7058 = vsel %vm4912, %v7055, %v7057
        %v7059 = vrot.slane %v6873, 1
        %v7060 = vrot.slane %v6876, 1
        %v7061 = vsel %vm4912, %v7059, %v7060
        %v7062 = vrot.slane %v6879, 1
        %v7063 = vsel %vm4912, %v7060, %v7062
        %v7064 = vrot.slane %v6882, 1
        %v7065 = vrot.slane %v6885, 1
        %v7066 = vsel %vm4912, %v7064, %v7065
        %v7067 = vrot.slane %v6888, 1
        %v7068 = vsel %vm4912, %v7065, %v7067
        %v7069 = vrot.slane %v6891, 1
        %v7070 = vrot.slane %v6894, 1
        %v7071 = vsel %vm4912, %v7069, %v7070
        %v7072 = vrot.slane %v6897, 1
        %v7073 = vsel %vm4912, %v7070, %v7072
        %v7074 = vrot.slane %v6900, 1
        %v7075 = vrot.slane %v6903, 1
        %v7076 = vsel %vm4912, %v7074, %v7075
        %v7077 = vrot.slane %v6906, 1
        %v7078 = vsel %vm4912, %v7075, %v7077
        %v7079 = vrot.slane %v6909, 1
        %v7080 = vrot.slane %v6912, 1
        %v7081 = vsel %vm4912, %v7079, %v7080
        %v7082 = vrot.slane %v6915, 1
        %v7083 = vsel %vm4912, %v7080, %v7082
        %v7084 = vrot.slane %v6918, 1
        %v7085 = vrot.slane %v6921, 1
        %v7086 = vsel %vm4912, %v7084, %v7085
        %v7087 = vrot.slane %v6924, 1
        %v7088 = vsel %vm4912, %v7085, %v7087
        %v7089 = vrot.slane %v6927, 1
        %v7090 = vrot.slane %v6930, 1
        %v7091 = vsel %vm4912, %v7089, %v7090
        %v7092 = vrot.slane %v6933, 1
        %v7093 = vsel %vm4912, %v7090, %v7092
        %v7094 = vrot.slane %v6936, 1
        %v7095 = vrot.slane %v6939, 1
        %v7096 = vsel %vm4912, %v7094, %v7095
        %v7097 = vrot.slane %v6942, 1
        %v7098 = vsel %vm4912, %v7095, %v7097
        %v7099 = vrot.slane %v6945, 1
        %v7100 = vrot.slane %v6948, 1
        %v7101 = vsel %vm4912, %v7099, %v7100
        %v7102 = vrot.slane %v6951, 1
        %v7103 = vsel %vm4912, %v7100, %v7102
        %v7104 = vrot.slane %v6954, 1
        %v7105 = vrot.slane %v6957, 1
        %v7106 = vsel %vm4912, %v7104, %v7105
        %v7107 = vrot.slane %v6960, 1
        %v7108 = vsel %vm4912, %v7105, %v7107
        %v7109 = vrot.slane %v6963, 1
        %v7110 = vrot.slane %v6966, 1
        %v7111 = vsel %vm4912, %v7109, %v7110
        %v7112 = vrot.slane %v6969, 1
        %v7113 = vsel %vm4912, %v7110, %v7112
        %v7114 = vrot.slane %v6972, 1
        %v7115 = vrot.slane %v6975, 1
        %v7116 = vsel %vm4912, %v7114, %v7115
        %v7117 = vrot.slane %v6978, 1
        %v7118 = vsel %vm4912, %v7115, %v7117
        %v7119 = vrot.slane %v6981, 1
        %v7120 = vrot.slane %v6984, 1
        %v7121 = vsel %vm4912, %v7119, %v7120
        %v7122 = vrot.slane %v6987, 1
        %v7123 = vsel %vm4912, %v7120, %v7122
        %v7124 = vrot.slane %v6990, 1
        %v7125 = vrot.slane %v6993, 1
        %v7126 = vsel %vm4912, %v7124, %v7125
        %v7127 = vrot.slane %v6996, 1
        %v7128 = vsel %vm4912, %v7125, %v7127
        %v7129 = vrot.slane %v6999, 1
        %v7130 = vrot.slane %v7002, 1
        %v7131 = vsel %vm4912, %v7129, %v7130
        %v7132 = vrot.slane %v7005, 1
        %v7133 = vsel %vm4912, %v7130, %v7132
        %v7166 = vadd.f32 %v6746, %v7056
        %v7167 = vadd.f32 %v6747, %v7058
        %v7168 = vadd.f32 %v6748, %v7061
        %v7169 = vadd.f32 %v6749, %v7063
        %v7170 = vadd.f32 %v6750, %v7066
        %v7171 = vadd.f32 %v6751, %v7068
        %v7172 = vadd.f32 %v6752, %v7071
        %v7173 = vadd.f32 %v6753, %v7073
        %v7174 = vadd.f32 %v6754, %v7076
        %v7175 = vadd.f32 %v6755, %v7078
        %v7176 = vadd.f32 %v6756, %v7081
        %v7177 = vadd.f32 %v6757, %v7083
        %v7178 = vadd.f32 %v6758, %v7086
        %v7179 = vadd.f32 %v6759, %v7088
        %v7180 = vadd.f32 %v6760, %v7091
        %v7181 = vadd.f32 %v6761, %v7093
        %v7182 = vadd.f32 %v6762, %v7096
        %v7183 = vadd.f32 %v6763, %v7098
        %v7184 = vadd.f32 %v6764, %v7101
        %v7185 = vadd.f32 %v6765, %v7103
        %v7186 = vadd.f32 %v6766, %v7106
        %v7187 = vadd.f32 %v6767, %v7108
        %v7188 = vadd.f32 %v6768, %v7111
        %v7189 = vadd.f32 %v6769, %v7113
        %v7190 = vadd.f32 %v6770, %v7116
        %v7191 = vadd.f32 %v6771, %v7118
        %v7192 = vadd.f32 %v6772, %v7121
        %v7193 = vadd.f32 %v6773, %v7123
        %v7194 = vadd.f32 %v6774, %v7126
        %v7195 = vadd.f32 %v6775, %v7128
        %v7196 = vadd.f32 %v6776, %v7131
        %v7197 = vadd.f32 %v6777, %v7133
        %v7198 = vld [vmem:[%s6549] sm:$0xe]
        %v7199 = vld [vmem:[%s6549 + $0xc] sm:$0xe]
        %v7200 = vld [vmem:[%s6549 + $0x18] sm:$0xe]
        %v7201 = vld [vmem:[%s6549 + $0x24] sm:$0xe]
        %v7202 = vld [vmem:[%s6549 + $0x30] sm:$0xe]
        %v7203 = vld [vmem:[%s6549 + $0x3c] sm:$0xe]
        %v7204 = vld [vmem:[%s6549 + $0x48] sm:$0xe]
        %v7205 = vld [vmem:[%s6549 + $0x54] sm:$0xe]
        %v7206 = vld [vmem:[%s6549 + $0x60] sm:$0xe]
        %v7207 = vld [vmem:[%s6549 + $0x6c] sm:$0xe]
        %v7208 = vld [vmem:[%s6549 + $0x78] sm:$0xe]
        %v7209 = vld [vmem:[%s6549 + $0x84] sm:$0xe]
        %v7210 = vld [vmem:[%s6549 + $0x90] sm:$0xe]
        %v7211 = vld [vmem:[%s6549 + $0x9c] sm:$0xe]
        %v7212 = vld [vmem:[%s6549 + $0xa8] sm:$0xe]
        %v7213 = vld [vmem:[%s6549 + $0xb4] sm:$0xe]
        %v7214 = vunpack.c.l.bf16 %v7198
        %v7215 = vunpack.c.l.bf16 %v7199
        %v7216 = vunpack.c.l.bf16 %v7200
        %v7217 = vunpack.c.l.bf16 %v7201
        %v7218 = vunpack.c.l.bf16 %v7202
        %v7219 = vunpack.c.l.bf16 %v7203
        %v7220 = vunpack.c.l.bf16 %v7204
        %v7221 = vunpack.c.l.bf16 %v7205
        %v7222 = vunpack.c.l.bf16 %v7206
        %v7223 = vunpack.c.l.bf16 %v7207
        %v7224 = vunpack.c.l.bf16 %v7208
        %v7225 = vunpack.c.l.bf16 %v7209
        %v7226 = vunpack.c.l.bf16 %v7210
        %v7227 = vunpack.c.l.bf16 %v7211
        %v7228 = vunpack.c.l.bf16 %v7212
        %v7229 = vunpack.c.l.bf16 %v7213
        %v7230 = vlaneseq
        %v7231 = vshrl.u32 %v7230, 7
        %v7232 = vsub.s32 0, %v7231
        %v7233 = vrot.slane %v4405, %v7232
        %v7234 = vmul.f32 %v7214, %v7233
        %v7235 = vmul.f32 %v6583, %v7233
        %v7236 = vmul.f32 %v6794, %v7233
        %v7237 = vmul.f32 %v7215, %v7233
        %v7238 = vmul.f32 %v6585, %v7233
        %v7239 = vmul.f32 %v6795, %v7233
        %v7240 = vmul.f32 %v7216, %v7233
        %v7241 = vmul.f32 %v6587, %v7233
        %v7242 = vmul.f32 %v6796, %v7233
        %v7243 = vmul.f32 %v7217, %v7233
        %v7244 = vmul.f32 %v6589, %v7233
        %v7245 = vmul.f32 %v6797, %v7233
        %v7246 = vmul.f32 %v7218, %v7233
        %v7247 = vmul.f32 %v6591, %v7233
        %v7248 = vmul.f32 %v6798, %v7233
        %v7249 = vmul.f32 %v7219, %v7233
        %v7250 = vmul.f32 %v6593, %v7233
        %v7251 = vmul.f32 %v6799, %v7233
        %v7252 = vmul.f32 %v7220, %v7233
        %v7253 = vmul.f32 %v6595, %v7233
        %v7254 = vmul.f32 %v6800, %v7233
        %v7255 = vmul.f32 %v7221, %v7233
        %v7256 = vmul.f32 %v6597, %v7233
        %v7257 = vmul.f32 %v6801, %v7233
        %v7258 = vmul.f32 %v7222, %v7233
        %v7259 = vmul.f32 %v6599, %v7233
        %v7260 = vmul.f32 %v6802, %v7233
        %v7261 = vmul.f32 %v7223, %v7233
        %v7262 = vmul.f32 %v6601, %v7233
        %v7263 = vmul.f32 %v6803, %v7233
        %v7264 = vmul.f32 %v7224, %v7233
        %v7265 = vmul.f32 %v6603, %v7233
        %v7266 = vmul.f32 %v6804, %v7233
        %v7267 = vmul.f32 %v7225, %v7233
        %v7268 = vmul.f32 %v6605, %v7233
        %v7269 = vmul.f32 %v6805, %v7233
        %v7270 = vmul.f32 %v7226, %v7233
        %v7271 = vmul.f32 %v6607, %v7233
        %v7272 = vmul.f32 %v6806, %v7233
        %v7273 = vmul.f32 %v7227, %v7233
        %v7274 = vmul.f32 %v6609, %v7233
        %v7275 = vmul.f32 %v6807, %v7233
        %v7276 = vmul.f32 %v7228, %v7233
        %v7277 = vmul.f32 %v6611, %v7233
        %v7278 = vmul.f32 %v6808, %v7233
        %v7279 = vmul.f32 %v7229, %v7233
        %v7280 = vmul.f32 %v6613, %v7233
        %v7281 = vmul.f32 %v6809, %v7233
        %v7282 = vsel %vm5141, %v7234, 0.0
        %7283 = vadd.xlane.f32.xlu0 %v7282
        %v7284 = vpop.xlane.xlu0 %7283
        %v7285 = vsel %vm4506, %v7235, 0.0
        %7286 = vadd.xlane.f32.xlu0 %v7285
        %v7287 = vpop.xlane.xlu0 %7286
        %v7288 = vsel %vm5148, %v7236, 0.0
        %7289 = vadd.xlane.f32.xlu0 %v7288
        %v7290 = vpop.xlane.xlu0 %7289
        %v7291 = vsel %vm5141, %v7237, 0.0
        %7292 = vadd.xlane.f32.xlu0 %v7291
        %v7293 = vpop.xlane.xlu0 %7292
        %v7294 = vsel %vm4506, %v7238, 0.0
        %7295 = vadd.xlane.f32.xlu0 %v7294
        %v7296 = vpop.xlane.xlu0 %7295
        %v7297 = vsel %vm5148, %v7239, 0.0
        %7298 = vadd.xlane.f32.xlu0 %v7297
        %v7299 = vpop.xlane.xlu0 %7298
        %v7300 = vsel %vm5141, %v7240, 0.0
        %7301 = vadd.xlane.f32.xlu0 %v7300
        %v7302 = vpop.xlane.xlu0 %7301
        %v7303 = vsel %vm4506, %v7241, 0.0
        %7304 = vadd.xlane.f32.xlu0 %v7303
        %v7305 = vpop.xlane.xlu0 %7304
        %v7306 = vsel %vm5148, %v7242, 0.0
        %7307 = vadd.xlane.f32.xlu0 %v7306
        %v7308 = vpop.xlane.xlu0 %7307
        %v7309 = vsel %vm5141, %v7243, 0.0
        %7310 = vadd.xlane.f32.xlu0 %v7309
        %v7311 = vpop.xlane.xlu0 %7310
        %v7312 = vsel %vm4506, %v7244, 0.0
        %7313 = vadd.xlane.f32.xlu0 %v7312
        %v7314 = vpop.xlane.xlu0 %7313
        %v7315 = vsel %vm5148, %v7245, 0.0
        %7316 = vadd.xlane.f32.xlu0 %v7315
        %v7317 = vpop.xlane.xlu0 %7316
        %v7318 = vsel %vm5141, %v7246, 0.0
        %7319 = vadd.xlane.f32.xlu0 %v7318
        %v7320 = vpop.xlane.xlu0 %7319
        %v7321 = vsel %vm4506, %v7247, 0.0
        %7322 = vadd.xlane.f32.xlu0 %v7321
        %v7323 = vpop.xlane.xlu0 %7322
        %v7324 = vsel %vm5148, %v7248, 0.0
        %7325 = vadd.xlane.f32.xlu0 %v7324
        %v7326 = vpop.xlane.xlu0 %7325
        %v7327 = vsel %vm5141, %v7249, 0.0
        %7328 = vadd.xlane.f32.xlu0 %v7327
        %v7329 = vpop.xlane.xlu0 %7328
        %v7330 = vsel %vm4506, %v7250, 0.0
        %7331 = vadd.xlane.f32.xlu0 %v7330
        %v7332 = vpop.xlane.xlu0 %7331
        %v7333 = vsel %vm5148, %v7251, 0.0
        %7334 = vadd.xlane.f32.xlu0 %v7333
        %v7335 = vpop.xlane.xlu0 %7334
        %v7336 = vsel %vm5141, %v7252, 0.0
        %7337 = vadd.xlane.f32.xlu0 %v7336
        %v7338 = vpop.xlane.xlu0 %7337
        %v7339 = vsel %vm4506, %v7253, 0.0
        %7340 = vadd.xlane.f32.xlu0 %v7339
        %v7341 = vpop.xlane.xlu0 %7340
        %v7342 = vsel %vm5148, %v7254, 0.0
        %7343 = vadd.xlane.f32.xlu0 %v7342
        %v7344 = vpop.xlane.xlu0 %7343
        %v7345 = vsel %vm5141, %v7255, 0.0
        %7346 = vadd.xlane.f32.xlu0 %v7345
        %v7347 = vpop.xlane.xlu0 %7346
        %v7348 = vsel %vm4506, %v7256, 0.0
        %7349 = vadd.xlane.f32.xlu0 %v7348
        %v7350 = vpop.xlane.xlu0 %7349
        %v7351 = vsel %vm5148, %v7257, 0.0
        %7352 = vadd.xlane.f32.xlu0 %v7351
        %v7353 = vpop.xlane.xlu0 %7352
        %v7354 = vsel %vm5141, %v7258, 0.0
        %7355 = vadd.xlane.f32.xlu0 %v7354
        %v7356 = vpop.xlane.xlu0 %7355
        %v7357 = vsel %vm4506, %v7259, 0.0
        %7358 = vadd.xlane.f32.xlu0 %v7357
        %v7359 = vpop.xlane.xlu0 %7358
        %v7360 = vsel %vm5148, %v7260, 0.0
        %7361 = vadd.xlane.f32.xlu0 %v7360
        %v7362 = vpop.xlane.xlu0 %7361
        %v7363 = vsel %vm5141, %v7261, 0.0
        %7364 = vadd.xlane.f32.xlu0 %v7363
        %v7365 = vpop.xlane.xlu0 %7364
        %v7366 = vsel %vm4506, %v7262, 0.0
        %7367 = vadd.xlane.f32.xlu0 %v7366
        %v7368 = vpop.xlane.xlu0 %7367
        %v7369 = vsel %vm5148, %v7263, 0.0
        %7370 = vadd.xlane.f32.xlu0 %v7369
        %v7371 = vpop.xlane.xlu0 %7370
        %v7372 = vsel %vm5141, %v7264, 0.0
        %7373 = vadd.xlane.f32.xlu0 %v7372
        %v7374 = vpop.xlane.xlu0 %7373
        %v7375 = vsel %vm4506, %v7265, 0.0
        %7376 = vadd.xlane.f32.xlu0 %v7375
        %v7377 = vpop.xlane.xlu0 %7376
        %v7378 = vsel %vm5148, %v7266, 0.0
        %7379 = vadd.xlane.f32.xlu0 %v7378
        %v7380 = vpop.xlane.xlu0 %7379
        %v7381 = vsel %vm5141, %v7267, 0.0
        %7382 = vadd.xlane.f32.xlu0 %v7381
        %v7383 = vpop.xlane.xlu0 %7382
        %v7384 = vsel %vm4506, %v7268, 0.0
        %7385 = vadd.xlane.f32.xlu0 %v7384
        %v7386 = vpop.xlane.xlu0 %7385
        %v7387 = vsel %vm5148, %v7269, 0.0
        %7388 = vadd.xlane.f32.xlu0 %v7387
        %v7389 = vpop.xlane.xlu0 %7388
        %v7390 = vsel %vm5141, %v7270, 0.0
        %7391 = vadd.xlane.f32.xlu0 %v7390
        %v7392 = vpop.xlane.xlu0 %7391
        %v7393 = vsel %vm4506, %v7271, 0.0
        %7394 = vadd.xlane.f32.xlu0 %v7393
        %v7395 = vpop.xlane.xlu0 %7394
        %v7396 = vsel %vm5148, %v7272, 0.0
        %7397 = vadd.xlane.f32.xlu0 %v7396
        %v7398 = vpop.xlane.xlu0 %7397
        %v7399 = vsel %vm5141, %v7273, 0.0
        %7400 = vadd.xlane.f32.xlu0 %v7399
        %v7401 = vpop.xlane.xlu0 %7400
        %v7402 = vsel %vm4506, %v7274, 0.0
        %7403 = vadd.xlane.f32.xlu0 %v7402
        %v7404 = vpop.xlane.xlu0 %7403
        %v7405 = vsel %vm5148, %v7275, 0.0
        %7406 = vadd.xlane.f32.xlu0 %v7405
        %v7407 = vpop.xlane.xlu0 %7406
        %v7408 = vsel %vm5141, %v7276, 0.0
        %7409 = vadd.xlane.f32.xlu0 %v7408
        %v7410 = vpop.xlane.xlu0 %7409
        %v7411 = vsel %vm4506, %v7277, 0.0
        %7412 = vadd.xlane.f32.xlu0 %v7411
        %v7413 = vpop.xlane.xlu0 %7412
        %v7414 = vsel %vm5148, %v7278, 0.0
        %7415 = vadd.xlane.f32.xlu0 %v7414
        %v7416 = vpop.xlane.xlu0 %7415
        %v7417 = vsel %vm5141, %v7279, 0.0
        %7418 = vadd.xlane.f32.xlu0 %v7417
        %v7419 = vpop.xlane.xlu0 %7418
        %v7420 = vsel %vm4506, %v7280, 0.0
        %7421 = vadd.xlane.f32.xlu0 %v7420
        %v7422 = vpop.xlane.xlu0 %7421
        %v7423 = vsel %vm5148, %v7281, 0.0
        %7424 = vadd.xlane.f32.xlu0 %v7423
        %v7425 = vpop.xlane.xlu0 %7424
        %v7474 = vrot.slane %v7284, 2
        %v7475 = vrot.slane %v7287, 2
        %v7476 = vsel %vm5335, %v7474, %v7475
        %v7477 = vrot.slane %v7290, 2
        %v7478 = vsel %vm5335, %v7475, %v7477
        %v7479 = vrot.slane %v7293, 2
        %v7480 = vrot.slane %v7296, 2
        %v7481 = vsel %vm5335, %v7479, %v7480
        %v7482 = vrot.slane %v7299, 2
        %v7483 = vsel %vm5335, %v7480, %v7482
        %v7484 = vrot.slane %v7302, 2
        %v7485 = vrot.slane %v7305, 2
        %v7486 = vsel %vm5335, %v7484, %v7485
        %v7487 = vrot.slane %v7308, 2
        %v7488 = vsel %vm5335, %v7485, %v7487
        %v7489 = vrot.slane %v7311, 2
        %v7490 = vrot.slane %v7314, 2
        %v7491 = vsel %vm5335, %v7489, %v7490
        %v7492 = vrot.slane %v7317, 2
        %v7493 = vsel %vm5335, %v7490, %v7492
        %v7494 = vrot.slane %v7320, 2
        %v7495 = vrot.slane %v7323, 2
        %v7496 = vsel %vm5335, %v7494, %v7495
        %v7497 = vrot.slane %v7326, 2
        %v7498 = vsel %vm5335, %v7495, %v7497
        %v7499 = vrot.slane %v7329, 2
        %v7500 = vrot.slane %v7332, 2
        %v7501 = vsel %vm5335, %v7499, %v7500
        %v7502 = vrot.slane %v7335, 2
        %v7503 = vsel %vm5335, %v7500, %v7502
        %v7504 = vrot.slane %v7338, 2
        %v7505 = vrot.slane %v7341, 2
        %v7506 = vsel %vm5335, %v7504, %v7505
        %v7507 = vrot.slane %v7344, 2
        %v7508 = vsel %vm5335, %v7505, %v7507
        %v7509 = vrot.slane %v7347, 2
        %v7510 = vrot.slane %v7350, 2
        %v7511 = vsel %vm5335, %v7509, %v7510
        %v7512 = vrot.slane %v7353, 2
        %v7513 = vsel %vm5335, %v7510, %v7512
        %v7514 = vrot.slane %v7356, 2
        %v7515 = vrot.slane %v7359, 2
        %v7516 = vsel %vm5335, %v7514, %v7515
        %v7517 = vrot.slane %v7362, 2
        %v7518 = vsel %vm5335, %v7515, %v7517
        %v7519 = vrot.slane %v7365, 2
        %v7520 = vrot.slane %v7368, 2
        %v7521 = vsel %vm5335, %v7519, %v7520
        %v7522 = vrot.slane %v7371, 2
        %v7523 = vsel %vm5335, %v7520, %v7522
        %v7524 = vrot.slane %v7374, 2
        %v7525 = vrot.slane %v7377, 2
        %v7526 = vsel %vm5335, %v7524, %v7525
        %v7527 = vrot.slane %v7380, 2
        %v7528 = vsel %vm5335, %v7525, %v7527
        %v7529 = vrot.slane %v7383, 2
        %v7530 = vrot.slane %v7386, 2
        %v7531 = vsel %vm5335, %v7529, %v7530
        %v7532 = vrot.slane %v7389, 2
        %v7533 = vsel %vm5335, %v7530, %v7532
        %v7534 = vrot.slane %v7392, 2
        %v7535 = vrot.slane %v7395, 2
        %v7536 = vsel %vm5335, %v7534, %v7535
        %v7537 = vrot.slane %v7398, 2
        %v7538 = vsel %vm5335, %v7535, %v7537
        %v7539 = vrot.slane %v7401, 2
        %v7540 = vrot.slane %v7404, 2
        %v7541 = vsel %vm5335, %v7539, %v7540
        %v7542 = vrot.slane %v7407, 2
        %v7543 = vsel %vm5335, %v7540, %v7542
        %v7544 = vrot.slane %v7410, 2
        %v7545 = vrot.slane %v7413, 2
        %v7546 = vsel %vm5335, %v7544, %v7545
        %v7547 = vrot.slane %v7416, 2
        %v7548 = vsel %vm5335, %v7545, %v7547
        %v7549 = vrot.slane %v7419, 2
        %v7550 = vrot.slane %v7422, 2
        %v7551 = vsel %vm5335, %v7549, %v7550
        %v7552 = vrot.slane %v7425, 2
        %v7553 = vsel %vm5335, %v7550, %v7552
        %v7586 = vadd.f32 %v7166, %v7476
        %v7587 = vadd.f32 %v7167, %v7478
        %v7588 = vadd.f32 %v7168, %v7481
        %v7589 = vadd.f32 %v7169, %v7483
        %v7590 = vadd.f32 %v7170, %v7486
        %v7591 = vadd.f32 %v7171, %v7488
        %v7592 = vadd.f32 %v7172, %v7491
        %v7593 = vadd.f32 %v7173, %v7493
        %v7594 = vadd.f32 %v7174, %v7496
        %v7595 = vadd.f32 %v7175, %v7498
        %v7596 = vadd.f32 %v7176, %v7501
        %v7597 = vadd.f32 %v7177, %v7503
        %v7598 = vadd.f32 %v7178, %v7506
        %v7599 = vadd.f32 %v7179, %v7508
        %v7600 = vadd.f32 %v7180, %v7511
        %v7601 = vadd.f32 %v7181, %v7513
        %v7602 = vadd.f32 %v7182, %v7516
        %v7603 = vadd.f32 %v7183, %v7518
        %v7604 = vadd.f32 %v7184, %v7521
        %v7605 = vadd.f32 %v7185, %v7523
        %v7606 = vadd.f32 %v7186, %v7526
        %v7607 = vadd.f32 %v7187, %v7528
        %v7608 = vadd.f32 %v7188, %v7531
        %v7609 = vadd.f32 %v7189, %v7533
        %v7610 = vadd.f32 %v7190, %v7536
        %v7611 = vadd.f32 %v7191, %v7538
        %v7612 = vadd.f32 %v7192, %v7541
        %v7613 = vadd.f32 %v7193, %v7543
        %v7614 = vadd.f32 %v7194, %v7546
        %v7615 = vadd.f32 %v7195, %v7548
        %v7616 = vadd.f32 %v7196, %v7551
        %v7617 = vadd.f32 %v7197, %v7553
        %7650 = vset.pattern.permute.xlu0 0
        %7651 = vperm.xlu0 %7650, %v7586
        %v7652 = vpop.permute.xlu0 %7651
        %7653 = vset.pattern.permute.xlu0 0
        %7654 = vperm.xlu0 %7653, %v7587
        %v7655 = vpop.permute.xlu0 %7654
        %7656 = vset.pattern.permute.xlu0 0
        %7657 = vperm.xlu0 %7656, %v7588
        %v7658 = vpop.permute.xlu0 %7657
        %7659 = vset.pattern.permute.xlu0 0
        %7660 = vperm.xlu0 %7659, %v7589
        %v7661 = vpop.permute.xlu0 %7660
        %7662 = vset.pattern.permute.xlu0 0
        %7663 = vperm.xlu0 %7662, %v7590
        %v7664 = vpop.permute.xlu0 %7663
        %7665 = vset.pattern.permute.xlu0 0
        %7666 = vperm.xlu0 %7665, %v7591
        %v7667 = vpop.permute.xlu0 %7666
        %7668 = vset.pattern.permute.xlu0 0
        %7669 = vperm.xlu0 %7668, %v7592
        %v7670 = vpop.permute.xlu0 %7669
        %7671 = vset.pattern.permute.xlu0 0
        %7672 = vperm.xlu0 %7671, %v7593
        %v7673 = vpop.permute.xlu0 %7672
        %7674 = vset.pattern.permute.xlu0 0
        %7675 = vperm.xlu0 %7674, %v7594
        %v7676 = vpop.permute.xlu0 %7675
        %7677 = vset.pattern.permute.xlu0 0
        %7678 = vperm.xlu0 %7677, %v7595
        %v7679 = vpop.permute.xlu0 %7678
        %7680 = vset.pattern.permute.xlu0 0
        %7681 = vperm.xlu0 %7680, %v7596
        %v7682 = vpop.permute.xlu0 %7681
        %7683 = vset.pattern.permute.xlu0 0
        %7684 = vperm.xlu0 %7683, %v7597
        %v7685 = vpop.permute.xlu0 %7684
        %7686 = vset.pattern.permute.xlu0 0
        %7687 = vperm.xlu0 %7686, %v7598
        %v7688 = vpop.permute.xlu0 %7687
        %7689 = vset.pattern.permute.xlu0 0
        %7690 = vperm.xlu0 %7689, %v7599
        %v7691 = vpop.permute.xlu0 %7690
        %7692 = vset.pattern.permute.xlu0 0
        %7693 = vperm.xlu0 %7692, %v7600
        %v7694 = vpop.permute.xlu0 %7693
        %7695 = vset.pattern.permute.xlu0 0
        %7696 = vperm.xlu0 %7695, %v7601
        %v7697 = vpop.permute.xlu0 %7696
        %7698 = vset.pattern.permute.xlu0 0
        %7699 = vperm.xlu0 %7698, %v7602
        %v7700 = vpop.permute.xlu0 %7699
        %7701 = vset.pattern.permute.xlu0 0
        %7702 = vperm.xlu0 %7701, %v7603
        %v7703 = vpop.permute.xlu0 %7702
        %7704 = vset.pattern.permute.xlu0 0
        %7705 = vperm.xlu0 %7704, %v7604
        %v7706 = vpop.permute.xlu0 %7705
        %7707 = vset.pattern.permute.xlu0 0
        %7708 = vperm.xlu0 %7707, %v7605
        %v7709 = vpop.permute.xlu0 %7708
        %7710 = vset.pattern.permute.xlu0 0
        %7711 = vperm.xlu0 %7710, %v7606
        %v7712 = vpop.permute.xlu0 %7711
        %7713 = vset.pattern.permute.xlu0 0
        %7714 = vperm.xlu0 %7713, %v7607
        %v7715 = vpop.permute.xlu0 %7714
        %7716 = vset.pattern.permute.xlu0 0
        %7717 = vperm.xlu0 %7716, %v7608
        %v7718 = vpop.permute.xlu0 %7717
        %7719 = vset.pattern.permute.xlu0 0
        %7720 = vperm.xlu0 %7719, %v7609
        %v7721 = vpop.permute.xlu0 %7720
        %7722 = vset.pattern.permute.xlu0 0
        %7723 = vperm.xlu0 %7722, %v7610
        %v7724 = vpop.permute.xlu0 %7723
        %7725 = vset.pattern.permute.xlu0 0
        %7726 = vperm.xlu0 %7725, %v7611
        %v7727 = vpop.permute.xlu0 %7726
        %7728 = vset.pattern.permute.xlu0 0
        %7729 = vperm.xlu0 %7728, %v7612
        %v7730 = vpop.permute.xlu0 %7729
        %7731 = vset.pattern.permute.xlu0 0
        %7732 = vperm.xlu0 %7731, %v7613
        %v7733 = vpop.permute.xlu0 %7732
        %7734 = vset.pattern.permute.xlu0 0
        %7735 = vperm.xlu0 %7734, %v7614
        %v7736 = vpop.permute.xlu0 %7735
        %7737 = vset.pattern.permute.xlu0 0
        %7738 = vperm.xlu0 %7737, %v7615
        %v7739 = vpop.permute.xlu0 %7738
        %7740 = vset.pattern.permute.xlu0 0
        %7741 = vperm.xlu0 %7740, %v7616
        %v7742 = vpop.permute.xlu0 %7741
        %7743 = vset.pattern.permute.xlu0 0
        %7744 = vperm.xlu0 %7743, %v7617
        %v7745 = vpop.permute.xlu0 %7744
        %v7746 = vlaneseq
        %v7747 = vand.u32 %v7746, 127
        %v7748 = vlaneseq
        %v7749 = vshrl.u32 %v7748, 7
        %v7750 = vsub.s32 %v7747, %v7749
        %v7751 = vrot.slane %v7652, %v7750
        %v7752 = vadd.s32 %v7747, 4294967288
        %v7753 = vlaneseq
        %v7754 = vshrl.u32 %v7753, 7
        %v7755 = vsub.s32 %v7752, %v7754
        %v7756 = vrot.slane %v7655, %v7755
        %vm7757 = vcmask 130112
        %v7758 = vsel %vm7757, %v7756, %v7751
        %v7759 = vlaneseq
        %v7760 = vshrl.u32 %v7759, 7
        %v7761 = vsub.s32 %v7747, %v7760
        %v7762 = vrot.slane %v7658, %v7761
        %v7763 = vlaneseq
        %v7764 = vshrl.u32 %v7763, 7
        %v7765 = vsub.s32 %v7752, %v7764
        %v7766 = vrot.slane %v7661, %v7765
        %v7767 = vsel %vm7757, %v7766, %v7762
        %v7768 = vlaneseq
        %v7769 = vshrl.u32 %v7768, 7
        %v7770 = vsub.s32 %v7747, %v7769
        %v7771 = vrot.slane %v7664, %v7770
        %v7772 = vlaneseq
        %v7773 = vshrl.u32 %v7772, 7
        %v7774 = vsub.s32 %v7752, %v7773
        %v7775 = vrot.slane %v7667, %v7774
        %v7776 = vsel %vm7757, %v7775, %v7771
        %v7777 = vlaneseq
        %v7778 = vshrl.u32 %v7777, 7
        %v7779 = vsub.s32 %v7747, %v7778
        %v7780 = vrot.slane %v7670, %v7779
        %v7781 = vlaneseq
        %v7782 = vshrl.u32 %v7781, 7
        %v7783 = vsub.s32 %v7752, %v7782
        %v7784 = vrot.slane %v7673, %v7783
        %v7785 = vsel %vm7757, %v7784, %v7780
        %v7786 = vlaneseq
        %v7787 = vshrl.u32 %v7786, 7
        %v7788 = vsub.s32 %v7747, %v7787
        %v7789 = vrot.slane %v7676, %v7788
        %v7790 = vlaneseq
        %v7791 = vshrl.u32 %v7790, 7
        %v7792 = vsub.s32 %v7752, %v7791
        %v7793 = vrot.slane %v7679, %v7792
        %v7794 = vsel %vm7757, %v7793, %v7789
        %v7795 = vlaneseq
        %v7796 = vshrl.u32 %v7795, 7
        %v7797 = vsub.s32 %v7747, %v7796
        %v7798 = vrot.slane %v7682, %v7797
        %v7799 = vlaneseq
        %v7800 = vshrl.u32 %v7799, 7
        %v7801 = vsub.s32 %v7752, %v7800
        %v7802 = vrot.slane %v7685, %v7801
        %v7803 = vsel %vm7757, %v7802, %v7798
        %v7804 = vlaneseq
        %v7805 = vshrl.u32 %v7804, 7
        %v7806 = vsub.s32 %v7747, %v7805
        %v7807 = vrot.slane %v7688, %v7806
        %v7808 = vlaneseq
        %v7809 = vshrl.u32 %v7808, 7
        %v7810 = vsub.s32 %v7752, %v7809
        %v7811 = vrot.slane %v7691, %v7810
        %v7812 = vsel %vm7757, %v7811, %v7807
        %v7813 = vlaneseq
        %v7814 = vshrl.u32 %v7813, 7
        %v7815 = vsub.s32 %v7747, %v7814
        %v7816 = vrot.slane %v7694, %v7815
        %v7817 = vlaneseq
        %v7818 = vshrl.u32 %v7817, 7
        %v7819 = vsub.s32 %v7752, %v7818
        %v7820 = vrot.slane %v7697, %v7819
        %v7821 = vsel %vm7757, %v7820, %v7816
        %v7822 = vlaneseq
        %v7823 = vshrl.u32 %v7822, 7
        %v7824 = vsub.s32 %v7747, %v7823
        %v7825 = vrot.slane %v7700, %v7824
        %v7826 = vlaneseq
        %v7827 = vshrl.u32 %v7826, 7
        %v7828 = vsub.s32 %v7752, %v7827
        %v7829 = vrot.slane %v7703, %v7828
        %v7830 = vsel %vm7757, %v7829, %v7825
        %v7831 = vlaneseq
        %v7832 = vshrl.u32 %v7831, 7
        %v7833 = vsub.s32 %v7747, %v7832
        %v7834 = vrot.slane %v7706, %v7833
        %v7835 = vlaneseq
        %v7836 = vshrl.u32 %v7835, 7
        %v7837 = vsub.s32 %v7752, %v7836
        %v7838 = vrot.slane %v7709, %v7837
        %v7839 = vsel %vm7757, %v7838, %v7834
        %v7840 = vlaneseq
        %v7841 = vshrl.u32 %v7840, 7
        %v7842 = vsub.s32 %v7747, %v7841
        %v7843 = vrot.slane %v7712, %v7842
        %v7844 = vlaneseq
        %v7845 = vshrl.u32 %v7844, 7
        %v7846 = vsub.s32 %v7752, %v7845
        %v7847 = vrot.slane %v7715, %v7846
        %v7848 = vsel %vm7757, %v7847, %v7843
        %v7849 = vlaneseq
        %v7850 = vshrl.u32 %v7849, 7
        %v7851 = vsub.s32 %v7747, %v7850
        %v7852 = vrot.slane %v7718, %v7851
        %v7853 = vlaneseq
        %v7854 = vshrl.u32 %v7853, 7
        %v7855 = vsub.s32 %v7752, %v7854
        %v7856 = vrot.slane %v7721, %v7855
        %v7857 = vsel %vm7757, %v7856, %v7852
        %v7858 = vlaneseq
        %v7859 = vshrl.u32 %v7858, 7
        %v7860 = vsub.s32 %v7747, %v7859
        %v7861 = vrot.slane %v7724, %v7860
        %v7862 = vlaneseq
        %v7863 = vshrl.u32 %v7862, 7
        %v7864 = vsub.s32 %v7752, %v7863
        %v7865 = vrot.slane %v7727, %v7864
        %v7866 = vsel %vm7757, %v7865, %v7861
        %v7867 = vlaneseq
        %v7868 = vshrl.u32 %v7867, 7
        %v7869 = vsub.s32 %v7747, %v7868
        %v7870 = vrot.slane %v7730, %v7869
        %v7871 = vlaneseq
        %v7872 = vshrl.u32 %v7871, 7
        %v7873 = vsub.s32 %v7752, %v7872
        %v7874 = vrot.slane %v7733, %v7873
        %v7875 = vsel %vm7757, %v7874, %v7870
        %v7876 = vlaneseq
        %v7877 = vshrl.u32 %v7876, 7
        %v7878 = vsub.s32 %v7747, %v7877
        %v7879 = vrot.slane %v7736, %v7878
        %v7880 = vlaneseq
        %v7881 = vshrl.u32 %v7880, 7
        %v7882 = vsub.s32 %v7752, %v7881
        %v7883 = vrot.slane %v7739, %v7882
        %v7884 = vsel %vm7757, %v7883, %v7879
        %v7885 = vlaneseq
        %v7886 = vshrl.u32 %v7885, 7
        %v7887 = vsub.s32 %v7747, %v7886
        %v7888 = vrot.slane %v7742, %v7887
        %v7889 = vlaneseq
        %v7890 = vshrl.u32 %v7889, 7
        %v7891 = vsub.s32 %v7752, %v7890
        %v7892 = vrot.slane %v7745, %v7891
        %v7893 = vsel %vm7757, %v7892, %v7888
        %vm7894 = vcmask 1041409
        %v7895 = vsel %vm7894, %v7767, %v7758
        %vm7896 = vcmask 1042434
        %v7897 = vsel %vm7896, %v7776, %v7895
        %vm7898 = vcmask 1043459
        %v7899 = vsel %vm7898, %v7785, %v7897
        %vm7900 = vcmask 1044484
        %v7901 = vsel %vm7900, %v7794, %v7899
        %vm7902 = vcmask 1045509
        %v7903 = vsel %vm7902, %v7803, %v7901
        %vm7904 = vcmask 1046534
        %v7905 = vsel %vm7904, %v7812, %v7903
        %vm7906 = vcmask 1047559
        %v7907 = vsel %vm7906, %v7821, %v7905
        %v7908 = vsel %vm7894, %v7839, %v7830
        %v7909 = vsel %vm7896, %v7848, %v7908
        %v7910 = vsel %vm7898, %v7857, %v7909
        %v7911 = vsel %vm7900, %v7866, %v7910
        %v7912 = vsel %vm7902, %v7875, %v7911
        %v7913 = vsel %vm7904, %v7884, %v7912
        %v7914 = vsel %vm7906, %v7893, %v7913
        %vm7917 = vcmask 130048
        %7918 = vst.msk [vmem:[%s190] sm:$0xff] %vm7917, %v7907
        %7919 = vst.msk [vmem:[%s190 + $0x8] sm:$0xff] %vm7917, %v7914
        %s7920 = sand.u32 %s115, 1
        %s7921 = scalar_lea.sflag [#allocation5], %s7920
        %s7922 = sand.u32 %s115, 1
        %s7923 = smul.addr %s7922, 16
        %s7924 = scalar_lea.vmem [#allocation4], %s7923
        // Predicated region
        $region44: #{denoising_cnn_forward.1} parent=35 // pred_check
          %p7925 = pneg %p125
        $region45: #{denoising_cnn_forward.1} parent=35 // pred_check_branch
          %7927 = sbr.rel (%p7925) target = $region47
        $region46: #{denoising_cnn_forward.1} parent=35 // pred_region
          %s7929 = ssub.s32 256, 256
          %7930 = vsyncadd %s7921, %s7929
          %s7931 = smul.addr %s18, 2
          %s7932 = smul.addr %s7931, 128
          %s7933 = scalar_lea.hbm %s4, %s7932
          %s7934 = sshll.u32 %s7924, 4
          %s7935 = int_to_ptr.vmem [resolvable:$true] %s7934
          %7940 = dma.vmem_to_hbm [thread:$0]  %s7935, 256, %s7933, %s7921, 128, 128, 8
        $region47: #{denoising_cnn_forward.1} parent=35 // pred_fallthru
          _
      $region36: #{denoising_cnn_forward.1} parent=5 // pred_fallthru
        _
      %p7941 = scmp.le.s32.totalorder 2, %s13
      // Predicated region
      $region48: #{denoising_cnn_forward.1} parent=5 // pred_check
        %p7942 = pneg %p7941
      $region49: #{denoising_cnn_forward.1} parent=5 // pred_check_branch
        %7944 = sbr.rel (%p7942) target = $region51
      $region50: #{denoising_cnn_forward.1} parent=5 // pred_region
        %s7945 = ssub.s32 %s13, 2
        // Predicated region
        $region52: #{denoising_cnn_forward.1} parent=50 // pred_check
          %p7946 = pneg %p131
        $region53: #{denoising_cnn_forward.1} parent=50 // pred_check_branch
          %7948 = sbr.rel (%p7946) target = $region55
        $region54: #{denoising_cnn_forward.1} parent=50 // pred_region
          %s7949 = sand.u32 %s116, 1
          %s7950 = scalar_lea.sflag [#allocation5], %s7949
          %s7951 = sand.u32 %s116, 1
          %s7952 = smul.addr %s7951, 16
          %s7953 = scalar_lea.vmem [#allocation4], %s7952
          %7954 = dma.done %s7950, 256
        $region55: #{denoising_cnn_forward.1} parent=50 // pred_fallthru
          _
      $region51: #{denoising_cnn_forward.1} parent=5 // pred_fallthru
        _
    $region6: #{denoising_cnn_forward.1} parent=1 // loop_footer
      %s17 = sadd.s32 1, %s13
    $region7: #{denoising_cnn_forward.1} parent=1 // loop_footer_branch
      %12 = sbr.rel target = $region3
    $region8: #{denoising_cnn_forward.1} parent=1 // loop_exit
      _
    %7955 = vsyncpa [#allocation5], 1
    %s7956 = scalar_lea.sflag [#allocation5], 1
    %7957 = vsyncpa %s7956, 1

</llo_original>
